<compile_context>
chip_gen: v7x
topology: tpu7x:2x2x1
jax: 0.10.0
libtpu: 0.0.40
codegen_flags: <defaults>
</compile_context>

<pallas_src>
import numpy as np
import jax
import jax.numpy as jnp
from jax import lax
from jax.experimental import pallas as pl
from jax.experimental.pallas import tpu as pltpu

EPS = 1e-5           # nn.InstanceNorm1d default eps
LEAKY_SLOPE = 0.01   # F.leaky_relu default negative_slope
ROWG = 16            # row-group of the im2col slab stores (bf16 sublane-tile aligned)
CHUNK = 384          # layer-1 lane tile: multiple of 3 (pool) and of 128 (vreg lanes)


# ----------------------------------------------------------------------------
# Parameter setup (plain JAX / numpy glue)
# ----------------------------------------------------------------------------
def make_sinc_filters(n_filters=80, kernel_size=251, sample_rate=16000.0,
                      min_low_hz=50.0, min_band_hz=50.0):
    """asteroid-filterbanks ParamSincFB filter synthesis -> (80, 251) float32."""
    cutoff = n_filters // 2          # 40 cos + 40 sin filters
    half_kernel = kernel_size // 2   # 125

    def to_mel(hz):
        return 2595.0 * np.log10(1.0 + hz / 700.0)

    def to_hz(mel):
        return 700.0 * (10.0 ** (mel / 2595.0) - 1.0)

    low_hz0 = 30.0
    high_hz0 = sample_rate / 2.0 - (min_low_hz + min_band_hz)
    mel = np.linspace(to_mel(low_hz0), to_mel(high_hz0), cutoff + 1)
    hz = to_hz(mel)
    low_hz_ = hz[:-1].reshape(-1, 1)        # learnable parameter (40, 1)
    band_hz_ = np.diff(hz).reshape(-1, 1)   # learnable parameter (40, 1)

    n_lin = np.arange(kernel_size, dtype=np.float64)
    window_ = (0.54 - 0.46 * np.cos(2.0 * np.pi * n_lin / (kernel_size - 1)))[:half_kernel]
    n_ = 2.0 * np.pi * np.arange(-half_kernel, 0.0).reshape(1, -1) / sample_rate

    low = min_low_hz + np.abs(low_hz_)
    high = np.clip(low + min_band_hz + np.abs(band_hz_), min_low_hz, sample_rate / 2.0)
    band = (high - low)[:, 0]
    ft_low = low @ n_
    ft_high = high @ n_

    def make(kind):
        if kind == "cos":
            bp_left = ((np.sin(ft_high) - np.sin(ft_low)) / (n_ / 2.0)) * window_
            bp_center = 2.0 * band.reshape(-1, 1)
            bp_right = np.flip(bp_left, axis=1)
        else:  # "sin"
            bp_left = ((np.cos(ft_low) - np.cos(ft_high)) / (n_ / 2.0)) * window_
            bp_center = np.zeros((cutoff, 1))
            bp_right = -np.flip(bp_left, axis=1)
        band_pass = np.concatenate([bp_left, bp_center, bp_right], axis=1)
        return band_pass / (2.0 * band[:, None])

    filters = np.concatenate([make("cos"), make("sin")], axis=0)   # (80, 251)
    return jnp.asarray(filters, dtype=jnp.float32)


def init_params(key):
    """Deterministic synthetic parameters with the module's shapes."""
    k = jax.random.split(key, 12)

    def unif(kk, shape, fan_in):
        bound = 1.0 / np.sqrt(fan_in)
        return jax.random.uniform(kk, shape, jnp.float32, -bound, bound)

    return dict(
        w_sinc=make_sinc_filters(80, 251, 16000.0, 50.0, 50.0),            # (80, 251)
        wav_g=1.0 + 0.1 * jax.random.normal(k[0], (1, 1), jnp.float32),    # InstanceNorm1d(1)
        wav_b=0.05 * jax.random.normal(k[1], (1, 1), jnp.float32),
        g1=1.0 + 0.1 * jax.random.normal(k[2], (80, 1), jnp.float32),      # InstanceNorm1d(80)
        b1=0.05 * jax.random.normal(k[3], (80, 1), jnp.float32),
        w2=unif(k[4], (60, 80, 5), 80 * 5),                                # Conv1d(80,60,5)
        bias2=unif(k[5], (60, 1), 80 * 5),
        g2=1.0 + 0.1 * jax.random.normal(k[6], (60, 1), jnp.float32),
        b2=0.05 * jax.random.normal(k[7], (60, 1), jnp.float32),
        w3=unif(k[8], (60, 60, 5), 60 * 5),                                # Conv1d(60,60,5)
        bias3=unif(k[9], (60, 1), 60 * 5),
        g3=1.0 + 0.1 * jax.random.normal(k[10], (60, 1), jnp.float32),
        b3=0.05 * jax.random.normal(k[11], (60, 1), jnp.float32),
    )


def _center_sel(width, n_out):
    """(width, n_out) 0/1 bf16 matrix with sel[3t+1, t] = 1.

    Picks the CENTER column of every MaxPool1d(3,3) window; pairs with the
    symmetric +-1 lane rolls (max(y[t-1], y[t], y[t+1]) evaluated at t = 3k+1).
    """
    s = np.zeros((width, n_out), np.float32)
    s[3 * np.arange(n_out) + 1, np.arange(n_out)] = 1.0
    return jnp.asarray(s, dtype=jnp.bfloat16)


def _start_sel(L, P):
    """(L-2, P) 0/1 bf16 matrix with sel[3t, t] = 1: picks every 3rd window-start max."""
    s = np.zeros((L - 2, P), np.float32)
    s[3 * np.arange(P), np.arange(P)] = 1.0
    return jnp.asarray(s, dtype=jnp.bfloat16)


# ----------------------------------------------------------------------------
# In-kernel helpers (traced into the fused Pallas kernel)
# ----------------------------------------------------------------------------
def _norm_leaky(p, gamma, beta):
    """InstanceNorm1d (one-pass biased stats, eps=1e-5, affine) + leaky_relu (f32)."""
    mu = jnp.mean(p, axis=-1, keepdims=True)
    ms = jnp.mean(p * p, axis=-1, keepdims=True)
    var = jnp.maximum(ms - mu * mu, 0.0)
    z = (p - mu) * lax.rsqrt(var + EPS) * gamma + beta
    return jnp.where(z >= 0, z, LEAKY_SLOPE * z)


def _pool3_norm_leaky(y, sel, gamma, beta):
    """MaxPool1d(3,3): sliding 3-max + 0/1 downsample matmul (bf16), then norm+leaky."""
    L = y.shape[1]
    m = jnp.maximum(jnp.maximum(y[:, 0:L - 2], y[:, 1:L - 1]), y[:, 2:L])
    p = jnp.dot(m.astype(jnp.bfloat16), sel, preferred_element_type=jnp.float32)
    return _norm_leaky(p, gamma, beta)


# ----------------------------------------------------------------------------
# Fused forward pass (single pallas_call)
# ----------------------------------------------------------------------------
@jax.jit
def sincnet_forward(waveforms, params):
    """waveforms: (batch, 1, samples) float32 -> (batch, 60, T_out)"""
    B, _, L_orig = waveforms.shape
    w_sinc = params["w_sinc"]                     # (80, 251)
    C1, K1 = w_sinc.shape
    KP = ROWG * (-(-K1 // ROWG))                  # taps padded 251 -> 256
    NSLAB = KP // ROWG                            # 16 slabs of 16 rows
    w2, w3 = params["w2"], params["w3"]           # (Cout, Cin, K)
    C2, _, K2 = w2.shape
    C3, _, K3 = w3.shape

    # valid-conv / pool(3,3) length chain
    L1 = L_orig - K1 + 1                          # 750
    P1 = (L1 - 3) // 3 + 1                        # 250
    L2 = P1 - K2 + 1                              # 246
    P2 = (L2 - 3) // 3 + 1                        # 82
    L3 = P2 - K3 + 1                              # 78
    P3 = (L3 - 3) // 3 + 1                        # 26

    NCH = -(-L1 // CHUNK)                         # layer-1 lane tiles (2)
    L1P = NCH * CHUNK                             # padded sinc-output width (768)
    PC = CHUNK // 3                               # pooled outputs per full tile (128)
    p_cnts = [min(PC, P1 - c * PC) for c in range(NCH)]   # [128, 122]
    L_u = ROWG * (NSLAB - 1) + L1P                # phase-buffer width (1008)
    need = ROWG - 1 + L_u                         # samples the im2col may touch (1023)
    L_pad = ((max(need, L_orig) + 127) // 128) * 128       # 1024
    assert CHUNK % 3 == 0 and CHUNK % 128 == 0 and 3 * P1 <= L1P

    # ---- host-side parameter re-layout (tiny; traced once under jit) ---------------
    # sinc filterbank padded to 256 taps (pad taps have zero weight), bf16 MXU operand
    wf = jnp.pad(w_sinc, ((0, 0), (0, KP - K1))).astype(jnp.bfloat16)          # (80, 256)
    # conv weights for single stacked matmuls: columns ordered k*C_in + c_in
    w2s = jnp.reshape(jnp.transpose(w2, (0, 2, 1)), (C2, K2 * C1)).astype(jnp.bfloat16)
    w3s = jnp.reshape(jnp.transpose(w3, (0, 2, 1)), (C3, K3 * C2)).astype(jnp.bfloat16)
    # constant 0/1 max-pool downsample matrices (resident in VMEM across grid steps)
    sel1s = [_center_sel(CHUNK, pc) for pc in p_cnts]     # (384,128), (384,122)
    sel2 = _start_sel(L2, P2)                             # (244, 82)
    sel3 = _start_sel(L3, P3)                             # (76, 26)

    # Zero-pad the waveform: padded taps (k >= K1) have zero weight and sinc-output
    # columns >= L1 are never selected by the pool matrices, so the pad never
    # contributes to the result.
    x_pad = jnp.pad(waveforms, ((0, 0), (0, 0), (0, L_pad - L_orig)))

    def kernel(*refs):
        (x_ref, wf_ref, wavg_ref, wavb_ref, g1_ref, b1_ref) = refs[:6]
        sel1_refs = refs[6:6 + NCH]
        (w2_ref, bias2_ref, g2_ref, b2_ref, sel2_ref,
         w3_ref, bias3_ref, g3_ref, b3_ref, sel3_ref) = refs[6 + NCH:16 + NCH]
        o_ref = refs[16 + NCH]
        u_ref, z2_ref, p1_ref, x2_ref, x3_ref = refs[17 + NCH:]

        # ---- wav InstanceNorm1d(1, affine); one-pass stats over real samples -------
        x = x_ref[0]                                            # (1, L_pad) f32
        xv = x[:, :L_orig]
        mu = jnp.mean(xv, axis=-1, keepdims=True)
        ms = jnp.mean(xv * xv, axis=-1, keepdims=True)
        var = jnp.maximum(ms - mu * mu, 0.0)
        xn = (x - mu) * lax.rsqrt(var + EPS) * wavg_ref[...] + wavb_ref[...]

        # ---- build the 256-row im2col z2[k, t] = xn[t + k] (bf16) ------------------
        # phase buffer: u[r, t] = xn[t + r], r in [0, 16)   (16 single-row stores)
        for r in range(ROWG):
            u_ref[r:r + 1, :] = xn[:, r:r + L_u]
        # z2[16m + r, t] = u[r, t + 16m]                     (16 aligned 16-row slabs)
        for m in range(NSLAB):
            z2_ref[m * ROWG:(m + 1) * ROWG, :] = (
                u_ref[:, m * ROWG:m * ROWG + L1P].astype(jnp.bfloat16))

        # ---- SincConv(1->80, K=251) -> |.| -> MaxPool(3,3), lane-tiled -------------
        wfv = wf_ref[...]                                       # (80, 256) bf16
        for c in range(NCH):
            yc = jnp.dot(wfv, z2_ref[:, c * CHUNK:(c + 1) * CHUNK],
                         preferred_element_type=jnp.float32)    # (80, 384) f32
            yc = jnp.abs(yc)
            # symmetric +-1 rolls (XLU): mc[t] = max(yc[t-1], yc[t], yc[t+1]);
            # the center-select matrix reads only t = 3k+1, so wrap lanes are unused.
            mc = jnp.maximum(yc, jnp.maximum(pltpu.roll(yc, 1, 1),
                                             pltpu.roll(yc, CHUNK - 1, 1)))
            p1_ref[:, c * PC:c * PC + p_cnts[c]] = jnp.dot(
                mc.astype(jnp.bfloat16), sel1_refs[c][...],
                preferred_element_type=jnp.float32)
        h1 = _norm_leaky(p1_ref[...], g1_ref[...], b1_ref[...])  # (80, 250) f32

        # ---- Conv1d(80->60, 5) as one (60,400)@(400,246) bf16 matmul ---------------
        h1b = h1.astype(jnp.bfloat16)
        for k in range(K2):                                     # 5 aligned slab stores
            x2_ref[k * C1:(k + 1) * C1, :] = h1b[:, k:k + L2]
        y2 = jnp.dot(w2_ref[...], x2_ref[...],
                     preferred_element_type=jnp.float32) + bias2_ref[...]
        h2 = _pool3_norm_leaky(y2, sel2_ref[...], g2_ref[...], b2_ref[...])   # (60, 82)

        # ---- Conv1d(60->60, 5) as one (60,300)@(300,78) bf16 matmul ----------------
        for k in range(K3):
            x3_ref[k * C2:(k + 1) * C2, :] = h2[:, k:k + L3]
        y3 = jnp.dot(w3_ref[...], x3_ref[...].astype(jnp.bfloat16),
                     preferred_element_type=jnp.float32) + bias3_ref[...]
        o_ref[0] = _pool3_norm_leaky(y3, sel3_ref[...], g3_ref[...], b3_ref[...])  # (60,26)

    def const2(shape):
        return pl.BlockSpec(shape, lambda b: (0, 0))

    in_specs = ([pl.BlockSpec((1, 1, L_pad), lambda b: (b, 0, 0)),   # waveform
                 const2((C1, KP)),                                   # sinc filter (bf16)
                 const2((1, 1)), const2((1, 1)),                     # wav_norm gamma/beta
                 const2((C1, 1)), const2((C1, 1))]                   # norm1 gamma/beta
                + [const2((CHUNK, pc)) for pc in p_cnts]             # pool sel 1 (chunked)
                + [const2((C2, K2 * C1)), const2((C2, 1)),           # conv2 weight/bias
                   const2((C2, 1)), const2((C2, 1)),                 # norm2 gamma/beta
                   const2((L2 - 2, P2)),                             # pool sel 2
                   const2((C3, K3 * C2)), const2((C3, 1)),           # conv3 weight/bias
                   const2((C3, 1)), const2((C3, 1)),                 # norm3 gamma/beta
                   const2((L3 - 2, P3))])                            # pool sel 3

    grid_spec = pltpu.PrefetchScalarGridSpec(
        num_scalar_prefetch=0,
        grid=(B,),
        in_specs=in_specs,
        out_specs=pl.BlockSpec((1, C3, P3), lambda b: (b, 0, 0)),
        scratch_shapes=[
            pltpu.VMEM((ROWG, L_u), jnp.float32),                    # 16-row phase buffer
            pltpu.VMEM((KP, L1P), jnp.bfloat16),                     # 256-row im2col
            pltpu.VMEM((C1, P1), jnp.float32),                       # pooled layer-1 staging
            pltpu.VMEM((K2 * C1, L2), jnp.bfloat16),                 # conv2 stacked operand
            pltpu.VMEM((K3 * C2, L3), jnp.float32),                  # conv3 stacked operand
        ],
    )

    return pl.pallas_call(
        kernel,
        out_shape=jax.ShapeDtypeStruct((B, C3, P3), jnp.float32),
        grid_spec=grid_spec,
        compiler_params=pltpu.CompilerParams(
            dimension_semantics=("parallel",)),     # batch splits across TCs on v7x
    )(x_pad, wf, params["wav_g"], params["wav_b"],
      params["g1"], params["b1"], *sel1s,
      w2s, params["bias2"], params["g2"], params["b2"], sel2,
      w3s, params["bias3"], params["g3"], params["b3"], sel3)


# ----------------------------------------------------------------------------
# Pure-JAX f32 reference (for a loose structural-correctness check)
# ----------------------------------------------------------------------------
def sincnet_reference(waveforms, params):
    def inorm(v, g, b):
        mu = jnp.mean(v, axis=-1, keepdims=True)
        var = jnp.mean((v - mu) ** 2, axis=-1, keepdims=True)
        return (v - mu) * lax.rsqrt(var + EPS) * g + b

    def leaky(v):
        return jnp.where(v >= 0, v, LEAKY_SLOPE * v)

    def conv(v, w):
        return lax.conv_general_dilated(v, w, (1,), "VALID",
                                        dimension_numbers=("NCH", "OIH", "NCH"),
                                        precision=lax.Precision.HIGHEST)

    def pool3(v):
        B, C, L = v.shape
        P = (L - 3) // 3 + 1
        return jnp.max(v[..., :3 * P].reshape(B, C, P, 3), axis=-1)

    out = inorm(waveforms, params["wav_g"], params["wav_b"])
    out = jnp.abs(conv(out, params["w_sinc"][:, None, :]))
    out = leaky(inorm(pool3(out), params["g1"], params["b1"]))
    out = conv(out, params["w2"]) + params["bias2"]
    out = leaky(inorm(pool3(out), params["g2"], params["b2"]))
    out = conv(out, params["w3"]) + params["bias3"]
    out = leaky(inorm(pool3(out), params["g3"], params["b3"]))
    return out


# ----------------------------------------------------------------------------
# Main
# ----------------------------------------------------------------------------
if __name__ == "__main__":
    key = jax.random.PRNGKey(0)
    k_wave, k_params = jax.random.split(key)

    B, L0 = 2, 1000                                   # (batch, channel=1, samples)
    waveforms = jax.random.normal(k_wave, (B, 1, L0), dtype=jnp.float32)
    params = init_params(k_params)

    out = jax.block_until_ready(sincnet_forward(waveforms, params))

    # 1000 -> conv251 -> 750 -> pool3 -> 250 -> conv5 -> 246 -> pool3 -> 82
    #      -> conv5 -> 78 -> pool3 -> 26
    assert out.shape == (B, 60, 26), out.shape
    assert bool(jnp.all(jnp.isfinite(out)))

    # Loose structural check vs. an f32 reference (kernel uses bf16 MXU operands, so
    # only coarse agreement is expected; a pooling/im2col/ordering bug would be O(1)).
    ref = jax.block_until_ready(sincnet_reference(waveforms, params))
    max_err = float(jnp.max(jnp.abs(out - ref)))
    assert max_err < 0.5, f"max abs diff vs f32 reference too large: {max_err}"

    print("KERNEL_OK")
</pallas_src>

<mosaic_0001>
module attributes {stable_mosaic.version = 11 : i64} {
  func.func @kernel(%arg0: i32, %arg1: memref<1x1x1024xf32, #tpu.memory_space<vmem>>, %arg2: memref<80x256xbf16, #tpu.memory_space<vmem>>, %arg3: memref<1x1xf32, #tpu.memory_space<vmem>>, %arg4: memref<1x1xf32, #tpu.memory_space<vmem>>, %arg5: memref<80x1xf32, #tpu.memory_space<vmem>>, %arg6: memref<80x1xf32, #tpu.memory_space<vmem>>, %arg7: memref<384x128xbf16, #tpu.memory_space<vmem>>, %arg8: memref<384x122xbf16, #tpu.memory_space<vmem>>, %arg9: memref<60x400xbf16, #tpu.memory_space<vmem>>, %arg10: memref<60x1xf32, #tpu.memory_space<vmem>>, %arg11: memref<60x1xf32, #tpu.memory_space<vmem>>, %arg12: memref<60x1xf32, #tpu.memory_space<vmem>>, %arg13: memref<244x82xbf16, #tpu.memory_space<vmem>>, %arg14: memref<60x300xbf16, #tpu.memory_space<vmem>>, %arg15: memref<60x1xf32, #tpu.memory_space<vmem>>, %arg16: memref<60x1xf32, #tpu.memory_space<vmem>>, %arg17: memref<60x1xf32, #tpu.memory_space<vmem>>, %arg18: memref<76x26xbf16, #tpu.memory_space<vmem>>, %arg19: memref<1x60x26xf32, #tpu.memory_space<vmem>>, %arg20: memref<16x1008xf32, #tpu.memory_space<vmem>>, %arg21: memref<256x768xbf16, #tpu.memory_space<vmem>>, %arg22: memref<80x250xf32, #tpu.memory_space<vmem>>, %arg23: memref<400x246xbf16, #tpu.memory_space<vmem>>, %arg24: memref<300x78xf32, #tpu.memory_space<vmem>>) attributes {dimension_semantics = [#tpu.dimension_semantics<parallel>], iteration_bounds = array<i64: 2>, scalar_prefetch = 0 : i64, scratch_operands = 5 : i64, tpu.core_type = #tpu.core_type<tc>, window_params = [{transform_indices = @transform_0, window_bounds = array<i64: 1, 1, 1024>}, {pipeline_mode = #tpu.pipeline_mode<synchronous>, transform_indices = @transform_1, window_bounds = array<i64: 80, 256>}, {pipeline_mode = #tpu.pipeline_mode<synchronous>, transform_indices = @transform_2, window_bounds = array<i64: 1, 1>}, {pipeline_mode = #tpu.pipeline_mode<synchronous>, transform_indices = @transform_3, window_bounds = array<i64: 1, 1>}, {pipeline_mode = #tpu.pipeline_mode<synchronous>, transform_indices = @transform_4, window_bounds = array<i64: 80, 1>}, {pipeline_mode = #tpu.pipeline_mode<synchronous>, transform_indices = @transform_5, window_bounds = array<i64: 80, 1>}, {pipeline_mode = #tpu.pipeline_mode<synchronous>, transform_indices = @transform_6, window_bounds = array<i64: 384, 128>}, {pipeline_mode = #tpu.pipeline_mode<synchronous>, transform_indices = @transform_7, window_bounds = array<i64: 384, 122>}, {pipeline_mode = #tpu.pipeline_mode<synchronous>, transform_indices = @transform_8, window_bounds = array<i64: 60, 400>}, {pipeline_mode = #tpu.pipeline_mode<synchronous>, transform_indices = @transform_9, window_bounds = array<i64: 60, 1>}, {pipeline_mode = #tpu.pipeline_mode<synchronous>, transform_indices = @transform_10, window_bounds = array<i64: 60, 1>}, {pipeline_mode = #tpu.pipeline_mode<synchronous>, transform_indices = @transform_11, window_bounds = array<i64: 60, 1>}, {pipeline_mode = #tpu.pipeline_mode<synchronous>, transform_indices = @transform_12, window_bounds = array<i64: 244, 82>}, {pipeline_mode = #tpu.pipeline_mode<synchronous>, transform_indices = @transform_13, window_bounds = array<i64: 60, 300>}, {pipeline_mode = #tpu.pipeline_mode<synchronous>, transform_indices = @transform_14, window_bounds = array<i64: 60, 1>}, {pipeline_mode = #tpu.pipeline_mode<synchronous>, transform_indices = @transform_15, window_bounds = array<i64: 60, 1>}, {pipeline_mode = #tpu.pipeline_mode<synchronous>, transform_indices = @transform_16, window_bounds = array<i64: 60, 1>}, {pipeline_mode = #tpu.pipeline_mode<synchronous>, transform_indices = @transform_17, window_bounds = array<i64: 76, 26>}, {transform_indices = @transform_18, window_bounds = array<i64: 1, 60, 26>}]} {
    %c0 = arith.constant 0 : index
    %c0_0 = arith.constant 0 : index
    %c0_1 = arith.constant 0 : index
    %0 = vector.load %arg1[%c0, %c0_0, %c0_1] : memref<1x1x1024xf32, #tpu.memory_space<vmem>>, vector<1x1x1024xf32>
    %1 = vector.shape_cast %0 : vector<1x1x1024xf32> to vector<1x1024xf32>
    %2 = vector.extract_strided_slice %1 {offsets = [0, 0], sizes = [1, 1000], strides = [1, 1]} : vector<1x1024xf32> to vector<1x1000xf32>
    %cst = arith.constant dense<0.000000e+00> : vector<1xf32>
    %3 = vector.multi_reduction <add>, %2, %cst [1] : vector<1x1000xf32> to vector<1xf32>
    %4 = vector.shape_cast %3 : vector<1xf32> to vector<1x1xf32>
    %cst_2 = arith.constant 1.000000e+03 : f32
    %5 = vector.broadcast %cst_2 : f32 to vector<1x1xf32>
    %6 = arith.divf %4, %5 : vector<1x1xf32>
    %7 = arith.mulf %2, %2 : vector<1x1000xf32>
    %cst_3 = arith.constant dense<0.000000e+00> : vector<1xf32>
    %8 = vector.multi_reduction <add>, %7, %cst_3 [1] : vector<1x1000xf32> to vector<1xf32>
    %9 = vector.shape_cast %8 : vector<1xf32> to vector<1x1xf32>
    %cst_4 = arith.constant 1.000000e+03 : f32
    %10 = vector.broadcast %cst_4 : f32 to vector<1x1xf32>
    %11 = arith.divf %9, %10 : vector<1x1xf32>
    %12 = arith.mulf %6, %6 : vector<1x1xf32>
    %13 = arith.subf %11, %12 : vector<1x1xf32>
    %cst_5 = arith.constant 0.000000e+00 : f32
    %14 = vector.broadcast %cst_5 : f32 to vector<1x1xf32>
    %15 = arith.maximumf %13, %14 : vector<1x1xf32>
    %16 = vector.broadcast %6 : vector<1x1xf32> to vector<1x1024xf32>
    %17 = arith.subf %1, %16 : vector<1x1024xf32>
    %cst_6 = arith.constant 9.99999974E-6 : f32
    %18 = vector.broadcast %cst_6 : f32 to vector<1x1xf32>
    %19 = arith.addf %15, %18 : vector<1x1xf32>
    %20 = math.rsqrt %19 : vector<1x1xf32>
    %21 = vector.broadcast %20 : vector<1x1xf32> to vector<1x1024xf32>
    %22 = arith.mulf %17, %21 : vector<1x1024xf32>
    %c0_7 = arith.constant 0 : index
    %c0_8 = arith.constant 0 : index
    %23 = vector.load %arg3[%c0_7, %c0_8] : memref<1x1xf32, #tpu.memory_space<vmem>>, vector<1x1xf32>
    %24 = vector.broadcast %23 : vector<1x1xf32> to vector<1x1024xf32>
    %25 = arith.mulf %22, %24 : vector<1x1024xf32>
    %c0_9 = arith.constant 0 : index
    %c0_10 = arith.constant 0 : index
    %26 = vector.load %arg4[%c0_9, %c0_10] : memref<1x1xf32, #tpu.memory_space<vmem>>, vector<1x1xf32>
    %27 = vector.broadcast %26 : vector<1x1xf32> to vector<1x1024xf32>
    %28 = arith.addf %25, %27 : vector<1x1024xf32>
    %29 = vector.extract_strided_slice %28 {offsets = [0, 0], sizes = [1, 1008], strides = [1, 1]} : vector<1x1024xf32> to vector<1x1008xf32>
    %c0_11 = arith.constant 0 : index
    %c0_12 = arith.constant 0 : index
    %30 = vector.load %arg20[%c0_11, %c0_12] : memref<16x1008xf32, #tpu.memory_space<vmem>>, vector<1x1008xf32>
    tpu.vector_store %arg20[%c0_11, %c0_12], %29 {strides = array<i32>} : memref<16x1008xf32, #tpu.memory_space<vmem>>, vector<1x1008xf32>,
    %31 = vector.extract_strided_slice %28 {offsets = [0, 1], sizes = [1, 1008], strides = [1, 1]} : vector<1x1024xf32> to vector<1x1008xf32>
    %c1 = arith.constant 1 : index
    %c0_13 = arith.constant 0 : index
    %32 = vector.load %arg20[%c1, %c0_13] : memref<16x1008xf32, #tpu.memory_space<vmem>>, vector<1x1008xf32>
    tpu.vector_store %arg20[%c1, %c0_13], %31 {strides = array<i32>} : memref<16x1008xf32, #tpu.memory_space<vmem>>, vector<1x1008xf32>,
    %33 = vector.extract_strided_slice %28 {offsets = [0, 2], sizes = [1, 1008], strides = [1, 1]} : vector<1x1024xf32> to vector<1x1008xf32>
    %c2 = arith.constant 2 : index
    %c0_14 = arith.constant 0 : index
    %34 = vector.load %arg20[%c2, %c0_14] : memref<16x1008xf32, #tpu.memory_space<vmem>>, vector<1x1008xf32>
    tpu.vector_store %arg20[%c2, %c0_14], %33 {strides = array<i32>} : memref<16x1008xf32, #tpu.memory_space<vmem>>, vector<1x1008xf32>,
    %35 = vector.extract_strided_slice %28 {offsets = [0, 3], sizes = [1, 1008], strides = [1, 1]} : vector<1x1024xf32> to vector<1x1008xf32>
    %c3 = arith.constant 3 : index
    %c0_15 = arith.constant 0 : index
    %36 = vector.load %arg20[%c3, %c0_15] : memref<16x1008xf32, #tpu.memory_space<vmem>>, vector<1x1008xf32>
    tpu.vector_store %arg20[%c3, %c0_15], %35 {strides = array<i32>} : memref<16x1008xf32, #tpu.memory_space<vmem>>, vector<1x1008xf32>,
    %37 = vector.extract_strided_slice %28 {offsets = [0, 4], sizes = [1, 1008], strides = [1, 1]} : vector<1x1024xf32> to vector<1x1008xf32>
    %c4 = arith.constant 4 : index
    %c0_16 = arith.constant 0 : index
    %38 = vector.load %arg20[%c4, %c0_16] : memref<16x1008xf32, #tpu.memory_space<vmem>>, vector<1x1008xf32>
    tpu.vector_store %arg20[%c4, %c0_16], %37 {strides = array<i32>} : memref<16x1008xf32, #tpu.memory_space<vmem>>, vector<1x1008xf32>,
    %39 = vector.extract_strided_slice %28 {offsets = [0, 5], sizes = [1, 1008], strides = [1, 1]} : vector<1x1024xf32> to vector<1x1008xf32>
    %c5 = arith.constant 5 : index
    %c0_17 = arith.constant 0 : index
    %40 = vector.load %arg20[%c5, %c0_17] : memref<16x1008xf32, #tpu.memory_space<vmem>>, vector<1x1008xf32>
    tpu.vector_store %arg20[%c5, %c0_17], %39 {strides = array<i32>} : memref<16x1008xf32, #tpu.memory_space<vmem>>, vector<1x1008xf32>,
    %41 = vector.extract_strided_slice %28 {offsets = [0, 6], sizes = [1, 1008], strides = [1, 1]} : vector<1x1024xf32> to vector<1x1008xf32>
    %c6 = arith.constant 6 : index
    %c0_18 = arith.constant 0 : index
    %42 = vector.load %arg20[%c6, %c0_18] : memref<16x1008xf32, #tpu.memory_space<vmem>>, vector<1x1008xf32>
    tpu.vector_store %arg20[%c6, %c0_18], %41 {strides = array<i32>} : memref<16x1008xf32, #tpu.memory_space<vmem>>, vector<1x1008xf32>,
    %43 = vector.extract_strided_slice %28 {offsets = [0, 7], sizes = [1, 1008], strides = [1, 1]} : vector<1x1024xf32> to vector<1x1008xf32>
    %c7 = arith.constant 7 : index
    %c0_19 = arith.constant 0 : index
    %44 = vector.load %arg20[%c7, %c0_19] : memref<16x1008xf32, #tpu.memory_space<vmem>>, vector<1x1008xf32>
    tpu.vector_store %arg20[%c7, %c0_19], %43 {strides = array<i32>} : memref<16x1008xf32, #tpu.memory_space<vmem>>, vector<1x1008xf32>,
    %45 = vector.extract_strided_slice %28 {offsets = [0, 8], sizes = [1, 1008], strides = [1, 1]} : vector<1x1024xf32> to vector<1x1008xf32>
    %c8 = arith.constant 8 : index
    %c0_20 = arith.constant 0 : index
    %46 = vector.load %arg20[%c8, %c0_20] : memref<16x1008xf32, #tpu.memory_space<vmem>>, vector<1x1008xf32>
    tpu.vector_store %arg20[%c8, %c0_20], %45 {strides = array<i32>} : memref<16x1008xf32, #tpu.memory_space<vmem>>, vector<1x1008xf32>,
    %47 = vector.extract_strided_slice %28 {offsets = [0, 9], sizes = [1, 1008], strides = [1, 1]} : vector<1x1024xf32> to vector<1x1008xf32>
    %c9 = arith.constant 9 : index
    %c0_21 = arith.constant 0 : index
    %48 = vector.load %arg20[%c9, %c0_21] : memref<16x1008xf32, #tpu.memory_space<vmem>>, vector<1x1008xf32>
    tpu.vector_store %arg20[%c9, %c0_21], %47 {strides = array<i32>} : memref<16x1008xf32, #tpu.memory_space<vmem>>, vector<1x1008xf32>,
    %49 = vector.extract_strided_slice %28 {offsets = [0, 10], sizes = [1, 1008], strides = [1, 1]} : vector<1x1024xf32> to vector<1x1008xf32>
    %c10 = arith.constant 10 : index
    %c0_22 = arith.constant 0 : index
    %50 = vector.load %arg20[%c10, %c0_22] : memref<16x1008xf32, #tpu.memory_space<vmem>>, vector<1x1008xf32>
    tpu.vector_store %arg20[%c10, %c0_22], %49 {strides = array<i32>} : memref<16x1008xf32, #tpu.memory_space<vmem>>, vector<1x1008xf32>,
    %51 = vector.extract_strided_slice %28 {offsets = [0, 11], sizes = [1, 1008], strides = [1, 1]} : vector<1x1024xf32> to vector<1x1008xf32>
    %c11 = arith.constant 11 : index
    %c0_23 = arith.constant 0 : index
    %52 = vector.load %arg20[%c11, %c0_23] : memref<16x1008xf32, #tpu.memory_space<vmem>>, vector<1x1008xf32>
    tpu.vector_store %arg20[%c11, %c0_23], %51 {strides = array<i32>} : memref<16x1008xf32, #tpu.memory_space<vmem>>, vector<1x1008xf32>,
    %53 = vector.extract_strided_slice %28 {offsets = [0, 12], sizes = [1, 1008], strides = [1, 1]} : vector<1x1024xf32> to vector<1x1008xf32>
    %c12 = arith.constant 12 : index
    %c0_24 = arith.constant 0 : index
    %54 = vector.load %arg20[%c12, %c0_24] : memref<16x1008xf32, #tpu.memory_space<vmem>>, vector<1x1008xf32>
    tpu.vector_store %arg20[%c12, %c0_24], %53 {strides = array<i32>} : memref<16x1008xf32, #tpu.memory_space<vmem>>, vector<1x1008xf32>,
    %55 = vector.extract_strided_slice %28 {offsets = [0, 13], sizes = [1, 1008], strides = [1, 1]} : vector<1x1024xf32> to vector<1x1008xf32>
    %c13 = arith.constant 13 : index
    %c0_25 = arith.constant 0 : index
    %56 = vector.load %arg20[%c13, %c0_25] : memref<16x1008xf32, #tpu.memory_space<vmem>>, vector<1x1008xf32>
    tpu.vector_store %arg20[%c13, %c0_25], %55 {strides = array<i32>} : memref<16x1008xf32, #tpu.memory_space<vmem>>, vector<1x1008xf32>,
    %57 = vector.extract_strided_slice %28 {offsets = [0, 14], sizes = [1, 1008], strides = [1, 1]} : vector<1x1024xf32> to vector<1x1008xf32>
    %c14 = arith.constant 14 : index
    %c0_26 = arith.constant 0 : index
    %58 = vector.load %arg20[%c14, %c0_26] : memref<16x1008xf32, #tpu.memory_space<vmem>>, vector<1x1008xf32>
    tpu.vector_store %arg20[%c14, %c0_26], %57 {strides = array<i32>} : memref<16x1008xf32, #tpu.memory_space<vmem>>, vector<1x1008xf32>,
    %59 = vector.extract_strided_slice %28 {offsets = [0, 15], sizes = [1, 1008], strides = [1, 1]} : vector<1x1024xf32> to vector<1x1008xf32>
    %c15 = arith.constant 15 : index
    %c0_27 = arith.constant 0 : index
    %60 = vector.load %arg20[%c15, %c0_27] : memref<16x1008xf32, #tpu.memory_space<vmem>>, vector<1x1008xf32>
    tpu.vector_store %arg20[%c15, %c0_27], %59 {strides = array<i32>} : memref<16x1008xf32, #tpu.memory_space<vmem>>, vector<1x1008xf32>,
    %c0_28 = arith.constant 0 : index
    %c0_29 = arith.constant 0 : index
    %61 = vector.load %arg20[%c0_28, %c0_29] : memref<16x1008xf32, #tpu.memory_space<vmem>>, vector<16x768xf32>
    %62 = arith.truncf %61 : vector<16x768xf32> to vector<16x768xbf16>
    %c0_30 = arith.constant 0 : index
    %c0_31 = arith.constant 0 : index
    %63 = vector.load %arg21[%c0_30, %c0_31] : memref<256x768xbf16, #tpu.memory_space<vmem>>, vector<16x768xbf16>
    tpu.vector_store %arg21[%c0_30, %c0_31], %62 {strides = array<i32>} : memref<256x768xbf16, #tpu.memory_space<vmem>>, vector<16x768xbf16>,
    %c0_32 = arith.constant 0 : index
    %c16 = arith.constant 16 : index
    %64 = vector.load %arg20[%c0_32, %c16] : memref<16x1008xf32, #tpu.memory_space<vmem>>, vector<16x768xf32>
    %65 = arith.truncf %64 : vector<16x768xf32> to vector<16x768xbf16>
    %c16_33 = arith.constant 16 : index
    %c0_34 = arith.constant 0 : index
    %66 = vector.load %arg21[%c16_33, %c0_34] : memref<256x768xbf16, #tpu.memory_space<vmem>>, vector<16x768xbf16>
    tpu.vector_store %arg21[%c16_33, %c0_34], %65 {strides = array<i32>} : memref<256x768xbf16, #tpu.memory_space<vmem>>, vector<16x768xbf16>,
    %c0_35 = arith.constant 0 : index
    %c32 = arith.constant 32 : index
    %67 = vector.load %arg20[%c0_35, %c32] : memref<16x1008xf32, #tpu.memory_space<vmem>>, vector<16x768xf32>
    %68 = arith.truncf %67 : vector<16x768xf32> to vector<16x768xbf16>
    %c32_36 = arith.constant 32 : index
    %c0_37 = arith.constant 0 : index
    %69 = vector.load %arg21[%c32_36, %c0_37] : memref<256x768xbf16, #tpu.memory_space<vmem>>, vector<16x768xbf16>
    tpu.vector_store %arg21[%c32_36, %c0_37], %68 {strides = array<i32>} : memref<256x768xbf16, #tpu.memory_space<vmem>>, vector<16x768xbf16>,
    %c0_38 = arith.constant 0 : index
    %c48 = arith.constant 48 : index
    %70 = vector.load %arg20[%c0_38, %c48] : memref<16x1008xf32, #tpu.memory_space<vmem>>, vector<16x768xf32>
    %71 = arith.truncf %70 : vector<16x768xf32> to vector<16x768xbf16>
    %c48_39 = arith.constant 48 : index
    %c0_40 = arith.constant 0 : index
    %72 = vector.load %arg21[%c48_39, %c0_40] : memref<256x768xbf16, #tpu.memory_space<vmem>>, vector<16x768xbf16>
    tpu.vector_store %arg21[%c48_39, %c0_40], %71 {strides = array<i32>} : memref<256x768xbf16, #tpu.memory_space<vmem>>, vector<16x768xbf16>,
    %c0_41 = arith.constant 0 : index
    %c64 = arith.constant 64 : index
    %73 = vector.load %arg20[%c0_41, %c64] : memref<16x1008xf32, #tpu.memory_space<vmem>>, vector<16x768xf32>
    %74 = arith.truncf %73 : vector<16x768xf32> to vector<16x768xbf16>
    %c64_42 = arith.constant 64 : index
    %c0_43 = arith.constant 0 : index
    %75 = vector.load %arg21[%c64_42, %c0_43] : memref<256x768xbf16, #tpu.memory_space<vmem>>, vector<16x768xbf16>
    tpu.vector_store %arg21[%c64_42, %c0_43], %74 {strides = array<i32>} : memref<256x768xbf16, #tpu.memory_space<vmem>>, vector<16x768xbf16>,
    %c0_44 = arith.constant 0 : index
    %c80 = arith.constant 80 : index
    %76 = vector.load %arg20[%c0_44, %c80] : memref<16x1008xf32, #tpu.memory_space<vmem>>, vector<16x768xf32>
    %77 = arith.truncf %76 : vector<16x768xf32> to vector<16x768xbf16>
    %c80_45 = arith.constant 80 : index
    %c0_46 = arith.constant 0 : index
    %78 = vector.load %arg21[%c80_45, %c0_46] : memref<256x768xbf16, #tpu.memory_space<vmem>>, vector<16x768xbf16>
    tpu.vector_store %arg21[%c80_45, %c0_46], %77 {strides = array<i32>} : memref<256x768xbf16, #tpu.memory_space<vmem>>, vector<16x768xbf16>,
    %c0_47 = arith.constant 0 : index
    %c96 = arith.constant 96 : index
    %79 = vector.load %arg20[%c0_47, %c96] : memref<16x1008xf32, #tpu.memory_space<vmem>>, vector<16x768xf32>
    %80 = arith.truncf %79 : vector<16x768xf32> to vector<16x768xbf16>
    %c96_48 = arith.constant 96 : index
    %c0_49 = arith.constant 0 : index
    %81 = vector.load %arg21[%c96_48, %c0_49] : memref<256x768xbf16, #tpu.memory_space<vmem>>, vector<16x768xbf16>
    tpu.vector_store %arg21[%c96_48, %c0_49], %80 {strides = array<i32>} : memref<256x768xbf16, #tpu.memory_space<vmem>>, vector<16x768xbf16>,
    %c0_50 = arith.constant 0 : index
    %c112 = arith.constant 112 : index
    %82 = vector.load %arg20[%c0_50, %c112] : memref<16x1008xf32, #tpu.memory_space<vmem>>, vector<16x768xf32>
    %83 = arith.truncf %82 : vector<16x768xf32> to vector<16x768xbf16>
    %c112_51 = arith.constant 112 : index
    %c0_52 = arith.constant 0 : index
    %84 = vector.load %arg21[%c112_51, %c0_52] : memref<256x768xbf16, #tpu.memory_space<vmem>>, vector<16x768xbf16>
    tpu.vector_store %arg21[%c112_51, %c0_52], %83 {strides = array<i32>} : memref<256x768xbf16, #tpu.memory_space<vmem>>, vector<16x768xbf16>,
    %c0_53 = arith.constant 0 : index
    %c128 = arith.constant 128 : index
    %85 = vector.load %arg20[%c0_53, %c128] : memref<16x1008xf32, #tpu.memory_space<vmem>>, vector<16x768xf32>
    %86 = arith.truncf %85 : vector<16x768xf32> to vector<16x768xbf16>
    %c128_54 = arith.constant 128 : index
    %c0_55 = arith.constant 0 : index
    %87 = vector.load %arg21[%c128_54, %c0_55] : memref<256x768xbf16, #tpu.memory_space<vmem>>, vector<16x768xbf16>
    tpu.vector_store %arg21[%c128_54, %c0_55], %86 {strides = array<i32>} : memref<256x768xbf16, #tpu.memory_space<vmem>>, vector<16x768xbf16>,
    %c0_56 = arith.constant 0 : index
    %c144 = arith.constant 144 : index
    %88 = vector.load %arg20[%c0_56, %c144] : memref<16x1008xf32, #tpu.memory_space<vmem>>, vector<16x768xf32>
    %89 = arith.truncf %88 : vector<16x768xf32> to vector<16x768xbf16>
    %c144_57 = arith.constant 144 : index
    %c0_58 = arith.constant 0 : index
    %90 = vector.load %arg21[%c144_57, %c0_58] : memref<256x768xbf16, #tpu.memory_space<vmem>>, vector<16x768xbf16>
    tpu.vector_store %arg21[%c144_57, %c0_58], %89 {strides = array<i32>} : memref<256x768xbf16, #tpu.memory_space<vmem>>, vector<16x768xbf16>,
    %c0_59 = arith.constant 0 : index
    %c160 = arith.constant 160 : index
    %91 = vector.load %arg20[%c0_59, %c160] : memref<16x1008xf32, #tpu.memory_space<vmem>>, vector<16x768xf32>
    %92 = arith.truncf %91 : vector<16x768xf32> to vector<16x768xbf16>
    %c160_60 = arith.constant 160 : index
    %c0_61 = arith.constant 0 : index
    %93 = vector.load %arg21[%c160_60, %c0_61] : memref<256x768xbf16, #tpu.memory_space<vmem>>, vector<16x768xbf16>
    tpu.vector_store %arg21[%c160_60, %c0_61], %92 {strides = array<i32>} : memref<256x768xbf16, #tpu.memory_space<vmem>>, vector<16x768xbf16>,
    %c0_62 = arith.constant 0 : index
    %c176 = arith.constant 176 : index
    %94 = vector.load %arg20[%c0_62, %c176] : memref<16x1008xf32, #tpu.memory_space<vmem>>, vector<16x768xf32>
    %95 = arith.truncf %94 : vector<16x768xf32> to vector<16x768xbf16>
    %c176_63 = arith.constant 176 : index
    %c0_64 = arith.constant 0 : index
    %96 = vector.load %arg21[%c176_63, %c0_64] : memref<256x768xbf16, #tpu.memory_space<vmem>>, vector<16x768xbf16>
    tpu.vector_store %arg21[%c176_63, %c0_64], %95 {strides = array<i32>} : memref<256x768xbf16, #tpu.memory_space<vmem>>, vector<16x768xbf16>,
    %c0_65 = arith.constant 0 : index
    %c192 = arith.constant 192 : index
    %97 = vector.load %arg20[%c0_65, %c192] : memref<16x1008xf32, #tpu.memory_space<vmem>>, vector<16x768xf32>
    %98 = arith.truncf %97 : vector<16x768xf32> to vector<16x768xbf16>
    %c192_66 = arith.constant 192 : index
    %c0_67 = arith.constant 0 : index
    %99 = vector.load %arg21[%c192_66, %c0_67] : memref<256x768xbf16, #tpu.memory_space<vmem>>, vector<16x768xbf16>
    tpu.vector_store %arg21[%c192_66, %c0_67], %98 {strides = array<i32>} : memref<256x768xbf16, #tpu.memory_space<vmem>>, vector<16x768xbf16>,
    %c0_68 = arith.constant 0 : index
    %c208 = arith.constant 208 : index
    %100 = vector.load %arg20[%c0_68, %c208] : memref<16x1008xf32, #tpu.memory_space<vmem>>, vector<16x768xf32>
    %101 = arith.truncf %100 : vector<16x768xf32> to vector<16x768xbf16>
    %c208_69 = arith.constant 208 : index
    %c0_70 = arith.constant 0 : index
    %102 = vector.load %arg21[%c208_69, %c0_70] : memref<256x768xbf16, #tpu.memory_space<vmem>>, vector<16x768xbf16>
    tpu.vector_store %arg21[%c208_69, %c0_70], %101 {strides = array<i32>} : memref<256x768xbf16, #tpu.memory_space<vmem>>, vector<16x768xbf16>,
    %c0_71 = arith.constant 0 : index
    %c224 = arith.constant 224 : index
    %103 = vector.load %arg20[%c0_71, %c224] : memref<16x1008xf32, #tpu.memory_space<vmem>>, vector<16x768xf32>
    %104 = arith.truncf %103 : vector<16x768xf32> to vector<16x768xbf16>
    %c224_72 = arith.constant 224 : index
    %c0_73 = arith.constant 0 : index
    %105 = vector.load %arg21[%c224_72, %c0_73] : memref<256x768xbf16, #tpu.memory_space<vmem>>, vector<16x768xbf16>
    tpu.vector_store %arg21[%c224_72, %c0_73], %104 {strides = array<i32>} : memref<256x768xbf16, #tpu.memory_space<vmem>>, vector<16x768xbf16>,
    %c0_74 = arith.constant 0 : index
    %c240 = arith.constant 240 : index
    %106 = vector.load %arg20[%c0_74, %c240] : memref<16x1008xf32, #tpu.memory_space<vmem>>, vector<16x768xf32>
    %107 = arith.truncf %106 : vector<16x768xf32> to vector<16x768xbf16>
    %c240_75 = arith.constant 240 : index
    %c0_76 = arith.constant 0 : index
    %108 = vector.load %arg21[%c240_75, %c0_76] : memref<256x768xbf16, #tpu.memory_space<vmem>>, vector<16x768xbf16>
    tpu.vector_store %arg21[%c240_75, %c0_76], %107 {strides = array<i32>} : memref<256x768xbf16, #tpu.memory_space<vmem>>, vector<16x768xbf16>,
    %c0_77 = arith.constant 0 : index
    %c0_78 = arith.constant 0 : index
    %109 = vector.load %arg2[%c0_77, %c0_78] : memref<80x256xbf16, #tpu.memory_space<vmem>>, vector<80x256xbf16>
    %c0_79 = arith.constant 0 : index
    %c0_80 = arith.constant 0 : index
    %110 = vector.load %arg21[%c0_79, %c0_80] : memref<256x768xbf16, #tpu.memory_space<vmem>>, vector<256x384xbf16>
    %cst_81 = arith.constant dense<0.000000e+00> : vector<80x384xf32>
    %111 = tpu.matmul %109, %110, %cst_81 {dimension_numbers = #tpu.dot_dimension_numbers<[1], [0], [0], [1], [0, 0, 1, 1], [], []>} : vector<80x256xbf16>, vector<256x384xbf16>, vector<80x384xf32> -> vector<80x384xf32>
    %112 = math.absf %111 : vector<80x384xf32>
    %c1_i32 = arith.constant 1 : i32
    %113 = tpu.dynamic_rotate %112 by %c1_i32 dim 1 : vector<80x384xf32>, i32 -> vector<80x384xf32>
    %c383_i32 = arith.constant 383 : i32
    %114 = tpu.dynamic_rotate %112 by %c383_i32 dim 1 : vector<80x384xf32>, i32 -> vector<80x384xf32>
    %115 = arith.maximumf %113, %114 : vector<80x384xf32>
    %116 = arith.maximumf %112, %115 : vector<80x384xf32>
    %117 = arith.truncf %116 : vector<80x384xf32> to vector<80x384xbf16>
    %c0_82 = arith.constant 0 : index
    %c0_83 = arith.constant 0 : index
    %118 = vector.load %arg7[%c0_82, %c0_83] : memref<384x128xbf16, #tpu.memory_space<vmem>>, vector<384x128xbf16>
    %cst_84 = arith.constant dense<0.000000e+00> : vector<80x128xf32>
    %119 = tpu.matmul %117, %118, %cst_84 {dimension_numbers = #tpu.dot_dimension_numbers<[1], [0], [0], [1], [0, 0, 1, 1], [], []>} : vector<80x384xbf16>, vector<384x128xbf16>, vector<80x128xf32> -> vector<80x128xf32>
    %c0_85 = arith.constant 0 : index
    %c0_86 = arith.constant 0 : index
    %120 = vector.load %arg22[%c0_85, %c0_86] : memref<80x250xf32, #tpu.memory_space<vmem>>, vector<80x128xf32>
    tpu.vector_store %arg22[%c0_85, %c0_86], %119 {strides = array<i32>} : memref<80x250xf32, #tpu.memory_space<vmem>>, vector<80x128xf32>,
    %c0_87 = arith.constant 0 : index
    %c384 = arith.constant 384 : index
    %121 = vector.load %arg21[%c0_87, %c384] : memref<256x768xbf16, #tpu.memory_space<vmem>>, vector<256x384xbf16>
    %cst_88 = arith.constant dense<0.000000e+00> : vector<80x384xf32>
    %122 = tpu.matmul %109, %121, %cst_88 {dimension_numbers = #tpu.dot_dimension_numbers<[1], [0], [0], [1], [0, 0, 1, 1], [], []>} : vector<80x256xbf16>, vector<256x384xbf16>, vector<80x384xf32> -> vector<80x384xf32>
    %123 = math.absf %122 : vector<80x384xf32>
    %c1_i32_89 = arith.constant 1 : i32
    %124 = tpu.dynamic_rotate %123 by %c1_i32_89 dim 1 : vector<80x384xf32>, i32 -> vector<80x384xf32>
    %c383_i32_90 = arith.constant 383 : i32
    %125 = tpu.dynamic_rotate %123 by %c383_i32_90 dim 1 : vector<80x384xf32>, i32 -> vector<80x384xf32>
    %126 = arith.maximumf %124, %125 : vector<80x384xf32>
    %127 = arith.maximumf %123, %126 : vector<80x384xf32>
    %128 = arith.truncf %127 : vector<80x384xf32> to vector<80x384xbf16>
    %c0_91 = arith.constant 0 : index
    %c0_92 = arith.constant 0 : index
    %129 = vector.load %arg8[%c0_91, %c0_92] : memref<384x122xbf16, #tpu.memory_space<vmem>>, vector<384x122xbf16>
    %cst_93 = arith.constant dense<0.000000e+00> : vector<80x122xf32>
    %130 = tpu.matmul %128, %129, %cst_93 {dimension_numbers = #tpu.dot_dimension_numbers<[1], [0], [0], [1], [0, 0, 1, 1], [], []>} : vector<80x384xbf16>, vector<384x122xbf16>, vector<80x122xf32> -> vector<80x122xf32>
    %c0_94 = arith.constant 0 : index
    %c128_95 = arith.constant 128 : index
    %131 = vector.load %arg22[%c0_94, %c128_95] : memref<80x250xf32, #tpu.memory_space<vmem>>, vector<80x122xf32>
    tpu.vector_store %arg22[%c0_94, %c128_95], %130 {strides = array<i32>} : memref<80x250xf32, #tpu.memory_space<vmem>>, vector<80x122xf32>,
    %c0_96 = arith.constant 0 : index
    %c0_97 = arith.constant 0 : index
    %132 = vector.load %arg22[%c0_96, %c0_97] : memref<80x250xf32, #tpu.memory_space<vmem>>, vector<80x250xf32>
    %c0_98 = arith.constant 0 : index
    %c0_99 = arith.constant 0 : index
    %133 = vector.load %arg5[%c0_98, %c0_99] : memref<80x1xf32, #tpu.memory_space<vmem>>, vector<80x1xf32>
    %c0_100 = arith.constant 0 : index
    %c0_101 = arith.constant 0 : index
    %134 = vector.load %arg6[%c0_100, %c0_101] : memref<80x1xf32, #tpu.memory_space<vmem>>, vector<80x1xf32>
    %cst_102 = arith.constant dense<0.000000e+00> : vector<80xf32>
    %135 = vector.multi_reduction <add>, %132, %cst_102 [1] : vector<80x250xf32> to vector<80xf32>
    %136 = vector.shape_cast %135 : vector<80xf32> to vector<80x1xf32>
    %cst_103 = arith.constant 2.500000e+02 : f32
    %137 = vector.broadcast %cst_103 : f32 to vector<80x1xf32>
    %138 = arith.divf %136, %137 : vector<80x1xf32>
    %139 = arith.mulf %132, %132 : vector<80x250xf32>
    %cst_104 = arith.constant dense<0.000000e+00> : vector<80xf32>
    %140 = vector.multi_reduction <add>, %139, %cst_104 [1] : vector<80x250xf32> to vector<80xf32>
    %141 = vector.shape_cast %140 : vector<80xf32> to vector<80x1xf32>
    %cst_105 = arith.constant 2.500000e+02 : f32
    %142 = vector.broadcast %cst_105 : f32 to vector<80x1xf32>
    %143 = arith.divf %141, %142 : vector<80x1xf32>
    %144 = arith.mulf %138, %138 : vector<80x1xf32>
    %145 = arith.subf %143, %144 : vector<80x1xf32>
    %cst_106 = arith.constant 0.000000e+00 : f32
    %146 = vector.broadcast %cst_106 : f32 to vector<80x1xf32>
    %147 = arith.maximumf %145, %146 : vector<80x1xf32>
    %148 = vector.broadcast %138 : vector<80x1xf32> to vector<80x250xf32>
    %149 = arith.subf %132, %148 : vector<80x250xf32>
    %cst_107 = arith.constant 9.99999974E-6 : f32
    %150 = vector.broadcast %cst_107 : f32 to vector<80x1xf32>
    %151 = arith.addf %147, %150 : vector<80x1xf32>
    %152 = math.rsqrt %151 : vector<80x1xf32>
    %153 = vector.broadcast %152 : vector<80x1xf32> to vector<80x250xf32>
    %154 = arith.mulf %149, %153 : vector<80x250xf32>
    %155 = vector.broadcast %133 : vector<80x1xf32> to vector<80x250xf32>
    %156 = arith.mulf %154, %155 : vector<80x250xf32>
    %157 = vector.broadcast %134 : vector<80x1xf32> to vector<80x250xf32>
    %158 = arith.addf %156, %157 : vector<80x250xf32>
    %cst_108 = arith.constant 0.000000e+00 : f32
    %159 = vector.broadcast %cst_108 : f32 to vector<80x250xf32>
    %160 = arith.cmpf oge, %158, %159 : vector<80x250xf32>
    %cst_109 = arith.constant 0.00999999977 : f32
    %161 = vector.broadcast %cst_109 : f32 to vector<80x250xf32>
    %162 = arith.mulf %161, %158 : vector<80x250xf32>
    %163 = arith.select %160, %158, %162 : vector<80x250xi1>, vector<80x250xf32>
    %164 = arith.truncf %163 : vector<80x250xf32> to vector<80x250xbf16>
    %165 = vector.extract_strided_slice %164 {offsets = [0, 0], sizes = [80, 246], strides = [1, 1]} : vector<80x250xbf16> to vector<80x246xbf16>
    %c0_110 = arith.constant 0 : index
    %c0_111 = arith.constant 0 : index
    %166 = vector.load %arg23[%c0_110, %c0_111] : memref<400x246xbf16, #tpu.memory_space<vmem>>, vector<80x246xbf16>
    tpu.vector_store %arg23[%c0_110, %c0_111], %165 {strides = array<i32>} : memref<400x246xbf16, #tpu.memory_space<vmem>>, vector<80x246xbf16>,
    %167 = vector.extract_strided_slice %164 {offsets = [0, 1], sizes = [80, 246], strides = [1, 1]} : vector<80x250xbf16> to vector<80x246xbf16>
    %c80_112 = arith.constant 80 : index
    %c0_113 = arith.constant 0 : index
    %168 = vector.load %arg23[%c80_112, %c0_113] : memref<400x246xbf16, #tpu.memory_space<vmem>>, vector<80x246xbf16>
    tpu.vector_store %arg23[%c80_112, %c0_113], %167 {strides = array<i32>} : memref<400x246xbf16, #tpu.memory_space<vmem>>, vector<80x246xbf16>,
    %169 = vector.extract_strided_slice %164 {offsets = [0, 2], sizes = [80, 246], strides = [1, 1]} : vector<80x250xbf16> to vector<80x246xbf16>
    %c160_114 = arith.constant 160 : index
    %c0_115 = arith.constant 0 : index
    %170 = vector.load %arg23[%c160_114, %c0_115] : memref<400x246xbf16, #tpu.memory_space<vmem>>, vector<80x246xbf16>
    tpu.vector_store %arg23[%c160_114, %c0_115], %169 {strides = array<i32>} : memref<400x246xbf16, #tpu.memory_space<vmem>>, vector<80x246xbf16>,
    %171 = vector.extract_strided_slice %164 {offsets = [0, 3], sizes = [80, 246], strides = [1, 1]} : vector<80x250xbf16> to vector<80x246xbf16>
    %c240_116 = arith.constant 240 : index
    %c0_117 = arith.constant 0 : index
    %172 = vector.load %arg23[%c240_116, %c0_117] : memref<400x246xbf16, #tpu.memory_space<vmem>>, vector<80x246xbf16>
    tpu.vector_store %arg23[%c240_116, %c0_117], %171 {strides = array<i32>} : memref<400x246xbf16, #tpu.memory_space<vmem>>, vector<80x246xbf16>,
    %173 = vector.extract_strided_slice %164 {offsets = [0, 4], sizes = [80, 246], strides = [1, 1]} : vector<80x250xbf16> to vector<80x246xbf16>
    %c320 = arith.constant 320 : index
    %c0_118 = arith.constant 0 : index
    %174 = vector.load %arg23[%c320, %c0_118] : memref<400x246xbf16, #tpu.memory_space<vmem>>, vector<80x246xbf16>
    tpu.vector_store %arg23[%c320, %c0_118], %173 {strides = array<i32>} : memref<400x246xbf16, #tpu.memory_space<vmem>>, vector<80x246xbf16>,
    %c0_119 = arith.constant 0 : index
    %c0_120 = arith.constant 0 : index
    %175 = vector.load %arg9[%c0_119, %c0_120] : memref<60x400xbf16, #tpu.memory_space<vmem>>, vector<60x400xbf16>
    %c0_121 = arith.constant 0 : index
    %c0_122 = arith.constant 0 : index
    %176 = vector.load %arg23[%c0_121, %c0_122] : memref<400x246xbf16, #tpu.memory_space<vmem>>, vector<400x246xbf16>
    %cst_123 = arith.constant dense<0.000000e+00> : vector<60x246xf32>
    %177 = tpu.matmul %175, %176, %cst_123 {dimension_numbers = #tpu.dot_dimension_numbers<[1], [0], [0], [1], [0, 0, 1, 1], [], []>} : vector<60x400xbf16>, vector<400x246xbf16>, vector<60x246xf32> -> vector<60x246xf32>
    %c0_124 = arith.constant 0 : index
    %c0_125 = arith.constant 0 : index
    %178 = vector.load %arg10[%c0_124, %c0_125] : memref<60x1xf32, #tpu.memory_space<vmem>>, vector<60x1xf32>
    %179 = vector.broadcast %178 : vector<60x1xf32> to vector<60x246xf32>
    %180 = arith.addf %177, %179 : vector<60x246xf32>
    %c0_126 = arith.constant 0 : index
    %c0_127 = arith.constant 0 : index
    %181 = vector.load %arg13[%c0_126, %c0_127] : memref<244x82xbf16, #tpu.memory_space<vmem>>, vector<244x82xbf16>
    %c0_128 = arith.constant 0 : index
    %c0_129 = arith.constant 0 : index
    %182 = vector.load %arg11[%c0_128, %c0_129] : memref<60x1xf32, #tpu.memory_space<vmem>>, vector<60x1xf32>
    %c0_130 = arith.constant 0 : index
    %c0_131 = arith.constant 0 : index
    %183 = vector.load %arg12[%c0_130, %c0_131] : memref<60x1xf32, #tpu.memory_space<vmem>>, vector<60x1xf32>
    %184 = vector.extract_strided_slice %180 {offsets = [0, 0], sizes = [60, 244], strides = [1, 1]} : vector<60x246xf32> to vector<60x244xf32>
    %185 = vector.extract_strided_slice %180 {offsets = [0, 1], sizes = [60, 244], strides = [1, 1]} : vector<60x246xf32> to vector<60x244xf32>
    %186 = arith.maximumf %184, %185 : vector<60x244xf32>
    %187 = vector.extract_strided_slice %180 {offsets = [0, 2], sizes = [60, 244], strides = [1, 1]} : vector<60x246xf32> to vector<60x244xf32>
    %188 = arith.maximumf %186, %187 : vector<60x244xf32>
    %189 = arith.truncf %188 : vector<60x244xf32> to vector<60x244xbf16>
    %cst_132 = arith.constant dense<0.000000e+00> : vector<60x82xf32>
    %190 = tpu.matmul %189, %181, %cst_132 {dimension_numbers = #tpu.dot_dimension_numbers<[1], [0], [0], [1], [0, 0, 1, 1], [], []>} : vector<60x244xbf16>, vector<244x82xbf16>, vector<60x82xf32> -> vector<60x82xf32>
    %cst_133 = arith.constant dense<0.000000e+00> : vector<60xf32>
    %191 = vector.multi_reduction <add>, %190, %cst_133 [1] : vector<60x82xf32> to vector<60xf32>
    %192 = vector.shape_cast %191 : vector<60xf32> to vector<60x1xf32>
    %cst_134 = arith.constant 8.200000e+01 : f32
    %193 = vector.broadcast %cst_134 : f32 to vector<60x1xf32>
    %194 = arith.divf %192, %193 : vector<60x1xf32>
    %195 = arith.mulf %190, %190 : vector<60x82xf32>
    %cst_135 = arith.constant dense<0.000000e+00> : vector<60xf32>
    %196 = vector.multi_reduction <add>, %195, %cst_135 [1] : vector<60x82xf32> to vector<60xf32>
    %197 = vector.shape_cast %196 : vector<60xf32> to vector<60x1xf32>
    %cst_136 = arith.constant 8.200000e+01 : f32
    %198 = vector.broadcast %cst_136 : f32 to vector<60x1xf32>
    %199 = arith.divf %197, %198 : vector<60x1xf32>
    %200 = arith.mulf %194, %194 : vector<60x1xf32>
    %201 = arith.subf %199, %200 : vector<60x1xf32>
    %cst_137 = arith.constant 0.000000e+00 : f32
    %202 = vector.broadcast %cst_137 : f32 to vector<60x1xf32>
    %203 = arith.maximumf %201, %202 : vector<60x1xf32>
    %204 = vector.broadcast %194 : vector<60x1xf32> to vector<60x82xf32>
    %205 = arith.subf %190, %204 : vector<60x82xf32>
    %cst_138 = arith.constant 9.99999974E-6 : f32
    %206 = vector.broadcast %cst_138 : f32 to vector<60x1xf32>
    %207 = arith.addf %203, %206 : vector<60x1xf32>
    %208 = math.rsqrt %207 : vector<60x1xf32>
    %209 = vector.broadcast %208 : vector<60x1xf32> to vector<60x82xf32>
    %210 = arith.mulf %205, %209 : vector<60x82xf32>
    %211 = vector.broadcast %182 : vector<60x1xf32> to vector<60x82xf32>
    %212 = arith.mulf %210, %211 : vector<60x82xf32>
    %213 = vector.broadcast %183 : vector<60x1xf32> to vector<60x82xf32>
    %214 = arith.addf %212, %213 : vector<60x82xf32>
    %cst_139 = arith.constant 0.000000e+00 : f32
    %215 = vector.broadcast %cst_139 : f32 to vector<60x82xf32>
    %216 = arith.cmpf oge, %214, %215 : vector<60x82xf32>
    %cst_140 = arith.constant 0.00999999977 : f32
    %217 = vector.broadcast %cst_140 : f32 to vector<60x82xf32>
    %218 = arith.mulf %217, %214 : vector<60x82xf32>
    %219 = arith.select %216, %214, %218 : vector<60x82xi1>, vector<60x82xf32>
    %220 = vector.extract_strided_slice %219 {offsets = [0, 0], sizes = [60, 78], strides = [1, 1]} : vector<60x82xf32> to vector<60x78xf32>
    %c0_141 = arith.constant 0 : index
    %c0_142 = arith.constant 0 : index
    %221 = vector.load %arg24[%c0_141, %c0_142] : memref<300x78xf32, #tpu.memory_space<vmem>>, vector<60x78xf32>
    tpu.vector_store %arg24[%c0_141, %c0_142], %220 {strides = array<i32>} : memref<300x78xf32, #tpu.memory_space<vmem>>, vector<60x78xf32>,
    %222 = vector.extract_strided_slice %219 {offsets = [0, 1], sizes = [60, 78], strides = [1, 1]} : vector<60x82xf32> to vector<60x78xf32>
    %c60 = arith.constant 60 : index
    %c0_143 = arith.constant 0 : index
    %223 = vector.load %arg24[%c60, %c0_143] : memref<300x78xf32, #tpu.memory_space<vmem>>, vector<60x78xf32>
    tpu.vector_store %arg24[%c60, %c0_143], %222 {strides = array<i32>} : memref<300x78xf32, #tpu.memory_space<vmem>>, vector<60x78xf32>,
    %224 = vector.extract_strided_slice %219 {offsets = [0, 2], sizes = [60, 78], strides = [1, 1]} : vector<60x82xf32> to vector<60x78xf32>
    %c120 = arith.constant 120 : index
    %c0_144 = arith.constant 0 : index
    %225 = vector.load %arg24[%c120, %c0_144] : memref<300x78xf32, #tpu.memory_space<vmem>>, vector<60x78xf32>
    tpu.vector_store %arg24[%c120, %c0_144], %224 {strides = array<i32>} : memref<300x78xf32, #tpu.memory_space<vmem>>, vector<60x78xf32>,
    %226 = vector.extract_strided_slice %219 {offsets = [0, 3], sizes = [60, 78], strides = [1, 1]} : vector<60x82xf32> to vector<60x78xf32>
    %c180 = arith.constant 180 : index
    %c0_145 = arith.constant 0 : index
    %227 = vector.load %arg24[%c180, %c0_145] : memref<300x78xf32, #tpu.memory_space<vmem>>, vector<60x78xf32>
    tpu.vector_store %arg24[%c180, %c0_145], %226 {strides = array<i32>} : memref<300x78xf32, #tpu.memory_space<vmem>>, vector<60x78xf32>,
    %228 = vector.extract_strided_slice %219 {offsets = [0, 4], sizes = [60, 78], strides = [1, 1]} : vector<60x82xf32> to vector<60x78xf32>
    %c240_146 = arith.constant 240 : index
    %c0_147 = arith.constant 0 : index
    %229 = vector.load %arg24[%c240_146, %c0_147] : memref<300x78xf32, #tpu.memory_space<vmem>>, vector<60x78xf32>
    tpu.vector_store %arg24[%c240_146, %c0_147], %228 {strides = array<i32>} : memref<300x78xf32, #tpu.memory_space<vmem>>, vector<60x78xf32>,
    %c0_148 = arith.constant 0 : index
    %c0_149 = arith.constant 0 : index
    %230 = vector.load %arg14[%c0_148, %c0_149] : memref<60x300xbf16, #tpu.memory_space<vmem>>, vector<60x300xbf16>
    %c0_150 = arith.constant 0 : index
    %c0_151 = arith.constant 0 : index
    %231 = vector.load %arg24[%c0_150, %c0_151] : memref<300x78xf32, #tpu.memory_space<vmem>>, vector<300x78xf32>
    %232 = arith.truncf %231 : vector<300x78xf32> to vector<300x78xbf16>
    %cst_152 = arith.constant dense<0.000000e+00> : vector<60x78xf32>
    %233 = tpu.matmul %230, %232, %cst_152 {dimension_numbers = #tpu.dot_dimension_numbers<[1], [0], [0], [1], [0, 0, 1, 1], [], []>} : vector<60x300xbf16>, vector<300x78xbf16>, vector<60x78xf32> -> vector<60x78xf32>
    %c0_153 = arith.constant 0 : index
    %c0_154 = arith.constant 0 : index
    %234 = vector.load %arg15[%c0_153, %c0_154] : memref<60x1xf32, #tpu.memory_space<vmem>>, vector<60x1xf32>
    %235 = vector.broadcast %234 : vector<60x1xf32> to vector<60x78xf32>
    %236 = arith.addf %233, %235 : vector<60x78xf32>
    %c0_155 = arith.constant 0 : index
    %c0_156 = arith.constant 0 : index
    %237 = vector.load %arg18[%c0_155, %c0_156] : memref<76x26xbf16, #tpu.memory_space<vmem>>, vector<76x26xbf16>
    %c0_157 = arith.constant 0 : index
    %c0_158 = arith.constant 0 : index
    %238 = vector.load %arg16[%c0_157, %c0_158] : memref<60x1xf32, #tpu.memory_space<vmem>>, vector<60x1xf32>
    %c0_159 = arith.constant 0 : index
    %c0_160 = arith.constant 0 : index
    %239 = vector.load %arg17[%c0_159, %c0_160] : memref<60x1xf32, #tpu.memory_space<vmem>>, vector<60x1xf32>
    %240 = vector.extract_strided_slice %236 {offsets = [0, 0], sizes = [60, 76], strides = [1, 1]} : vector<60x78xf32> to vector<60x76xf32>
    %241 = vector.extract_strided_slice %236 {offsets = [0, 1], sizes = [60, 76], strides = [1, 1]} : vector<60x78xf32> to vector<60x76xf32>
    %242 = arith.maximumf %240, %241 : vector<60x76xf32>
    %243 = vector.extract_strided_slice %236 {offsets = [0, 2], sizes = [60, 76], strides = [1, 1]} : vector<60x78xf32> to vector<60x76xf32>
    %244 = arith.maximumf %242, %243 : vector<60x76xf32>
    %245 = arith.truncf %244 : vector<60x76xf32> to vector<60x76xbf16>
    %cst_161 = arith.constant dense<0.000000e+00> : vector<60x26xf32>
    %246 = tpu.matmul %245, %237, %cst_161 {dimension_numbers = #tpu.dot_dimension_numbers<[1], [0], [0], [1], [0, 0, 1, 1], [], []>} : vector<60x76xbf16>, vector<76x26xbf16>, vector<60x26xf32> -> vector<60x26xf32>
    %cst_162 = arith.constant dense<0.000000e+00> : vector<60xf32>
    %247 = vector.multi_reduction <add>, %246, %cst_162 [1] : vector<60x26xf32> to vector<60xf32>
    %248 = vector.shape_cast %247 : vector<60xf32> to vector<60x1xf32>
    %cst_163 = arith.constant 2.600000e+01 : f32
    %249 = vector.broadcast %cst_163 : f32 to vector<60x1xf32>
    %250 = arith.divf %248, %249 : vector<60x1xf32>
    %251 = arith.mulf %246, %246 : vector<60x26xf32>
    %cst_164 = arith.constant dense<0.000000e+00> : vector<60xf32>
    %252 = vector.multi_reduction <add>, %251, %cst_164 [1] : vector<60x26xf32> to vector<60xf32>
    %253 = vector.shape_cast %252 : vector<60xf32> to vector<60x1xf32>
    %cst_165 = arith.constant 2.600000e+01 : f32
    %254 = vector.broadcast %cst_165 : f32 to vector<60x1xf32>
    %255 = arith.divf %253, %254 : vector<60x1xf32>
    %256 = arith.mulf %250, %250 : vector<60x1xf32>
    %257 = arith.subf %255, %256 : vector<60x1xf32>
    %cst_166 = arith.constant 0.000000e+00 : f32
    %258 = vector.broadcast %cst_166 : f32 to vector<60x1xf32>
    %259 = arith.maximumf %257, %258 : vector<60x1xf32>
    %260 = vector.broadcast %250 : vector<60x1xf32> to vector<60x26xf32>
    %261 = arith.subf %246, %260 : vector<60x26xf32>
    %cst_167 = arith.constant 9.99999974E-6 : f32
    %262 = vector.broadcast %cst_167 : f32 to vector<60x1xf32>
    %263 = arith.addf %259, %262 : vector<60x1xf32>
    %264 = math.rsqrt %263 : vector<60x1xf32>
    %265 = vector.broadcast %264 : vector<60x1xf32> to vector<60x26xf32>
    %266 = arith.mulf %261, %265 : vector<60x26xf32>
    %267 = vector.broadcast %238 : vector<60x1xf32> to vector<60x26xf32>
    %268 = arith.mulf %266, %267 : vector<60x26xf32>
    %269 = vector.broadcast %239 : vector<60x1xf32> to vector<60x26xf32>
    %270 = arith.addf %268, %269 : vector<60x26xf32>
    %cst_168 = arith.constant 0.000000e+00 : f32
    %271 = vector.broadcast %cst_168 : f32 to vector<60x26xf32>
    %272 = arith.cmpf oge, %270, %271 : vector<60x26xf32>
    %cst_169 = arith.constant 0.00999999977 : f32
    %273 = vector.broadcast %cst_169 : f32 to vector<60x26xf32>
    %274 = arith.mulf %273, %270 : vector<60x26xf32>
    %275 = arith.select %272, %270, %274 : vector<60x26xi1>, vector<60x26xf32>
    %c0_170 = arith.constant 0 : index
    %c0_171 = arith.constant 0 : index
    %c0_172 = arith.constant 0 : index
    %276 = vector.load %arg19[%c0_170, %c0_171, %c0_172] : memref<1x60x26xf32, #tpu.memory_space<vmem>>, vector<1x60x26xf32>
    %277 = vector.shape_cast %276 : vector<1x60x26xf32> to vector<60x26xf32>
    %278 = vector.shape_cast %275 : vector<60x26xf32> to vector<1x60x26xf32>
    tpu.vector_store %arg19[%c0_170, %c0_171, %c0_172], %278 {strides = array<i32>} : memref<1x60x26xf32, #tpu.memory_space<vmem>>, vector<1x60x26xf32>,
    return
  }
  func.func @transform_0(%arg0: i32) -> (i32, i32, i32) {
    %c0_i32 = arith.constant 0 : i32
    %c0_i32_0 = arith.constant 0 : i32
    %c0_i32_1 = arith.constant 0 : i32
    return %arg0, %c0_i32, %c0_i32_0 : i32, i32, i32
  }
  func.func @transform_1(%arg0: i32) -> (i32, i32) {
    %c0_i32 = arith.constant 0 : i32
    %c0_i32_0 = arith.constant 0 : i32
    %c0_i32_1 = arith.constant 0 : i32
    return %c0_i32, %c0_i32_0 : i32, i32
  }
  func.func @transform_2(%arg0: i32) -> (i32, i32) {
    %c0_i32 = arith.constant 0 : i32
    %c0_i32_0 = arith.constant 0 : i32
    %c0_i32_1 = arith.constant 0 : i32
    return %c0_i32, %c0_i32_0 : i32, i32
  }
  func.func @transform_3(%arg0: i32) -> (i32, i32) {
    %c0_i32 = arith.constant 0 : i32
    %c0_i32_0 = arith.constant 0 : i32
    %c0_i32_1 = arith.constant 0 : i32
    return %c0_i32, %c0_i32_0 : i32, i32
  }
  func.func @transform_4(%arg0: i32) -> (i32, i32) {
    %c0_i32 = arith.constant 0 : i32
    %c0_i32_0 = arith.constant 0 : i32
    %c0_i32_1 = arith.constant 0 : i32
    return %c0_i32, %c0_i32_0 : i32, i32
  }
  func.func @transform_5(%arg0: i32) -> (i32, i32) {
    %c0_i32 = arith.constant 0 : i32
    %c0_i32_0 = arith.constant 0 : i32
    %c0_i32_1 = arith.constant 0 : i32
    return %c0_i32, %c0_i32_0 : i32, i32
  }
  func.func @transform_6(%arg0: i32) -> (i32, i32) {
    %c0_i32 = arith.constant 0 : i32
    %c0_i32_0 = arith.constant 0 : i32
    %c0_i32_1 = arith.constant 0 : i32
    return %c0_i32, %c0_i32_0 : i32, i32
  }
  func.func @transform_7(%arg0: i32) -> (i32, i32) {
    %c0_i32 = arith.constant 0 : i32
    %c0_i32_0 = arith.constant 0 : i32
    %c0_i32_1 = arith.constant 0 : i32
    return %c0_i32, %c0_i32_0 : i32, i32
  }
  func.func @transform_8(%arg0: i32) -> (i32, i32) {
    %c0_i32 = arith.constant 0 : i32
    %c0_i32_0 = arith.constant 0 : i32
    %c0_i32_1 = arith.constant 0 : i32
    return %c0_i32, %c0_i32_0 : i32, i32
  }
  func.func @transform_9(%arg0: i32) -> (i32, i32) {
    %c0_i32 = arith.constant 0 : i32
    %c0_i32_0 = arith.constant 0 : i32
    %c0_i32_1 = arith.constant 0 : i32
    return %c0_i32, %c0_i32_0 : i32, i32
  }
  func.func @transform_10(%arg0: i32) -> (i32, i32) {
    %c0_i32 = arith.constant 0 : i32
    %c0_i32_0 = arith.constant 0 : i32
    %c0_i32_1 = arith.constant 0 : i32
    return %c0_i32, %c0_i32_0 : i32, i32
  }
  func.func @transform_11(%arg0: i32) -> (i32, i32) {
    %c0_i32 = arith.constant 0 : i32
    %c0_i32_0 = arith.constant 0 : i32
    %c0_i32_1 = arith.constant 0 : i32
    return %c0_i32, %c0_i32_0 : i32, i32
  }
  func.func @transform_12(%arg0: i32) -> (i32, i32) {
    %c0_i32 = arith.constant 0 : i32
    %c0_i32_0 = arith.constant 0 : i32
    %c0_i32_1 = arith.constant 0 : i32
    return %c0_i32, %c0_i32_0 : i32, i32
  }
  func.func @transform_13(%arg0: i32) -> (i32, i32) {
    %c0_i32 = arith.constant 0 : i32
    %c0_i32_0 = arith.constant 0 : i32
    %c0_i32_1 = arith.constant 0 : i32
    return %c0_i32, %c0_i32_0 : i32, i32
  }
  func.func @transform_14(%arg0: i32) -> (i32, i32) {
    %c0_i32 = arith.constant 0 : i32
    %c0_i32_0 = arith.constant 0 : i32
    %c0_i32_1 = arith.constant 0 : i32
    return %c0_i32, %c0_i32_0 : i32, i32
  }
  func.func @transform_15(%arg0: i32) -> (i32, i32) {
    %c0_i32 = arith.constant 0 : i32
    %c0_i32_0 = arith.constant 0 : i32
    %c0_i32_1 = arith.constant 0 : i32
    return %c0_i32, %c0_i32_0 : i32, i32
  }
  func.func @transform_16(%arg0: i32) -> (i32, i32) {
    %c0_i32 = arith.constant 0 : i32
    %c0_i32_0 = arith.constant 0 : i32
    %c0_i32_1 = arith.constant 0 : i32
    return %c0_i32, %c0_i32_0 : i32, i32
  }
  func.func @transform_17(%arg0: i32) -> (i32, i32) {
    %c0_i32 = arith.constant 0 : i32
    %c0_i32_0 = arith.constant 0 : i32
    %c0_i32_1 = arith.constant 0 : i32
    return %c0_i32, %c0_i32_0 : i32, i32
  }
  func.func @transform_18(%arg0: i32) -> (i32, i32, i32) {
    %c0_i32 = arith.constant 0 : i32
    %c0_i32_0 = arith.constant 0 : i32
    %c0_i32_1 = arith.constant 0 : i32
    return %arg0, %c0_i32, %c0_i32_0 : i32, i32, i32
  }
}

</mosaic_0001>

<llo_original>
// kernel: sincnet_forward.1
$region0: #{sincnet_forward.1}
  #allocation0 [shape = 'u32[]', space=smem, size = 0x4, offset = 0x4, fixed_abs, tag = 'smem constant byte address 0x4 - core index']
  #allocation1 [shape = 'u32[144,128]{1,0:T(1,128)}', space=vmem, size = 0x12000, scoped, tag = 'internal scratch']
  #allocation2 [shape = 'f32[16,1008]{1,0:T(8,128)}', space=vmem, size = 0x10000, scoped, tag = 'scratch operand']
  #allocation3 [shape = 'bf16[256,768]{1,0:T(16,128)(2,1)}', space=vmem, size = 0x60000, scoped, tag = 'scratch operand']
  #allocation4 [shape = 'f32[80,250]{1,0:T(8,128)}', space=vmem, size = 0x14000, scoped, tag = 'scratch operand']
  #allocation5 [shape = 'bf16[400,246]{1,0:T(16,128)(2,1)}', space=vmem, size = 0x32000, scoped, tag = 'scratch operand']
  #allocation6 [shape = 'f32[300,78]{1,0:T(8,128)}', space=vmem, size = 0x26000, scoped, tag = 'scratch operand']
  #allocation7 [shape = 'f32[1,1]{1,0:T(1,128)S(1)}', space=vmem, size = 0x200, scoped, tag = 'scoped memory for sincnet_forward.1']
  #allocation8 [shape = 'f32[1,1]{1,0:T(1,128)S(1)}', space=vmem, size = 0x200, scoped, tag = 'scoped memory for sincnet_forward.1']
  %s0 = inlined_call_operand.vmem [shape: f32[2,1,1024], index: 0, kind: input, shape index: {}]
  %s1 = inlined_call_operand.vmem [shape: bf16[80,256], index: 1, kind: input, shape index: {}]
  %s2 = inlined_call_operand.<no memory space> [shape: f32[1,1], index: 2, kind: input, shape index: {}]
  %s3 = inlined_call_operand.<no memory space> [shape: f32[1,1], index: 3, kind: input, shape index: {}]
  %s4 = inlined_call_operand.vmem [shape: f32[80,1], index: 4, kind: input, shape index: {}]
  %s5 = inlined_call_operand.vmem [shape: f32[80,1], index: 5, kind: input, shape index: {}]
  %s6 = inlined_call_operand.vmem [shape: bf16[384,128], index: 6, kind: input, shape index: {}]
  %s7 = inlined_call_operand.vmem [shape: bf16[384,122], index: 7, kind: input, shape index: {}]
  %s8 = inlined_call_operand.vmem [shape: bf16[60,400], index: 8, kind: input, shape index: {}]
  %s9 = inlined_call_operand.vmem [shape: f32[60,1], index: 9, kind: input, shape index: {}]
  %s10 = inlined_call_operand.vmem [shape: f32[60,1], index: 10, kind: input, shape index: {}]
  %s11 = inlined_call_operand.vmem [shape: f32[60,1], index: 11, kind: input, shape index: {}]
  %s12 = inlined_call_operand.vmem [shape: bf16[244,82], index: 12, kind: input, shape index: {}]
  %s13 = inlined_call_operand.vmem [shape: bf16[60,300], index: 13, kind: input, shape index: {}]
  %s14 = inlined_call_operand.vmem [shape: f32[60,1], index: 14, kind: input, shape index: {}]
  %s15 = inlined_call_operand.vmem [shape: f32[60,1], index: 15, kind: input, shape index: {}]
  %s16 = inlined_call_operand.vmem [shape: f32[60,1], index: 16, kind: input, shape index: {}]
  %s17 = inlined_call_operand.vmem [shape: bf16[76,26], index: 17, kind: input, shape index: {}]
  %s18 = inlined_call_operand.vmem [shape: f32[2,60,26], index: 18, kind: output, shape index: {}]
  %s19 = sld [smem:[#allocation0]]
  $region105: #{sincnet_forward.1} parent=0
    _
  %s21 = ssub.s32 1, %s19
  %s22 = scalar_select 0, %s21, %s19
  %v23 = vstv %s2
  %24 = vst [vmem:[#allocation7] sm:$0x1] %v23
  %v25 = vstv %s3
  %26 = vst [vmem:[#allocation8] sm:$0x1] %v25
  loop: start=0, step=1, limit=4
  $region2: #{sincnet_forward.1} parent=0 // loop_pre_header
    _
  $region3: #{sincnet_forward.1} parent=0 // loop_header
    %s28 = sphi 0, %s32
    %p29 = scmp.ge.s32.totalorder %s28, 4
    %s38 = sphi 0, %s40
    %s41 = sphi 0, %s38
    %s42 = sphi 0, %s41
    %s58 = sphi 0, %s42
    %s62 = sphi 0, %s62
    %s64 = sphi 0, %s62
    %s65 = sphi 0, %s64
    %s79 = sphi 0, %s65
    %s83 = sphi 0, %s83
    %s85 = sphi 0, %s83
    %s86 = sphi 0, %s85
    %s100 = sphi 0, %s86
    %s104 = sphi 0, %s104
    %s106 = sphi 0, %s104
    %s107 = sphi 0, %s106
    %s121 = sphi 0, %s107
    %s125 = sphi 0, %s125
    %s127 = sphi 0, %s125
    %s128 = sphi 0, %s127
    %s142 = sphi 0, %s128
    %s146 = sphi 0, %s146
    %s148 = sphi 0, %s146
    %s149 = sphi 0, %s148
    %s163 = sphi 0, %s149
    %s167 = sphi 0, %s167
    %s169 = sphi 0, %s167
    %s170 = sphi 0, %s169
    %s184 = sphi 0, %s170
    %s188 = sphi 0, %s188
    %s190 = sphi 0, %s188
    %s191 = sphi 0, %s190
    %s205 = sphi 0, %s191
    %s209 = sphi 0, %s209
    %s211 = sphi 0, %s209
    %s212 = sphi 0, %s211
    %s226 = sphi 0, %s212
    %s230 = sphi 0, %s230
    %s232 = sphi 0, %s230
    %s233 = sphi 0, %s232
    %s247 = sphi 0, %s233
    %s251 = sphi 0, %s251
    %s253 = sphi 0, %s251
    %s254 = sphi 0, %s253
    %s268 = sphi 0, %s254
    %s272 = sphi 0, %s272
    %s274 = sphi 0, %s272
    %s275 = sphi 0, %s274
    %s289 = sphi 0, %s275
    %s293 = sphi 0, %s293
    %s295 = sphi 0, %s293
    %s296 = sphi 0, %s295
    %s310 = sphi 0, %s296
    %s314 = sphi 0, %s314
    %s316 = sphi 0, %s314
    %s317 = sphi 0, %s316
    %s331 = sphi 0, %s317
    %s335 = sphi 0, %s335
    %s337 = sphi 0, %s335
    %s338 = sphi 0, %s337
    %s352 = sphi 0, %s338
    %s356 = sphi 0, %s356
    %s358 = sphi 0, %s356
    %s359 = sphi 0, %s358
    %s373 = sphi 0, %s359
    %s377 = sphi 0, %s377
    %s379 = sphi 0, %s377
    %s380 = sphi 0, %s379
    %s394 = sphi 0, %s380
    %s398 = sphi 0, %s398
    %s400 = sphi 0, %s398
    %s401 = sphi 0, %s400
    %s415 = sphi 0, %s401
    %s421 = sphi 0, %s423
    %s424 = sphi 0, %s421
    %s425 = sphi 0, %s424
    %s441 = sphi 0, %s425
  $region4: #{sincnet_forward.1} parent=0 // loop_header_branch
    %31 = sbr.rel (%p29) target = $region8
  $region5: #{sincnet_forward.1} parent=0 // loop_body
    %s33 = ssub.s32 %s28, 1
    %s34 = ssub.s32 %s28, 2
    %s35 = sadd.s32 %s28, 1
    %s36 = ssub.s32 %s28, %s35
    %p37 = scmp.eq.s32.totalorder %s36, 0
    %s39 = sadd.s32 %s38, 1
    %s40 = scalar_select %p37, %s38, %s39
    %p43 = pneg %p37
    %p44 = scmp.eq.s32.totalorder %s28, 1
    %p45 = por %p43, %p44
    %p46 = scmp.ne.s32.totalorder %s38, %s41
    %p47 = scmp.eq.s32.totalorder %s28, 0
    %p48 = por %p46, %p47
    %p49 = scmp.ne.s32.totalorder %s38, %s41
    %p50 = scmp.eq.s32.totalorder %s33, 1
    %p51 = por %p49, %p50
    %p52 = scmp.ne.s32.totalorder %s41, %s42
    %p53 = scmp.eq.s32.totalorder %s33, 0
    %p54 = por %p52, %p53
    %p55 = scmp.ne.s32.totalorder %s41, %s42
    %p56 = scmp.eq.s32.totalorder %s34, 1
    %p57 = por %p55, %p56
    %p59 = scmp.ne.s32.totalorder %s42, %s58
    %p60 = scmp.eq.s32.totalorder %s34, 0
    %p61 = por %p59, %p60
    %s63 = sadd.s32 %s62, 1
    %p66 = scmp.eq.s32.totalorder %s28, 1
    %p67 = scmp.ne.s32.totalorder %s62, %s64
    %p68 = scmp.eq.s32.totalorder %s28, 0
    %p69 = por %p67, %p68
    %p70 = scmp.ne.s32.totalorder %s62, %s64
    %p71 = scmp.eq.s32.totalorder %s33, 1
    %p72 = por %p70, %p71
    %p73 = scmp.ne.s32.totalorder %s64, %s65
    %p74 = scmp.eq.s32.totalorder %s33, 0
    %p75 = por %p73, %p74
    %p76 = scmp.ne.s32.totalorder %s64, %s65
    %p77 = scmp.eq.s32.totalorder %s34, 1
    %p78 = por %p76, %p77
    %p80 = scmp.ne.s32.totalorder %s65, %s79
    %p81 = scmp.eq.s32.totalorder %s34, 0
    %p82 = por %p80, %p81
    %s84 = sadd.s32 %s83, 1
    %p87 = scmp.eq.s32.totalorder %s28, 1
    %p88 = scmp.ne.s32.totalorder %s83, %s85
    %p89 = scmp.eq.s32.totalorder %s28, 0
    %p90 = por %p88, %p89
    %p91 = scmp.ne.s32.totalorder %s83, %s85
    %p92 = scmp.eq.s32.totalorder %s33, 1
    %p93 = por %p91, %p92
    %p94 = scmp.ne.s32.totalorder %s85, %s86
    %p95 = scmp.eq.s32.totalorder %s33, 0
    %p96 = por %p94, %p95
    %p97 = scmp.ne.s32.totalorder %s85, %s86
    %p98 = scmp.eq.s32.totalorder %s34, 1
    %p99 = por %p97, %p98
    %p101 = scmp.ne.s32.totalorder %s86, %s100
    %p102 = scmp.eq.s32.totalorder %s34, 0
    %p103 = por %p101, %p102
    %s105 = sadd.s32 %s104, 1
    %p108 = scmp.eq.s32.totalorder %s28, 1
    %p109 = scmp.ne.s32.totalorder %s104, %s106
    %p110 = scmp.eq.s32.totalorder %s28, 0
    %p111 = por %p109, %p110
    %p112 = scmp.ne.s32.totalorder %s104, %s106
    %p113 = scmp.eq.s32.totalorder %s33, 1
    %p114 = por %p112, %p113
    %p115 = scmp.ne.s32.totalorder %s106, %s107
    %p116 = scmp.eq.s32.totalorder %s33, 0
    %p117 = por %p115, %p116
    %p118 = scmp.ne.s32.totalorder %s106, %s107
    %p119 = scmp.eq.s32.totalorder %s34, 1
    %p120 = por %p118, %p119
    %p122 = scmp.ne.s32.totalorder %s107, %s121
    %p123 = scmp.eq.s32.totalorder %s34, 0
    %p124 = por %p122, %p123
    %s126 = sadd.s32 %s125, 1
    %p129 = scmp.eq.s32.totalorder %s28, 1
    %p130 = scmp.ne.s32.totalorder %s125, %s127
    %p131 = scmp.eq.s32.totalorder %s28, 0
    %p132 = por %p130, %p131
    %p133 = scmp.ne.s32.totalorder %s125, %s127
    %p134 = scmp.eq.s32.totalorder %s33, 1
    %p135 = por %p133, %p134
    %p136 = scmp.ne.s32.totalorder %s127, %s128
    %p137 = scmp.eq.s32.totalorder %s33, 0
    %p138 = por %p136, %p137
    %p139 = scmp.ne.s32.totalorder %s127, %s128
    %p140 = scmp.eq.s32.totalorder %s34, 1
    %p141 = por %p139, %p140
    %p143 = scmp.ne.s32.totalorder %s128, %s142
    %p144 = scmp.eq.s32.totalorder %s34, 0
    %p145 = por %p143, %p144
    %s147 = sadd.s32 %s146, 1
    %p150 = scmp.eq.s32.totalorder %s28, 1
    %p151 = scmp.ne.s32.totalorder %s146, %s148
    %p152 = scmp.eq.s32.totalorder %s28, 0
    %p153 = por %p151, %p152
    %p154 = scmp.ne.s32.totalorder %s146, %s148
    %p155 = scmp.eq.s32.totalorder %s33, 1
    %p156 = por %p154, %p155
    %p157 = scmp.ne.s32.totalorder %s148, %s149
    %p158 = scmp.eq.s32.totalorder %s33, 0
    %p159 = por %p157, %p158
    %p160 = scmp.ne.s32.totalorder %s148, %s149
    %p161 = scmp.eq.s32.totalorder %s34, 1
    %p162 = por %p160, %p161
    %p164 = scmp.ne.s32.totalorder %s149, %s163
    %p165 = scmp.eq.s32.totalorder %s34, 0
    %p166 = por %p164, %p165
    %s168 = sadd.s32 %s167, 1
    %p171 = scmp.eq.s32.totalorder %s28, 1
    %p172 = scmp.ne.s32.totalorder %s167, %s169
    %p173 = scmp.eq.s32.totalorder %s28, 0
    %p174 = por %p172, %p173
    %p175 = scmp.ne.s32.totalorder %s167, %s169
    %p176 = scmp.eq.s32.totalorder %s33, 1
    %p177 = por %p175, %p176
    %p178 = scmp.ne.s32.totalorder %s169, %s170
    %p179 = scmp.eq.s32.totalorder %s33, 0
    %p180 = por %p178, %p179
    %p181 = scmp.ne.s32.totalorder %s169, %s170
    %p182 = scmp.eq.s32.totalorder %s34, 1
    %p183 = por %p181, %p182
    %p185 = scmp.ne.s32.totalorder %s170, %s184
    %p186 = scmp.eq.s32.totalorder %s34, 0
    %p187 = por %p185, %p186
    %s189 = sadd.s32 %s188, 1
    %p192 = scmp.eq.s32.totalorder %s28, 1
    %p193 = scmp.ne.s32.totalorder %s188, %s190
    %p194 = scmp.eq.s32.totalorder %s28, 0
    %p195 = por %p193, %p194
    %p196 = scmp.ne.s32.totalorder %s188, %s190
    %p197 = scmp.eq.s32.totalorder %s33, 1
    %p198 = por %p196, %p197
    %p199 = scmp.ne.s32.totalorder %s190, %s191
    %p200 = scmp.eq.s32.totalorder %s33, 0
    %p201 = por %p199, %p200
    %p202 = scmp.ne.s32.totalorder %s190, %s191
    %p203 = scmp.eq.s32.totalorder %s34, 1
    %p204 = por %p202, %p203
    %p206 = scmp.ne.s32.totalorder %s191, %s205
    %p207 = scmp.eq.s32.totalorder %s34, 0
    %p208 = por %p206, %p207
    %s210 = sadd.s32 %s209, 1
    %p213 = scmp.eq.s32.totalorder %s28, 1
    %p214 = scmp.ne.s32.totalorder %s209, %s211
    %p215 = scmp.eq.s32.totalorder %s28, 0
    %p216 = por %p214, %p215
    %p217 = scmp.ne.s32.totalorder %s209, %s211
    %p218 = scmp.eq.s32.totalorder %s33, 1
    %p219 = por %p217, %p218
    %p220 = scmp.ne.s32.totalorder %s211, %s212
    %p221 = scmp.eq.s32.totalorder %s33, 0
    %p222 = por %p220, %p221
    %p223 = scmp.ne.s32.totalorder %s211, %s212
    %p224 = scmp.eq.s32.totalorder %s34, 1
    %p225 = por %p223, %p224
    %p227 = scmp.ne.s32.totalorder %s212, %s226
    %p228 = scmp.eq.s32.totalorder %s34, 0
    %p229 = por %p227, %p228
    %s231 = sadd.s32 %s230, 1
    %p234 = scmp.eq.s32.totalorder %s28, 1
    %p235 = scmp.ne.s32.totalorder %s230, %s232
    %p236 = scmp.eq.s32.totalorder %s28, 0
    %p237 = por %p235, %p236
    %p238 = scmp.ne.s32.totalorder %s230, %s232
    %p239 = scmp.eq.s32.totalorder %s33, 1
    %p240 = por %p238, %p239
    %p241 = scmp.ne.s32.totalorder %s232, %s233
    %p242 = scmp.eq.s32.totalorder %s33, 0
    %p243 = por %p241, %p242
    %p244 = scmp.ne.s32.totalorder %s232, %s233
    %p245 = scmp.eq.s32.totalorder %s34, 1
    %p246 = por %p244, %p245
    %p248 = scmp.ne.s32.totalorder %s233, %s247
    %p249 = scmp.eq.s32.totalorder %s34, 0
    %p250 = por %p248, %p249
    %s252 = sadd.s32 %s251, 1
    %p255 = scmp.eq.s32.totalorder %s28, 1
    %p256 = scmp.ne.s32.totalorder %s251, %s253
    %p257 = scmp.eq.s32.totalorder %s28, 0
    %p258 = por %p256, %p257
    %p259 = scmp.ne.s32.totalorder %s251, %s253
    %p260 = scmp.eq.s32.totalorder %s33, 1
    %p261 = por %p259, %p260
    %p262 = scmp.ne.s32.totalorder %s253, %s254
    %p263 = scmp.eq.s32.totalorder %s33, 0
    %p264 = por %p262, %p263
    %p265 = scmp.ne.s32.totalorder %s253, %s254
    %p266 = scmp.eq.s32.totalorder %s34, 1
    %p267 = por %p265, %p266
    %p269 = scmp.ne.s32.totalorder %s254, %s268
    %p270 = scmp.eq.s32.totalorder %s34, 0
    %p271 = por %p269, %p270
    %s273 = sadd.s32 %s272, 1
    %p276 = scmp.eq.s32.totalorder %s28, 1
    %p277 = scmp.ne.s32.totalorder %s272, %s274
    %p278 = scmp.eq.s32.totalorder %s28, 0
    %p279 = por %p277, %p278
    %p280 = scmp.ne.s32.totalorder %s272, %s274
    %p281 = scmp.eq.s32.totalorder %s33, 1
    %p282 = por %p280, %p281
    %p283 = scmp.ne.s32.totalorder %s274, %s275
    %p284 = scmp.eq.s32.totalorder %s33, 0
    %p285 = por %p283, %p284
    %p286 = scmp.ne.s32.totalorder %s274, %s275
    %p287 = scmp.eq.s32.totalorder %s34, 1
    %p288 = por %p286, %p287
    %p290 = scmp.ne.s32.totalorder %s275, %s289
    %p291 = scmp.eq.s32.totalorder %s34, 0
    %p292 = por %p290, %p291
    %s294 = sadd.s32 %s293, 1
    %p297 = scmp.eq.s32.totalorder %s28, 1
    %p298 = scmp.ne.s32.totalorder %s293, %s295
    %p299 = scmp.eq.s32.totalorder %s28, 0
    %p300 = por %p298, %p299
    %p301 = scmp.ne.s32.totalorder %s293, %s295
    %p302 = scmp.eq.s32.totalorder %s33, 1
    %p303 = por %p301, %p302
    %p304 = scmp.ne.s32.totalorder %s295, %s296
    %p305 = scmp.eq.s32.totalorder %s33, 0
    %p306 = por %p304, %p305
    %p307 = scmp.ne.s32.totalorder %s295, %s296
    %p308 = scmp.eq.s32.totalorder %s34, 1
    %p309 = por %p307, %p308
    %p311 = scmp.ne.s32.totalorder %s296, %s310
    %p312 = scmp.eq.s32.totalorder %s34, 0
    %p313 = por %p311, %p312
    %s315 = sadd.s32 %s314, 1
    %p318 = scmp.eq.s32.totalorder %s28, 1
    %p319 = scmp.ne.s32.totalorder %s314, %s316
    %p320 = scmp.eq.s32.totalorder %s28, 0
    %p321 = por %p319, %p320
    %p322 = scmp.ne.s32.totalorder %s314, %s316
    %p323 = scmp.eq.s32.totalorder %s33, 1
    %p324 = por %p322, %p323
    %p325 = scmp.ne.s32.totalorder %s316, %s317
    %p326 = scmp.eq.s32.totalorder %s33, 0
    %p327 = por %p325, %p326
    %p328 = scmp.ne.s32.totalorder %s316, %s317
    %p329 = scmp.eq.s32.totalorder %s34, 1
    %p330 = por %p328, %p329
    %p332 = scmp.ne.s32.totalorder %s317, %s331
    %p333 = scmp.eq.s32.totalorder %s34, 0
    %p334 = por %p332, %p333
    %s336 = sadd.s32 %s335, 1
    %p339 = scmp.eq.s32.totalorder %s28, 1
    %p340 = scmp.ne.s32.totalorder %s335, %s337
    %p341 = scmp.eq.s32.totalorder %s28, 0
    %p342 = por %p340, %p341
    %p343 = scmp.ne.s32.totalorder %s335, %s337
    %p344 = scmp.eq.s32.totalorder %s33, 1
    %p345 = por %p343, %p344
    %p346 = scmp.ne.s32.totalorder %s337, %s338
    %p347 = scmp.eq.s32.totalorder %s33, 0
    %p348 = por %p346, %p347
    %p349 = scmp.ne.s32.totalorder %s337, %s338
    %p350 = scmp.eq.s32.totalorder %s34, 1
    %p351 = por %p349, %p350
    %p353 = scmp.ne.s32.totalorder %s338, %s352
    %p354 = scmp.eq.s32.totalorder %s34, 0
    %p355 = por %p353, %p354
    %s357 = sadd.s32 %s356, 1
    %p360 = scmp.eq.s32.totalorder %s28, 1
    %p361 = scmp.ne.s32.totalorder %s356, %s358
    %p362 = scmp.eq.s32.totalorder %s28, 0
    %p363 = por %p361, %p362
    %p364 = scmp.ne.s32.totalorder %s356, %s358
    %p365 = scmp.eq.s32.totalorder %s33, 1
    %p366 = por %p364, %p365
    %p367 = scmp.ne.s32.totalorder %s358, %s359
    %p368 = scmp.eq.s32.totalorder %s33, 0
    %p369 = por %p367, %p368
    %p370 = scmp.ne.s32.totalorder %s358, %s359
    %p371 = scmp.eq.s32.totalorder %s34, 1
    %p372 = por %p370, %p371
    %p374 = scmp.ne.s32.totalorder %s359, %s373
    %p375 = scmp.eq.s32.totalorder %s34, 0
    %p376 = por %p374, %p375
    %s378 = sadd.s32 %s377, 1
    %p381 = scmp.eq.s32.totalorder %s28, 1
    %p382 = scmp.ne.s32.totalorder %s377, %s379
    %p383 = scmp.eq.s32.totalorder %s28, 0
    %p384 = por %p382, %p383
    %p385 = scmp.ne.s32.totalorder %s377, %s379
    %p386 = scmp.eq.s32.totalorder %s33, 1
    %p387 = por %p385, %p386
    %p388 = scmp.ne.s32.totalorder %s379, %s380
    %p389 = scmp.eq.s32.totalorder %s33, 0
    %p390 = por %p388, %p389
    %p391 = scmp.ne.s32.totalorder %s379, %s380
    %p392 = scmp.eq.s32.totalorder %s34, 1
    %p393 = por %p391, %p392
    %p395 = scmp.ne.s32.totalorder %s380, %s394
    %p396 = scmp.eq.s32.totalorder %s34, 0
    %p397 = por %p395, %p396
    %s399 = sadd.s32 %s398, 1
    %p402 = scmp.eq.s32.totalorder %s28, 1
    %p403 = scmp.ne.s32.totalorder %s398, %s400
    %p404 = scmp.eq.s32.totalorder %s28, 0
    %p405 = por %p403, %p404
    %p406 = scmp.ne.s32.totalorder %s398, %s400
    %p407 = scmp.eq.s32.totalorder %s33, 1
    %p408 = por %p406, %p407
    %p409 = scmp.ne.s32.totalorder %s400, %s401
    %p410 = scmp.eq.s32.totalorder %s33, 0
    %p411 = por %p409, %p410
    %p412 = scmp.ne.s32.totalorder %s400, %s401
    %p413 = scmp.eq.s32.totalorder %s34, 1
    %p414 = por %p412, %p413
    %p416 = scmp.ne.s32.totalorder %s401, %s415
    %p417 = scmp.eq.s32.totalorder %s34, 0
    %p418 = por %p416, %p417
    %s419 = ssub.s32 %s28, %s35
    %p420 = scmp.eq.s32.totalorder %s419, 0
    %s422 = sadd.s32 %s421, 1
    %s423 = scalar_select %p420, %s421, %s422
    %p426 = pneg %p420
    %p427 = scmp.eq.s32.totalorder %s28, 1
    %p428 = por %p426, %p427
    %p429 = scmp.ne.s32.totalorder %s421, %s424
    %p430 = scmp.eq.s32.totalorder %s28, 0
    %p431 = por %p429, %p430
    %p432 = scmp.ne.s32.totalorder %s421, %s424
    %p433 = scmp.eq.s32.totalorder %s33, 1
    %p434 = por %p432, %p433
    %p435 = scmp.ne.s32.totalorder %s424, %s425
    %p436 = scmp.eq.s32.totalorder %s33, 0
    %p437 = por %p435, %p436
    %p438 = scmp.ne.s32.totalorder %s424, %s425
    %p439 = scmp.eq.s32.totalorder %s34, 1
    %p440 = por %p438, %p439
    %p442 = scmp.ne.s32.totalorder %s425, %s441
    %p443 = scmp.eq.s32.totalorder %s34, 0
    %p444 = por %p442, %p443
    %p445 = scmp.le.s32.totalorder 1, %s28
    %p446 = scmp.lt.s32.totalorder %s28, 3
    %p447 = pnand %p445, %p446
    %p448 = pneg %p447
    // Predicated region
    $region9: #{sincnet_forward.1} parent=5 // pred_check
      _
    $region10: #{sincnet_forward.1} parent=5 // pred_check_branch
      %450 = sbr.rel (%p447) target = $region12
    $region11: #{sincnet_forward.1} parent=5 // pred_region
      %s451 = ssub.s32 %s28, 1
      // Predicated region
      $region13: #{sincnet_forward.1} parent=11 // pred_check
        %p452 = pneg %p75
      $region14: #{sincnet_forward.1} parent=11 // pred_check_branch
        %454 = sbr.rel (%p452) target = $region16
      $region15: #{sincnet_forward.1} parent=11 // pred_region
        _
      $region16: #{sincnet_forward.1} parent=11 // pred_fallthru
        _
      // Predicated region
      $region17: #{sincnet_forward.1} parent=11 // pred_check
        %p455 = pneg %p96
      $region18: #{sincnet_forward.1} parent=11 // pred_check_branch
        %457 = sbr.rel (%p455) target = $region20
      $region19: #{sincnet_forward.1} parent=11 // pred_region
        _
      $region20: #{sincnet_forward.1} parent=11 // pred_fallthru
        _
      // Predicated region
      $region21: #{sincnet_forward.1} parent=11 // pred_check
        %p458 = pneg %p117
      $region22: #{sincnet_forward.1} parent=11 // pred_check_branch
        %460 = sbr.rel (%p458) target = $region24
      $region23: #{sincnet_forward.1} parent=11 // pred_region
        _
      $region24: #{sincnet_forward.1} parent=11 // pred_fallthru
        _
      // Predicated region
      $region25: #{sincnet_forward.1} parent=11 // pred_check
        %p461 = pneg %p138
      $region26: #{sincnet_forward.1} parent=11 // pred_check_branch
        %463 = sbr.rel (%p461) target = $region28
      $region27: #{sincnet_forward.1} parent=11 // pred_region
        _
      $region28: #{sincnet_forward.1} parent=11 // pred_fallthru
        _
      // Predicated region
      $region29: #{sincnet_forward.1} parent=11 // pred_check
        %p464 = pneg %p159
      $region30: #{sincnet_forward.1} parent=11 // pred_check_branch
        %466 = sbr.rel (%p464) target = $region32
      $region31: #{sincnet_forward.1} parent=11 // pred_region
        _
      $region32: #{sincnet_forward.1} parent=11 // pred_fallthru
        _
      // Predicated region
      $region33: #{sincnet_forward.1} parent=11 // pred_check
        %p467 = pneg %p180
      $region34: #{sincnet_forward.1} parent=11 // pred_check_branch
        %469 = sbr.rel (%p467) target = $region36
      $region35: #{sincnet_forward.1} parent=11 // pred_region
        _
      $region36: #{sincnet_forward.1} parent=11 // pred_fallthru
        _
      // Predicated region
      $region37: #{sincnet_forward.1} parent=11 // pred_check
        %p470 = pneg %p201
      $region38: #{sincnet_forward.1} parent=11 // pred_check_branch
        %472 = sbr.rel (%p470) target = $region40
      $region39: #{sincnet_forward.1} parent=11 // pred_region
        _
      $region40: #{sincnet_forward.1} parent=11 // pred_fallthru
        _
      // Predicated region
      $region41: #{sincnet_forward.1} parent=11 // pred_check
        %p473 = pneg %p222
      $region42: #{sincnet_forward.1} parent=11 // pred_check_branch
        %475 = sbr.rel (%p473) target = $region44
      $region43: #{sincnet_forward.1} parent=11 // pred_region
        _
      $region44: #{sincnet_forward.1} parent=11 // pred_fallthru
        _
      // Predicated region
      $region45: #{sincnet_forward.1} parent=11 // pred_check
        %p476 = pneg %p243
      $region46: #{sincnet_forward.1} parent=11 // pred_check_branch
        %478 = sbr.rel (%p476) target = $region48
      $region47: #{sincnet_forward.1} parent=11 // pred_region
        _
      $region48: #{sincnet_forward.1} parent=11 // pred_fallthru
        _
      // Predicated region
      $region49: #{sincnet_forward.1} parent=11 // pred_check
        %p479 = pneg %p264
      $region50: #{sincnet_forward.1} parent=11 // pred_check_branch
        %481 = sbr.rel (%p479) target = $region52
      $region51: #{sincnet_forward.1} parent=11 // pred_region
        _
      $region52: #{sincnet_forward.1} parent=11 // pred_fallthru
        _
      // Predicated region
      $region53: #{sincnet_forward.1} parent=11 // pred_check
        %p482 = pneg %p285
      $region54: #{sincnet_forward.1} parent=11 // pred_check_branch
        %484 = sbr.rel (%p482) target = $region56
      $region55: #{sincnet_forward.1} parent=11 // pred_region
        _
      $region56: #{sincnet_forward.1} parent=11 // pred_fallthru
        _
      // Predicated region
      $region57: #{sincnet_forward.1} parent=11 // pred_check
        %p485 = pneg %p306
      $region58: #{sincnet_forward.1} parent=11 // pred_check_branch
        %487 = sbr.rel (%p485) target = $region60
      $region59: #{sincnet_forward.1} parent=11 // pred_region
        _
      $region60: #{sincnet_forward.1} parent=11 // pred_fallthru
        _
      // Predicated region
      $region61: #{sincnet_forward.1} parent=11 // pred_check
        %p488 = pneg %p327
      $region62: #{sincnet_forward.1} parent=11 // pred_check_branch
        %490 = sbr.rel (%p488) target = $region64
      $region63: #{sincnet_forward.1} parent=11 // pred_region
        _
      $region64: #{sincnet_forward.1} parent=11 // pred_fallthru
        _
      // Predicated region
      $region65: #{sincnet_forward.1} parent=11 // pred_check
        %p491 = pneg %p348
      $region66: #{sincnet_forward.1} parent=11 // pred_check_branch
        %493 = sbr.rel (%p491) target = $region68
      $region67: #{sincnet_forward.1} parent=11 // pred_region
        _
      $region68: #{sincnet_forward.1} parent=11 // pred_fallthru
        _
      // Predicated region
      $region69: #{sincnet_forward.1} parent=11 // pred_check
        %p494 = pneg %p369
      $region70: #{sincnet_forward.1} parent=11 // pred_check_branch
        %496 = sbr.rel (%p494) target = $region72
      $region71: #{sincnet_forward.1} parent=11 // pred_region
        _
      $region72: #{sincnet_forward.1} parent=11 // pred_fallthru
        _
      // Predicated region
      $region73: #{sincnet_forward.1} parent=11 // pred_check
        %p497 = pneg %p390
      $region74: #{sincnet_forward.1} parent=11 // pred_check_branch
        %499 = sbr.rel (%p497) target = $region76
      $region75: #{sincnet_forward.1} parent=11 // pred_region
        _
      $region76: #{sincnet_forward.1} parent=11 // pred_fallthru
        _
      // Predicated region
      $region77: #{sincnet_forward.1} parent=11 // pred_check
        %p500 = pneg %p411
      $region78: #{sincnet_forward.1} parent=11 // pred_check_branch
        %502 = sbr.rel (%p500) target = $region80
      $region79: #{sincnet_forward.1} parent=11 // pred_region
        _
      $region80: #{sincnet_forward.1} parent=11 // pred_fallthru
        _
    $region12: #{sincnet_forward.1} parent=5 // pred_fallthru
      _
    %p503 = scmp.lt.s32.totalorder %s28, 2
    // Predicated region
    $region81: #{sincnet_forward.1} parent=5 // pred_check
      %p504 = pneg %p503
    $region82: #{sincnet_forward.1} parent=5 // pred_check_branch
      %506 = sbr.rel (%p504) target = $region84
    $region83: #{sincnet_forward.1} parent=5 // pred_region
      // Predicated region
      $region85: #{sincnet_forward.1} parent=83 // pred_check
        %p507 = pneg %p48
      $region86: #{sincnet_forward.1} parent=83 // pred_check_branch
        %509 = sbr.rel (%p507) target = $region88
      $region87: #{sincnet_forward.1} parent=83 // pred_region
        %p510 = scmp.lt.s32.totalorder %s28, 1
        %s511 = scalar_select %p510, %s28, 1
        %s512 = smul.addr %s511, 8
        %s513 = scalar_lea.vmem %s0, %s512
      $region88: #{sincnet_forward.1} parent=83 // pred_fallthru
        _
    $region84: #{sincnet_forward.1} parent=5 // pred_fallthru
      _
    %p514 = scmp.le.s32.totalorder 1, %s28
    %p515 = scmp.lt.s32.totalorder %s28, 3
    %p516 = pnand %p514, %p515
    %p517 = pneg %p516
    // Predicated region
    $region89: #{sincnet_forward.1} parent=5 // pred_check
      _
    $region90: #{sincnet_forward.1} parent=5 // pred_check_branch
      %519 = sbr.rel (%p516) target = $region92
    $region91: #{sincnet_forward.1} parent=5 // pred_region
      %s520 = ssub.s32 %s28, 1
      %p521 = scmp.lt.s32.totalorder %s33, 1
      %s522 = scalar_select %p521, %s33, 1
      %s523 = smul.addr %s522, 8
      %s524 = scalar_lea.vmem %s0, %s523
      %p525 = pneg %p54
      %p526 = pneg %p51
      %p527 = pneg %p75
      %p528 = pneg %p72
      %p529 = pneg %p96
      %p530 = pneg %p93
      %p531 = pneg %p117
      %p532 = pneg %p114
      %p533 = pneg %p138
      %p534 = pneg %p135
      %p535 = pneg %p159
      %p536 = pneg %p156
      %p537 = pneg %p180
      %p538 = pneg %p177
      %p539 = pneg %p201
      %p540 = pneg %p198
      %p541 = pneg %p222
      %p542 = pneg %p219
      %p543 = pneg %p243
      %p544 = pneg %p240
      %p545 = pneg %p264
      %p546 = pneg %p261
      %p547 = pneg %p285
      %p548 = pneg %p282
      %p549 = pneg %p306
      %p550 = pneg %p303
      %p551 = pneg %p327
      %p552 = pneg %p324
      %p553 = pneg %p348
      %p554 = pneg %p345
      %p555 = pneg %p369
      %p556 = pneg %p366
      %p557 = pneg %p390
      %p558 = pneg %p387
      %p559 = pneg %p411
      %p560 = pneg %p408
      %p561 = pneg %p437
      %p562 = pneg %p434
      %p563 = scmp.lt.s32.totalorder %s33, 1
      %s564 = scalar_select %p563, %s33, 1
      %s565 = smul.addr %s564, 8
      %s566 = smul.addr %s565, 8
      %s567 = scalar_lea.vmem %s18, %s566
      %p568 = scmp.lt.s32.totalorder %s33, 1
      %s569 = scalar_select %p568, %s33, 1
      %s570 = smul.addr %s569, 8
      %s571 = scalar_lea.vmem %s0, %s570
      %p572 = scmp.lt.s32.totalorder %s33, 1
      %s573 = scalar_select %p572, %s33, 1
      %s574 = smul.addr %s573, 8
      %s575 = smul.addr %s574, 8
      %s576 = scalar_lea.vmem %s18, %s575
      %v578 = vld [vmem:[%s571] sm:$0xff]
      %v580 = vlaneseq
      %v581 = vshrl.u32 %v580, 7
      %v582 = vsub.s32 0, %v581
      %v583 = vrot.slane %v578, %v582
      %v584 = vlaneseq
      %v585 = vshrl.u32 %v584, 7
      %v586 = vsub.s32 1, %v585
      %v587 = vrot.slane %v578, %v586
      %v588 = vlaneseq
      %v589 = vshrl.u32 %v588, 7
      %v590 = vsub.s32 2, %v589
      %v591 = vrot.slane %v578, %v590
      %v592 = vlaneseq
      %v593 = vshrl.u32 %v592, 7
      %v594 = vsub.s32 3, %v593
      %v595 = vrot.slane %v578, %v594
      %v596 = vlaneseq
      %v597 = vshrl.u32 %v596, 7
      %v598 = vsub.s32 4, %v597
      %v599 = vrot.slane %v578, %v598
      %v600 = vlaneseq
      %v601 = vshrl.u32 %v600, 7
      %v602 = vsub.s32 5, %v601
      %v603 = vrot.slane %v578, %v602
      %v604 = vlaneseq
      %v605 = vshrl.u32 %v604, 7
      %v606 = vsub.s32 6, %v605
      %v607 = vrot.slane %v578, %v606
      %v608 = vlaneseq
      %v609 = vshrl.u32 %v608, 7
      %v610 = vsub.s32 7, %v609
      %v611 = vrot.slane %v578, %v610
      %vm620 = vcmask 1040384
      %v621 = vsel %vm620, %v583, 0.0
      %v622 = vsel %vm620, %v587, 0.0
      %v623 = vadd.f32 %v621, %v622
      %v624 = vsel %vm620, %v591, 0.0
      %v625 = vadd.f32 %v623, %v624
      %v626 = vsel %vm620, %v595, 0.0
      %v627 = vadd.f32 %v625, %v626
      %v628 = vsel %vm620, %v599, 0.0
      %v629 = vadd.f32 %v627, %v628
      %v630 = vsel %vm620, %v603, 0.0
      %v631 = vadd.f32 %v629, %v630
      %v632 = vsel %vm620, %v607, 0.0
      %v633 = vadd.f32 %v631, %v632
      %vm634 = vcmask 843776
      %v635 = vsel %vm634, %v611, 0.0
      %v636 = vadd.f32 %v633, %v635
      %637 = vadd.xlane.f32.xlu0 %v636
      %v638 = vpop.xlane.xlu0 %637
      %v639 = vrcp.pop 1000.0
      %v640 = vmul.f32 %v638, %v639
      %v641 = vmul.f32 %v578, %v578
      %v643 = vlaneseq
      %v644 = vshrl.u32 %v643, 7
      %v645 = vsub.s32 0, %v644
      %v646 = vrot.slane %v641, %v645
      %v647 = vlaneseq
      %v648 = vshrl.u32 %v647, 7
      %v649 = vsub.s32 1, %v648
      %v650 = vrot.slane %v641, %v649
      %v651 = vlaneseq
      %v652 = vshrl.u32 %v651, 7
      %v653 = vsub.s32 2, %v652
      %v654 = vrot.slane %v641, %v653
      %v655 = vlaneseq
      %v656 = vshrl.u32 %v655, 7
      %v657 = vsub.s32 3, %v656
      %v658 = vrot.slane %v641, %v657
      %v659 = vlaneseq
      %v660 = vshrl.u32 %v659, 7
      %v661 = vsub.s32 4, %v660
      %v662 = vrot.slane %v641, %v661
      %v663 = vlaneseq
      %v664 = vshrl.u32 %v663, 7
      %v665 = vsub.s32 5, %v664
      %v666 = vrot.slane %v641, %v665
      %v667 = vlaneseq
      %v668 = vshrl.u32 %v667, 7
      %v669 = vsub.s32 6, %v668
      %v670 = vrot.slane %v641, %v669
      %v671 = vlaneseq
      %v672 = vshrl.u32 %v671, 7
      %v673 = vsub.s32 7, %v672
      %v674 = vrot.slane %v641, %v673
      %v683 = vsel %vm620, %v646, 0.0
      %v684 = vsel %vm620, %v650, 0.0
      %v685 = vadd.f32 %v683, %v684
      %v686 = vsel %vm620, %v654, 0.0
      %v687 = vadd.f32 %v685, %v686
      %v688 = vsel %vm620, %v658, 0.0
      %v689 = vadd.f32 %v687, %v688
      %v690 = vsel %vm620, %v662, 0.0
      %v691 = vadd.f32 %v689, %v690
      %v692 = vsel %vm620, %v666, 0.0
      %v693 = vadd.f32 %v691, %v692
      %v694 = vsel %vm620, %v670, 0.0
      %v695 = vadd.f32 %v693, %v694
      %v696 = vsel %vm634, %v674, 0.0
      %v697 = vadd.f32 %v695, %v696
      %698 = vadd.xlane.f32.xlu0 %v697
      %v699 = vpop.xlane.xlu0 %698
      %v700 = vmul.f32 %v699, %v639
      %v701 = vmul.f32 %v640, %v640
      %v702 = vsub.f32 %v700, %v701
      %v703 = vmax.f32 %v702, 0.0
      %v705 = vlaneseq
      %v706 = vshrl.u32 %v705, 7
      %v707 = vsub.s32 0, %v706
      %v708 = vrot.slane %v640, %v707
      %v710 = vsub.f32 %v578, %v708
      %v711 = vadd.f32 %v703, 1e-05
      %v712 = vrsqrt.pop %v711
      %v714 = vlaneseq
      %v715 = vshrl.u32 %v714, 7
      %v716 = vsub.s32 0, %v715
      %v717 = vrot.slane %v712, %v716
      %v719 = vmul.f32 %v710, %v717
      %v720 = vld [vmem:[#allocation7] sm:$0x1]
      %722 = vset.pattern.permute.xlu0 0
      %723 = vperm.xlu0 %722, %v720
      %v724 = vpop.permute.xlu0 %723
      %v726 = vlaneseq
      %v727 = vshrl.u32 %v726, 7
      %v728 = vsub.s32 0, %v727
      %v729 = vrot.slane %v724, %v728
      %v730 = vmul.f32 %v719, %v729
      %v731 = vld [vmem:[#allocation8] sm:$0x1]
      %733 = vset.pattern.permute.xlu0 0
      %734 = vperm.xlu0 %733, %v731
      %v735 = vpop.permute.xlu0 %734
      %v737 = vlaneseq
      %v738 = vshrl.u32 %v737, 7
      %v739 = vsub.s32 0, %v738
      %v740 = vrot.slane %v735, %v739
      %v741 = vadd.f32 %v730, %v740
      %v742 = vlaneseq
      %vm743 = vcmp.ge.s32.totalorder %v742, 0
      %vm744 = vcmp.lt.s32.totalorder %v742, 1008
      %vm745 = vmand %vm743, %vm744
      %746 = vst.msk [vmem:[#allocation2] ss:$8 sm:$0xf] %vm745, %v741
      %747 = vst.msk [vmem:[#allocation2] ss:$8 sm:$0xf0] %vm745, %v741
      %749 = vrot.lane.b32.xlu0 %v741, 127
      %v750 = vpop.permute.xlu0 %749
      %v751 = vrot.slane %v750, 1
      %vm752 = vcmask 1039360
      %v753 = vsel %vm752, %v750, %v751
      %s755 = scalar_lea.vmem [#allocation2], 1
      %756 = vst.msk [vmem:[%s755] ss:$8 sm:$0xf] %vm745, %v753
      %757 = vst.msk [vmem:[%s755] ss:$8 sm:$0xf0] %vm745, %v753
      %758 = vrot.lane.b32.xlu0 %v741, 126
      %v759 = vpop.permute.xlu0 %758
      %v760 = vrot.slane %v759, 1
      %vm761 = vcmask 1031168
      %v762 = vsel %vm761, %v759, %v760
      %s764 = scalar_lea.vmem [#allocation2], 2
      %765 = vst.msk [vmem:[%s764] ss:$8 sm:$0xf] %vm745, %v762
      %766 = vst.msk [vmem:[%s764] ss:$8 sm:$0xf0] %vm745, %v762
      %767 = vrot.lane.b32.xlu0 %v741, 125
      %v768 = vpop.permute.xlu0 %767
      %v769 = vrot.slane %v768, 1
      %vm770 = vcmask 1022976
      %v771 = vsel %vm770, %v768, %v769
      %s773 = scalar_lea.vmem [#allocation2], 3
      %774 = vst.msk [vmem:[%s773] ss:$8 sm:$0xf] %vm745, %v771
      %775 = vst.msk [vmem:[%s773] ss:$8 sm:$0xf0] %vm745, %v771
      %776 = vrot.lane.b32.xlu0 %v741, 124
      %v777 = vpop.permute.xlu0 %776
      %v778 = vrot.slane %v777, 1
      %vm779 = vcmask 1014784
      %v780 = vsel %vm779, %v777, %v778
      %s782 = scalar_lea.vmem [#allocation2], 4
      %783 = vst.msk [vmem:[%s782] ss:$8 sm:$0xf] %vm745, %v780
      %784 = vst.msk [vmem:[%s782] ss:$8 sm:$0xf0] %vm745, %v780
      %785 = vrot.lane.b32.xlu0 %v741, 123
      %v786 = vpop.permute.xlu0 %785
      %v787 = vrot.slane %v786, 1
      %vm788 = vcmask 1006592
      %v789 = vsel %vm788, %v786, %v787
      %s791 = scalar_lea.vmem [#allocation2], 5
      %792 = vst.msk [vmem:[%s791] ss:$8 sm:$0xf] %vm745, %v789
      %793 = vst.msk [vmem:[%s791] ss:$8 sm:$0xf0] %vm745, %v789
      %794 = vrot.lane.b32.xlu0 %v741, 122
      %v795 = vpop.permute.xlu0 %794
      %v796 = vrot.slane %v795, 1
      %vm797 = vcmask 998400
      %v798 = vsel %vm797, %v795, %v796
      %s800 = scalar_lea.vmem [#allocation2], 6
      %801 = vst.msk [vmem:[%s800] ss:$8 sm:$0xf] %vm745, %v798
      %802 = vst.msk [vmem:[%s800] ss:$8 sm:$0xf0] %vm745, %v798
      %803 = vrot.lane.b32.xlu0 %v741, 121
      %v804 = vpop.permute.xlu0 %803
      %v805 = vrot.slane %v804, 1
      %vm806 = vcmask 990208
      %v807 = vsel %vm806, %v804, %v805
      %s809 = scalar_lea.vmem [#allocation2], 7
      %810 = vst.msk [vmem:[%s809] ss:$8 sm:$0xf] %vm745, %v807
      %811 = vst.msk [vmem:[%s809] ss:$8 sm:$0xf0] %vm745, %v807
      %812 = vrot.lane.b32.xlu0 %v741, 120
      %v813 = vpop.permute.xlu0 %812
      %v814 = vrot.slane %v813, 1
      %vm815 = vcmask 982016
      %v816 = vsel %vm815, %v813, %v814
      %s818 = scalar_lea.vmem [#allocation2], 64
      %819 = vst.msk [vmem:[%s818] ss:$8 sm:$0xf] %vm745, %v816
      %820 = vst.msk [vmem:[%s818] ss:$8 sm:$0xf0] %vm745, %v816
      %821 = vrot.lane.b32.xlu0 %v741, 119
      %v822 = vpop.permute.xlu0 %821
      %v823 = vrot.slane %v822, 1
      %vm824 = vcmask 973824
      %v825 = vsel %vm824, %v822, %v823
      %s827 = scalar_lea.vmem [#allocation2], 65
      %828 = vst.msk [vmem:[%s827] ss:$8 sm:$0xf] %vm745, %v825
      %829 = vst.msk [vmem:[%s827] ss:$8 sm:$0xf0] %vm745, %v825
      %830 = vrot.lane.b32.xlu0 %v741, 118
      %v831 = vpop.permute.xlu0 %830
      %v832 = vrot.slane %v831, 1
      %vm833 = vcmask 965632
      %v834 = vsel %vm833, %v831, %v832
      %s836 = scalar_lea.vmem [#allocation2], 66
      %837 = vst.msk [vmem:[%s836] ss:$8 sm:$0xf] %vm745, %v834
      %838 = vst.msk [vmem:[%s836] ss:$8 sm:$0xf0] %vm745, %v834
      %839 = vrot.lane.b32.xlu0 %v741, 117
      %v840 = vpop.permute.xlu0 %839
      %v841 = vrot.slane %v840, 1
      %vm842 = vcmask 957440
      %v843 = vsel %vm842, %v840, %v841
      %s845 = scalar_lea.vmem [#allocation2], 67
      %846 = vst.msk [vmem:[%s845] ss:$8 sm:$0xf] %vm745, %v843
      %847 = vst.msk [vmem:[%s845] ss:$8 sm:$0xf0] %vm745, %v843
      %848 = vrot.lane.b32.xlu0 %v741, 116
      %v849 = vpop.permute.xlu0 %848
      %v850 = vrot.slane %v849, 1
      %vm851 = vcmask 949248
      %v852 = vsel %vm851, %v849, %v850
      %s854 = scalar_lea.vmem [#allocation2], 68
      %855 = vst.msk [vmem:[%s854] ss:$8 sm:$0xf] %vm745, %v852
      %856 = vst.msk [vmem:[%s854] ss:$8 sm:$0xf0] %vm745, %v852
      %857 = vrot.lane.b32.xlu0 %v741, 115
      %v858 = vpop.permute.xlu0 %857
      %v859 = vrot.slane %v858, 1
      %vm860 = vcmask 941056
      %v861 = vsel %vm860, %v858, %v859
      %s863 = scalar_lea.vmem [#allocation2], 69
      %864 = vst.msk [vmem:[%s863] ss:$8 sm:$0xf] %vm745, %v861
      %865 = vst.msk [vmem:[%s863] ss:$8 sm:$0xf0] %vm745, %v861
      %866 = vrot.lane.b32.xlu0 %v741, 114
      %v867 = vpop.permute.xlu0 %866
      %v868 = vrot.slane %v867, 1
      %vm869 = vcmask 932864
      %v870 = vsel %vm869, %v867, %v868
      %s872 = scalar_lea.vmem [#allocation2], 70
      %873 = vst.msk [vmem:[%s872] ss:$8 sm:$0xf] %vm745, %v870
      %874 = vst.msk [vmem:[%s872] ss:$8 sm:$0xf0] %vm745, %v870
      %875 = vrot.lane.b32.xlu0 %v741, 113
      %v876 = vpop.permute.xlu0 %875
      %v877 = vrot.slane %v876, 1
      %vm878 = vcmask 924672
      %v879 = vsel %vm878, %v876, %v877
      %s881 = scalar_lea.vmem [#allocation2], 71
      %882 = vst.msk [vmem:[%s881] ss:$8 sm:$0xf] %vm745, %v879
      %883 = vst.msk [vmem:[%s881] ss:$8 sm:$0xf0] %vm745, %v879
      %v884 = vld [vmem:[#allocation2] sm:$0xff]
      %v885 = vld [vmem:[#allocation2 + $0x8] sm:$0xff]
      %v886 = vld [vmem:[#allocation2 + $0x10] sm:$0xff]
      %v887 = vld [vmem:[#allocation2 + $0x18] sm:$0xff]
      %v888 = vld [vmem:[#allocation2 + $0x20] sm:$0xff]
      %v889 = vld [vmem:[#allocation2 + $0x28] sm:$0xff]
      %v890 = vld [vmem:[#allocation2 + $0x40] sm:$0xff]
      %v891 = vld [vmem:[#allocation2 + $0x48] sm:$0xff]
      %v892 = vld [vmem:[#allocation2 + $0x50] sm:$0xff]
      %v893 = vld [vmem:[#allocation2 + $0x58] sm:$0xff]
      %v894 = vld [vmem:[#allocation2 + $0x60] sm:$0xff]
      %v895 = vld [vmem:[#allocation2 + $0x68] sm:$0xff]
      %v896 = vpack.c.bf16 %v890, %v884
      %v897 = vpack.c.bf16 %v891, %v885
      %v898 = vpack.c.bf16 %v892, %v886
      %v899 = vpack.c.bf16 %v893, %v887
      %v900 = vpack.c.bf16 %v894, %v888
      %v901 = vpack.c.bf16 %v895, %v889
      %902 = vst [vmem:[#allocation3] sm:$0xff] %v896
      %903 = vst [vmem:[#allocation3 + $0x8] sm:$0xff] %v897
      %904 = vst [vmem:[#allocation3 + $0x10] sm:$0xff] %v898
      %905 = vst [vmem:[#allocation3 + $0x18] sm:$0xff] %v899
      %906 = vst [vmem:[#allocation3 + $0x20] sm:$0xff] %v900
      %907 = vst [vmem:[#allocation3 + $0x28] sm:$0xff] %v901
      %v908 = vld [vmem:[#allocation2] sm:$0xff]
      %v909 = vld [vmem:[#allocation2 + $0x8] sm:$0xff]
      %v910 = vld [vmem:[#allocation2 + $0x10] sm:$0xff]
      %v911 = vld [vmem:[#allocation2 + $0x18] sm:$0xff]
      %v912 = vld [vmem:[#allocation2 + $0x20] sm:$0xff]
      %v913 = vld [vmem:[#allocation2 + $0x28] sm:$0xff]
      %v914 = vld [vmem:[#allocation2 + $0x30] sm:$0xff]
      %v915 = vld [vmem:[#allocation2 + $0x40] sm:$0xff]
      %v916 = vld [vmem:[#allocation2 + $0x48] sm:$0xff]
      %v917 = vld [vmem:[#allocation2 + $0x50] sm:$0xff]
      %v918 = vld [vmem:[#allocation2 + $0x58] sm:$0xff]
      %v919 = vld [vmem:[#allocation2 + $0x60] sm:$0xff]
      %v920 = vld [vmem:[#allocation2 + $0x68] sm:$0xff]
      %v921 = vld [vmem:[#allocation2 + $0x70] sm:$0xff]
      %v922 = vpack.c.bf16 %v915, %v908
      %v923 = vpack.c.bf16 %v916, %v909
      %v924 = vpack.c.bf16 %v917, %v910
      %v925 = vpack.c.bf16 %v918, %v911
      %v926 = vpack.c.bf16 %v919, %v912
      %v927 = vpack.c.bf16 %v920, %v913
      %v928 = vpack.c.bf16 %v921, %v914
      %936 = vrot.lane.b32.xlu0 %v922, 112
      %v937 = vpop.permute.xlu0 %936
      %938 = vrot.lane.b32.xlu0 %v923, 112
      %v939 = vpop.permute.xlu0 %938
      %940 = vrot.lane.b32.xlu0 %v924, 112
      %v941 = vpop.permute.xlu0 %940
      %942 = vrot.lane.b32.xlu0 %v925, 112
      %v943 = vpop.permute.xlu0 %942
      %944 = vrot.lane.b32.xlu0 %v926, 112
      %v945 = vpop.permute.xlu0 %944
      %946 = vrot.lane.b32.xlu0 %v927, 112
      %v947 = vpop.permute.xlu0 %946
      %948 = vrot.lane.b32.xlu0 %v928, 112
      %v949 = vpop.permute.xlu0 %948
      %vm950 = vcmask 916480
      %v951 = vsel %vm950, %v937, %v939
      %v952 = vsel %vm950, %v939, %v941
      %v953 = vsel %vm950, %v941, %v943
      %v954 = vsel %vm950, %v943, %v945
      %v955 = vsel %vm950, %v945, %v947
      %v956 = vsel %vm950, %v947, %v949
      %963 = vst [vmem:[#allocation3 + $0x30] sm:$0xff] %v951
      %964 = vst [vmem:[#allocation3 + $0x38] sm:$0xff] %v952
      %965 = vst [vmem:[#allocation3 + $0x40] sm:$0xff] %v953
      %966 = vst [vmem:[#allocation3 + $0x48] sm:$0xff] %v954
      %967 = vst [vmem:[#allocation3 + $0x50] sm:$0xff] %v955
      %968 = vst [vmem:[#allocation3 + $0x58] sm:$0xff] %v956
      %v969 = vld [vmem:[#allocation2] sm:$0xff]
      %v970 = vld [vmem:[#allocation2 + $0x8] sm:$0xff]
      %v971 = vld [vmem:[#allocation2 + $0x10] sm:$0xff]
      %v972 = vld [vmem:[#allocation2 + $0x18] sm:$0xff]
      %v973 = vld [vmem:[#allocation2 + $0x20] sm:$0xff]
      %v974 = vld [vmem:[#allocation2 + $0x28] sm:$0xff]
      %v975 = vld [vmem:[#allocation2 + $0x30] sm:$0xff]
      %v976 = vld [vmem:[#allocation2 + $0x40] sm:$0xff]
      %v977 = vld [vmem:[#allocation2 + $0x48] sm:$0xff]
      %v978 = vld [vmem:[#allocation2 + $0x50] sm:$0xff]
      %v979 = vld [vmem:[#allocation2 + $0x58] sm:$0xff]
      %v980 = vld [vmem:[#allocation2 + $0x60] sm:$0xff]
      %v981 = vld [vmem:[#allocation2 + $0x68] sm:$0xff]
      %v982 = vld [vmem:[#allocation2 + $0x70] sm:$0xff]
      %v983 = vpack.c.bf16 %v976, %v969
      %v984 = vpack.c.bf16 %v977, %v970
      %v985 = vpack.c.bf16 %v978, %v971
      %v986 = vpack.c.bf16 %v979, %v972
      %v987 = vpack.c.bf16 %v980, %v973
      %v988 = vpack.c.bf16 %v981, %v974
      %v989 = vpack.c.bf16 %v982, %v975
      %997 = vrot.lane.b32.xlu0 %v983, 96
      %v998 = vpop.permute.xlu0 %997
      %999 = vrot.lane.b32.xlu0 %v984, 96
      %v1000 = vpop.permute.xlu0 %999
      %1001 = vrot.lane.b32.xlu0 %v985, 96
      %v1002 = vpop.permute.xlu0 %1001
      %1003 = vrot.lane.b32.xlu0 %v986, 96
      %v1004 = vpop.permute.xlu0 %1003
      %1005 = vrot.lane.b32.xlu0 %v987, 96
      %v1006 = vpop.permute.xlu0 %1005
      %1007 = vrot.lane.b32.xlu0 %v988, 96
      %v1008 = vpop.permute.xlu0 %1007
      %1009 = vrot.lane.b32.xlu0 %v989, 96
      %v1010 = vpop.permute.xlu0 %1009
      %vm1011 = vcmask 785408
      %v1012 = vsel %vm1011, %v998, %v1000
      %v1013 = vsel %vm1011, %v1000, %v1002
      %v1014 = vsel %vm1011, %v1002, %v1004
      %v1015 = vsel %vm1011, %v1004, %v1006
      %v1016 = vsel %vm1011, %v1006, %v1008
      %v1017 = vsel %vm1011, %v1008, %v1010
      %1024 = vst [vmem:[#allocation3 + $0x60] sm:$0xff] %v1012
      %1025 = vst [vmem:[#allocation3 + $0x68] sm:$0xff] %v1013
      %1026 = vst [vmem:[#allocation3 + $0x70] sm:$0xff] %v1014
      %1027 = vst [vmem:[#allocation3 + $0x78] sm:$0xff] %v1015
      %1028 = vst [vmem:[#allocation3 + $0x80] sm:$0xff] %v1016
      %1029 = vst [vmem:[#allocation3 + $0x88] sm:$0xff] %v1017
      %v1030 = vld [vmem:[#allocation2] sm:$0xff]
      %v1031 = vld [vmem:[#allocation2 + $0x8] sm:$0xff]
      %v1032 = vld [vmem:[#allocation2 + $0x10] sm:$0xff]
      %v1033 = vld [vmem:[#allocation2 + $0x18] sm:$0xff]
      %v1034 = vld [vmem:[#allocation2 + $0x20] sm:$0xff]
      %v1035 = vld [vmem:[#allocation2 + $0x28] sm:$0xff]
      %v1036 = vld [vmem:[#allocation2 + $0x30] sm:$0xff]
      %v1037 = vld [vmem:[#allocation2 + $0x40] sm:$0xff]
      %v1038 = vld [vmem:[#allocation2 + $0x48] sm:$0xff]
      %v1039 = vld [vmem:[#allocation2 + $0x50] sm:$0xff]
      %v1040 = vld [vmem:[#allocation2 + $0x58] sm:$0xff]
      %v1041 = vld [vmem:[#allocation2 + $0x60] sm:$0xff]
      %v1042 = vld [vmem:[#allocation2 + $0x68] sm:$0xff]
      %v1043 = vld [vmem:[#allocation2 + $0x70] sm:$0xff]
      %v1044 = vpack.c.bf16 %v1037, %v1030
      %v1045 = vpack.c.bf16 %v1038, %v1031
      %v1046 = vpack.c.bf16 %v1039, %v1032
      %v1047 = vpack.c.bf16 %v1040, %v1033
      %v1048 = vpack.c.bf16 %v1041, %v1034
      %v1049 = vpack.c.bf16 %v1042, %v1035
      %v1050 = vpack.c.bf16 %v1043, %v1036
      %1058 = vrot.lane.b32.xlu0 %v1044, 80
      %v1059 = vpop.permute.xlu0 %1058
      %1060 = vrot.lane.b32.xlu0 %v1045, 80
      %v1061 = vpop.permute.xlu0 %1060
      %1062 = vrot.lane.b32.xlu0 %v1046, 80
      %v1063 = vpop.permute.xlu0 %1062
      %1064 = vrot.lane.b32.xlu0 %v1047, 80
      %v1065 = vpop.permute.xlu0 %1064
      %1066 = vrot.lane.b32.xlu0 %v1048, 80
      %v1067 = vpop.permute.xlu0 %1066
      %1068 = vrot.lane.b32.xlu0 %v1049, 80
      %v1069 = vpop.permute.xlu0 %1068
      %1070 = vrot.lane.b32.xlu0 %v1050, 80
      %v1071 = vpop.permute.xlu0 %1070
      %vm1072 = vcmask 654336
      %v1073 = vsel %vm1072, %v1059, %v1061
      %v1074 = vsel %vm1072, %v1061, %v1063
      %v1075 = vsel %vm1072, %v1063, %v1065
      %v1076 = vsel %vm1072, %v1065, %v1067
      %v1077 = vsel %vm1072, %v1067, %v1069
      %v1078 = vsel %vm1072, %v1069, %v1071
      %1085 = vst [vmem:[#allocation3 + $0x90] sm:$0xff] %v1073
      %1086 = vst [vmem:[#allocation3 + $0x98] sm:$0xff] %v1074
      %1087 = vst [vmem:[#allocation3 + $0xa0] sm:$0xff] %v1075
      %1088 = vst [vmem:[#allocation3 + $0xa8] sm:$0xff] %v1076
      %1089 = vst [vmem:[#allocation3 + $0xb0] sm:$0xff] %v1077
      %1090 = vst [vmem:[#allocation3 + $0xb8] sm:$0xff] %v1078
      %v1091 = vld [vmem:[#allocation2] sm:$0xff]
      %v1092 = vld [vmem:[#allocation2 + $0x8] sm:$0xff]
      %v1093 = vld [vmem:[#allocation2 + $0x10] sm:$0xff]
      %v1094 = vld [vmem:[#allocation2 + $0x18] sm:$0xff]
      %v1095 = vld [vmem:[#allocation2 + $0x20] sm:$0xff]
      %v1096 = vld [vmem:[#allocation2 + $0x28] sm:$0xff]
      %v1097 = vld [vmem:[#allocation2 + $0x30] sm:$0xff]
      %v1098 = vld [vmem:[#allocation2 + $0x40] sm:$0xff]
      %v1099 = vld [vmem:[#allocation2 + $0x48] sm:$0xff]
      %v1100 = vld [vmem:[#allocation2 + $0x50] sm:$0xff]
      %v1101 = vld [vmem:[#allocation2 + $0x58] sm:$0xff]
      %v1102 = vld [vmem:[#allocation2 + $0x60] sm:$0xff]
      %v1103 = vld [vmem:[#allocation2 + $0x68] sm:$0xff]
      %v1104 = vld [vmem:[#allocation2 + $0x70] sm:$0xff]
      %v1105 = vpack.c.bf16 %v1098, %v1091
      %v1106 = vpack.c.bf16 %v1099, %v1092
      %v1107 = vpack.c.bf16 %v1100, %v1093
      %v1108 = vpack.c.bf16 %v1101, %v1094
      %v1109 = vpack.c.bf16 %v1102, %v1095
      %v1110 = vpack.c.bf16 %v1103, %v1096
      %v1111 = vpack.c.bf16 %v1104, %v1097
      %1119 = vrot.lane.b32.xlu0 %v1105, 64
      %v1120 = vpop.permute.xlu0 %1119
      %1121 = vrot.lane.b32.xlu0 %v1106, 64
      %v1122 = vpop.permute.xlu0 %1121
      %1123 = vrot.lane.b32.xlu0 %v1107, 64
      %v1124 = vpop.permute.xlu0 %1123
      %1125 = vrot.lane.b32.xlu0 %v1108, 64
      %v1126 = vpop.permute.xlu0 %1125
      %1127 = vrot.lane.b32.xlu0 %v1109, 64
      %v1128 = vpop.permute.xlu0 %1127
      %1129 = vrot.lane.b32.xlu0 %v1110, 64
      %v1130 = vpop.permute.xlu0 %1129
      %1131 = vrot.lane.b32.xlu0 %v1111, 64
      %v1132 = vpop.permute.xlu0 %1131
      %vm1133 = vcmask 523264
      %v1134 = vsel %vm1133, %v1120, %v1122
      %v1135 = vsel %vm1133, %v1122, %v1124
      %v1136 = vsel %vm1133, %v1124, %v1126
      %v1137 = vsel %vm1133, %v1126, %v1128
      %v1138 = vsel %vm1133, %v1128, %v1130
      %v1139 = vsel %vm1133, %v1130, %v1132
      %1146 = vst [vmem:[#allocation3 + $0xc0] sm:$0xff] %v1134
      %1147 = vst [vmem:[#allocation3 + $0xc8] sm:$0xff] %v1135
      %1148 = vst [vmem:[#allocation3 + $0xd0] sm:$0xff] %v1136
      %1149 = vst [vmem:[#allocation3 + $0xd8] sm:$0xff] %v1137
      %1150 = vst [vmem:[#allocation3 + $0xe0] sm:$0xff] %v1138
      %1151 = vst [vmem:[#allocation3 + $0xe8] sm:$0xff] %v1139
      %v1152 = vld [vmem:[#allocation2] sm:$0xff]
      %v1153 = vld [vmem:[#allocation2 + $0x8] sm:$0xff]
      %v1154 = vld [vmem:[#allocation2 + $0x10] sm:$0xff]
      %v1155 = vld [vmem:[#allocation2 + $0x18] sm:$0xff]
      %v1156 = vld [vmem:[#allocation2 + $0x20] sm:$0xff]
      %v1157 = vld [vmem:[#allocation2 + $0x28] sm:$0xff]
      %v1158 = vld [vmem:[#allocation2 + $0x30] sm:$0xff]
      %v1159 = vld [vmem:[#allocation2 + $0x40] sm:$0xff]
      %v1160 = vld [vmem:[#allocation2 + $0x48] sm:$0xff]
      %v1161 = vld [vmem:[#allocation2 + $0x50] sm:$0xff]
      %v1162 = vld [vmem:[#allocation2 + $0x58] sm:$0xff]
      %v1163 = vld [vmem:[#allocation2 + $0x60] sm:$0xff]
      %v1164 = vld [vmem:[#allocation2 + $0x68] sm:$0xff]
      %v1165 = vld [vmem:[#allocation2 + $0x70] sm:$0xff]
      %v1166 = vpack.c.bf16 %v1159, %v1152
      %v1167 = vpack.c.bf16 %v1160, %v1153
      %v1168 = vpack.c.bf16 %v1161, %v1154
      %v1169 = vpack.c.bf16 %v1162, %v1155
      %v1170 = vpack.c.bf16 %v1163, %v1156
      %v1171 = vpack.c.bf16 %v1164, %v1157
      %v1172 = vpack.c.bf16 %v1165, %v1158
      %1180 = vrot.lane.b32.xlu0 %v1166, 48
      %v1181 = vpop.permute.xlu0 %1180
      %1182 = vrot.lane.b32.xlu0 %v1167, 48
      %v1183 = vpop.permute.xlu0 %1182
      %1184 = vrot.lane.b32.xlu0 %v1168, 48
      %v1185 = vpop.permute.xlu0 %1184
      %1186 = vrot.lane.b32.xlu0 %v1169, 48
      %v1187 = vpop.permute.xlu0 %1186
      %1188 = vrot.lane.b32.xlu0 %v1170, 48
      %v1189 = vpop.permute.xlu0 %1188
      %1190 = vrot.lane.b32.xlu0 %v1171, 48
      %v1191 = vpop.permute.xlu0 %1190
      %1192 = vrot.lane.b32.xlu0 %v1172, 48
      %v1193 = vpop.permute.xlu0 %1192
      %vm1194 = vcmask 392192
      %v1195 = vsel %vm1194, %v1181, %v1183
      %v1196 = vsel %vm1194, %v1183, %v1185
      %v1197 = vsel %vm1194, %v1185, %v1187
      %v1198 = vsel %vm1194, %v1187, %v1189
      %v1199 = vsel %vm1194, %v1189, %v1191
      %v1200 = vsel %vm1194, %v1191, %v1193
      %1207 = vst [vmem:[#allocation3 + $0xf0] sm:$0xff] %v1195
      %1208 = vst [vmem:[#allocation3 + $0xf8] sm:$0xff] %v1196
      %1209 = vst [vmem:[#allocation3 + $0x100] sm:$0xff] %v1197
      %1210 = vst [vmem:[#allocation3 + $0x108] sm:$0xff] %v1198
      %1211 = vst [vmem:[#allocation3 + $0x110] sm:$0xff] %v1199
      %1212 = vst [vmem:[#allocation3 + $0x118] sm:$0xff] %v1200
      %v1213 = vld [vmem:[#allocation2] sm:$0xff]
      %v1214 = vld [vmem:[#allocation2 + $0x8] sm:$0xff]
      %v1215 = vld [vmem:[#allocation2 + $0x10] sm:$0xff]
      %v1216 = vld [vmem:[#allocation2 + $0x18] sm:$0xff]
      %v1217 = vld [vmem:[#allocation2 + $0x20] sm:$0xff]
      %v1218 = vld [vmem:[#allocation2 + $0x28] sm:$0xff]
      %v1219 = vld [vmem:[#allocation2 + $0x30] sm:$0xff]
      %v1220 = vld [vmem:[#allocation2 + $0x40] sm:$0xff]
      %v1221 = vld [vmem:[#allocation2 + $0x48] sm:$0xff]
      %v1222 = vld [vmem:[#allocation2 + $0x50] sm:$0xff]
      %v1223 = vld [vmem:[#allocation2 + $0x58] sm:$0xff]
      %v1224 = vld [vmem:[#allocation2 + $0x60] sm:$0xff]
      %v1225 = vld [vmem:[#allocation2 + $0x68] sm:$0xff]
      %v1226 = vld [vmem:[#allocation2 + $0x70] sm:$0xff]
      %v1227 = vpack.c.bf16 %v1220, %v1213
      %v1228 = vpack.c.bf16 %v1221, %v1214
      %v1229 = vpack.c.bf16 %v1222, %v1215
      %v1230 = vpack.c.bf16 %v1223, %v1216
      %v1231 = vpack.c.bf16 %v1224, %v1217
      %v1232 = vpack.c.bf16 %v1225, %v1218
      %v1233 = vpack.c.bf16 %v1226, %v1219
      %1241 = vrot.lane.b32.xlu0 %v1227, 32
      %v1242 = vpop.permute.xlu0 %1241
      %1243 = vrot.lane.b32.xlu0 %v1228, 32
      %v1244 = vpop.permute.xlu0 %1243
      %1245 = vrot.lane.b32.xlu0 %v1229, 32
      %v1246 = vpop.permute.xlu0 %1245
      %1247 = vrot.lane.b32.xlu0 %v1230, 32
      %v1248 = vpop.permute.xlu0 %1247
      %1249 = vrot.lane.b32.xlu0 %v1231, 32
      %v1250 = vpop.permute.xlu0 %1249
      %1251 = vrot.lane.b32.xlu0 %v1232, 32
      %v1252 = vpop.permute.xlu0 %1251
      %1253 = vrot.lane.b32.xlu0 %v1233, 32
      %v1254 = vpop.permute.xlu0 %1253
      %vm1255 = vcmask 261120
      %v1256 = vsel %vm1255, %v1242, %v1244
      %v1257 = vsel %vm1255, %v1244, %v1246
      %v1258 = vsel %vm1255, %v1246, %v1248
      %v1259 = vsel %vm1255, %v1248, %v1250
      %v1260 = vsel %vm1255, %v1250, %v1252
      %v1261 = vsel %vm1255, %v1252, %v1254
      %1268 = vst [vmem:[#allocation3 + $0x120] sm:$0xff] %v1256
      %1269 = vst [vmem:[#allocation3 + $0x128] sm:$0xff] %v1257
      %1270 = vst [vmem:[#allocation3 + $0x130] sm:$0xff] %v1258
      %1271 = vst [vmem:[#allocation3 + $0x138] sm:$0xff] %v1259
      %1272 = vst [vmem:[#allocation3 + $0x140] sm:$0xff] %v1260
      %1273 = vst [vmem:[#allocation3 + $0x148] sm:$0xff] %v1261
      %v1274 = vld [vmem:[#allocation2] sm:$0xff]
      %v1275 = vld [vmem:[#allocation2 + $0x8] sm:$0xff]
      %v1276 = vld [vmem:[#allocation2 + $0x10] sm:$0xff]
      %v1277 = vld [vmem:[#allocation2 + $0x18] sm:$0xff]
      %v1278 = vld [vmem:[#allocation2 + $0x20] sm:$0xff]
      %v1279 = vld [vmem:[#allocation2 + $0x28] sm:$0xff]
      %v1280 = vld [vmem:[#allocation2 + $0x30] sm:$0xff]
      %v1281 = vld [vmem:[#allocation2 + $0x40] sm:$0xff]
      %v1282 = vld [vmem:[#allocation2 + $0x48] sm:$0xff]
      %v1283 = vld [vmem:[#allocation2 + $0x50] sm:$0xff]
      %v1284 = vld [vmem:[#allocation2 + $0x58] sm:$0xff]
      %v1285 = vld [vmem:[#allocation2 + $0x60] sm:$0xff]
      %v1286 = vld [vmem:[#allocation2 + $0x68] sm:$0xff]
      %v1287 = vld [vmem:[#allocation2 + $0x70] sm:$0xff]
      %v1288 = vpack.c.bf16 %v1281, %v1274
      %v1289 = vpack.c.bf16 %v1282, %v1275
      %v1290 = vpack.c.bf16 %v1283, %v1276
      %v1291 = vpack.c.bf16 %v1284, %v1277
      %v1292 = vpack.c.bf16 %v1285, %v1278
      %v1293 = vpack.c.bf16 %v1286, %v1279
      %v1294 = vpack.c.bf16 %v1287, %v1280
      %1302 = vrot.lane.b32.xlu0 %v1288, 16
      %v1303 = vpop.permute.xlu0 %1302
      %1304 = vrot.lane.b32.xlu0 %v1289, 16
      %v1305 = vpop.permute.xlu0 %1304
      %1306 = vrot.lane.b32.xlu0 %v1290, 16
      %v1307 = vpop.permute.xlu0 %1306
      %1308 = vrot.lane.b32.xlu0 %v1291, 16
      %v1309 = vpop.permute.xlu0 %1308
      %1310 = vrot.lane.b32.xlu0 %v1292, 16
      %v1311 = vpop.permute.xlu0 %1310
      %1312 = vrot.lane.b32.xlu0 %v1293, 16
      %v1313 = vpop.permute.xlu0 %1312
      %1314 = vrot.lane.b32.xlu0 %v1294, 16
      %v1315 = vpop.permute.xlu0 %1314
      %vm1316 = vcmask 130048
      %v1317 = vsel %vm1316, %v1303, %v1305
      %v1318 = vsel %vm1316, %v1305, %v1307
      %v1319 = vsel %vm1316, %v1307, %v1309
      %v1320 = vsel %vm1316, %v1309, %v1311
      %v1321 = vsel %vm1316, %v1311, %v1313
      %v1322 = vsel %vm1316, %v1313, %v1315
      %1329 = vst [vmem:[#allocation3 + $0x150] sm:$0xff] %v1317
      %1330 = vst [vmem:[#allocation3 + $0x158] sm:$0xff] %v1318
      %1331 = vst [vmem:[#allocation3 + $0x160] sm:$0xff] %v1319
      %1332 = vst [vmem:[#allocation3 + $0x168] sm:$0xff] %v1320
      %1333 = vst [vmem:[#allocation3 + $0x170] sm:$0xff] %v1321
      %1334 = vst [vmem:[#allocation3 + $0x178] sm:$0xff] %v1322
      %v1335 = vld [vmem:[#allocation2 + $0x8] sm:$0xff]
      %v1336 = vld [vmem:[#allocation2 + $0x10] sm:$0xff]
      %v1337 = vld [vmem:[#allocation2 + $0x18] sm:$0xff]
      %v1338 = vld [vmem:[#allocation2 + $0x20] sm:$0xff]
      %v1339 = vld [vmem:[#allocation2 + $0x28] sm:$0xff]
      %v1340 = vld [vmem:[#allocation2 + $0x30] sm:$0xff]
      %v1341 = vld [vmem:[#allocation2 + $0x48] sm:$0xff]
      %v1342 = vld [vmem:[#allocation2 + $0x50] sm:$0xff]
      %v1343 = vld [vmem:[#allocation2 + $0x58] sm:$0xff]
      %v1344 = vld [vmem:[#allocation2 + $0x60] sm:$0xff]
      %v1345 = vld [vmem:[#allocation2 + $0x68] sm:$0xff]
      %v1346 = vld [vmem:[#allocation2 + $0x70] sm:$0xff]
      %v1347 = vpack.c.bf16 %v1341, %v1335
      %v1348 = vpack.c.bf16 %v1342, %v1336
      %v1349 = vpack.c.bf16 %v1343, %v1337
      %v1350 = vpack.c.bf16 %v1344, %v1338
      %v1351 = vpack.c.bf16 %v1345, %v1339
      %v1352 = vpack.c.bf16 %v1346, %v1340
      %1353 = vst [vmem:[#allocation3 + $0x180] sm:$0xff] %v1347
      %1354 = vst [vmem:[#allocation3 + $0x188] sm:$0xff] %v1348
      %1355 = vst [vmem:[#allocation3 + $0x190] sm:$0xff] %v1349
      %1356 = vst [vmem:[#allocation3 + $0x198] sm:$0xff] %v1350
      %1357 = vst [vmem:[#allocation3 + $0x1a0] sm:$0xff] %v1351
      %1358 = vst [vmem:[#allocation3 + $0x1a8] sm:$0xff] %v1352
      %v1359 = vld [vmem:[#allocation2 + $0x8] sm:$0xff]
      %v1360 = vld [vmem:[#allocation2 + $0x10] sm:$0xff]
      %v1361 = vld [vmem:[#allocation2 + $0x18] sm:$0xff]
      %v1362 = vld [vmem:[#allocation2 + $0x20] sm:$0xff]
      %v1363 = vld [vmem:[#allocation2 + $0x28] sm:$0xff]
      %v1364 = vld [vmem:[#allocation2 + $0x30] sm:$0xff]
      %v1365 = vld [vmem:[#allocation2 + $0x38] sm:$0xff]
      %v1366 = vld [vmem:[#allocation2 + $0x48] sm:$0xff]
      %v1367 = vld [vmem:[#allocation2 + $0x50] sm:$0xff]
      %v1368 = vld [vmem:[#allocation2 + $0x58] sm:$0xff]
      %v1369 = vld [vmem:[#allocation2 + $0x60] sm:$0xff]
      %v1370 = vld [vmem:[#allocation2 + $0x68] sm:$0xff]
      %v1371 = vld [vmem:[#allocation2 + $0x70] sm:$0xff]
      %v1372 = vld [vmem:[#allocation2 + $0x78] sm:$0xff]
      %v1373 = vpack.c.bf16 %v1366, %v1359
      %v1374 = vpack.c.bf16 %v1367, %v1360
      %v1375 = vpack.c.bf16 %v1368, %v1361
      %v1376 = vpack.c.bf16 %v1369, %v1362
      %v1377 = vpack.c.bf16 %v1370, %v1363
      %v1378 = vpack.c.bf16 %v1371, %v1364
      %v1379 = vpack.c.bf16 %v1372, %v1365
      %1387 = vrot.lane.b32.xlu0 %v1373, 112
      %v1388 = vpop.permute.xlu0 %1387
      %1389 = vrot.lane.b32.xlu0 %v1374, 112
      %v1390 = vpop.permute.xlu0 %1389
      %1391 = vrot.lane.b32.xlu0 %v1375, 112
      %v1392 = vpop.permute.xlu0 %1391
      %1393 = vrot.lane.b32.xlu0 %v1376, 112
      %v1394 = vpop.permute.xlu0 %1393
      %1395 = vrot.lane.b32.xlu0 %v1377, 112
      %v1396 = vpop.permute.xlu0 %1395
      %1397 = vrot.lane.b32.xlu0 %v1378, 112
      %v1398 = vpop.permute.xlu0 %1397
      %1399 = vrot.lane.b32.xlu0 %v1379, 112
      %v1400 = vpop.permute.xlu0 %1399
      %v1401 = vsel %vm950, %v1388, %v1390
      %v1402 = vsel %vm950, %v1390, %v1392
      %v1403 = vsel %vm950, %v1392, %v1394
      %v1404 = vsel %vm950, %v1394, %v1396
      %v1405 = vsel %vm950, %v1396, %v1398
      %v1406 = vsel %vm950, %v1398, %v1400
      %1413 = vst [vmem:[#allocation3 + $0x1b0] sm:$0xff] %v1401
      %1414 = vst [vmem:[#allocation3 + $0x1b8] sm:$0xff] %v1402
      %1415 = vst [vmem:[#allocation3 + $0x1c0] sm:$0xff] %v1403
      %1416 = vst [vmem:[#allocation3 + $0x1c8] sm:$0xff] %v1404
      %1417 = vst [vmem:[#allocation3 + $0x1d0] sm:$0xff] %v1405
      %1418 = vst [vmem:[#allocation3 + $0x1d8] sm:$0xff] %v1406
      %v1419 = vld [vmem:[#allocation2 + $0x8] sm:$0xff]
      %v1420 = vld [vmem:[#allocation2 + $0x10] sm:$0xff]
      %v1421 = vld [vmem:[#allocation2 + $0x18] sm:$0xff]
      %v1422 = vld [vmem:[#allocation2 + $0x20] sm:$0xff]
      %v1423 = vld [vmem:[#allocation2 + $0x28] sm:$0xff]
      %v1424 = vld [vmem:[#allocation2 + $0x30] sm:$0xff]
      %v1425 = vld [vmem:[#allocation2 + $0x38] sm:$0xff]
      %v1426 = vld [vmem:[#allocation2 + $0x48] sm:$0xff]
      %v1427 = vld [vmem:[#allocation2 + $0x50] sm:$0xff]
      %v1428 = vld [vmem:[#allocation2 + $0x58] sm:$0xff]
      %v1429 = vld [vmem:[#allocation2 + $0x60] sm:$0xff]
      %v1430 = vld [vmem:[#allocation2 + $0x68] sm:$0xff]
      %v1431 = vld [vmem:[#allocation2 + $0x70] sm:$0xff]
      %v1432 = vld [vmem:[#allocation2 + $0x78] sm:$0xff]
      %v1433 = vpack.c.bf16 %v1426, %v1419
      %v1434 = vpack.c.bf16 %v1427, %v1420
      %v1435 = vpack.c.bf16 %v1428, %v1421
      %v1436 = vpack.c.bf16 %v1429, %v1422
      %v1437 = vpack.c.bf16 %v1430, %v1423
      %v1438 = vpack.c.bf16 %v1431, %v1424
      %v1439 = vpack.c.bf16 %v1432, %v1425
      %1447 = vrot.lane.b32.xlu0 %v1433, 96
      %v1448 = vpop.permute.xlu0 %1447
      %1449 = vrot.lane.b32.xlu0 %v1434, 96
      %v1450 = vpop.permute.xlu0 %1449
      %1451 = vrot.lane.b32.xlu0 %v1435, 96
      %v1452 = vpop.permute.xlu0 %1451
      %1453 = vrot.lane.b32.xlu0 %v1436, 96
      %v1454 = vpop.permute.xlu0 %1453
      %1455 = vrot.lane.b32.xlu0 %v1437, 96
      %v1456 = vpop.permute.xlu0 %1455
      %1457 = vrot.lane.b32.xlu0 %v1438, 96
      %v1458 = vpop.permute.xlu0 %1457
      %1459 = vrot.lane.b32.xlu0 %v1439, 96
      %v1460 = vpop.permute.xlu0 %1459
      %v1461 = vsel %vm1011, %v1448, %v1450
      %v1462 = vsel %vm1011, %v1450, %v1452
      %v1463 = vsel %vm1011, %v1452, %v1454
      %v1464 = vsel %vm1011, %v1454, %v1456
      %v1465 = vsel %vm1011, %v1456, %v1458
      %v1466 = vsel %vm1011, %v1458, %v1460
      %1473 = vst [vmem:[#allocation3 + $0x1e0] sm:$0xff] %v1461
      %1474 = vst [vmem:[#allocation3 + $0x1e8] sm:$0xff] %v1462
      %1475 = vst [vmem:[#allocation3 + $0x1f0] sm:$0xff] %v1463
      %1476 = vst [vmem:[#allocation3 + $0x1f8] sm:$0xff] %v1464
      %1477 = vst [vmem:[#allocation3 + $0x200] sm:$0xff] %v1465
      %1478 = vst [vmem:[#allocation3 + $0x208] sm:$0xff] %v1466
      %v1479 = vld [vmem:[#allocation2 + $0x8] sm:$0xff]
      %v1480 = vld [vmem:[#allocation2 + $0x10] sm:$0xff]
      %v1481 = vld [vmem:[#allocation2 + $0x18] sm:$0xff]
      %v1482 = vld [vmem:[#allocation2 + $0x20] sm:$0xff]
      %v1483 = vld [vmem:[#allocation2 + $0x28] sm:$0xff]
      %v1484 = vld [vmem:[#allocation2 + $0x30] sm:$0xff]
      %v1485 = vld [vmem:[#allocation2 + $0x38] sm:$0xff]
      %v1486 = vld [vmem:[#allocation2 + $0x48] sm:$0xff]
      %v1487 = vld [vmem:[#allocation2 + $0x50] sm:$0xff]
      %v1488 = vld [vmem:[#allocation2 + $0x58] sm:$0xff]
      %v1489 = vld [vmem:[#allocation2 + $0x60] sm:$0xff]
      %v1490 = vld [vmem:[#allocation2 + $0x68] sm:$0xff]
      %v1491 = vld [vmem:[#allocation2 + $0x70] sm:$0xff]
      %v1492 = vld [vmem:[#allocation2 + $0x78] sm:$0xff]
      %v1493 = vpack.c.bf16 %v1486, %v1479
      %v1494 = vpack.c.bf16 %v1487, %v1480
      %v1495 = vpack.c.bf16 %v1488, %v1481
      %v1496 = vpack.c.bf16 %v1489, %v1482
      %v1497 = vpack.c.bf16 %v1490, %v1483
      %v1498 = vpack.c.bf16 %v1491, %v1484
      %v1499 = vpack.c.bf16 %v1492, %v1485
      %1507 = vrot.lane.b32.xlu0 %v1493, 80
      %v1508 = vpop.permute.xlu0 %1507
      %1509 = vrot.lane.b32.xlu0 %v1494, 80
      %v1510 = vpop.permute.xlu0 %1509
      %1511 = vrot.lane.b32.xlu0 %v1495, 80
      %v1512 = vpop.permute.xlu0 %1511
      %1513 = vrot.lane.b32.xlu0 %v1496, 80
      %v1514 = vpop.permute.xlu0 %1513
      %1515 = vrot.lane.b32.xlu0 %v1497, 80
      %v1516 = vpop.permute.xlu0 %1515
      %1517 = vrot.lane.b32.xlu0 %v1498, 80
      %v1518 = vpop.permute.xlu0 %1517
      %1519 = vrot.lane.b32.xlu0 %v1499, 80
      %v1520 = vpop.permute.xlu0 %1519
      %v1521 = vsel %vm1072, %v1508, %v1510
      %v1522 = vsel %vm1072, %v1510, %v1512
      %v1523 = vsel %vm1072, %v1512, %v1514
      %v1524 = vsel %vm1072, %v1514, %v1516
      %v1525 = vsel %vm1072, %v1516, %v1518
      %v1526 = vsel %vm1072, %v1518, %v1520
      %1533 = vst [vmem:[#allocation3 + $0x210] sm:$0xff] %v1521
      %1534 = vst [vmem:[#allocation3 + $0x218] sm:$0xff] %v1522
      %1535 = vst [vmem:[#allocation3 + $0x220] sm:$0xff] %v1523
      %1536 = vst [vmem:[#allocation3 + $0x228] sm:$0xff] %v1524
      %1537 = vst [vmem:[#allocation3 + $0x230] sm:$0xff] %v1525
      %1538 = vst [vmem:[#allocation3 + $0x238] sm:$0xff] %v1526
      %v1539 = vld [vmem:[#allocation2 + $0x8] sm:$0xff]
      %v1540 = vld [vmem:[#allocation2 + $0x10] sm:$0xff]
      %v1541 = vld [vmem:[#allocation2 + $0x18] sm:$0xff]
      %v1542 = vld [vmem:[#allocation2 + $0x20] sm:$0xff]
      %v1543 = vld [vmem:[#allocation2 + $0x28] sm:$0xff]
      %v1544 = vld [vmem:[#allocation2 + $0x30] sm:$0xff]
      %v1545 = vld [vmem:[#allocation2 + $0x38] sm:$0xff]
      %v1546 = vld [vmem:[#allocation2 + $0x48] sm:$0xff]
      %v1547 = vld [vmem:[#allocation2 + $0x50] sm:$0xff]
      %v1548 = vld [vmem:[#allocation2 + $0x58] sm:$0xff]
      %v1549 = vld [vmem:[#allocation2 + $0x60] sm:$0xff]
      %v1550 = vld [vmem:[#allocation2 + $0x68] sm:$0xff]
      %v1551 = vld [vmem:[#allocation2 + $0x70] sm:$0xff]
      %v1552 = vld [vmem:[#allocation2 + $0x78] sm:$0xff]
      %v1553 = vpack.c.bf16 %v1546, %v1539
      %v1554 = vpack.c.bf16 %v1547, %v1540
      %v1555 = vpack.c.bf16 %v1548, %v1541
      %v1556 = vpack.c.bf16 %v1549, %v1542
      %v1557 = vpack.c.bf16 %v1550, %v1543
      %v1558 = vpack.c.bf16 %v1551, %v1544
      %v1559 = vpack.c.bf16 %v1552, %v1545
      %1567 = vrot.lane.b32.xlu0 %v1553, 64
      %v1568 = vpop.permute.xlu0 %1567
      %1569 = vrot.lane.b32.xlu0 %v1554, 64
      %v1570 = vpop.permute.xlu0 %1569
      %1571 = vrot.lane.b32.xlu0 %v1555, 64
      %v1572 = vpop.permute.xlu0 %1571
      %1573 = vrot.lane.b32.xlu0 %v1556, 64
      %v1574 = vpop.permute.xlu0 %1573
      %1575 = vrot.lane.b32.xlu0 %v1557, 64
      %v1576 = vpop.permute.xlu0 %1575
      %1577 = vrot.lane.b32.xlu0 %v1558, 64
      %v1578 = vpop.permute.xlu0 %1577
      %1579 = vrot.lane.b32.xlu0 %v1559, 64
      %v1580 = vpop.permute.xlu0 %1579
      %v1581 = vsel %vm1133, %v1568, %v1570
      %v1582 = vsel %vm1133, %v1570, %v1572
      %v1583 = vsel %vm1133, %v1572, %v1574
      %v1584 = vsel %vm1133, %v1574, %v1576
      %v1585 = vsel %vm1133, %v1576, %v1578
      %v1586 = vsel %vm1133, %v1578, %v1580
      %1593 = vst [vmem:[#allocation3 + $0x240] sm:$0xff] %v1581
      %1594 = vst [vmem:[#allocation3 + $0x248] sm:$0xff] %v1582
      %1595 = vst [vmem:[#allocation3 + $0x250] sm:$0xff] %v1583
      %1596 = vst [vmem:[#allocation3 + $0x258] sm:$0xff] %v1584
      %1597 = vst [vmem:[#allocation3 + $0x260] sm:$0xff] %v1585
      %1598 = vst [vmem:[#allocation3 + $0x268] sm:$0xff] %v1586
      %v1599 = vld [vmem:[#allocation2 + $0x8] sm:$0xff]
      %v1600 = vld [vmem:[#allocation2 + $0x10] sm:$0xff]
      %v1601 = vld [vmem:[#allocation2 + $0x18] sm:$0xff]
      %v1602 = vld [vmem:[#allocation2 + $0x20] sm:$0xff]
      %v1603 = vld [vmem:[#allocation2 + $0x28] sm:$0xff]
      %v1604 = vld [vmem:[#allocation2 + $0x30] sm:$0xff]
      %v1605 = vld [vmem:[#allocation2 + $0x38] sm:$0xff]
      %v1606 = vld [vmem:[#allocation2 + $0x48] sm:$0xff]
      %v1607 = vld [vmem:[#allocation2 + $0x50] sm:$0xff]
      %v1608 = vld [vmem:[#allocation2 + $0x58] sm:$0xff]
      %v1609 = vld [vmem:[#allocation2 + $0x60] sm:$0xff]
      %v1610 = vld [vmem:[#allocation2 + $0x68] sm:$0xff]
      %v1611 = vld [vmem:[#allocation2 + $0x70] sm:$0xff]
      %v1612 = vld [vmem:[#allocation2 + $0x78] sm:$0xff]
      %v1613 = vpack.c.bf16 %v1606, %v1599
      %v1614 = vpack.c.bf16 %v1607, %v1600
      %v1615 = vpack.c.bf16 %v1608, %v1601
      %v1616 = vpack.c.bf16 %v1609, %v1602
      %v1617 = vpack.c.bf16 %v1610, %v1603
      %v1618 = vpack.c.bf16 %v1611, %v1604
      %v1619 = vpack.c.bf16 %v1612, %v1605
      %1627 = vrot.lane.b32.xlu0 %v1613, 48
      %v1628 = vpop.permute.xlu0 %1627
      %1629 = vrot.lane.b32.xlu0 %v1614, 48
      %v1630 = vpop.permute.xlu0 %1629
      %1631 = vrot.lane.b32.xlu0 %v1615, 48
      %v1632 = vpop.permute.xlu0 %1631
      %1633 = vrot.lane.b32.xlu0 %v1616, 48
      %v1634 = vpop.permute.xlu0 %1633
      %1635 = vrot.lane.b32.xlu0 %v1617, 48
      %v1636 = vpop.permute.xlu0 %1635
      %1637 = vrot.lane.b32.xlu0 %v1618, 48
      %v1638 = vpop.permute.xlu0 %1637
      %1639 = vrot.lane.b32.xlu0 %v1619, 48
      %v1640 = vpop.permute.xlu0 %1639
      %v1641 = vsel %vm1194, %v1628, %v1630
      %v1642 = vsel %vm1194, %v1630, %v1632
      %v1643 = vsel %vm1194, %v1632, %v1634
      %v1644 = vsel %vm1194, %v1634, %v1636
      %v1645 = vsel %vm1194, %v1636, %v1638
      %v1646 = vsel %vm1194, %v1638, %v1640
      %1653 = vst [vmem:[#allocation3 + $0x270] sm:$0xff] %v1641
      %1654 = vst [vmem:[#allocation3 + $0x278] sm:$0xff] %v1642
      %1655 = vst [vmem:[#allocation3 + $0x280] sm:$0xff] %v1643
      %1656 = vst [vmem:[#allocation3 + $0x288] sm:$0xff] %v1644
      %1657 = vst [vmem:[#allocation3 + $0x290] sm:$0xff] %v1645
      %1658 = vst [vmem:[#allocation3 + $0x298] sm:$0xff] %v1646
      %v1659 = vld [vmem:[#allocation2 + $0x8] sm:$0xff]
      %v1660 = vld [vmem:[#allocation2 + $0x10] sm:$0xff]
      %v1661 = vld [vmem:[#allocation2 + $0x18] sm:$0xff]
      %v1662 = vld [vmem:[#allocation2 + $0x20] sm:$0xff]
      %v1663 = vld [vmem:[#allocation2 + $0x28] sm:$0xff]
      %v1664 = vld [vmem:[#allocation2 + $0x30] sm:$0xff]
      %v1665 = vld [vmem:[#allocation2 + $0x38] sm:$0xff]
      %v1666 = vld [vmem:[#allocation2 + $0x48] sm:$0xff]
      %v1667 = vld [vmem:[#allocation2 + $0x50] sm:$0xff]
      %v1668 = vld [vmem:[#allocation2 + $0x58] sm:$0xff]
      %v1669 = vld [vmem:[#allocation2 + $0x60] sm:$0xff]
      %v1670 = vld [vmem:[#allocation2 + $0x68] sm:$0xff]
      %v1671 = vld [vmem:[#allocation2 + $0x70] sm:$0xff]
      %v1672 = vld [vmem:[#allocation2 + $0x78] sm:$0xff]
      %v1673 = vpack.c.bf16 %v1666, %v1659
      %v1674 = vpack.c.bf16 %v1667, %v1660
      %v1675 = vpack.c.bf16 %v1668, %v1661
      %v1676 = vpack.c.bf16 %v1669, %v1662
      %v1677 = vpack.c.bf16 %v1670, %v1663
      %v1678 = vpack.c.bf16 %v1671, %v1664
      %v1679 = vpack.c.bf16 %v1672, %v1665
      %1687 = vrot.lane.b32.xlu0 %v1673, 32
      %v1688 = vpop.permute.xlu0 %1687
      %1689 = vrot.lane.b32.xlu0 %v1674, 32
      %v1690 = vpop.permute.xlu0 %1689
      %1691 = vrot.lane.b32.xlu0 %v1675, 32
      %v1692 = vpop.permute.xlu0 %1691
      %1693 = vrot.lane.b32.xlu0 %v1676, 32
      %v1694 = vpop.permute.xlu0 %1693
      %1695 = vrot.lane.b32.xlu0 %v1677, 32
      %v1696 = vpop.permute.xlu0 %1695
      %1697 = vrot.lane.b32.xlu0 %v1678, 32
      %v1698 = vpop.permute.xlu0 %1697
      %1699 = vrot.lane.b32.xlu0 %v1679, 32
      %v1700 = vpop.permute.xlu0 %1699
      %v1701 = vsel %vm1255, %v1688, %v1690
      %v1702 = vsel %vm1255, %v1690, %v1692
      %v1703 = vsel %vm1255, %v1692, %v1694
      %v1704 = vsel %vm1255, %v1694, %v1696
      %v1705 = vsel %vm1255, %v1696, %v1698
      %v1706 = vsel %vm1255, %v1698, %v1700
      %1713 = vst [vmem:[#allocation3 + $0x2a0] sm:$0xff] %v1701
      %1714 = vst [vmem:[#allocation3 + $0x2a8] sm:$0xff] %v1702
      %1715 = vst [vmem:[#allocation3 + $0x2b0] sm:$0xff] %v1703
      %1716 = vst [vmem:[#allocation3 + $0x2b8] sm:$0xff] %v1704
      %1717 = vst [vmem:[#allocation3 + $0x2c0] sm:$0xff] %v1705
      %1718 = vst [vmem:[#allocation3 + $0x2c8] sm:$0xff] %v1706
      %v1719 = vld [vmem:[#allocation2 + $0x8] sm:$0xff]
      %v1720 = vld [vmem:[#allocation2 + $0x10] sm:$0xff]
      %v1721 = vld [vmem:[#allocation2 + $0x18] sm:$0xff]
      %v1722 = vld [vmem:[#allocation2 + $0x20] sm:$0xff]
      %v1723 = vld [vmem:[#allocation2 + $0x28] sm:$0xff]
      %v1724 = vld [vmem:[#allocation2 + $0x30] sm:$0xff]
      %v1725 = vld [vmem:[#allocation2 + $0x38] sm:$0xff]
      %v1726 = vld [vmem:[#allocation2 + $0x48] sm:$0xff]
      %v1727 = vld [vmem:[#allocation2 + $0x50] sm:$0xff]
      %v1728 = vld [vmem:[#allocation2 + $0x58] sm:$0xff]
      %v1729 = vld [vmem:[#allocation2 + $0x60] sm:$0xff]
      %v1730 = vld [vmem:[#allocation2 + $0x68] sm:$0xff]
      %v1731 = vld [vmem:[#allocation2 + $0x70] sm:$0xff]
      %v1732 = vld [vmem:[#allocation2 + $0x78] sm:$0xff]
      %v1733 = vpack.c.bf16 %v1726, %v1719
      %v1734 = vpack.c.bf16 %v1727, %v1720
      %v1735 = vpack.c.bf16 %v1728, %v1721
      %v1736 = vpack.c.bf16 %v1729, %v1722
      %v1737 = vpack.c.bf16 %v1730, %v1723
      %v1738 = vpack.c.bf16 %v1731, %v1724
      %v1739 = vpack.c.bf16 %v1732, %v1725
      %1747 = vrot.lane.b32.xlu0 %v1733, 16
      %v1748 = vpop.permute.xlu0 %1747
      %1749 = vrot.lane.b32.xlu0 %v1734, 16
      %v1750 = vpop.permute.xlu0 %1749
      %1751 = vrot.lane.b32.xlu0 %v1735, 16
      %v1752 = vpop.permute.xlu0 %1751
      %1753 = vrot.lane.b32.xlu0 %v1736, 16
      %v1754 = vpop.permute.xlu0 %1753
      %1755 = vrot.lane.b32.xlu0 %v1737, 16
      %v1756 = vpop.permute.xlu0 %1755
      %1757 = vrot.lane.b32.xlu0 %v1738, 16
      %v1758 = vpop.permute.xlu0 %1757
      %1759 = vrot.lane.b32.xlu0 %v1739, 16
      %v1760 = vpop.permute.xlu0 %1759
      %v1761 = vsel %vm1316, %v1748, %v1750
      %v1762 = vsel %vm1316, %v1750, %v1752
      %v1763 = vsel %vm1316, %v1752, %v1754
      %v1764 = vsel %vm1316, %v1754, %v1756
      %v1765 = vsel %vm1316, %v1756, %v1758
      %v1766 = vsel %vm1316, %v1758, %v1760
      %1773 = vst [vmem:[#allocation3 + $0x2d0] sm:$0xff] %v1761
      %1774 = vst [vmem:[#allocation3 + $0x2d8] sm:$0xff] %v1762
      %1775 = vst [vmem:[#allocation3 + $0x2e0] sm:$0xff] %v1763
      %1776 = vst [vmem:[#allocation3 + $0x2e8] sm:$0xff] %v1764
      %1777 = vst [vmem:[#allocation3 + $0x2f0] sm:$0xff] %v1765
      %1778 = vst [vmem:[#allocation3 + $0x2f8] sm:$0xff] %v1766
      %v1779 = vld [vmem:[%s1] sm:$0xff]
      %v1780 = vld [vmem:[%s1 + $0x8] sm:$0xff]
      %v1781 = vld [vmem:[%s1 + $0x10] sm:$0xff]
      %v1782 = vld [vmem:[%s1 + $0x18] sm:$0xff]
      %v1783 = vld [vmem:[%s1 + $0x20] sm:$0xff]
      %v1784 = vld [vmem:[%s1 + $0x28] sm:$0xff]
      %v1785 = vld [vmem:[%s1 + $0x30] sm:$0xff]
      %v1786 = vld [vmem:[%s1 + $0x38] sm:$0xff]
      %v1787 = vld [vmem:[%s1 + $0x40] sm:$0xff]
      %v1788 = vld [vmem:[%s1 + $0x48] sm:$0xff]
      %v1789 = vld [vmem:[#allocation3] sm:$0xff]
      %v1790 = vld [vmem:[#allocation3 + $0x8] sm:$0xff]
      %v1791 = vld [vmem:[#allocation3 + $0x10] sm:$0xff]
      %v1792 = vld [vmem:[#allocation3 + $0x30] sm:$0xff]
      %v1793 = vld [vmem:[#allocation3 + $0x38] sm:$0xff]
      %v1794 = vld [vmem:[#allocation3 + $0x40] sm:$0xff]
      %v1795 = vld [vmem:[#allocation3 + $0x60] sm:$0xff]
      %v1796 = vld [vmem:[#allocation3 + $0x68] sm:$0xff]
      %v1797 = vld [vmem:[#allocation3 + $0x70] sm:$0xff]
      %v1798 = vld [vmem:[#allocation3 + $0x90] sm:$0xff]
      %v1799 = vld [vmem:[#allocation3 + $0x98] sm:$0xff]
      %v1800 = vld [vmem:[#allocation3 + $0xa0] sm:$0xff]
      %v1801 = vld [vmem:[#allocation3 + $0xc0] sm:$0xff]
      %v1802 = vld [vmem:[#allocation3 + $0xc8] sm:$0xff]
      %v1803 = vld [vmem:[#allocation3 + $0xd0] sm:$0xff]
      %v1804 = vld [vmem:[#allocation3 + $0xf0] sm:$0xff]
      %v1805 = vld [vmem:[#allocation3 + $0xf8] sm:$0xff]
      %v1806 = vld [vmem:[#allocation3 + $0x100] sm:$0xff]
      %v1807 = vld [vmem:[#allocation3 + $0x120] sm:$0xff]
      %v1808 = vld [vmem:[#allocation3 + $0x128] sm:$0xff]
      %v1809 = vld [vmem:[#allocation3 + $0x130] sm:$0xff]
      %v1810 = vld [vmem:[#allocation3 + $0x150] sm:$0xff]
      %v1811 = vld [vmem:[#allocation3 + $0x158] sm:$0xff]
      %v1812 = vld [vmem:[#allocation3 + $0x160] sm:$0xff]
      %v1813 = vld [vmem:[#allocation3 + $0x180] sm:$0xff]
      %v1814 = vld [vmem:[#allocation3 + $0x188] sm:$0xff]
      %v1815 = vld [vmem:[#allocation3 + $0x190] sm:$0xff]
      %v1816 = vld [vmem:[#allocation3 + $0x1b0] sm:$0xff]
      %v1817 = vld [vmem:[#allocation3 + $0x1b8] sm:$0xff]
      %v1818 = vld [vmem:[#allocation3 + $0x1c0] sm:$0xff]
      %v1819 = vld [vmem:[#allocation3 + $0x1e0] sm:$0xff]
      %v1820 = vld [vmem:[#allocation3 + $0x1e8] sm:$0xff]
      %v1821 = vld [vmem:[#allocation3 + $0x1f0] sm:$0xff]
      %v1822 = vld [vmem:[#allocation3 + $0x210] sm:$0xff]
      %v1823 = vld [vmem:[#allocation3 + $0x218] sm:$0xff]
      %v1824 = vld [vmem:[#allocation3 + $0x220] sm:$0xff]
      %v1825 = vld [vmem:[#allocation3 + $0x240] sm:$0xff]
      %v1826 = vld [vmem:[#allocation3 + $0x248] sm:$0xff]
      %v1827 = vld [vmem:[#allocation3 + $0x250] sm:$0xff]
      %v1828 = vld [vmem:[#allocation3 + $0x270] sm:$0xff]
      %v1829 = vld [vmem:[#allocation3 + $0x278] sm:$0xff]
      %v1830 = vld [vmem:[#allocation3 + $0x280] sm:$0xff]
      %v1831 = vld [vmem:[#allocation3 + $0x2a0] sm:$0xff]
      %v1832 = vld [vmem:[#allocation3 + $0x2a8] sm:$0xff]
      %v1833 = vld [vmem:[#allocation3 + $0x2b0] sm:$0xff]
      %v1834 = vld [vmem:[#allocation3 + $0x2d0] sm:$0xff]
      %v1835 = vld [vmem:[#allocation3 + $0x2d8] sm:$0xff]
      %v1836 = vld [vmem:[#allocation3 + $0x2e0] sm:$0xff]
      %v1847 = vunpack.c.l.b16 %v1779
      %v1848 = vunpack.c.h.b16 %v1779
      %v1849 = vunpack.c.l.b16 %v1780
      %v1850 = vunpack.c.h.b16 %v1780
      %v1851 = vunpack.c.l.b16 %v1781
      %v1852 = vunpack.c.h.b16 %v1781
      %v1853 = vunpack.c.l.b16 %v1782
      %v1854 = vunpack.c.h.b16 %v1782
      %v1855 = vunpack.c.l.b16 %v1783
      %v1856 = vunpack.c.h.b16 %v1783
      %v1857 = vunpack.c.l.b16 %v1784
      %v1858 = vunpack.c.h.b16 %v1784
      %v1859 = vunpack.c.l.b16 %v1785
      %v1860 = vunpack.c.h.b16 %v1785
      %v1861 = vunpack.c.l.b16 %v1786
      %v1862 = vunpack.c.h.b16 %v1786
      %v1863 = vunpack.c.l.b16 %v1787
      %v1864 = vunpack.c.h.b16 %v1787
      %v1865 = vunpack.c.l.b16 %v1788
      %v1866 = vunpack.c.h.b16 %v1788
      %v1867 = vpack.c.b16 %v1849, %v1847
      %v1868 = vpack.c.b16 %v1850, %v1848
      %v1869 = vpack.c.b16 %v1853, %v1851
      %v1870 = vpack.c.b16 %v1854, %v1852
      %v1871 = vpack.c.b16 %v1857, %v1855
      %v1872 = vpack.c.b16 %v1858, %v1856
      %v1873 = vpack.c.b16 %v1861, %v1859
      %v1874 = vpack.c.b16 %v1862, %v1860
      %v1875 = vpack.c.b16 %v1865, %v1863
      %v1876 = vpack.c.b16 %v1866, %v1864
      %1887 = vmatprep.subr.bf16.mxu0 %v1790
      %1888 = vmatpush1.bf16.msra.mxu0 %v1789
      %1889 = vmatprep.subr.bf16.mxu0 %v1793
      %1890 = vmatpush1.bf16.msra.mxu0 %v1792
      %1891 = vmatprep.subr.bf16.mxu0 %v1796
      %1892 = vmatpush1.bf16.msra.mxu0 %v1795
      %1893 = vmatprep.subr.bf16.mxu0 %v1799
      %1894 = vmatpush1.bf16.msra.mxu0 %v1798
      %1895 = vmatprep.subr.bf16.mxu0 %v1802
      %1896 = vmatpush1.bf16.msra.mxu0 %v1801
      %1897 = vmatprep.subr.bf16.mxu0 %v1805
      %1898 = vmatpush1.bf16.msra.mxu0 %v1804
      %1899 = vmatprep.subr.bf16.mxu0 %v1808
      %1900 = vmatpush1.bf16.msra.mxu0 %v1807
      %1901 = vmatprep.subr.bf16.mxu0 %v1811
      %1902 = vmatpush1.bf16.msra.mxu0 %v1810
      %1903 = vmatprep.subr.bf16.mxu0 %v1814
      %1904 = vmatpush1.bf16.msra.mxu0 %v1813
      %1905 = vmatprep.subr.bf16.mxu0 %v1817
      %1906 = vmatpush1.bf16.msra.mxu0 %v1816
      %1907 = vmatprep.subr.bf16.mxu0 %v1820
      %1908 = vmatpush1.bf16.msra.mxu0 %v1819
      %1909 = vmatprep.subr.bf16.mxu0 %v1823
      %1910 = vmatpush1.bf16.msra.mxu0 %v1822
      %1911 = vmatprep.subr.bf16.mxu0 %v1826
      %1912 = vmatpush1.bf16.msra.mxu0 %v1825
      %1913 = vmatprep.subr.bf16.mxu0 %v1829
      %1914 = vmatpush1.bf16.msra.mxu0 %v1828
      %1915 = vmatprep.subr.bf16.mxu0 %v1832
      %1916 = vmatpush1.bf16.msra.mxu0 %v1831
      %1917 = vmatprep.subr.bf16.mxu0 %v1835
      %1918 = vmatpush1.bf16.msra.mxu0 %v1834
      %1919 = vmatprep.mubr.bf16.mxu0 %v1868
      %1920 = vmatmul.mubr.bf16.gmra.mrb[0].mxu0 %v1867
      %v1921 = vpop.f32.mrb[0].mxu0
      %v1922 = vadd.f32 0.0, %v1921
      %v1923 = vpop.f32.mrb[0].mxu0
      %v1924 = vadd.f32 0.0, %v1923
      %v1925 = vpop.f32.mrb[0].mxu0
      %v1926 = vadd.f32 0.0, %v1925
      %v1927 = vpop.f32.mrb[0].mxu0
      %v1928 = vadd.f32 0.0, %v1927
      %1929 = vmatprep.mubr.bf16.mxu0 %v1870
      %1930 = vmatmul.mubr.bf16.gmra.mrb[0].mxu0 %v1869
      %v1931 = vpop.f32.mrb[0].mxu0
      %v1932 = vadd.f32 0.0, %v1931
      %v1933 = vpop.f32.mrb[0].mxu0
      %v1934 = vadd.f32 0.0, %v1933
      %v1935 = vpop.f32.mrb[0].mxu0
      %v1936 = vadd.f32 0.0, %v1935
      %v1937 = vpop.f32.mrb[0].mxu0
      %v1938 = vadd.f32 0.0, %v1937
      %1939 = vmatprep.mubr.bf16.mxu0 %v1872
      %1940 = vmatmul.mubr.bf16.gmra.mrb[0].mxu0 %v1871
      %v1941 = vpop.f32.mrb[0].mxu0
      %v1942 = vadd.f32 0.0, %v1941
      %v1943 = vpop.f32.mrb[0].mxu0
      %v1944 = vadd.f32 0.0, %v1943
      %v1945 = vpop.f32.mrb[0].mxu0
      %v1946 = vadd.f32 0.0, %v1945
      %v1947 = vpop.f32.mrb[0].mxu0
      %v1948 = vadd.f32 0.0, %v1947
      %1949 = vmatprep.mubr.bf16.mxu0 %v1874
      %1950 = vmatmul.mubr.bf16.gmra.mrb[0].mxu0 %v1873
      %v1951 = vpop.f32.mrb[0].mxu0
      %v1952 = vadd.f32 0.0, %v1951
      %v1953 = vpop.f32.mrb[0].mxu0
      %v1954 = vadd.f32 0.0, %v1953
      %v1955 = vpop.f32.mrb[0].mxu0
      %v1956 = vadd.f32 0.0, %v1955
      %v1957 = vpop.f32.mrb[0].mxu0
      %v1958 = vadd.f32 0.0, %v1957
      %1959 = vmatprep.mubr.bf16.mxu0 %v1876
      %1960 = vmatmul.mubr.bf16.gmra.mrb[0].mxu0 %v1875
      %v1961 = vpop.f32.mrb[0].mxu0
      %v1962 = vadd.f32 0.0, %v1961
      %v1963 = vpop.f32.mrb[0].mxu0
      %v1964 = vadd.f32 0.0, %v1963
      %v1965 = vpop.f32.mrb[0].mxu0
      %v1966 = vadd.f32 0.0, %v1965
      %v1967 = vpop.f32.mrb[0].mxu0
      %v1968 = vadd.f32 0.0, %v1967
      %1969 = vdwg.mxu0
      %1970 = vmatprep.subr.bf16.mxu0 0
      %1971 = vmatpush1.bf16.msra.mxu0 %v1791
      %1972 = vmatprep.subr.bf16.mxu0 0
      %1973 = vmatpush1.bf16.msra.mxu0 %v1794
      %1974 = vmatprep.subr.bf16.mxu0 0
      %1975 = vmatpush1.bf16.msra.mxu0 %v1797
      %1976 = vmatprep.subr.bf16.mxu0 0
      %1977 = vmatpush1.bf16.msra.mxu0 %v1800
      %1978 = vmatprep.subr.bf16.mxu0 0
      %1979 = vmatpush1.bf16.msra.mxu0 %v1803
      %1980 = vmatprep.subr.bf16.mxu0 0
      %1981 = vmatpush1.bf16.msra.mxu0 %v1806
      %1982 = vmatprep.subr.bf16.mxu0 0
      %1983 = vmatpush1.bf16.msra.mxu0 %v1809
      %1984 = vmatprep.subr.bf16.mxu0 0
      %1985 = vmatpush1.bf16.msra.mxu0 %v1812
      %1986 = vmatprep.subr.bf16.mxu0 0
      %1987 = vmatpush1.bf16.msra.mxu0 %v1815
      %1988 = vmatprep.subr.bf16.mxu0 0
      %1989 = vmatpush1.bf16.msra.mxu0 %v1818
      %1990 = vmatprep.subr.bf16.mxu0 0
      %1991 = vmatpush1.bf16.msra.mxu0 %v1821
      %1992 = vmatprep.subr.bf16.mxu0 0
      %1993 = vmatpush1.bf16.msra.mxu0 %v1824
      %1994 = vmatprep.subr.bf16.mxu0 0
      %1995 = vmatpush1.bf16.msra.mxu0 %v1827
      %1996 = vmatprep.subr.bf16.mxu0 0
      %1997 = vmatpush1.bf16.msra.mxu0 %v1830
      %1998 = vmatprep.subr.bf16.mxu0 0
      %1999 = vmatpush1.bf16.msra.mxu0 %v1833
      %2000 = vmatprep.subr.bf16.mxu0 0
      %2001 = vmatpush1.bf16.msra.mxu0 %v1836
      %2002 = vmatprep.mubr.bf16.mxu0 %v1868
      %2003 = vmatmul.mubr.bf16.gmra.mrb[0].mxu0 %v1867
      %v2004 = vpop.f32.mrb[0].mxu0
      %v2005 = vadd.f32 0.0, %v2004
      %v2006 = vpop.f32.mrb[0].mxu0
      %v2007 = vpop.f32.mrb[0].mxu0
      %v2008 = vadd.f32 0.0, %v2007
      %v2009 = vpop.f32.mrb[0].mxu0
      %2010 = vmatprep.mubr.bf16.mxu0 %v1870
      %2011 = vmatmul.mubr.bf16.gmra.mrb[0].mxu0 %v1869
      %v2012 = vpop.f32.mrb[0].mxu0
      %v2013 = vadd.f32 0.0, %v2012
      %v2014 = vpop.f32.mrb[0].mxu0
      %v2015 = vpop.f32.mrb[0].mxu0
      %v2016 = vadd.f32 0.0, %v2015
      %v2017 = vpop.f32.mrb[0].mxu0
      %2018 = vmatprep.mubr.bf16.mxu0 %v1872
      %2019 = vmatmul.mubr.bf16.gmra.mrb[0].mxu0 %v1871
      %v2020 = vpop.f32.mrb[0].mxu0
      %v2021 = vadd.f32 0.0, %v2020
      %v2022 = vpop.f32.mrb[0].mxu0
      %v2023 = vpop.f32.mrb[0].mxu0
      %v2024 = vadd.f32 0.0, %v2023
      %v2025 = vpop.f32.mrb[0].mxu0
      %2026 = vmatprep.mubr.bf16.mxu0 %v1874
      %2027 = vmatmul.mubr.bf16.gmra.mrb[0].mxu0 %v1873
      %v2028 = vpop.f32.mrb[0].mxu0
      %v2029 = vadd.f32 0.0, %v2028
      %v2030 = vpop.f32.mrb[0].mxu0
      %v2031 = vpop.f32.mrb[0].mxu0
      %v2032 = vadd.f32 0.0, %v2031
      %v2033 = vpop.f32.mrb[0].mxu0
      %2034 = vmatprep.mubr.bf16.mxu0 %v1876
      %2035 = vmatmul.mubr.bf16.gmra.mrb[0].mxu0 %v1875
      %v2036 = vpop.f32.mrb[0].mxu0
      %v2037 = vadd.f32 0.0, %v2036
      %v2038 = vpop.f32.mrb[0].mxu0
      %v2039 = vpop.f32.mrb[0].mxu0
      %v2040 = vadd.f32 0.0, %v2039
      %v2041 = vpop.f32.mrb[0].mxu0
      %2042 = vdwg.mxu0
      %v2043 = vand.u32 2147483647, %v1922
      %v2044 = vand.u32 2147483647, %v1924
      %v2045 = vand.u32 2147483647, %v2005
      %v2046 = vand.u32 2147483647, %v1926
      %v2047 = vand.u32 2147483647, %v1928
      %v2048 = vand.u32 2147483647, %v2008
      %v2049 = vand.u32 2147483647, %v1932
      %v2050 = vand.u32 2147483647, %v1934
      %v2051 = vand.u32 2147483647, %v2013
      %v2052 = vand.u32 2147483647, %v1936
      %v2053 = vand.u32 2147483647, %v1938
      %v2054 = vand.u32 2147483647, %v2016
      %v2055 = vand.u32 2147483647, %v1942
      %v2056 = vand.u32 2147483647, %v1944
      %v2057 = vand.u32 2147483647, %v2021
      %v2058 = vand.u32 2147483647, %v1946
      %v2059 = vand.u32 2147483647, %v1948
      %v2060 = vand.u32 2147483647, %v2024
      %v2061 = vand.u32 2147483647, %v1952
      %v2062 = vand.u32 2147483647, %v1954
      %v2063 = vand.u32 2147483647, %v2029
      %v2064 = vand.u32 2147483647, %v1956
      %v2065 = vand.u32 2147483647, %v1958
      %v2066 = vand.u32 2147483647, %v2032
      %v2067 = vand.u32 2147483647, %v1962
      %v2068 = vand.u32 2147483647, %v1964
      %v2069 = vand.u32 2147483647, %v2037
      %v2070 = vand.u32 2147483647, %v1966
      %v2071 = vand.u32 2147483647, %v1968
      %v2072 = vand.u32 2147483647, %v2040
      %2073 = vrot.lane.b32.xlu0 %v2043, 1
      %v2074 = vpop.permute.xlu0 %2073
      %2075 = vrot.lane.b32.xlu0 %v2046, 1
      %v2076 = vpop.permute.xlu0 %2075
      %2077 = vrot.lane.b32.xlu0 %v2049, 1
      %v2078 = vpop.permute.xlu0 %2077
      %2079 = vrot.lane.b32.xlu0 %v2052, 1
      %v2080 = vpop.permute.xlu0 %2079
      %2081 = vrot.lane.b32.xlu0 %v2055, 1
      %v2082 = vpop.permute.xlu0 %2081
      %2083 = vrot.lane.b32.xlu0 %v2058, 1
      %v2084 = vpop.permute.xlu0 %2083
      %2085 = vrot.lane.b32.xlu0 %v2061, 1
      %v2086 = vpop.permute.xlu0 %2085
      %2087 = vrot.lane.b32.xlu0 %v2064, 1
      %v2088 = vpop.permute.xlu0 %2087
      %2089 = vrot.lane.b32.xlu0 %v2067, 1
      %v2090 = vpop.permute.xlu0 %2089
      %2091 = vrot.lane.b32.xlu0 %v2070, 1
      %v2092 = vpop.permute.xlu0 %2091
      %2093 = vrot.lane.b32.xlu0 %v2044, 1
      %v2094 = vpop.permute.xlu0 %2093
      %2095 = vrot.lane.b32.xlu0 %v2047, 1
      %v2096 = vpop.permute.xlu0 %2095
      %2097 = vrot.lane.b32.xlu0 %v2050, 1
      %v2098 = vpop.permute.xlu0 %2097
      %2099 = vrot.lane.b32.xlu0 %v2053, 1
      %v2100 = vpop.permute.xlu0 %2099
      %2101 = vrot.lane.b32.xlu0 %v2056, 1
      %v2102 = vpop.permute.xlu0 %2101
      %2103 = vrot.lane.b32.xlu0 %v2059, 1
      %v2104 = vpop.permute.xlu0 %2103
      %2105 = vrot.lane.b32.xlu0 %v2062, 1
      %v2106 = vpop.permute.xlu0 %2105
      %2107 = vrot.lane.b32.xlu0 %v2065, 1
      %v2108 = vpop.permute.xlu0 %2107
      %2109 = vrot.lane.b32.xlu0 %v2068, 1
      %v2110 = vpop.permute.xlu0 %2109
      %2111 = vrot.lane.b32.xlu0 %v2071, 1
      %v2112 = vpop.permute.xlu0 %2111
      %2113 = vrot.lane.b32.xlu0 %v2045, 1
      %v2114 = vpop.permute.xlu0 %2113
      %2115 = vrot.lane.b32.xlu0 %v2048, 1
      %v2116 = vpop.permute.xlu0 %2115
      %2117 = vrot.lane.b32.xlu0 %v2051, 1
      %v2118 = vpop.permute.xlu0 %2117
      %2119 = vrot.lane.b32.xlu0 %v2054, 1
      %v2120 = vpop.permute.xlu0 %2119
      %2121 = vrot.lane.b32.xlu0 %v2057, 1
      %v2122 = vpop.permute.xlu0 %2121
      %2123 = vrot.lane.b32.xlu0 %v2060, 1
      %v2124 = vpop.permute.xlu0 %2123
      %2125 = vrot.lane.b32.xlu0 %v2063, 1
      %v2126 = vpop.permute.xlu0 %2125
      %2127 = vrot.lane.b32.xlu0 %v2066, 1
      %v2128 = vpop.permute.xlu0 %2127
      %2129 = vrot.lane.b32.xlu0 %v2069, 1
      %v2130 = vpop.permute.xlu0 %2129
      %2131 = vrot.lane.b32.xlu0 %v2072, 1
      %v2132 = vpop.permute.xlu0 %2131
      %v2133 = vlaneseq
      %v2134 = vand.u32 %v2133, 127
      %vm2135 = vcmp.lt.s32.totalorder %v2134, 1
      %v2136 = vsel %vm2135, %v2094, %v2114
      %v2137 = vsel %vm2135, %v2096, %v2116
      %v2138 = vsel %vm2135, %v2098, %v2118
      %v2139 = vsel %vm2135, %v2100, %v2120
      %v2140 = vsel %vm2135, %v2102, %v2122
      %v2141 = vsel %vm2135, %v2104, %v2124
      %v2142 = vsel %vm2135, %v2106, %v2126
      %v2143 = vsel %vm2135, %v2108, %v2128
      %v2144 = vsel %vm2135, %v2110, %v2130
      %v2145 = vsel %vm2135, %v2112, %v2132
      %v2146 = vsel %vm2135, %v2074, %v2094
      %v2147 = vsel %vm2135, %v2076, %v2096
      %v2148 = vsel %vm2135, %v2078, %v2098
      %v2149 = vsel %vm2135, %v2080, %v2100
      %v2150 = vsel %vm2135, %v2082, %v2102
      %v2151 = vsel %vm2135, %v2084, %v2104
      %v2152 = vsel %vm2135, %v2086, %v2106
      %v2153 = vsel %vm2135, %v2088, %v2108
      %v2154 = vsel %vm2135, %v2090, %v2110
      %v2155 = vsel %vm2135, %v2092, %v2112
      %v2156 = vsel %vm2135, %v2114, %v2074
      %v2157 = vsel %vm2135, %v2116, %v2076
      %v2158 = vsel %vm2135, %v2118, %v2078
      %v2159 = vsel %vm2135, %v2120, %v2080
      %v2160 = vsel %vm2135, %v2122, %v2082
      %v2161 = vsel %vm2135, %v2124, %v2084
      %v2162 = vsel %vm2135, %v2126, %v2086
      %v2163 = vsel %vm2135, %v2128, %v2088
      %v2164 = vsel %vm2135, %v2130, %v2090
      %v2165 = vsel %vm2135, %v2132, %v2092
      %2166 = vrot.lane.b32.xlu0 %v2043, 127
      %v2167 = vpop.permute.xlu0 %2166
      %2168 = vrot.lane.b32.xlu0 %v2046, 127
      %v2169 = vpop.permute.xlu0 %2168
      %2170 = vrot.lane.b32.xlu0 %v2049, 127
      %v2171 = vpop.permute.xlu0 %2170
      %2172 = vrot.lane.b32.xlu0 %v2052, 127
      %v2173 = vpop.permute.xlu0 %2172
      %2174 = vrot.lane.b32.xlu0 %v2055, 127
      %v2175 = vpop.permute.xlu0 %2174
      %2176 = vrot.lane.b32.xlu0 %v2058, 127
      %v2177 = vpop.permute.xlu0 %2176
      %2178 = vrot.lane.b32.xlu0 %v2061, 127
      %v2179 = vpop.permute.xlu0 %2178
      %2180 = vrot.lane.b32.xlu0 %v2064, 127
      %v2181 = vpop.permute.xlu0 %2180
      %2182 = vrot.lane.b32.xlu0 %v2067, 127
      %v2183 = vpop.permute.xlu0 %2182
      %2184 = vrot.lane.b32.xlu0 %v2070, 127
      %v2185 = vpop.permute.xlu0 %2184
      %2186 = vrot.lane.b32.xlu0 %v2044, 127
      %v2187 = vpop.permute.xlu0 %2186
      %2188 = vrot.lane.b32.xlu0 %v2047, 127
      %v2189 = vpop.permute.xlu0 %2188
      %2190 = vrot.lane.b32.xlu0 %v2050, 127
      %v2191 = vpop.permute.xlu0 %2190
      %2192 = vrot.lane.b32.xlu0 %v2053, 127
      %v2193 = vpop.permute.xlu0 %2192
      %2194 = vrot.lane.b32.xlu0 %v2056, 127
      %v2195 = vpop.permute.xlu0 %2194
      %2196 = vrot.lane.b32.xlu0 %v2059, 127
      %v2197 = vpop.permute.xlu0 %2196
      %2198 = vrot.lane.b32.xlu0 %v2062, 127
      %v2199 = vpop.permute.xlu0 %2198
      %2200 = vrot.lane.b32.xlu0 %v2065, 127
      %v2201 = vpop.permute.xlu0 %2200
      %2202 = vrot.lane.b32.xlu0 %v2068, 127
      %v2203 = vpop.permute.xlu0 %2202
      %2204 = vrot.lane.b32.xlu0 %v2071, 127
      %v2205 = vpop.permute.xlu0 %2204
      %2206 = vrot.lane.b32.xlu0 %v2045, 127
      %v2207 = vpop.permute.xlu0 %2206
      %2208 = vrot.lane.b32.xlu0 %v2048, 127
      %v2209 = vpop.permute.xlu0 %2208
      %2210 = vrot.lane.b32.xlu0 %v2051, 127
      %v2211 = vpop.permute.xlu0 %2210
      %2212 = vrot.lane.b32.xlu0 %v2054, 127
      %v2213 = vpop.permute.xlu0 %2212
      %2214 = vrot.lane.b32.xlu0 %v2057, 127
      %v2215 = vpop.permute.xlu0 %2214
      %2216 = vrot.lane.b32.xlu0 %v2060, 127
      %v2217 = vpop.permute.xlu0 %2216
      %2218 = vrot.lane.b32.xlu0 %v2063, 127
      %v2219 = vpop.permute.xlu0 %2218
      %2220 = vrot.lane.b32.xlu0 %v2066, 127
      %v2221 = vpop.permute.xlu0 %2220
      %2222 = vrot.lane.b32.xlu0 %v2069, 127
      %v2223 = vpop.permute.xlu0 %2222
      %2224 = vrot.lane.b32.xlu0 %v2072, 127
      %v2225 = vpop.permute.xlu0 %2224
      %vm2226 = vcmp.lt.s32.totalorder %v2134, 127
      %v2227 = vsel %vm2226, %v2187, %v2207
      %v2228 = vsel %vm2226, %v2189, %v2209
      %v2229 = vsel %vm2226, %v2191, %v2211
      %v2230 = vsel %vm2226, %v2193, %v2213
      %v2231 = vsel %vm2226, %v2195, %v2215
      %v2232 = vsel %vm2226, %v2197, %v2217
      %v2233 = vsel %vm2226, %v2199, %v2219
      %v2234 = vsel %vm2226, %v2201, %v2221
      %v2235 = vsel %vm2226, %v2203, %v2223
      %v2236 = vsel %vm2226, %v2205, %v2225
      %v2237 = vsel %vm2226, %v2167, %v2187
      %v2238 = vsel %vm2226, %v2169, %v2189
      %v2239 = vsel %vm2226, %v2171, %v2191
      %v2240 = vsel %vm2226, %v2173, %v2193
      %v2241 = vsel %vm2226, %v2175, %v2195
      %v2242 = vsel %vm2226, %v2177, %v2197
      %v2243 = vsel %vm2226, %v2179, %v2199
      %v2244 = vsel %vm2226, %v2181, %v2201
      %v2245 = vsel %vm2226, %v2183, %v2203
      %v2246 = vsel %vm2226, %v2185, %v2205
      %v2247 = vsel %vm2226, %v2207, %v2167
      %v2248 = vsel %vm2226, %v2209, %v2169
      %v2249 = vsel %vm2226, %v2211, %v2171
      %v2250 = vsel %vm2226, %v2213, %v2173
      %v2251 = vsel %vm2226, %v2215, %v2175
      %v2252 = vsel %vm2226, %v2217, %v2177
      %v2253 = vsel %vm2226, %v2219, %v2179
      %v2254 = vsel %vm2226, %v2221, %v2181
      %v2255 = vsel %vm2226, %v2223, %v2183
      %v2256 = vsel %vm2226, %v2225, %v2185
      %v2257 = vmax.f32 %v2156, %v2237
      %v2258 = vmax.f32 %v2146, %v2227
      %v2259 = vmax.f32 %v2136, %v2247
      %v2260 = vmax.f32 %v2157, %v2238
      %v2261 = vmax.f32 %v2147, %v2228
      %v2262 = vmax.f32 %v2137, %v2248
      %v2263 = vmax.f32 %v2158, %v2239
      %v2264 = vmax.f32 %v2148, %v2229
      %v2265 = vmax.f32 %v2138, %v2249
      %v2266 = vmax.f32 %v2159, %v2240
      %v2267 = vmax.f32 %v2149, %v2230
      %v2268 = vmax.f32 %v2139, %v2250
      %v2269 = vmax.f32 %v2160, %v2241
      %v2270 = vmax.f32 %v2150, %v2231
      %v2271 = vmax.f32 %v2140, %v2251
      %v2272 = vmax.f32 %v2161, %v2242
      %v2273 = vmax.f32 %v2151, %v2232
      %v2274 = vmax.f32 %v2141, %v2252
      %v2275 = vmax.f32 %v2162, %v2243
      %v2276 = vmax.f32 %v2152, %v2233
      %v2277 = vmax.f32 %v2142, %v2253
      %v2278 = vmax.f32 %v2163, %v2244
      %v2279 = vmax.f32 %v2153, %v2234
      %v2280 = vmax.f32 %v2143, %v2254
      %v2281 = vmax.f32 %v2164, %v2245
      %v2282 = vmax.f32 %v2154, %v2235
      %v2283 = vmax.f32 %v2144, %v2255
      %v2284 = vmax.f32 %v2165, %v2246
      %v2285 = vmax.f32 %v2155, %v2236
      %v2286 = vmax.f32 %v2145, %v2256
      %v2287 = vmax.f32 %v2043, %v2257
      %v2288 = vmax.f32 %v2044, %v2258
      %v2289 = vmax.f32 %v2045, %v2259
      %v2290 = vmax.f32 %v2046, %v2260
      %v2291 = vmax.f32 %v2047, %v2261
      %v2292 = vmax.f32 %v2048, %v2262
      %v2293 = vmax.f32 %v2049, %v2263
      %v2294 = vmax.f32 %v2050, %v2264
      %v2295 = vmax.f32 %v2051, %v2265
      %v2296 = vmax.f32 %v2052, %v2266
      %v2297 = vmax.f32 %v2053, %v2267
      %v2298 = vmax.f32 %v2054, %v2268
      %v2299 = vmax.f32 %v2055, %v2269
      %v2300 = vmax.f32 %v2056, %v2270
      %v2301 = vmax.f32 %v2057, %v2271
      %v2302 = vmax.f32 %v2058, %v2272
      %v2303 = vmax.f32 %v2059, %v2273
      %v2304 = vmax.f32 %v2060, %v2274
      %v2305 = vmax.f32 %v2061, %v2275
      %v2306 = vmax.f32 %v2062, %v2276
      %v2307 = vmax.f32 %v2063, %v2277
      %v2308 = vmax.f32 %v2064, %v2278
      %v2309 = vmax.f32 %v2065, %v2279
      %v2310 = vmax.f32 %v2066, %v2280
      %v2311 = vmax.f32 %v2067, %v2281
      %v2312 = vmax.f32 %v2068, %v2282
      %v2313 = vmax.f32 %v2069, %v2283
      %v2314 = vmax.f32 %v2070, %v2284
      %v2315 = vmax.f32 %v2071, %v2285
      %v2316 = vmax.f32 %v2072, %v2286
      %v2317 = vpack.c.bf16 %v2290, %v2287
      %v2318 = vpack.c.bf16 %v2291, %v2288
      %v2319 = vpack.c.bf16 %v2292, %v2289
      %v2320 = vpack.c.bf16 %v2296, %v2293
      %v2321 = vpack.c.bf16 %v2297, %v2294
      %v2322 = vpack.c.bf16 %v2298, %v2295
      %v2323 = vpack.c.bf16 %v2302, %v2299
      %v2324 = vpack.c.bf16 %v2303, %v2300
      %v2325 = vpack.c.bf16 %v2304, %v2301
      %v2326 = vpack.c.bf16 %v2308, %v2305
      %v2327 = vpack.c.bf16 %v2309, %v2306
      %v2328 = vpack.c.bf16 %v2310, %v2307
      %v2329 = vpack.c.bf16 %v2314, %v2311
      %v2330 = vpack.c.bf16 %v2315, %v2312
      %v2331 = vpack.c.bf16 %v2316, %v2313
      %v2332 = vld [vmem:[%s6] sm:$0xf]
      %v2333 = vld [vmem:[%s6 + $0x4] sm:$0xf]
      %v2334 = vld [vmem:[%s6 + $0x8] sm:$0xf]
      %v2335 = vld [vmem:[%s6 + $0xc] sm:$0xf]
      %v2336 = vld [vmem:[%s6 + $0x10] sm:$0xf]
      %v2337 = vld [vmem:[%s6 + $0x14] sm:$0xf]
      %v2338 = vld [vmem:[%s6 + $0x18] sm:$0xf]
      %v2339 = vld [vmem:[%s6 + $0x1c] sm:$0xf]
      %v2340 = vld [vmem:[%s6 + $0x20] sm:$0xf]
      %v2341 = vld [vmem:[%s6 + $0x24] sm:$0xf]
      %v2342 = vld [vmem:[%s6 + $0x28] sm:$0xf]
      %v2343 = vld [vmem:[%s6 + $0x2c] sm:$0xf]
      %v2344 = vld [vmem:[%s6 + $0x30] sm:$0xf]
      %v2345 = vld [vmem:[%s6 + $0x34] sm:$0xf]
      %v2346 = vld [vmem:[%s6 + $0x38] sm:$0xf]
      %v2347 = vld [vmem:[%s6 + $0x3c] sm:$0xf]
      %v2348 = vld [vmem:[%s6 + $0x40] sm:$0xf]
      %v2349 = vld [vmem:[%s6 + $0x44] sm:$0xf]
      %v2350 = vld [vmem:[%s6 + $0x48] sm:$0xf]
      %v2351 = vld [vmem:[%s6 + $0x4c] sm:$0xf]
      %v2352 = vld [vmem:[%s6 + $0x50] sm:$0xf]
      %v2353 = vld [vmem:[%s6 + $0x54] sm:$0xf]
      %v2354 = vld [vmem:[%s6 + $0x58] sm:$0xf]
      %v2355 = vld [vmem:[%s6 + $0x5c] sm:$0xf]
      %v2356 = vld [vmem:[%s6 + $0x60] sm:$0xf]
      %v2357 = vld [vmem:[%s6 + $0x64] sm:$0xf]
      %v2358 = vld [vmem:[%s6 + $0x68] sm:$0xf]
      %v2359 = vld [vmem:[%s6 + $0x6c] sm:$0xf]
      %v2360 = vld [vmem:[%s6 + $0x70] sm:$0xf]
      %v2361 = vld [vmem:[%s6 + $0x74] sm:$0xf]
      %v2362 = vld [vmem:[%s6 + $0x78] sm:$0xf]
      %v2363 = vld [vmem:[%s6 + $0x7c] sm:$0xf]
      %v2364 = vld [vmem:[%s6 + $0x80] sm:$0xf]
      %v2365 = vld [vmem:[%s6 + $0x84] sm:$0xf]
      %v2366 = vld [vmem:[%s6 + $0x88] sm:$0xf]
      %v2367 = vld [vmem:[%s6 + $0x8c] sm:$0xf]
      %v2368 = vld [vmem:[%s6 + $0x90] sm:$0xf]
      %v2369 = vld [vmem:[%s6 + $0x94] sm:$0xf]
      %v2370 = vld [vmem:[%s6 + $0x98] sm:$0xf]
      %v2371 = vld [vmem:[%s6 + $0x9c] sm:$0xf]
      %v2372 = vld [vmem:[%s6 + $0xa0] sm:$0xf]
      %v2373 = vld [vmem:[%s6 + $0xa4] sm:$0xf]
      %v2374 = vld [vmem:[%s6 + $0xa8] sm:$0xf]
      %v2375 = vld [vmem:[%s6 + $0xac] sm:$0xf]
      %v2376 = vld [vmem:[%s6 + $0xb0] sm:$0xf]
      %v2377 = vld [vmem:[%s6 + $0xb4] sm:$0xf]
      %v2378 = vld [vmem:[%s6 + $0xb8] sm:$0xf]
      %v2379 = vld [vmem:[%s6 + $0xbc] sm:$0xf]
      %v2428 = vunpack.c.l.b16 %v2332
      %v2429 = vunpack.c.l.b16 %v2333
      %v2430 = vunpack.c.l.b16 %v2334
      %v2431 = vunpack.c.l.b16 %v2335
      %v2432 = vunpack.c.l.b16 %v2336
      %v2433 = vunpack.c.l.b16 %v2337
      %v2434 = vunpack.c.l.b16 %v2338
      %v2435 = vunpack.c.l.b16 %v2339
      %v2436 = vunpack.c.l.b16 %v2340
      %v2437 = vunpack.c.l.b16 %v2341
      %v2438 = vunpack.c.l.b16 %v2342
      %v2439 = vunpack.c.l.b16 %v2343
      %v2440 = vunpack.c.l.b16 %v2344
      %v2441 = vunpack.c.l.b16 %v2345
      %v2442 = vunpack.c.l.b16 %v2346
      %v2443 = vunpack.c.l.b16 %v2347
      %v2444 = vunpack.c.l.b16 %v2348
      %v2445 = vunpack.c.l.b16 %v2349
      %v2446 = vunpack.c.l.b16 %v2350
      %v2447 = vunpack.c.l.b16 %v2351
      %v2448 = vunpack.c.l.b16 %v2352
      %v2449 = vunpack.c.l.b16 %v2353
      %v2450 = vunpack.c.l.b16 %v2354
      %v2451 = vunpack.c.l.b16 %v2355
      %v2452 = vunpack.c.l.b16 %v2356
      %v2453 = vunpack.c.l.b16 %v2357
      %v2454 = vunpack.c.l.b16 %v2358
      %v2455 = vunpack.c.l.b16 %v2359
      %v2456 = vunpack.c.l.b16 %v2360
      %v2457 = vunpack.c.l.b16 %v2361
      %v2458 = vunpack.c.l.b16 %v2362
      %v2459 = vunpack.c.l.b16 %v2363
      %v2460 = vunpack.c.l.b16 %v2364
      %v2461 = vunpack.c.l.b16 %v2365
      %v2462 = vunpack.c.l.b16 %v2366
      %v2463 = vunpack.c.l.b16 %v2367
      %v2464 = vunpack.c.l.b16 %v2368
      %v2465 = vunpack.c.l.b16 %v2369
      %v2466 = vunpack.c.l.b16 %v2370
      %v2467 = vunpack.c.l.b16 %v2371
      %v2468 = vunpack.c.l.b16 %v2372
      %v2469 = vunpack.c.l.b16 %v2373
      %v2470 = vunpack.c.l.b16 %v2374
      %v2471 = vunpack.c.l.b16 %v2375
      %v2472 = vunpack.c.l.b16 %v2376
      %v2473 = vunpack.c.l.b16 %v2377
      %v2474 = vunpack.c.l.b16 %v2378
      %v2475 = vunpack.c.l.b16 %v2379
      %v2476 = vpack.c.b16 %v2429, %v2428
      %v2477 = vpack.c.b16 %v2431, %v2430
      %v2478 = vpack.c.b16 %v2433, %v2432
      %v2479 = vpack.c.b16 %v2435, %v2434
      %v2480 = vpack.c.b16 %v2437, %v2436
      %v2481 = vpack.c.b16 %v2439, %v2438
      %v2482 = vpack.c.b16 %v2441, %v2440
      %v2483 = vpack.c.b16 %v2443, %v2442
      %v2484 = vpack.c.b16 %v2445, %v2444
      %v2485 = vpack.c.b16 %v2447, %v2446
      %v2486 = vpack.c.b16 %v2449, %v2448
      %v2487 = vpack.c.b16 %v2451, %v2450
      %v2488 = vpack.c.b16 %v2453, %v2452
      %v2489 = vpack.c.b16 %v2455, %v2454
      %v2490 = vpack.c.b16 %v2457, %v2456
      %v2491 = vpack.c.b16 %v2459, %v2458
      %v2492 = vpack.c.b16 %v2461, %v2460
      %v2493 = vpack.c.b16 %v2463, %v2462
      %v2494 = vpack.c.b16 %v2465, %v2464
      %v2495 = vpack.c.b16 %v2467, %v2466
      %v2496 = vpack.c.b16 %v2469, %v2468
      %v2497 = vpack.c.b16 %v2471, %v2470
      %v2498 = vpack.c.b16 %v2473, %v2472
      %v2499 = vpack.c.b16 %v2475, %v2474
      %2524 = vmatprep.subr.bf16.mxu0 0
      %2525 = vmatpush1.bf16.msra.mxu0 %v2476
      %2526 = vmatprep.subr.bf16.mxu0 0
      %2527 = vmatpush1.bf16.msra.mxu0 %v2477
      %2528 = vmatprep.subr.bf16.mxu0 0
      %2529 = vmatpush1.bf16.msra.mxu0 %v2478
      %2530 = vmatprep.subr.bf16.mxu0 0
      %2531 = vmatpush1.bf16.msra.mxu0 %v2479
      %2532 = vmatprep.subr.bf16.mxu0 0
      %2533 = vmatpush1.bf16.msra.mxu0 %v2480
      %2534 = vmatprep.subr.bf16.mxu0 0
      %2535 = vmatpush1.bf16.msra.mxu0 %v2481
      %2536 = vmatprep.subr.bf16.mxu0 0
      %2537 = vmatpush1.bf16.msra.mxu0 %v2482
      %2538 = vmatprep.subr.bf16.mxu0 0
      %2539 = vmatpush1.bf16.msra.mxu0 %v2483
      %2540 = vmatprep.subr.bf16.mxu0 0
      %2541 = vmatpush1.bf16.msra.mxu0 %v2484
      %2542 = vmatprep.subr.bf16.mxu0 0
      %2543 = vmatpush1.bf16.msra.mxu0 %v2485
      %2544 = vmatprep.subr.bf16.mxu0 0
      %2545 = vmatpush1.bf16.msra.mxu0 %v2486
      %2546 = vmatprep.subr.bf16.mxu0 0
      %2547 = vmatpush1.bf16.msra.mxu0 %v2487
      %2548 = vmatprep.subr.bf16.mxu0 0
      %2549 = vmatpush1.bf16.msra.mxu0 %v2488
      %2550 = vmatprep.subr.bf16.mxu0 0
      %2551 = vmatpush1.bf16.msra.mxu0 %v2489
      %2552 = vmatprep.subr.bf16.mxu0 0
      %2553 = vmatpush1.bf16.msra.mxu0 %v2490
      %2554 = vmatprep.subr.bf16.mxu0 0
      %2555 = vmatpush1.bf16.msra.mxu0 %v2491
      %2556 = vmatprep.mubr.bf16.mxu0 %v2318
      %2557 = vmatmul.mubr.bf16.gmra.mrb[0].mxu0 %v2317
      %v2558 = vpop.f32.mrb[0].mxu0
      %v2559 = vadd.f32 0.0, %v2558
      %v2560 = vpop.f32.mrb[0].mxu0
      %v2561 = vpop.f32.mrb[0].mxu0
      %v2562 = vadd.f32 0.0, %v2561
      %v2563 = vpop.f32.mrb[0].mxu0
      %2564 = vmatprep.mubr.bf16.mxu0 %v2321
      %2565 = vmatmul.mubr.bf16.gmra.mrb[0].mxu0 %v2320
      %v2566 = vpop.f32.mrb[0].mxu0
      %v2567 = vadd.f32 0.0, %v2566
      %v2568 = vpop.f32.mrb[0].mxu0
      %v2569 = vpop.f32.mrb[0].mxu0
      %v2570 = vadd.f32 0.0, %v2569
      %v2571 = vpop.f32.mrb[0].mxu0
      %2572 = vmatprep.mubr.bf16.mxu0 %v2324
      %2573 = vmatmul.mubr.bf16.gmra.mrb[0].mxu0 %v2323
      %v2574 = vpop.f32.mrb[0].mxu0
      %v2575 = vadd.f32 0.0, %v2574
      %v2576 = vpop.f32.mrb[0].mxu0
      %v2577 = vpop.f32.mrb[0].mxu0
      %v2578 = vadd.f32 0.0, %v2577
      %v2579 = vpop.f32.mrb[0].mxu0
      %2580 = vmatprep.mubr.bf16.mxu0 %v2327
      %2581 = vmatmul.mubr.bf16.gmra.mrb[0].mxu0 %v2326
      %v2582 = vpop.f32.mrb[0].mxu0
      %v2583 = vadd.f32 0.0, %v2582
      %v2584 = vpop.f32.mrb[0].mxu0
      %v2585 = vpop.f32.mrb[0].mxu0
      %v2586 = vadd.f32 0.0, %v2585
      %v2587 = vpop.f32.mrb[0].mxu0
      %2588 = vmatprep.mubr.bf16.mxu0 %v2330
      %2589 = vmatmul.mubr.bf16.gmra.mrb[0].mxu0 %v2329
      %v2590 = vpop.f32.mrb[0].mxu0
      %v2591 = vadd.f32 0.0, %v2590
      %v2592 = vpop.f32.mrb[0].mxu0
      %v2593 = vpop.f32.mrb[0].mxu0
      %v2594 = vadd.f32 0.0, %v2593
      %v2595 = vpop.f32.mrb[0].mxu0
      %2596 = vdwg.mxu0
      %2597 = vmatprep.subr.bf16.mxu0 0
      %2598 = vmatpush1.bf16.msra.mxu0 %v2492
      %2599 = vmatprep.subr.bf16.mxu0 0
      %2600 = vmatpush1.bf16.msra.mxu0 %v2493
      %2601 = vmatprep.subr.bf16.mxu0 0
      %2602 = vmatpush1.bf16.msra.mxu0 %v2494
      %2603 = vmatprep.subr.bf16.mxu0 0
      %2604 = vmatpush1.bf16.msra.mxu0 %v2495
      %2605 = vmatprep.subr.bf16.mxu0 0
      %2606 = vmatpush1.bf16.msra.mxu0 %v2496
      %2607 = vmatprep.subr.bf16.mxu0 0
      %2608 = vmatpush1.bf16.msra.mxu0 %v2497
      %2609 = vmatprep.subr.bf16.mxu0 0
      %2610 = vmatpush1.bf16.msra.mxu0 %v2498
      %2611 = vmatprep.subr.bf16.mxu0 0
      %2612 = vmatpush1.bf16.msra.mxu0 %v2499
      %2613 = vmatprep.subr.bf16.mxu0 0
      %2614 = vmatpush1.bf16.msra.mxu0 0
      %2615 = vmatprep.subr.bf16.mxu0 0
      %2616 = vmatpush1.bf16.msra.mxu0 0
      %2617 = vmatprep.subr.bf16.mxu0 0
      %2618 = vmatpush1.bf16.msra.mxu0 0
      %2619 = vmatprep.subr.bf16.mxu0 0
      %2620 = vmatpush1.bf16.msra.mxu0 0
      %2621 = vmatprep.subr.bf16.mxu0 0
      %2622 = vmatpush1.bf16.msra.mxu0 0
      %2623 = vmatprep.subr.bf16.mxu0 0
      %2624 = vmatpush1.bf16.msra.mxu0 0
      %2625 = vmatprep.subr.bf16.mxu0 0
      %2626 = vmatpush1.bf16.msra.mxu0 0
      %2627 = vmatprep.subr.bf16.mxu0 0
      %2628 = vmatpush1.bf16.msra.mxu0 0
      %2629 = vmatprep.mubr.bf16.mxu0 0
      %2630 = vmatmul.mubr.bf16.gmra.mrb[0].mxu0 %v2319
      %v2631 = vpop.f32.mrb[0].mxu0
      %v2632 = vadd.f32 %v2559, %v2631
      %v2633 = vpop.f32.mrb[0].mxu0
      %v2634 = vpop.f32.mrb[0].mxu0
      %v2635 = vadd.f32 %v2562, %v2634
      %v2636 = vpop.f32.mrb[0].mxu0
      %2637 = vmatprep.mubr.bf16.mxu0 0
      %2638 = vmatmul.mubr.bf16.gmra.mrb[0].mxu0 %v2322
      %v2639 = vpop.f32.mrb[0].mxu0
      %v2640 = vadd.f32 %v2567, %v2639
      %v2641 = vpop.f32.mrb[0].mxu0
      %v2642 = vpop.f32.mrb[0].mxu0
      %v2643 = vadd.f32 %v2570, %v2642
      %v2644 = vpop.f32.mrb[0].mxu0
      %2645 = vmatprep.mubr.bf16.mxu0 0
      %2646 = vmatmul.mubr.bf16.gmra.mrb[0].mxu0 %v2325
      %v2647 = vpop.f32.mrb[0].mxu0
      %v2648 = vadd.f32 %v2575, %v2647
      %v2649 = vpop.f32.mrb[0].mxu0
      %v2650 = vpop.f32.mrb[0].mxu0
      %v2651 = vadd.f32 %v2578, %v2650
      %v2652 = vpop.f32.mrb[0].mxu0
      %2653 = vmatprep.mubr.bf16.mxu0 0
      %2654 = vmatmul.mubr.bf16.gmra.mrb[0].mxu0 %v2328
      %v2655 = vpop.f32.mrb[0].mxu0
      %v2656 = vadd.f32 %v2583, %v2655
      %v2657 = vpop.f32.mrb[0].mxu0
      %v2658 = vpop.f32.mrb[0].mxu0
      %v2659 = vadd.f32 %v2586, %v2658
      %v2660 = vpop.f32.mrb[0].mxu0
      %2661 = vmatprep.mubr.bf16.mxu0 0
      %2662 = vmatmul.mubr.bf16.gmra.mrb[0].mxu0 %v2331
      %v2663 = vpop.f32.mrb[0].mxu0
      %v2664 = vadd.f32 %v2591, %v2663
      %v2665 = vpop.f32.mrb[0].mxu0
      %v2666 = vpop.f32.mrb[0].mxu0
      %v2667 = vadd.f32 %v2594, %v2666
      %v2668 = vpop.f32.mrb[0].mxu0
      %2669 = vdwg.mxu0
      %2670 = vst [vmem:[#allocation4] sm:$0xff] %v2632
      %2671 = vst [vmem:[#allocation4 + $0x10] sm:$0xff] %v2635
      %2672 = vst [vmem:[#allocation4 + $0x20] sm:$0xff] %v2640
      %2673 = vst [vmem:[#allocation4 + $0x30] sm:$0xff] %v2643
      %2674 = vst [vmem:[#allocation4 + $0x40] sm:$0xff] %v2648
      %2675 = vst [vmem:[#allocation4 + $0x50] sm:$0xff] %v2651
      %2676 = vst [vmem:[#allocation4 + $0x60] sm:$0xff] %v2656
      %2677 = vst [vmem:[#allocation4 + $0x70] sm:$0xff] %v2659
      %2678 = vst [vmem:[#allocation4 + $0x80] sm:$0xff] %v2664
      %2679 = vst [vmem:[#allocation4 + $0x90] sm:$0xff] %v2667
      %v2680 = vld [vmem:[#allocation3 + $0x18] sm:$0xff]
      %v2681 = vld [vmem:[#allocation3 + $0x20] sm:$0xff]
      %v2682 = vld [vmem:[#allocation3 + $0x28] sm:$0xff]
      %v2683 = vld [vmem:[#allocation3 + $0x48] sm:$0xff]
      %v2684 = vld [vmem:[#allocation3 + $0x50] sm:$0xff]
      %v2685 = vld [vmem:[#allocation3 + $0x58] sm:$0xff]
      %v2686 = vld [vmem:[#allocation3 + $0x78] sm:$0xff]
      %v2687 = vld [vmem:[#allocation3 + $0x80] sm:$0xff]
      %v2688 = vld [vmem:[#allocation3 + $0x88] sm:$0xff]
      %v2689 = vld [vmem:[#allocation3 + $0xa8] sm:$0xff]
      %v2690 = vld [vmem:[#allocation3 + $0xb0] sm:$0xff]
      %v2691 = vld [vmem:[#allocation3 + $0xb8] sm:$0xff]
      %v2692 = vld [vmem:[#allocation3 + $0xd8] sm:$0xff]
      %v2693 = vld [vmem:[#allocation3 + $0xe0] sm:$0xff]
      %v2694 = vld [vmem:[#allocation3 + $0xe8] sm:$0xff]
      %v2695 = vld [vmem:[#allocation3 + $0x108] sm:$0xff]
      %v2696 = vld [vmem:[#allocation3 + $0x110] sm:$0xff]
      %v2697 = vld [vmem:[#allocation3 + $0x118] sm:$0xff]
      %v2698 = vld [vmem:[#allocation3 + $0x138] sm:$0xff]
      %v2699 = vld [vmem:[#allocation3 + $0x140] sm:$0xff]
      %v2700 = vld [vmem:[#allocation3 + $0x148] sm:$0xff]
      %v2701 = vld [vmem:[#allocation3 + $0x168] sm:$0xff]
      %v2702 = vld [vmem:[#allocation3 + $0x170] sm:$0xff]
      %v2703 = vld [vmem:[#allocation3 + $0x178] sm:$0xff]
      %v2704 = vld [vmem:[#allocation3 + $0x198] sm:$0xff]
      %v2705 = vld [vmem:[#allocation3 + $0x1a0] sm:$0xff]
      %v2706 = vld [vmem:[#allocation3 + $0x1a8] sm:$0xff]
      %v2707 = vld [vmem:[#allocation3 + $0x1c8] sm:$0xff]
      %v2708 = vld [vmem:[#allocation3 + $0x1d0] sm:$0xff]
      %v2709 = vld [vmem:[#allocation3 + $0x1d8] sm:$0xff]
      %v2710 = vld [vmem:[#allocation3 + $0x1f8] sm:$0xff]
      %v2711 = vld [vmem:[#allocation3 + $0x200] sm:$0xff]
      %v2712 = vld [vmem:[#allocation3 + $0x208] sm:$0xff]
      %v2713 = vld [vmem:[#allocation3 + $0x228] sm:$0xff]
      %v2714 = vld [vmem:[#allocation3 + $0x230] sm:$0xff]
      %v2715 = vld [vmem:[#allocation3 + $0x238] sm:$0xff]
      %v2716 = vld [vmem:[#allocation3 + $0x258] sm:$0xff]
      %v2717 = vld [vmem:[#allocation3 + $0x260] sm:$0xff]
      %v2718 = vld [vmem:[#allocation3 + $0x268] sm:$0xff]
      %v2719 = vld [vmem:[#allocation3 + $0x288] sm:$0xff]
      %v2720 = vld [vmem:[#allocation3 + $0x290] sm:$0xff]
      %v2721 = vld [vmem:[#allocation3 + $0x298] sm:$0xff]
      %v2722 = vld [vmem:[#allocation3 + $0x2b8] sm:$0xff]
      %v2723 = vld [vmem:[#allocation3 + $0x2c0] sm:$0xff]
      %v2724 = vld [vmem:[#allocation3 + $0x2c8] sm:$0xff]
      %v2725 = vld [vmem:[#allocation3 + $0x2e8] sm:$0xff]
      %v2726 = vld [vmem:[#allocation3 + $0x2f0] sm:$0xff]
      %v2727 = vld [vmem:[#allocation3 + $0x2f8] sm:$0xff]
      %2728 = vmatprep.subr.bf16.mxu0 %v2681
      %2729 = vmatpush1.bf16.msra.mxu0 %v2680
      %2730 = vmatprep.subr.bf16.mxu0 %v2684
      %2731 = vmatpush1.bf16.msra.mxu0 %v2683
      %2732 = vmatprep.subr.bf16.mxu0 %v2687
      %2733 = vmatpush1.bf16.msra.mxu0 %v2686
      %2734 = vmatprep.subr.bf16.mxu0 %v2690
      %2735 = vmatpush1.bf16.msra.mxu0 %v2689
      %2736 = vmatprep.subr.bf16.mxu0 %v2693
      %2737 = vmatpush1.bf16.msra.mxu0 %v2692
      %2738 = vmatprep.subr.bf16.mxu0 %v2696
      %2739 = vmatpush1.bf16.msra.mxu0 %v2695
      %2740 = vmatprep.subr.bf16.mxu0 %v2699
      %2741 = vmatpush1.bf16.msra.mxu0 %v2698
      %2742 = vmatprep.subr.bf16.mxu0 %v2702
      %2743 = vmatpush1.bf16.msra.mxu0 %v2701
      %2744 = vmatprep.subr.bf16.mxu0 %v2705
      %2745 = vmatpush1.bf16.msra.mxu0 %v2704
      %2746 = vmatprep.subr.bf16.mxu0 %v2708
      %2747 = vmatpush1.bf16.msra.mxu0 %v2707
      %2748 = vmatprep.subr.bf16.mxu0 %v2711
      %2749 = vmatpush1.bf16.msra.mxu0 %v2710
      %2750 = vmatprep.subr.bf16.mxu0 %v2714
      %2751 = vmatpush1.bf16.msra.mxu0 %v2713
      %2752 = vmatprep.subr.bf16.mxu0 %v2717
      %2753 = vmatpush1.bf16.msra.mxu0 %v2716
      %2754 = vmatprep.subr.bf16.mxu0 %v2720
      %2755 = vmatpush1.bf16.msra.mxu0 %v2719
      %2756 = vmatprep.subr.bf16.mxu0 %v2723
      %2757 = vmatpush1.bf16.msra.mxu0 %v2722
      %2758 = vmatprep.subr.bf16.mxu0 %v2726
      %2759 = vmatpush1.bf16.msra.mxu0 %v2725
      %2760 = vmatprep.mubr.bf16.mxu0 %v1868
      %2761 = vmatmul.mubr.bf16.gmra.mrb[0].mxu0 %v1867
      %v2762 = vpop.f32.mrb[0].mxu0
      %v2763 = vadd.f32 0.0, %v2762
      %v2764 = vpop.f32.mrb[0].mxu0
      %v2765 = vadd.f32 0.0, %v2764
      %v2766 = vpop.f32.mrb[0].mxu0
      %v2767 = vadd.f32 0.0, %v2766
      %v2768 = vpop.f32.mrb[0].mxu0
      %v2769 = vadd.f32 0.0, %v2768
      %2770 = vmatprep.mubr.bf16.mxu0 %v1870
      %2771 = vmatmul.mubr.bf16.gmra.mrb[0].mxu0 %v1869
      %v2772 = vpop.f32.mrb[0].mxu0
      %v2773 = vadd.f32 0.0, %v2772
      %v2774 = vpop.f32.mrb[0].mxu0
      %v2775 = vadd.f32 0.0, %v2774
      %v2776 = vpop.f32.mrb[0].mxu0
      %v2777 = vadd.f32 0.0, %v2776
      %v2778 = vpop.f32.mrb[0].mxu0
      %v2779 = vadd.f32 0.0, %v2778
      %2780 = vmatprep.mubr.bf16.mxu0 %v1872
      %2781 = vmatmul.mubr.bf16.gmra.mrb[0].mxu0 %v1871
      %v2782 = vpop.f32.mrb[0].mxu0
      %v2783 = vadd.f32 0.0, %v2782
      %v2784 = vpop.f32.mrb[0].mxu0
      %v2785 = vadd.f32 0.0, %v2784
      %v2786 = vpop.f32.mrb[0].mxu0
      %v2787 = vadd.f32 0.0, %v2786
      %v2788 = vpop.f32.mrb[0].mxu0
      %v2789 = vadd.f32 0.0, %v2788
      %2790 = vmatprep.mubr.bf16.mxu0 %v1874
      %2791 = vmatmul.mubr.bf16.gmra.mrb[0].mxu0 %v1873
      %v2792 = vpop.f32.mrb[0].mxu0
      %v2793 = vadd.f32 0.0, %v2792
      %v2794 = vpop.f32.mrb[0].mxu0
      %v2795 = vadd.f32 0.0, %v2794
      %v2796 = vpop.f32.mrb[0].mxu0
      %v2797 = vadd.f32 0.0, %v2796
      %v2798 = vpop.f32.mrb[0].mxu0
      %v2799 = vadd.f32 0.0, %v2798
      %2800 = vmatprep.mubr.bf16.mxu0 %v1876
      %2801 = vmatmul.mubr.bf16.gmra.mrb[0].mxu0 %v1875
      %v2802 = vpop.f32.mrb[0].mxu0
      %v2803 = vadd.f32 0.0, %v2802
      %v2804 = vpop.f32.mrb[0].mxu0
      %v2805 = vadd.f32 0.0, %v2804
      %v2806 = vpop.f32.mrb[0].mxu0
      %v2807 = vadd.f32 0.0, %v2806
      %v2808 = vpop.f32.mrb[0].mxu0
      %v2809 = vadd.f32 0.0, %v2808
      %2810 = vdwg.mxu0
      %2811 = vmatprep.subr.bf16.mxu0 0
      %2812 = vmatpush1.bf16.msra.mxu0 %v2682
      %2813 = vmatprep.subr.bf16.mxu0 0
      %2814 = vmatpush1.bf16.msra.mxu0 %v2685
      %2815 = vmatprep.subr.bf16.mxu0 0
      %2816 = vmatpush1.bf16.msra.mxu0 %v2688
      %2817 = vmatprep.subr.bf16.mxu0 0
      %2818 = vmatpush1.bf16.msra.mxu0 %v2691
      %2819 = vmatprep.subr.bf16.mxu0 0
      %2820 = vmatpush1.bf16.msra.mxu0 %v2694
      %2821 = vmatprep.subr.bf16.mxu0 0
      %2822 = vmatpush1.bf16.msra.mxu0 %v2697
      %2823 = vmatprep.subr.bf16.mxu0 0
      %2824 = vmatpush1.bf16.msra.mxu0 %v2700
      %2825 = vmatprep.subr.bf16.mxu0 0
      %2826 = vmatpush1.bf16.msra.mxu0 %v2703
      %2827 = vmatprep.subr.bf16.mxu0 0
      %2828 = vmatpush1.bf16.msra.mxu0 %v2706
      %2829 = vmatprep.subr.bf16.mxu0 0
      %2830 = vmatpush1.bf16.msra.mxu0 %v2709
      %2831 = vmatprep.subr.bf16.mxu0 0
      %2832 = vmatpush1.bf16.msra.mxu0 %v2712
      %2833 = vmatprep.subr.bf16.mxu0 0
      %2834 = vmatpush1.bf16.msra.mxu0 %v2715
      %2835 = vmatprep.subr.bf16.mxu0 0
      %2836 = vmatpush1.bf16.msra.mxu0 %v2718
      %2837 = vmatprep.subr.bf16.mxu0 0
      %2838 = vmatpush1.bf16.msra.mxu0 %v2721
      %2839 = vmatprep.subr.bf16.mxu0 0
      %2840 = vmatpush1.bf16.msra.mxu0 %v2724
      %2841 = vmatprep.subr.bf16.mxu0 0
      %2842 = vmatpush1.bf16.msra.mxu0 %v2727
      %2843 = vmatprep.mubr.bf16.mxu0 %v1868
      %2844 = vmatmul.mubr.bf16.gmra.mrb[0].mxu0 %v1867
      %v2845 = vpop.f32.mrb[0].mxu0
      %v2846 = vadd.f32 0.0, %v2845
      %v2847 = vpop.f32.mrb[0].mxu0
      %v2848 = vpop.f32.mrb[0].mxu0
      %v2849 = vadd.f32 0.0, %v2848
      %v2850 = vpop.f32.mrb[0].mxu0
      %2851 = vmatprep.mubr.bf16.mxu0 %v1870
      %2852 = vmatmul.mubr.bf16.gmra.mrb[0].mxu0 %v1869
      %v2853 = vpop.f32.mrb[0].mxu0
      %v2854 = vadd.f32 0.0, %v2853
      %v2855 = vpop.f32.mrb[0].mxu0
      %v2856 = vpop.f32.mrb[0].mxu0
      %v2857 = vadd.f32 0.0, %v2856
      %v2858 = vpop.f32.mrb[0].mxu0
      %2859 = vmatprep.mubr.bf16.mxu0 %v1872
      %2860 = vmatmul.mubr.bf16.gmra.mrb[0].mxu0 %v1871
      %v2861 = vpop.f32.mrb[0].mxu0
      %v2862 = vadd.f32 0.0, %v2861
      %v2863 = vpop.f32.mrb[0].mxu0
      %v2864 = vpop.f32.mrb[0].mxu0
      %v2865 = vadd.f32 0.0, %v2864
      %v2866 = vpop.f32.mrb[0].mxu0
      %2867 = vmatprep.mubr.bf16.mxu0 %v1874
      %2868 = vmatmul.mubr.bf16.gmra.mrb[0].mxu0 %v1873
      %v2869 = vpop.f32.mrb[0].mxu0
      %v2870 = vadd.f32 0.0, %v2869
      %v2871 = vpop.f32.mrb[0].mxu0
      %v2872 = vpop.f32.mrb[0].mxu0
      %v2873 = vadd.f32 0.0, %v2872
      %v2874 = vpop.f32.mrb[0].mxu0
      %2875 = vmatprep.mubr.bf16.mxu0 %v1876
      %2876 = vmatmul.mubr.bf16.gmra.mrb[0].mxu0 %v1875
      %v2877 = vpop.f32.mrb[0].mxu0
      %v2878 = vadd.f32 0.0, %v2877
      %v2879 = vpop.f32.mrb[0].mxu0
      %v2880 = vpop.f32.mrb[0].mxu0
      %v2881 = vadd.f32 0.0, %v2880
      %v2882 = vpop.f32.mrb[0].mxu0
      %2883 = vdwg.mxu0
      %v2884 = vand.u32 2147483647, %v2763
      %v2885 = vand.u32 2147483647, %v2765
      %v2886 = vand.u32 2147483647, %v2846
      %v2887 = vand.u32 2147483647, %v2767
      %v2888 = vand.u32 2147483647, %v2769
      %v2889 = vand.u32 2147483647, %v2849
      %v2890 = vand.u32 2147483647, %v2773
      %v2891 = vand.u32 2147483647, %v2775
      %v2892 = vand.u32 2147483647, %v2854
      %v2893 = vand.u32 2147483647, %v2777
      %v2894 = vand.u32 2147483647, %v2779
      %v2895 = vand.u32 2147483647, %v2857
      %v2896 = vand.u32 2147483647, %v2783
      %v2897 = vand.u32 2147483647, %v2785
      %v2898 = vand.u32 2147483647, %v2862
      %v2899 = vand.u32 2147483647, %v2787
      %v2900 = vand.u32 2147483647, %v2789
      %v2901 = vand.u32 2147483647, %v2865
      %v2902 = vand.u32 2147483647, %v2793
      %v2903 = vand.u32 2147483647, %v2795
      %v2904 = vand.u32 2147483647, %v2870
      %v2905 = vand.u32 2147483647, %v2797
      %v2906 = vand.u32 2147483647, %v2799
      %v2907 = vand.u32 2147483647, %v2873
      %v2908 = vand.u32 2147483647, %v2803
      %v2909 = vand.u32 2147483647, %v2805
      %v2910 = vand.u32 2147483647, %v2878
      %v2911 = vand.u32 2147483647, %v2807
      %v2912 = vand.u32 2147483647, %v2809
      %v2913 = vand.u32 2147483647, %v2881
      %2914 = vrot.lane.b32.xlu0 %v2884, 1
      %v2915 = vpop.permute.xlu0 %2914
      %2916 = vrot.lane.b32.xlu0 %v2887, 1
      %v2917 = vpop.permute.xlu0 %2916
      %2918 = vrot.lane.b32.xlu0 %v2890, 1
      %v2919 = vpop.permute.xlu0 %2918
      %2920 = vrot.lane.b32.xlu0 %v2893, 1
      %v2921 = vpop.permute.xlu0 %2920
      %2922 = vrot.lane.b32.xlu0 %v2896, 1
      %v2923 = vpop.permute.xlu0 %2922
      %2924 = vrot.lane.b32.xlu0 %v2899, 1
      %v2925 = vpop.permute.xlu0 %2924
      %2926 = vrot.lane.b32.xlu0 %v2902, 1
      %v2927 = vpop.permute.xlu0 %2926
      %2928 = vrot.lane.b32.xlu0 %v2905, 1
      %v2929 = vpop.permute.xlu0 %2928
      %2930 = vrot.lane.b32.xlu0 %v2908, 1
      %v2931 = vpop.permute.xlu0 %2930
      %2932 = vrot.lane.b32.xlu0 %v2911, 1
      %v2933 = vpop.permute.xlu0 %2932
      %2934 = vrot.lane.b32.xlu0 %v2885, 1
      %v2935 = vpop.permute.xlu0 %2934
      %2936 = vrot.lane.b32.xlu0 %v2888, 1
      %v2937 = vpop.permute.xlu0 %2936
      %2938 = vrot.lane.b32.xlu0 %v2891, 1
      %v2939 = vpop.permute.xlu0 %2938
      %2940 = vrot.lane.b32.xlu0 %v2894, 1
      %v2941 = vpop.permute.xlu0 %2940
      %2942 = vrot.lane.b32.xlu0 %v2897, 1
      %v2943 = vpop.permute.xlu0 %2942
      %2944 = vrot.lane.b32.xlu0 %v2900, 1
      %v2945 = vpop.permute.xlu0 %2944
      %2946 = vrot.lane.b32.xlu0 %v2903, 1
      %v2947 = vpop.permute.xlu0 %2946
      %2948 = vrot.lane.b32.xlu0 %v2906, 1
      %v2949 = vpop.permute.xlu0 %2948
      %2950 = vrot.lane.b32.xlu0 %v2909, 1
      %v2951 = vpop.permute.xlu0 %2950
      %2952 = vrot.lane.b32.xlu0 %v2912, 1
      %v2953 = vpop.permute.xlu0 %2952
      %2954 = vrot.lane.b32.xlu0 %v2886, 1
      %v2955 = vpop.permute.xlu0 %2954
      %2956 = vrot.lane.b32.xlu0 %v2889, 1
      %v2957 = vpop.permute.xlu0 %2956
      %2958 = vrot.lane.b32.xlu0 %v2892, 1
      %v2959 = vpop.permute.xlu0 %2958
      %2960 = vrot.lane.b32.xlu0 %v2895, 1
      %v2961 = vpop.permute.xlu0 %2960
      %2962 = vrot.lane.b32.xlu0 %v2898, 1
      %v2963 = vpop.permute.xlu0 %2962
      %2964 = vrot.lane.b32.xlu0 %v2901, 1
      %v2965 = vpop.permute.xlu0 %2964
      %2966 = vrot.lane.b32.xlu0 %v2904, 1
      %v2967 = vpop.permute.xlu0 %2966
      %2968 = vrot.lane.b32.xlu0 %v2907, 1
      %v2969 = vpop.permute.xlu0 %2968
      %2970 = vrot.lane.b32.xlu0 %v2910, 1
      %v2971 = vpop.permute.xlu0 %2970
      %2972 = vrot.lane.b32.xlu0 %v2913, 1
      %v2973 = vpop.permute.xlu0 %2972
      %v2974 = vsel %vm2135, %v2935, %v2955
      %v2975 = vsel %vm2135, %v2937, %v2957
      %v2976 = vsel %vm2135, %v2939, %v2959
      %v2977 = vsel %vm2135, %v2941, %v2961
      %v2978 = vsel %vm2135, %v2943, %v2963
      %v2979 = vsel %vm2135, %v2945, %v2965
      %v2980 = vsel %vm2135, %v2947, %v2967
      %v2981 = vsel %vm2135, %v2949, %v2969
      %v2982 = vsel %vm2135, %v2951, %v2971
      %v2983 = vsel %vm2135, %v2953, %v2973
      %v2984 = vsel %vm2135, %v2915, %v2935
      %v2985 = vsel %vm2135, %v2917, %v2937
      %v2986 = vsel %vm2135, %v2919, %v2939
      %v2987 = vsel %vm2135, %v2921, %v2941
      %v2988 = vsel %vm2135, %v2923, %v2943
      %v2989 = vsel %vm2135, %v2925, %v2945
      %v2990 = vsel %vm2135, %v2927, %v2947
      %v2991 = vsel %vm2135, %v2929, %v2949
      %v2992 = vsel %vm2135, %v2931, %v2951
      %v2993 = vsel %vm2135, %v2933, %v2953
      %v2994 = vsel %vm2135, %v2955, %v2915
      %v2995 = vsel %vm2135, %v2957, %v2917
      %v2996 = vsel %vm2135, %v2959, %v2919
      %v2997 = vsel %vm2135, %v2961, %v2921
      %v2998 = vsel %vm2135, %v2963, %v2923
      %v2999 = vsel %vm2135, %v2965, %v2925
      %v3000 = vsel %vm2135, %v2967, %v2927
      %v3001 = vsel %vm2135, %v2969, %v2929
      %v3002 = vsel %vm2135, %v2971, %v2931
      %v3003 = vsel %vm2135, %v2973, %v2933
      %3004 = vrot.lane.b32.xlu0 %v2884, 127
      %v3005 = vpop.permute.xlu0 %3004
      %3006 = vrot.lane.b32.xlu0 %v2887, 127
      %v3007 = vpop.permute.xlu0 %3006
      %3008 = vrot.lane.b32.xlu0 %v2890, 127
      %v3009 = vpop.permute.xlu0 %3008
      %3010 = vrot.lane.b32.xlu0 %v2893, 127
      %v3011 = vpop.permute.xlu0 %3010
      %3012 = vrot.lane.b32.xlu0 %v2896, 127
      %v3013 = vpop.permute.xlu0 %3012
      %3014 = vrot.lane.b32.xlu0 %v2899, 127
      %v3015 = vpop.permute.xlu0 %3014
      %3016 = vrot.lane.b32.xlu0 %v2902, 127
      %v3017 = vpop.permute.xlu0 %3016
      %3018 = vrot.lane.b32.xlu0 %v2905, 127
      %v3019 = vpop.permute.xlu0 %3018
      %3020 = vrot.lane.b32.xlu0 %v2908, 127
      %v3021 = vpop.permute.xlu0 %3020
      %3022 = vrot.lane.b32.xlu0 %v2911, 127
      %v3023 = vpop.permute.xlu0 %3022
      %3024 = vrot.lane.b32.xlu0 %v2885, 127
      %v3025 = vpop.permute.xlu0 %3024
      %3026 = vrot.lane.b32.xlu0 %v2888, 127
      %v3027 = vpop.permute.xlu0 %3026
      %3028 = vrot.lane.b32.xlu0 %v2891, 127
      %v3029 = vpop.permute.xlu0 %3028
      %3030 = vrot.lane.b32.xlu0 %v2894, 127
      %v3031 = vpop.permute.xlu0 %3030
      %3032 = vrot.lane.b32.xlu0 %v2897, 127
      %v3033 = vpop.permute.xlu0 %3032
      %3034 = vrot.lane.b32.xlu0 %v2900, 127
      %v3035 = vpop.permute.xlu0 %3034
      %3036 = vrot.lane.b32.xlu0 %v2903, 127
      %v3037 = vpop.permute.xlu0 %3036
      %3038 = vrot.lane.b32.xlu0 %v2906, 127
      %v3039 = vpop.permute.xlu0 %3038
      %3040 = vrot.lane.b32.xlu0 %v2909, 127
      %v3041 = vpop.permute.xlu0 %3040
      %3042 = vrot.lane.b32.xlu0 %v2912, 127
      %v3043 = vpop.permute.xlu0 %3042
      %3044 = vrot.lane.b32.xlu0 %v2886, 127
      %v3045 = vpop.permute.xlu0 %3044
      %3046 = vrot.lane.b32.xlu0 %v2889, 127
      %v3047 = vpop.permute.xlu0 %3046
      %3048 = vrot.lane.b32.xlu0 %v2892, 127
      %v3049 = vpop.permute.xlu0 %3048
      %3050 = vrot.lane.b32.xlu0 %v2895, 127
      %v3051 = vpop.permute.xlu0 %3050
      %3052 = vrot.lane.b32.xlu0 %v2898, 127
      %v3053 = vpop.permute.xlu0 %3052
      %3054 = vrot.lane.b32.xlu0 %v2901, 127
      %v3055 = vpop.permute.xlu0 %3054
      %3056 = vrot.lane.b32.xlu0 %v2904, 127
      %v3057 = vpop.permute.xlu0 %3056
      %3058 = vrot.lane.b32.xlu0 %v2907, 127
      %v3059 = vpop.permute.xlu0 %3058
      %3060 = vrot.lane.b32.xlu0 %v2910, 127
      %v3061 = vpop.permute.xlu0 %3060
      %3062 = vrot.lane.b32.xlu0 %v2913, 127
      %v3063 = vpop.permute.xlu0 %3062
      %v3064 = vsel %vm2226, %v3025, %v3045
      %v3065 = vsel %vm2226, %v3027, %v3047
      %v3066 = vsel %vm2226, %v3029, %v3049
      %v3067 = vsel %vm2226, %v3031, %v3051
      %v3068 = vsel %vm2226, %v3033, %v3053
      %v3069 = vsel %vm2226, %v3035, %v3055
      %v3070 = vsel %vm2226, %v3037, %v3057
      %v3071 = vsel %vm2226, %v3039, %v3059
      %v3072 = vsel %vm2226, %v3041, %v3061
      %v3073 = vsel %vm2226, %v3043, %v3063
      %v3074 = vsel %vm2226, %v3005, %v3025
      %v3075 = vsel %vm2226, %v3007, %v3027
      %v3076 = vsel %vm2226, %v3009, %v3029
      %v3077 = vsel %vm2226, %v3011, %v3031
      %v3078 = vsel %vm2226, %v3013, %v3033
      %v3079 = vsel %vm2226, %v3015, %v3035
      %v3080 = vsel %vm2226, %v3017, %v3037
      %v3081 = vsel %vm2226, %v3019, %v3039
      %v3082 = vsel %vm2226, %v3021, %v3041
      %v3083 = vsel %vm2226, %v3023, %v3043
      %v3084 = vsel %vm2226, %v3045, %v3005
      %v3085 = vsel %vm2226, %v3047, %v3007
      %v3086 = vsel %vm2226, %v3049, %v3009
      %v3087 = vsel %vm2226, %v3051, %v3011
      %v3088 = vsel %vm2226, %v3053, %v3013
      %v3089 = vsel %vm2226, %v3055, %v3015
      %v3090 = vsel %vm2226, %v3057, %v3017
      %v3091 = vsel %vm2226, %v3059, %v3019
      %v3092 = vsel %vm2226, %v3061, %v3021
      %v3093 = vsel %vm2226, %v3063, %v3023
      %v3094 = vmax.f32 %v2994, %v3074
      %v3095 = vmax.f32 %v2984, %v3064
      %v3096 = vmax.f32 %v2974, %v3084
      %v3097 = vmax.f32 %v2995, %v3075
      %v3098 = vmax.f32 %v2985, %v3065
      %v3099 = vmax.f32 %v2975, %v3085
      %v3100 = vmax.f32 %v2996, %v3076
      %v3101 = vmax.f32 %v2986, %v3066
      %v3102 = vmax.f32 %v2976, %v3086
      %v3103 = vmax.f32 %v2997, %v3077
      %v3104 = vmax.f32 %v2987, %v3067
      %v3105 = vmax.f32 %v2977, %v3087
      %v3106 = vmax.f32 %v2998, %v3078
      %v3107 = vmax.f32 %v2988, %v3068
      %v3108 = vmax.f32 %v2978, %v3088
      %v3109 = vmax.f32 %v2999, %v3079
      %v3110 = vmax.f32 %v2989, %v3069
      %v3111 = vmax.f32 %v2979, %v3089
      %v3112 = vmax.f32 %v3000, %v3080
      %v3113 = vmax.f32 %v2990, %v3070
      %v3114 = vmax.f32 %v2980, %v3090
      %v3115 = vmax.f32 %v3001, %v3081
      %v3116 = vmax.f32 %v2991, %v3071
      %v3117 = vmax.f32 %v2981, %v3091
      %v3118 = vmax.f32 %v3002, %v3082
      %v3119 = vmax.f32 %v2992, %v3072
      %v3120 = vmax.f32 %v2982, %v3092
      %v3121 = vmax.f32 %v3003, %v3083
      %v3122 = vmax.f32 %v2993, %v3073
      %v3123 = vmax.f32 %v2983, %v3093
      %v3124 = vmax.f32 %v2884, %v3094
      %v3125 = vmax.f32 %v2885, %v3095
      %v3126 = vmax.f32 %v2886, %v3096
      %v3127 = vmax.f32 %v2887, %v3097
      %v3128 = vmax.f32 %v2888, %v3098
      %v3129 = vmax.f32 %v2889, %v3099
      %v3130 = vmax.f32 %v2890, %v3100
      %v3131 = vmax.f32 %v2891, %v3101
      %v3132 = vmax.f32 %v2892, %v3102
      %v3133 = vmax.f32 %v2893, %v3103
      %v3134 = vmax.f32 %v2894, %v3104
      %v3135 = vmax.f32 %v2895, %v3105
      %v3136 = vmax.f32 %v2896, %v3106
      %v3137 = vmax.f32 %v2897, %v3107
      %v3138 = vmax.f32 %v2898, %v3108
      %v3139 = vmax.f32 %v2899, %v3109
      %v3140 = vmax.f32 %v2900, %v3110
      %v3141 = vmax.f32 %v2901, %v3111
      %v3142 = vmax.f32 %v2902, %v3112
      %v3143 = vmax.f32 %v2903, %v3113
      %v3144 = vmax.f32 %v2904, %v3114
      %v3145 = vmax.f32 %v2905, %v3115
      %v3146 = vmax.f32 %v2906, %v3116
      %v3147 = vmax.f32 %v2907, %v3117
      %v3148 = vmax.f32 %v2908, %v3118
      %v3149 = vmax.f32 %v2909, %v3119
      %v3150 = vmax.f32 %v2910, %v3120
      %v3151 = vmax.f32 %v2911, %v3121
      %v3152 = vmax.f32 %v2912, %v3122
      %v3153 = vmax.f32 %v2913, %v3123
      %v3154 = vpack.c.bf16 %v3127, %v3124
      %v3155 = vpack.c.bf16 %v3128, %v3125
      %v3156 = vpack.c.bf16 %v3129, %v3126
      %v3157 = vpack.c.bf16 %v3133, %v3130
      %v3158 = vpack.c.bf16 %v3134, %v3131
      %v3159 = vpack.c.bf16 %v3135, %v3132
      %v3160 = vpack.c.bf16 %v3139, %v3136
      %v3161 = vpack.c.bf16 %v3140, %v3137
      %v3162 = vpack.c.bf16 %v3141, %v3138
      %v3163 = vpack.c.bf16 %v3145, %v3142
      %v3164 = vpack.c.bf16 %v3146, %v3143
      %v3165 = vpack.c.bf16 %v3147, %v3144
      %v3166 = vpack.c.bf16 %v3151, %v3148
      %v3167 = vpack.c.bf16 %v3152, %v3149
      %v3168 = vpack.c.bf16 %v3153, %v3150
      %v3169 = vld [vmem:[%s7] sm:$0xf]
      %v3170 = vld [vmem:[%s7 + $0x4] sm:$0xf]
      %v3171 = vld [vmem:[%s7 + $0x8] sm:$0xf]
      %v3172 = vld [vmem:[%s7 + $0xc] sm:$0xf]
      %v3173 = vld [vmem:[%s7 + $0x10] sm:$0xf]
      %v3174 = vld [vmem:[%s7 + $0x14] sm:$0xf]
      %v3175 = vld [vmem:[%s7 + $0x18] sm:$0xf]
      %v3176 = vld [vmem:[%s7 + $0x1c] sm:$0xf]
      %v3177 = vld [vmem:[%s7 + $0x20] sm:$0xf]
      %v3178 = vld [vmem:[%s7 + $0x24] sm:$0xf]
      %v3179 = vld [vmem:[%s7 + $0x28] sm:$0xf]
      %v3180 = vld [vmem:[%s7 + $0x2c] sm:$0xf]
      %v3181 = vld [vmem:[%s7 + $0x30] sm:$0xf]
      %v3182 = vld [vmem:[%s7 + $0x34] sm:$0xf]
      %v3183 = vld [vmem:[%s7 + $0x38] sm:$0xf]
      %v3184 = vld [vmem:[%s7 + $0x3c] sm:$0xf]
      %v3185 = vld [vmem:[%s7 + $0x40] sm:$0xf]
      %v3186 = vld [vmem:[%s7 + $0x44] sm:$0xf]
      %v3187 = vld [vmem:[%s7 + $0x48] sm:$0xf]
      %v3188 = vld [vmem:[%s7 + $0x4c] sm:$0xf]
      %v3189 = vld [vmem:[%s7 + $0x50] sm:$0xf]
      %v3190 = vld [vmem:[%s7 + $0x54] sm:$0xf]
      %v3191 = vld [vmem:[%s7 + $0x58] sm:$0xf]
      %v3192 = vld [vmem:[%s7 + $0x5c] sm:$0xf]
      %v3193 = vld [vmem:[%s7 + $0x60] sm:$0xf]
      %v3194 = vld [vmem:[%s7 + $0x64] sm:$0xf]
      %v3195 = vld [vmem:[%s7 + $0x68] sm:$0xf]
      %v3196 = vld [vmem:[%s7 + $0x6c] sm:$0xf]
      %v3197 = vld [vmem:[%s7 + $0x70] sm:$0xf]
      %v3198 = vld [vmem:[%s7 + $0x74] sm:$0xf]
      %v3199 = vld [vmem:[%s7 + $0x78] sm:$0xf]
      %v3200 = vld [vmem:[%s7 + $0x7c] sm:$0xf]
      %v3201 = vld [vmem:[%s7 + $0x80] sm:$0xf]
      %v3202 = vld [vmem:[%s7 + $0x84] sm:$0xf]
      %v3203 = vld [vmem:[%s7 + $0x88] sm:$0xf]
      %v3204 = vld [vmem:[%s7 + $0x8c] sm:$0xf]
      %v3205 = vld [vmem:[%s7 + $0x90] sm:$0xf]
      %v3206 = vld [vmem:[%s7 + $0x94] sm:$0xf]
      %v3207 = vld [vmem:[%s7 + $0x98] sm:$0xf]
      %v3208 = vld [vmem:[%s7 + $0x9c] sm:$0xf]
      %v3209 = vld [vmem:[%s7 + $0xa0] sm:$0xf]
      %v3210 = vld [vmem:[%s7 + $0xa4] sm:$0xf]
      %v3211 = vld [vmem:[%s7 + $0xa8] sm:$0xf]
      %v3212 = vld [vmem:[%s7 + $0xac] sm:$0xf]
      %v3213 = vld [vmem:[%s7 + $0xb0] sm:$0xf]
      %v3214 = vld [vmem:[%s7 + $0xb4] sm:$0xf]
      %v3215 = vld [vmem:[%s7 + $0xb8] sm:$0xf]
      %v3216 = vld [vmem:[%s7 + $0xbc] sm:$0xf]
      %v3265 = vunpack.c.l.b16 %v3169
      %v3266 = vunpack.c.l.b16 %v3170
      %v3267 = vunpack.c.l.b16 %v3171
      %v3268 = vunpack.c.l.b16 %v3172
      %v3269 = vunpack.c.l.b16 %v3173
      %v3270 = vunpack.c.l.b16 %v3174
      %v3271 = vunpack.c.l.b16 %v3175
      %v3272 = vunpack.c.l.b16 %v3176
      %v3273 = vunpack.c.l.b16 %v3177
      %v3274 = vunpack.c.l.b16 %v3178
      %v3275 = vunpack.c.l.b16 %v3179
      %v3276 = vunpack.c.l.b16 %v3180
      %v3277 = vunpack.c.l.b16 %v3181
      %v3278 = vunpack.c.l.b16 %v3182
      %v3279 = vunpack.c.l.b16 %v3183
      %v3280 = vunpack.c.l.b16 %v3184
      %v3281 = vunpack.c.l.b16 %v3185
      %v3282 = vunpack.c.l.b16 %v3186
      %v3283 = vunpack.c.l.b16 %v3187
      %v3284 = vunpack.c.l.b16 %v3188
      %v3285 = vunpack.c.l.b16 %v3189
      %v3286 = vunpack.c.l.b16 %v3190
      %v3287 = vunpack.c.l.b16 %v3191
      %v3288 = vunpack.c.l.b16 %v3192
      %v3289 = vunpack.c.l.b16 %v3193
      %v3290 = vunpack.c.l.b16 %v3194
      %v3291 = vunpack.c.l.b16 %v3195
      %v3292 = vunpack.c.l.b16 %v3196
      %v3293 = vunpack.c.l.b16 %v3197
      %v3294 = vunpack.c.l.b16 %v3198
      %v3295 = vunpack.c.l.b16 %v3199
      %v3296 = vunpack.c.l.b16 %v3200
      %v3297 = vunpack.c.l.b16 %v3201
      %v3298 = vunpack.c.l.b16 %v3202
      %v3299 = vunpack.c.l.b16 %v3203
      %v3300 = vunpack.c.l.b16 %v3204
      %v3301 = vunpack.c.l.b16 %v3205
      %v3302 = vunpack.c.l.b16 %v3206
      %v3303 = vunpack.c.l.b16 %v3207
      %v3304 = vunpack.c.l.b16 %v3208
      %v3305 = vunpack.c.l.b16 %v3209
      %v3306 = vunpack.c.l.b16 %v3210
      %v3307 = vunpack.c.l.b16 %v3211
      %v3308 = vunpack.c.l.b16 %v3212
      %v3309 = vunpack.c.l.b16 %v3213
      %v3310 = vunpack.c.l.b16 %v3214
      %v3311 = vunpack.c.l.b16 %v3215
      %v3312 = vunpack.c.l.b16 %v3216
      %v3313 = vpack.c.b16 %v3266, %v3265
      %v3314 = vpack.c.b16 %v3268, %v3267
      %v3315 = vpack.c.b16 %v3270, %v3269
      %v3316 = vpack.c.b16 %v3272, %v3271
      %v3317 = vpack.c.b16 %v3274, %v3273
      %v3318 = vpack.c.b16 %v3276, %v3275
      %v3319 = vpack.c.b16 %v3278, %v3277
      %v3320 = vpack.c.b16 %v3280, %v3279
      %v3321 = vpack.c.b16 %v3282, %v3281
      %v3322 = vpack.c.b16 %v3284, %v3283
      %v3323 = vpack.c.b16 %v3286, %v3285
      %v3324 = vpack.c.b16 %v3288, %v3287
      %v3325 = vpack.c.b16 %v3290, %v3289
      %v3326 = vpack.c.b16 %v3292, %v3291
      %v3327 = vpack.c.b16 %v3294, %v3293
      %v3328 = vpack.c.b16 %v3296, %v3295
      %v3329 = vpack.c.b16 %v3298, %v3297
      %v3330 = vpack.c.b16 %v3300, %v3299
      %v3331 = vpack.c.b16 %v3302, %v3301
      %v3332 = vpack.c.b16 %v3304, %v3303
      %v3333 = vpack.c.b16 %v3306, %v3305
      %v3334 = vpack.c.b16 %v3308, %v3307
      %v3335 = vpack.c.b16 %v3310, %v3309
      %v3336 = vpack.c.b16 %v3312, %v3311
      %3361 = vmatprep.subr.bf16.mxu0 0
      %3362 = vmatpush1.bf16.msra.mxu0 %v3313
      %3363 = vmatprep.subr.bf16.mxu0 0
      %3364 = vmatpush1.bf16.msra.mxu0 %v3314
      %3365 = vmatprep.subr.bf16.mxu0 0
      %3366 = vmatpush1.bf16.msra.mxu0 %v3315
      %3367 = vmatprep.subr.bf16.mxu0 0
      %3368 = vmatpush1.bf16.msra.mxu0 %v3316
      %3369 = vmatprep.subr.bf16.mxu0 0
      %3370 = vmatpush1.bf16.msra.mxu0 %v3317
      %3371 = vmatprep.subr.bf16.mxu0 0
      %3372 = vmatpush1.bf16.msra.mxu0 %v3318
      %3373 = vmatprep.subr.bf16.mxu0 0
      %3374 = vmatpush1.bf16.msra.mxu0 %v3319
      %3375 = vmatprep.subr.bf16.mxu0 0
      %3376 = vmatpush1.bf16.msra.mxu0 %v3320
      %3377 = vmatprep.subr.bf16.mxu0 0
      %3378 = vmatpush1.bf16.msra.mxu0 %v3321
      %3379 = vmatprep.subr.bf16.mxu0 0
      %3380 = vmatpush1.bf16.msra.mxu0 %v3322
      %3381 = vmatprep.subr.bf16.mxu0 0
      %3382 = vmatpush1.bf16.msra.mxu0 %v3323
      %3383 = vmatprep.subr.bf16.mxu0 0
      %3384 = vmatpush1.bf16.msra.mxu0 %v3324
      %3385 = vmatprep.subr.bf16.mxu0 0
      %3386 = vmatpush1.bf16.msra.mxu0 %v3325
      %3387 = vmatprep.subr.bf16.mxu0 0
      %3388 = vmatpush1.bf16.msra.mxu0 %v3326
      %3389 = vmatprep.subr.bf16.mxu0 0
      %3390 = vmatpush1.bf16.msra.mxu0 %v3327
      %3391 = vmatprep.subr.bf16.mxu0 0
      %3392 = vmatpush1.bf16.msra.mxu0 %v3328
      %3393 = vmatprep.mubr.bf16.mxu0 %v3155
      %3394 = vmatmul.mubr.bf16.gmra.mrb[0].mxu0 %v3154
      %v3395 = vpop.f32.mrb[0].mxu0
      %v3396 = vadd.f32 0.0, %v3395
      %v3397 = vpop.f32.mrb[0].mxu0
      %v3398 = vpop.f32.mrb[0].mxu0
      %v3399 = vadd.f32 0.0, %v3398
      %v3400 = vpop.f32.mrb[0].mxu0
      %3401 = vmatprep.mubr.bf16.mxu0 %v3158
      %3402 = vmatmul.mubr.bf16.gmra.mrb[0].mxu0 %v3157
      %v3403 = vpop.f32.mrb[0].mxu0
      %v3404 = vadd.f32 0.0, %v3403
      %v3405 = vpop.f32.mrb[0].mxu0
      %v3406 = vpop.f32.mrb[0].mxu0
      %v3407 = vadd.f32 0.0, %v3406
      %v3408 = vpop.f32.mrb[0].mxu0
      %3409 = vmatprep.mubr.bf16.mxu0 %v3161
      %3410 = vmatmul.mubr.bf16.gmra.mrb[0].mxu0 %v3160
      %v3411 = vpop.f32.mrb[0].mxu0
      %v3412 = vadd.f32 0.0, %v3411
      %v3413 = vpop.f32.mrb[0].mxu0
      %v3414 = vpop.f32.mrb[0].mxu0
      %v3415 = vadd.f32 0.0, %v3414
      %v3416 = vpop.f32.mrb[0].mxu0
      %3417 = vmatprep.mubr.bf16.mxu0 %v3164
      %3418 = vmatmul.mubr.bf16.gmra.mrb[0].mxu0 %v3163
      %v3419 = vpop.f32.mrb[0].mxu0
      %v3420 = vadd.f32 0.0, %v3419
      %v3421 = vpop.f32.mrb[0].mxu0
      %v3422 = vpop.f32.mrb[0].mxu0
      %v3423 = vadd.f32 0.0, %v3422
      %v3424 = vpop.f32.mrb[0].mxu0
      %3425 = vmatprep.mubr.bf16.mxu0 %v3167
      %3426 = vmatmul.mubr.bf16.gmra.mrb[0].mxu0 %v3166
      %v3427 = vpop.f32.mrb[0].mxu0
      %v3428 = vadd.f32 0.0, %v3427
      %v3429 = vpop.f32.mrb[0].mxu0
      %v3430 = vpop.f32.mrb[0].mxu0
      %v3431 = vadd.f32 0.0, %v3430
      %v3432 = vpop.f32.mrb[0].mxu0
      %3433 = vdwg.mxu0
      %3434 = vmatprep.subr.bf16.mxu0 0
      %3435 = vmatpush1.bf16.msra.mxu0 %v3329
      %3436 = vmatprep.subr.bf16.mxu0 0
      %3437 = vmatpush1.bf16.msra.mxu0 %v3330
      %3438 = vmatprep.subr.bf16.mxu0 0
      %3439 = vmatpush1.bf16.msra.mxu0 %v3331
      %3440 = vmatprep.subr.bf16.mxu0 0
      %3441 = vmatpush1.bf16.msra.mxu0 %v3332
      %3442 = vmatprep.subr.bf16.mxu0 0
      %3443 = vmatpush1.bf16.msra.mxu0 %v3333
      %3444 = vmatprep.subr.bf16.mxu0 0
      %3445 = vmatpush1.bf16.msra.mxu0 %v3334
      %3446 = vmatprep.subr.bf16.mxu0 0
      %3447 = vmatpush1.bf16.msra.mxu0 %v3335
      %3448 = vmatprep.subr.bf16.mxu0 0
      %3449 = vmatpush1.bf16.msra.mxu0 %v3336
      %3450 = vmatprep.subr.bf16.mxu0 0
      %3451 = vmatpush1.bf16.msra.mxu0 0
      %3452 = vmatprep.subr.bf16.mxu0 0
      %3453 = vmatpush1.bf16.msra.mxu0 0
      %3454 = vmatprep.subr.bf16.mxu0 0
      %3455 = vmatpush1.bf16.msra.mxu0 0
      %3456 = vmatprep.subr.bf16.mxu0 0
      %3457 = vmatpush1.bf16.msra.mxu0 0
      %3458 = vmatprep.subr.bf16.mxu0 0
      %3459 = vmatpush1.bf16.msra.mxu0 0
      %3460 = vmatprep.subr.bf16.mxu0 0
      %3461 = vmatpush1.bf16.msra.mxu0 0
      %3462 = vmatprep.subr.bf16.mxu0 0
      %3463 = vmatpush1.bf16.msra.mxu0 0
      %3464 = vmatprep.subr.bf16.mxu0 0
      %3465 = vmatpush1.bf16.msra.mxu0 0
      %3466 = vmatprep.mubr.bf16.mxu0 0
      %3467 = vmatmul.mubr.bf16.gmra.mrb[0].mxu0 %v3156
      %v3468 = vpop.f32.mrb[0].mxu0
      %v3469 = vadd.f32 %v3396, %v3468
      %v3470 = vpop.f32.mrb[0].mxu0
      %v3471 = vpop.f32.mrb[0].mxu0
      %v3472 = vadd.f32 %v3399, %v3471
      %v3473 = vpop.f32.mrb[0].mxu0
      %3474 = vmatprep.mubr.bf16.mxu0 0
      %3475 = vmatmul.mubr.bf16.gmra.mrb[0].mxu0 %v3159
      %v3476 = vpop.f32.mrb[0].mxu0
      %v3477 = vadd.f32 %v3404, %v3476
      %v3478 = vpop.f32.mrb[0].mxu0
      %v3479 = vpop.f32.mrb[0].mxu0
      %v3480 = vadd.f32 %v3407, %v3479
      %v3481 = vpop.f32.mrb[0].mxu0
      %3482 = vmatprep.mubr.bf16.mxu0 0
      %3483 = vmatmul.mubr.bf16.gmra.mrb[0].mxu0 %v3162
      %v3484 = vpop.f32.mrb[0].mxu0
      %v3485 = vadd.f32 %v3412, %v3484
      %v3486 = vpop.f32.mrb[0].mxu0
      %v3487 = vpop.f32.mrb[0].mxu0
      %v3488 = vadd.f32 %v3415, %v3487
      %v3489 = vpop.f32.mrb[0].mxu0
      %3490 = vmatprep.mubr.bf16.mxu0 0
      %3491 = vmatmul.mubr.bf16.gmra.mrb[0].mxu0 %v3165
      %v3492 = vpop.f32.mrb[0].mxu0
      %v3493 = vadd.f32 %v3420, %v3492
      %v3494 = vpop.f32.mrb[0].mxu0
      %v3495 = vpop.f32.mrb[0].mxu0
      %v3496 = vadd.f32 %v3423, %v3495
      %v3497 = vpop.f32.mrb[0].mxu0
      %3498 = vmatprep.mubr.bf16.mxu0 0
      %3499 = vmatmul.mubr.bf16.gmra.mrb[0].mxu0 %v3168
      %v3500 = vpop.f32.mrb[0].mxu0
      %v3501 = vadd.f32 %v3428, %v3500
      %v3502 = vpop.f32.mrb[0].mxu0
      %v3503 = vpop.f32.mrb[0].mxu0
      %v3504 = vadd.f32 %v3431, %v3503
      %v3505 = vpop.f32.mrb[0].mxu0
      %3506 = vdwg.mxu0
      %3507 = vst.msk [vmem:[#allocation4 + $0x8] sm:$0xff] %vm797, %v3469
      %3508 = vst.msk [vmem:[#allocation4 + $0x18] sm:$0xff] %vm797, %v3472
      %3509 = vst.msk [vmem:[#allocation4 + $0x28] sm:$0xff] %vm797, %v3477
      %3510 = vst.msk [vmem:[#allocation4 + $0x38] sm:$0xff] %vm797, %v3480
      %3511 = vst.msk [vmem:[#allocation4 + $0x48] sm:$0xff] %vm797, %v3485
      %3512 = vst.msk [vmem:[#allocation4 + $0x58] sm:$0xff] %vm797, %v3488
      %3513 = vst.msk [vmem:[#allocation4 + $0x68] sm:$0xff] %vm797, %v3493
      %3514 = vst.msk [vmem:[#allocation4 + $0x78] sm:$0xff] %vm797, %v3496
      %3515 = vst.msk [vmem:[#allocation4 + $0x88] sm:$0xff] %vm797, %v3501
      %3516 = vst.msk [vmem:[#allocation4 + $0x98] sm:$0xff] %vm797, %v3504
      %v3517 = vld [vmem:[#allocation4] sm:$0xff]
      %v3518 = vld [vmem:[#allocation4 + $0x8] sm:$0xff]
      %v3519 = vld [vmem:[#allocation4 + $0x10] sm:$0xff]
      %v3520 = vld [vmem:[#allocation4 + $0x18] sm:$0xff]
      %v3521 = vld [vmem:[#allocation4 + $0x20] sm:$0xff]
      %v3522 = vld [vmem:[#allocation4 + $0x28] sm:$0xff]
      %v3523 = vld [vmem:[#allocation4 + $0x30] sm:$0xff]
      %v3524 = vld [vmem:[#allocation4 + $0x38] sm:$0xff]
      %v3525 = vld [vmem:[#allocation4 + $0x40] sm:$0xff]
      %v3526 = vld [vmem:[#allocation4 + $0x48] sm:$0xff]
      %v3527 = vld [vmem:[#allocation4 + $0x50] sm:$0xff]
      %v3528 = vld [vmem:[#allocation4 + $0x58] sm:$0xff]
      %v3529 = vld [vmem:[#allocation4 + $0x60] sm:$0xff]
      %v3530 = vld [vmem:[#allocation4 + $0x68] sm:$0xff]
      %v3531 = vld [vmem:[#allocation4 + $0x70] sm:$0xff]
      %v3532 = vld [vmem:[#allocation4 + $0x78] sm:$0xff]
      %v3533 = vld [vmem:[#allocation4 + $0x80] sm:$0xff]
      %v3534 = vld [vmem:[#allocation4 + $0x88] sm:$0xff]
      %v3535 = vld [vmem:[#allocation4 + $0x90] sm:$0xff]
      %v3536 = vld [vmem:[#allocation4 + $0x98] sm:$0xff]
      %v3537 = vld [vmem:[%s4] sm:$0xff]
      %v3538 = vld [vmem:[%s4 + $0x8] sm:$0xff]
      %v3539 = vld [vmem:[%s4 + $0x10] sm:$0xff]
      %v3540 = vld [vmem:[%s4 + $0x18] sm:$0xff]
      %v3541 = vld [vmem:[%s4 + $0x20] sm:$0xff]
      %v3542 = vld [vmem:[%s4 + $0x28] sm:$0xff]
      %v3543 = vld [vmem:[%s4 + $0x30] sm:$0xff]
      %v3544 = vld [vmem:[%s4 + $0x38] sm:$0xff]
      %v3545 = vld [vmem:[%s4 + $0x40] sm:$0xff]
      %v3546 = vld [vmem:[%s4 + $0x48] sm:$0xff]
      %v3547 = vld [vmem:[%s5] sm:$0xff]
      %v3548 = vld [vmem:[%s5 + $0x8] sm:$0xff]
      %v3549 = vld [vmem:[%s5 + $0x10] sm:$0xff]
      %v3550 = vld [vmem:[%s5 + $0x18] sm:$0xff]
      %v3551 = vld [vmem:[%s5 + $0x20] sm:$0xff]
      %v3552 = vld [vmem:[%s5 + $0x28] sm:$0xff]
      %v3553 = vld [vmem:[%s5 + $0x30] sm:$0xff]
      %v3554 = vld [vmem:[%s5 + $0x38] sm:$0xff]
      %v3555 = vld [vmem:[%s5 + $0x40] sm:$0xff]
      %v3556 = vld [vmem:[%s5 + $0x48] sm:$0xff]
      %v3557 = vsel %vm797, %v3518, 0.0
      %v3558 = vadd.f32 %v3517, %v3557
      %3559 = vadd.xlane.f32.xlu0 %v3558
      %v3560 = vpop.xlane.xlu0 %3559
      %v3561 = vsel %vm797, %v3520, 0.0
      %v3562 = vadd.f32 %v3519, %v3561
      %3563 = vadd.xlane.f32.xlu0 %v3562
      %v3564 = vpop.xlane.xlu0 %3563
      %v3565 = vsel %vm797, %v3522, 0.0
      %v3566 = vadd.f32 %v3521, %v3565
      %3567 = vadd.xlane.f32.xlu0 %v3566
      %v3568 = vpop.xlane.xlu0 %3567
      %v3569 = vsel %vm797, %v3524, 0.0
      %v3570 = vadd.f32 %v3523, %v3569
      %3571 = vadd.xlane.f32.xlu0 %v3570
      %v3572 = vpop.xlane.xlu0 %3571
      %v3573 = vsel %vm797, %v3526, 0.0
      %v3574 = vadd.f32 %v3525, %v3573
      %3575 = vadd.xlane.f32.xlu0 %v3574
      %v3576 = vpop.xlane.xlu0 %3575
      %v3577 = vsel %vm797, %v3528, 0.0
      %v3578 = vadd.f32 %v3527, %v3577
      %3579 = vadd.xlane.f32.xlu0 %v3578
      %v3580 = vpop.xlane.xlu0 %3579
      %v3581 = vsel %vm797, %v3530, 0.0
      %v3582 = vadd.f32 %v3529, %v3581
      %3583 = vadd.xlane.f32.xlu0 %v3582
      %v3584 = vpop.xlane.xlu0 %3583
      %v3585 = vsel %vm797, %v3532, 0.0
      %v3586 = vadd.f32 %v3531, %v3585
      %3587 = vadd.xlane.f32.xlu0 %v3586
      %v3588 = vpop.xlane.xlu0 %3587
      %v3589 = vsel %vm797, %v3534, 0.0
      %v3590 = vadd.f32 %v3533, %v3589
      %3591 = vadd.xlane.f32.xlu0 %v3590
      %v3592 = vpop.xlane.xlu0 %3591
      %v3593 = vsel %vm797, %v3536, 0.0
      %v3594 = vadd.f32 %v3535, %v3593
      %3595 = vadd.xlane.f32.xlu0 %v3594
      %v3596 = vpop.xlane.xlu0 %3595
      %v3597 = vrcp.pop 250.0
      %v3598 = vmul.f32 %v3560, %v3597
      %v3599 = vmul.f32 %v3564, %v3597
      %v3600 = vmul.f32 %v3568, %v3597
      %v3601 = vmul.f32 %v3572, %v3597
      %v3602 = vmul.f32 %v3576, %v3597
      %v3603 = vmul.f32 %v3580, %v3597
      %v3604 = vmul.f32 %v3584, %v3597
      %v3605 = vmul.f32 %v3588, %v3597
      %v3606 = vmul.f32 %v3592, %v3597
      %v3607 = vmul.f32 %v3596, %v3597
      %v3608 = vmul.f32 %v3517, %v3517
      %v3609 = vmul.f32 %v3518, %v3518
      %v3610 = vmul.f32 %v3519, %v3519
      %v3611 = vmul.f32 %v3520, %v3520
      %v3612 = vmul.f32 %v3521, %v3521
      %v3613 = vmul.f32 %v3522, %v3522
      %v3614 = vmul.f32 %v3523, %v3523
      %v3615 = vmul.f32 %v3524, %v3524
      %v3616 = vmul.f32 %v3525, %v3525
      %v3617 = vmul.f32 %v3526, %v3526
      %v3618 = vmul.f32 %v3527, %v3527
      %v3619 = vmul.f32 %v3528, %v3528
      %v3620 = vmul.f32 %v3529, %v3529
      %v3621 = vmul.f32 %v3530, %v3530
      %v3622 = vmul.f32 %v3531, %v3531
      %v3623 = vmul.f32 %v3532, %v3532
      %v3624 = vmul.f32 %v3533, %v3533
      %v3625 = vmul.f32 %v3534, %v3534
      %v3626 = vmul.f32 %v3535, %v3535
      %v3627 = vmul.f32 %v3536, %v3536
      %v3628 = vsel %vm797, %v3609, 0.0
      %v3629 = vadd.f32 %v3608, %v3628
      %3630 = vadd.xlane.f32.xlu0 %v3629
      %v3631 = vpop.xlane.xlu0 %3630
      %v3632 = vsel %vm797, %v3611, 0.0
      %v3633 = vadd.f32 %v3610, %v3632
      %3634 = vadd.xlane.f32.xlu0 %v3633
      %v3635 = vpop.xlane.xlu0 %3634
      %v3636 = vsel %vm797, %v3613, 0.0
      %v3637 = vadd.f32 %v3612, %v3636
      %3638 = vadd.xlane.f32.xlu0 %v3637
      %v3639 = vpop.xlane.xlu0 %3638
      %v3640 = vsel %vm797, %v3615, 0.0
      %v3641 = vadd.f32 %v3614, %v3640
      %3642 = vadd.xlane.f32.xlu0 %v3641
      %v3643 = vpop.xlane.xlu0 %3642
      %v3644 = vsel %vm797, %v3617, 0.0
      %v3645 = vadd.f32 %v3616, %v3644
      %3646 = vadd.xlane.f32.xlu0 %v3645
      %v3647 = vpop.xlane.xlu0 %3646
      %v3648 = vsel %vm797, %v3619, 0.0
      %v3649 = vadd.f32 %v3618, %v3648
      %3650 = vadd.xlane.f32.xlu0 %v3649
      %v3651 = vpop.xlane.xlu0 %3650
      %v3652 = vsel %vm797, %v3621, 0.0
      %v3653 = vadd.f32 %v3620, %v3652
      %3654 = vadd.xlane.f32.xlu0 %v3653
      %v3655 = vpop.xlane.xlu0 %3654
      %v3656 = vsel %vm797, %v3623, 0.0
      %v3657 = vadd.f32 %v3622, %v3656
      %3658 = vadd.xlane.f32.xlu0 %v3657
      %v3659 = vpop.xlane.xlu0 %3658
      %v3660 = vsel %vm797, %v3625, 0.0
      %v3661 = vadd.f32 %v3624, %v3660
      %3662 = vadd.xlane.f32.xlu0 %v3661
      %v3663 = vpop.xlane.xlu0 %3662
      %v3664 = vsel %vm797, %v3627, 0.0
      %v3665 = vadd.f32 %v3626, %v3664
      %3666 = vadd.xlane.f32.xlu0 %v3665
      %v3667 = vpop.xlane.xlu0 %3666
      %v3668 = vmul.f32 %v3631, %v3597
      %v3669 = vmul.f32 %v3635, %v3597
      %v3670 = vmul.f32 %v3639, %v3597
      %v3671 = vmul.f32 %v3643, %v3597
      %v3672 = vmul.f32 %v3647, %v3597
      %v3673 = vmul.f32 %v3651, %v3597
      %v3674 = vmul.f32 %v3655, %v3597
      %v3675 = vmul.f32 %v3659, %v3597
      %v3676 = vmul.f32 %v3663, %v3597
      %v3677 = vmul.f32 %v3667, %v3597
      %v3678 = vmul.f32 %v3598, %v3598
      %v3679 = vmul.f32 %v3599, %v3599
      %v3680 = vmul.f32 %v3600, %v3600
      %v3681 = vmul.f32 %v3601, %v3601
      %v3682 = vmul.f32 %v3602, %v3602
      %v3683 = vmul.f32 %v3603, %v3603
      %v3684 = vmul.f32 %v3604, %v3604
      %v3685 = vmul.f32 %v3605, %v3605
      %v3686 = vmul.f32 %v3606, %v3606
      %v3687 = vmul.f32 %v3607, %v3607
      %v3688 = vsub.f32 %v3668, %v3678
      %v3689 = vsub.f32 %v3669, %v3679
      %v3690 = vsub.f32 %v3670, %v3680
      %v3691 = vsub.f32 %v3671, %v3681
      %v3692 = vsub.f32 %v3672, %v3682
      %v3693 = vsub.f32 %v3673, %v3683
      %v3694 = vsub.f32 %v3674, %v3684
      %v3695 = vsub.f32 %v3675, %v3685
      %v3696 = vsub.f32 %v3676, %v3686
      %v3697 = vsub.f32 %v3677, %v3687
      %v3698 = vmax.f32 %v3688, 0.0
      %v3699 = vmax.f32 %v3689, 0.0
      %v3700 = vmax.f32 %v3690, 0.0
      %v3701 = vmax.f32 %v3691, 0.0
      %v3702 = vmax.f32 %v3692, 0.0
      %v3703 = vmax.f32 %v3693, 0.0
      %v3704 = vmax.f32 %v3694, 0.0
      %v3705 = vmax.f32 %v3695, 0.0
      %v3706 = vmax.f32 %v3696, 0.0
      %v3707 = vmax.f32 %v3697, 0.0
      %v3708 = vsub.f32 %v3517, %v3598
      %v3709 = vsub.f32 %v3518, %v3598
      %v3710 = vsub.f32 %v3519, %v3599
      %v3711 = vsub.f32 %v3520, %v3599
      %v3712 = vsub.f32 %v3521, %v3600
      %v3713 = vsub.f32 %v3522, %v3600
      %v3714 = vsub.f32 %v3523, %v3601
      %v3715 = vsub.f32 %v3524, %v3601
      %v3716 = vsub.f32 %v3525, %v3602
      %v3717 = vsub.f32 %v3526, %v3602
      %v3718 = vsub.f32 %v3527, %v3603
      %v3719 = vsub.f32 %v3528, %v3603
      %v3720 = vsub.f32 %v3529, %v3604
      %v3721 = vsub.f32 %v3530, %v3604
      %v3722 = vsub.f32 %v3531, %v3605
      %v3723 = vsub.f32 %v3532, %v3605
      %v3724 = vsub.f32 %v3533, %v3606
      %v3725 = vsub.f32 %v3534, %v3606
      %v3726 = vsub.f32 %v3535, %v3607
      %v3727 = vsub.f32 %v3536, %v3607
      %v3728 = vadd.f32 %v3698, 1e-05
      %v3729 = vadd.f32 %v3699, 1e-05
      %v3730 = vadd.f32 %v3700, 1e-05
      %v3731 = vadd.f32 %v3701, 1e-05
      %v3732 = vadd.f32 %v3702, 1e-05
      %v3733 = vadd.f32 %v3703, 1e-05
      %v3734 = vadd.f32 %v3704, 1e-05
      %v3735 = vadd.f32 %v3705, 1e-05
      %v3736 = vadd.f32 %v3706, 1e-05
      %v3737 = vadd.f32 %v3707, 1e-05
      %v3738 = vrsqrt.pop %v3728
      %v3739 = vrsqrt.pop %v3729
      %v3740 = vrsqrt.pop %v3730
      %v3741 = vrsqrt.pop %v3731
      %v3742 = vrsqrt.pop %v3732
      %v3743 = vrsqrt.pop %v3733
      %v3744 = vrsqrt.pop %v3734
      %v3745 = vrsqrt.pop %v3735
      %v3746 = vrsqrt.pop %v3736
      %v3747 = vrsqrt.pop %v3737
      %v3748 = vmul.f32 %v3708, %v3738
      %v3749 = vmul.f32 %v3709, %v3738
      %v3750 = vmul.f32 %v3710, %v3739
      %v3751 = vmul.f32 %v3711, %v3739
      %v3752 = vmul.f32 %v3712, %v3740
      %v3753 = vmul.f32 %v3713, %v3740
      %v3754 = vmul.f32 %v3714, %v3741
      %v3755 = vmul.f32 %v3715, %v3741
      %v3756 = vmul.f32 %v3716, %v3742
      %v3757 = vmul.f32 %v3717, %v3742
      %v3758 = vmul.f32 %v3718, %v3743
      %v3759 = vmul.f32 %v3719, %v3743
      %v3760 = vmul.f32 %v3720, %v3744
      %v3761 = vmul.f32 %v3721, %v3744
      %v3762 = vmul.f32 %v3722, %v3745
      %v3763 = vmul.f32 %v3723, %v3745
      %v3764 = vmul.f32 %v3724, %v3746
      %v3765 = vmul.f32 %v3725, %v3746
      %v3766 = vmul.f32 %v3726, %v3747
      %v3767 = vmul.f32 %v3727, %v3747
      %3769 = vset.pattern.permute.xlu0 0
      %3770 = vperm.xlu0 %3769, %v3537
      %v3771 = vpop.permute.xlu0 %3770
      %3774 = vset.pattern.permute.xlu0 0
      %3775 = vperm.xlu0 %3774, %v3538
      %v3776 = vpop.permute.xlu0 %3775
      %3779 = vset.pattern.permute.xlu0 0
      %3780 = vperm.xlu0 %3779, %v3539
      %v3781 = vpop.permute.xlu0 %3780
      %3784 = vset.pattern.permute.xlu0 0
      %3785 = vperm.xlu0 %3784, %v3540
      %v3786 = vpop.permute.xlu0 %3785
      %3789 = vset.pattern.permute.xlu0 0
      %3790 = vperm.xlu0 %3789, %v3541
      %v3791 = vpop.permute.xlu0 %3790
      %3794 = vset.pattern.permute.xlu0 0
      %3795 = vperm.xlu0 %3794, %v3542
      %v3796 = vpop.permute.xlu0 %3795
      %3799 = vset.pattern.permute.xlu0 0
      %3800 = vperm.xlu0 %3799, %v3543
      %v3801 = vpop.permute.xlu0 %3800
      %3804 = vset.pattern.permute.xlu0 0
      %3805 = vperm.xlu0 %3804, %v3544
      %v3806 = vpop.permute.xlu0 %3805
      %3809 = vset.pattern.permute.xlu0 0
      %3810 = vperm.xlu0 %3809, %v3545
      %v3811 = vpop.permute.xlu0 %3810
      %3814 = vset.pattern.permute.xlu0 0
      %3815 = vperm.xlu0 %3814, %v3546
      %v3816 = vpop.permute.xlu0 %3815
      %v3818 = vmul.f32 %v3748, %v3771
      %v3819 = vmul.f32 %v3749, %v3771
      %v3820 = vmul.f32 %v3750, %v3776
      %v3821 = vmul.f32 %v3751, %v3776
      %v3822 = vmul.f32 %v3752, %v3781
      %v3823 = vmul.f32 %v3753, %v3781
      %v3824 = vmul.f32 %v3754, %v3786
      %v3825 = vmul.f32 %v3755, %v3786
      %v3826 = vmul.f32 %v3756, %v3791
      %v3827 = vmul.f32 %v3757, %v3791
      %v3828 = vmul.f32 %v3758, %v3796
      %v3829 = vmul.f32 %v3759, %v3796
      %v3830 = vmul.f32 %v3760, %v3801
      %v3831 = vmul.f32 %v3761, %v3801
      %v3832 = vmul.f32 %v3762, %v3806
      %v3833 = vmul.f32 %v3763, %v3806
      %v3834 = vmul.f32 %v3764, %v3811
      %v3835 = vmul.f32 %v3765, %v3811
      %v3836 = vmul.f32 %v3766, %v3816
      %v3837 = vmul.f32 %v3767, %v3816
      %3839 = vset.pattern.permute.xlu0 0
      %3840 = vperm.xlu0 %3839, %v3547
      %v3841 = vpop.permute.xlu0 %3840
      %3844 = vset.pattern.permute.xlu0 0
      %3845 = vperm.xlu0 %3844, %v3548
      %v3846 = vpop.permute.xlu0 %3845
      %3849 = vset.pattern.permute.xlu0 0
      %3850 = vperm.xlu0 %3849, %v3549
      %v3851 = vpop.permute.xlu0 %3850
      %3854 = vset.pattern.permute.xlu0 0
      %3855 = vperm.xlu0 %3854, %v3550
      %v3856 = vpop.permute.xlu0 %3855
      %3859 = vset.pattern.permute.xlu0 0
      %3860 = vperm.xlu0 %3859, %v3551
      %v3861 = vpop.permute.xlu0 %3860
      %3864 = vset.pattern.permute.xlu0 0
      %3865 = vperm.xlu0 %3864, %v3552
      %v3866 = vpop.permute.xlu0 %3865
      %3869 = vset.pattern.permute.xlu0 0
      %3870 = vperm.xlu0 %3869, %v3553
      %v3871 = vpop.permute.xlu0 %3870
      %3874 = vset.pattern.permute.xlu0 0
      %3875 = vperm.xlu0 %3874, %v3554
      %v3876 = vpop.permute.xlu0 %3875
      %3879 = vset.pattern.permute.xlu0 0
      %3880 = vperm.xlu0 %3879, %v3555
      %v3881 = vpop.permute.xlu0 %3880
      %3884 = vset.pattern.permute.xlu0 0
      %3885 = vperm.xlu0 %3884, %v3556
      %v3886 = vpop.permute.xlu0 %3885
      %v3888 = vadd.f32 %v3818, %v3841
      %v3889 = vadd.f32 %v3819, %v3841
      %v3890 = vadd.f32 %v3820, %v3846
      %v3891 = vadd.f32 %v3821, %v3846
      %v3892 = vadd.f32 %v3822, %v3851
      %v3893 = vadd.f32 %v3823, %v3851
      %v3894 = vadd.f32 %v3824, %v3856
      %v3895 = vadd.f32 %v3825, %v3856
      %v3896 = vadd.f32 %v3826, %v3861
      %v3897 = vadd.f32 %v3827, %v3861
      %v3898 = vadd.f32 %v3828, %v3866
      %v3899 = vadd.f32 %v3829, %v3866
      %v3900 = vadd.f32 %v3830, %v3871
      %v3901 = vadd.f32 %v3831, %v3871
      %v3902 = vadd.f32 %v3832, %v3876
      %v3903 = vadd.f32 %v3833, %v3876
      %v3904 = vadd.f32 %v3834, %v3881
      %v3905 = vadd.f32 %v3835, %v3881
      %v3906 = vadd.f32 %v3836, %v3886
      %v3907 = vadd.f32 %v3837, %v3886
      %vm3908 = vcmp.ge.f32.partialorder %v3888, 0.0
      %vm3909 = vcmp.ge.f32.partialorder %v3889, 0.0
      %vm3910 = vcmp.ge.f32.partialorder %v3890, 0.0
      %vm3911 = vcmp.ge.f32.partialorder %v3891, 0.0
      %vm3912 = vcmp.ge.f32.partialorder %v3892, 0.0
      %vm3913 = vcmp.ge.f32.partialorder %v3893, 0.0
      %vm3914 = vcmp.ge.f32.partialorder %v3894, 0.0
      %vm3915 = vcmp.ge.f32.partialorder %v3895, 0.0
      %vm3916 = vcmp.ge.f32.partialorder %v3896, 0.0
      %vm3917 = vcmp.ge.f32.partialorder %v3897, 0.0
      %vm3918 = vcmp.ge.f32.partialorder %v3898, 0.0
      %vm3919 = vcmp.ge.f32.partialorder %v3899, 0.0
      %vm3920 = vcmp.ge.f32.partialorder %v3900, 0.0
      %vm3921 = vcmp.ge.f32.partialorder %v3901, 0.0
      %vm3922 = vcmp.ge.f32.partialorder %v3902, 0.0
      %vm3923 = vcmp.ge.f32.partialorder %v3903, 0.0
      %vm3924 = vcmp.ge.f32.partialorder %v3904, 0.0
      %vm3925 = vcmp.ge.f32.partialorder %v3905, 0.0
      %vm3926 = vcmp.ge.f32.partialorder %v3906, 0.0
      %vm3927 = vcmp.ge.f32.partialorder %v3907, 0.0
      %v3928 = vmul.f32 %v3888, 0.01
      %v3929 = vmul.f32 %v3889, 0.01
      %v3930 = vmul.f32 %v3890, 0.01
      %v3931 = vmul.f32 %v3891, 0.01
      %v3932 = vmul.f32 %v3892, 0.01
      %v3933 = vmul.f32 %v3893, 0.01
      %v3934 = vmul.f32 %v3894, 0.01
      %v3935 = vmul.f32 %v3895, 0.01
      %v3936 = vmul.f32 %v3896, 0.01
      %v3937 = vmul.f32 %v3897, 0.01
      %v3938 = vmul.f32 %v3898, 0.01
      %v3939 = vmul.f32 %v3899, 0.01
      %v3940 = vmul.f32 %v3900, 0.01
      %v3941 = vmul.f32 %v3901, 0.01
      %v3942 = vmul.f32 %v3902, 0.01
      %v3943 = vmul.f32 %v3903, 0.01
      %v3944 = vmul.f32 %v3904, 0.01
      %v3945 = vmul.f32 %v3905, 0.01
      %v3946 = vmul.f32 %v3906, 0.01
      %v3947 = vmul.f32 %v3907, 0.01
      %v3948 = vsel %vm3908, %v3888, %v3928
      %v3949 = vsel %vm3909, %v3889, %v3929
      %v3950 = vsel %vm3910, %v3890, %v3930
      %v3951 = vsel %vm3911, %v3891, %v3931
      %v3952 = vsel %vm3912, %v3892, %v3932
      %v3953 = vsel %vm3913, %v3893, %v3933
      %v3954 = vsel %vm3914, %v3894, %v3934
      %v3955 = vsel %vm3915, %v3895, %v3935
      %v3956 = vsel %vm3916, %v3896, %v3936
      %v3957 = vsel %vm3917, %v3897, %v3937
      %v3958 = vsel %vm3918, %v3898, %v3938
      %v3959 = vsel %vm3919, %v3899, %v3939
      %v3960 = vsel %vm3920, %v3900, %v3940
      %v3961 = vsel %vm3921, %v3901, %v3941
      %v3962 = vsel %vm3922, %v3902, %v3942
      %v3963 = vsel %vm3923, %v3903, %v3943
      %v3964 = vsel %vm3924, %v3904, %v3944
      %v3965 = vsel %vm3925, %v3905, %v3945
      %v3966 = vsel %vm3926, %v3906, %v3946
      %v3967 = vsel %vm3927, %v3907, %v3947
      %v3968 = vpack.c.bf16 %v3950, %v3948
      %v3969 = vpack.c.bf16 %v3951, %v3949
      %v3970 = vpack.c.bf16 %v3954, %v3952
      %v3971 = vpack.c.bf16 %v3955, %v3953
      %v3972 = vpack.c.bf16 %v3958, %v3956
      %v3973 = vpack.c.bf16 %v3959, %v3957
      %v3974 = vpack.c.bf16 %v3962, %v3960
      %v3975 = vpack.c.bf16 %v3963, %v3961
      %v3976 = vpack.c.bf16 %v3966, %v3964
      %v3977 = vpack.c.bf16 %v3967, %v3965
      %3978 = vst [vmem:[#allocation5] sm:$0xff] %v3968
      %3979 = vst.msk [vmem:[#allocation5 + $0x8] sm:$0xff] %vm833, %v3969
      %3980 = vst [vmem:[#allocation5 + $0x10] sm:$0xff] %v3970
      %3981 = vst.msk [vmem:[#allocation5 + $0x18] sm:$0xff] %vm833, %v3971
      %3982 = vst [vmem:[#allocation5 + $0x20] sm:$0xff] %v3972
      %3983 = vst.msk [vmem:[#allocation5 + $0x28] sm:$0xff] %vm833, %v3973
      %3984 = vst [vmem:[#allocation5 + $0x30] sm:$0xff] %v3974
      %3985 = vst.msk [vmem:[#allocation5 + $0x38] sm:$0xff] %vm833, %v3975
      %3986 = vst [vmem:[#allocation5 + $0x40] sm:$0xff] %v3976
      %3987 = vst.msk [vmem:[#allocation5 + $0x48] sm:$0xff] %vm833, %v3977
      %3998 = vrot.lane.b32.xlu0 %v3968, 127
      %v3999 = vpop.permute.xlu0 %3998
      %4000 = vrot.lane.b32.xlu0 %v3969, 127
      %v4001 = vpop.permute.xlu0 %4000
      %4002 = vrot.lane.b32.xlu0 %v3970, 127
      %v4003 = vpop.permute.xlu0 %4002
      %4004 = vrot.lane.b32.xlu0 %v3971, 127
      %v4005 = vpop.permute.xlu0 %4004
      %4006 = vrot.lane.b32.xlu0 %v3972, 127
      %v4007 = vpop.permute.xlu0 %4006
      %4008 = vrot.lane.b32.xlu0 %v3973, 127
      %v4009 = vpop.permute.xlu0 %4008
      %4010 = vrot.lane.b32.xlu0 %v3974, 127
      %v4011 = vpop.permute.xlu0 %4010
      %4012 = vrot.lane.b32.xlu0 %v3975, 127
      %v4013 = vpop.permute.xlu0 %4012
      %4014 = vrot.lane.b32.xlu0 %v3976, 127
      %v4015 = vpop.permute.xlu0 %4014
      %4016 = vrot.lane.b32.xlu0 %v3977, 127
      %v4017 = vpop.permute.xlu0 %4016
      %vm4018 = vcmask 1039360
      %v4019 = vsel %vm4018, %v3999, %v4001
      %v4020 = vsel %vm4018, %v4003, %v4005
      %v4021 = vsel %vm4018, %v4007, %v4009
      %v4022 = vsel %vm4018, %v4011, %v4013
      %v4023 = vsel %vm4018, %v4015, %v4017
      %4034 = vst [vmem:[#allocation5 + $0x50] sm:$0xff] %v4019
      %4035 = vst.msk [vmem:[#allocation5 + $0x58] sm:$0xff] %vm833, %v4001
      %4036 = vst [vmem:[#allocation5 + $0x60] sm:$0xff] %v4020
      %4037 = vst.msk [vmem:[#allocation5 + $0x68] sm:$0xff] %vm833, %v4005
      %4038 = vst [vmem:[#allocation5 + $0x70] sm:$0xff] %v4021
      %4039 = vst.msk [vmem:[#allocation5 + $0x78] sm:$0xff] %vm833, %v4009
      %4040 = vst [vmem:[#allocation5 + $0x80] sm:$0xff] %v4022
      %4041 = vst.msk [vmem:[#allocation5 + $0x88] sm:$0xff] %vm833, %v4013
      %4042 = vst [vmem:[#allocation5 + $0x90] sm:$0xff] %v4023
      %4043 = vst.msk [vmem:[#allocation5 + $0x98] sm:$0xff] %vm833, %v4017
      %4044 = vrot.lane.b32.xlu0 %v3968, 126
      %v4045 = vpop.permute.xlu0 %4044
      %4046 = vrot.lane.b32.xlu0 %v3969, 126
      %v4047 = vpop.permute.xlu0 %4046
      %4048 = vrot.lane.b32.xlu0 %v3970, 126
      %v4049 = vpop.permute.xlu0 %4048
      %4050 = vrot.lane.b32.xlu0 %v3971, 126
      %v4051 = vpop.permute.xlu0 %4050
      %4052 = vrot.lane.b32.xlu0 %v3972, 126
      %v4053 = vpop.permute.xlu0 %4052
      %4054 = vrot.lane.b32.xlu0 %v3973, 126
      %v4055 = vpop.permute.xlu0 %4054
      %4056 = vrot.lane.b32.xlu0 %v3974, 126
      %v4057 = vpop.permute.xlu0 %4056
      %4058 = vrot.lane.b32.xlu0 %v3975, 126
      %v4059 = vpop.permute.xlu0 %4058
      %4060 = vrot.lane.b32.xlu0 %v3976, 126
      %v4061 = vpop.permute.xlu0 %4060
      %4062 = vrot.lane.b32.xlu0 %v3977, 126
      %v4063 = vpop.permute.xlu0 %4062
      %vm4064 = vcmask 1031168
      %v4065 = vsel %vm4064, %v4045, %v4047
      %v4066 = vsel %vm4064, %v4049, %v4051
      %v4067 = vsel %vm4064, %v4053, %v4055
      %v4068 = vsel %vm4064, %v4057, %v4059
      %v4069 = vsel %vm4064, %v4061, %v4063
      %4080 = vst [vmem:[#allocation5 + $0xa0] sm:$0xff] %v4065
      %4081 = vst.msk [vmem:[#allocation5 + $0xa8] sm:$0xff] %vm833, %v4047
      %4082 = vst [vmem:[#allocation5 + $0xb0] sm:$0xff] %v4066
      %4083 = vst.msk [vmem:[#allocation5 + $0xb8] sm:$0xff] %vm833, %v4051
      %4084 = vst [vmem:[#allocation5 + $0xc0] sm:$0xff] %v4067
      %4085 = vst.msk [vmem:[#allocation5 + $0xc8] sm:$0xff] %vm833, %v4055
      %4086 = vst [vmem:[#allocation5 + $0xd0] sm:$0xff] %v4068
      %4087 = vst.msk [vmem:[#allocation5 + $0xd8] sm:$0xff] %vm833, %v4059
      %4088 = vst [vmem:[#allocation5 + $0xe0] sm:$0xff] %v4069
      %4089 = vst.msk [vmem:[#allocation5 + $0xe8] sm:$0xff] %vm833, %v4063
      %4090 = vrot.lane.b32.xlu0 %v3968, 125
      %v4091 = vpop.permute.xlu0 %4090
      %4092 = vrot.lane.b32.xlu0 %v3969, 125
      %v4093 = vpop.permute.xlu0 %4092
      %4094 = vrot.lane.b32.xlu0 %v3970, 125
      %v4095 = vpop.permute.xlu0 %4094
      %4096 = vrot.lane.b32.xlu0 %v3971, 125
      %v4097 = vpop.permute.xlu0 %4096
      %4098 = vrot.lane.b32.xlu0 %v3972, 125
      %v4099 = vpop.permute.xlu0 %4098
      %4100 = vrot.lane.b32.xlu0 %v3973, 125
      %v4101 = vpop.permute.xlu0 %4100
      %4102 = vrot.lane.b32.xlu0 %v3974, 125
      %v4103 = vpop.permute.xlu0 %4102
      %4104 = vrot.lane.b32.xlu0 %v3975, 125
      %v4105 = vpop.permute.xlu0 %4104
      %4106 = vrot.lane.b32.xlu0 %v3976, 125
      %v4107 = vpop.permute.xlu0 %4106
      %4108 = vrot.lane.b32.xlu0 %v3977, 125
      %v4109 = vpop.permute.xlu0 %4108
      %vm4110 = vcmask 1022976
      %v4111 = vsel %vm4110, %v4091, %v4093
      %v4112 = vsel %vm4110, %v4095, %v4097
      %v4113 = vsel %vm4110, %v4099, %v4101
      %v4114 = vsel %vm4110, %v4103, %v4105
      %v4115 = vsel %vm4110, %v4107, %v4109
      %4126 = vst [vmem:[#allocation5 + $0xf0] sm:$0xff] %v4111
      %4127 = vst.msk [vmem:[#allocation5 + $0xf8] sm:$0xff] %vm833, %v4093
      %4128 = vst [vmem:[#allocation5 + $0x100] sm:$0xff] %v4112
      %4129 = vst.msk [vmem:[#allocation5 + $0x108] sm:$0xff] %vm833, %v4097
      %4130 = vst [vmem:[#allocation5 + $0x110] sm:$0xff] %v4113
      %4131 = vst.msk [vmem:[#allocation5 + $0x118] sm:$0xff] %vm833, %v4101
      %4132 = vst [vmem:[#allocation5 + $0x120] sm:$0xff] %v4114
      %4133 = vst.msk [vmem:[#allocation5 + $0x128] sm:$0xff] %vm833, %v4105
      %4134 = vst [vmem:[#allocation5 + $0x130] sm:$0xff] %v4115
      %4135 = vst.msk [vmem:[#allocation5 + $0x138] sm:$0xff] %vm833, %v4109
      %4136 = vrot.lane.b32.xlu0 %v3968, 124
      %v4137 = vpop.permute.xlu0 %4136
      %4138 = vrot.lane.b32.xlu0 %v3969, 124
      %v4139 = vpop.permute.xlu0 %4138
      %4140 = vrot.lane.b32.xlu0 %v3970, 124
      %v4141 = vpop.permute.xlu0 %4140
      %4142 = vrot.lane.b32.xlu0 %v3971, 124
      %v4143 = vpop.permute.xlu0 %4142
      %4144 = vrot.lane.b32.xlu0 %v3972, 124
      %v4145 = vpop.permute.xlu0 %4144
      %4146 = vrot.lane.b32.xlu0 %v3973, 124
      %v4147 = vpop.permute.xlu0 %4146
      %4148 = vrot.lane.b32.xlu0 %v3974, 124
      %v4149 = vpop.permute.xlu0 %4148
      %4150 = vrot.lane.b32.xlu0 %v3975, 124
      %v4151 = vpop.permute.xlu0 %4150
      %4152 = vrot.lane.b32.xlu0 %v3976, 124
      %v4153 = vpop.permute.xlu0 %4152
      %4154 = vrot.lane.b32.xlu0 %v3977, 124
      %v4155 = vpop.permute.xlu0 %4154
      %vm4156 = vcmask 1014784
      %v4157 = vsel %vm4156, %v4137, %v4139
      %v4158 = vsel %vm4156, %v4141, %v4143
      %v4159 = vsel %vm4156, %v4145, %v4147
      %v4160 = vsel %vm4156, %v4149, %v4151
      %v4161 = vsel %vm4156, %v4153, %v4155
      %4172 = vst [vmem:[#allocation5 + $0x140] sm:$0xff] %v4157
      %4173 = vst.msk [vmem:[#allocation5 + $0x148] sm:$0xff] %vm833, %v4139
      %4174 = vst [vmem:[#allocation5 + $0x150] sm:$0xff] %v4158
      %4175 = vst.msk [vmem:[#allocation5 + $0x158] sm:$0xff] %vm833, %v4143
      %4176 = vst [vmem:[#allocation5 + $0x160] sm:$0xff] %v4159
      %4177 = vst.msk [vmem:[#allocation5 + $0x168] sm:$0xff] %vm833, %v4147
      %4178 = vst [vmem:[#allocation5 + $0x170] sm:$0xff] %v4160
      %4179 = vst.msk [vmem:[#allocation5 + $0x178] sm:$0xff] %vm833, %v4151
      %4180 = vst [vmem:[#allocation5 + $0x180] sm:$0xff] %v4161
      %4181 = vst.msk [vmem:[#allocation5 + $0x188] sm:$0xff] %vm833, %v4155
      %v4182 = vld [vmem:[%s8] sm:$0xff]
      %v4183 = vld [vmem:[%s8 + $0x8] sm:$0xff]
      %v4184 = vld [vmem:[%s8 + $0x10] sm:$0xff]
      %v4185 = vld [vmem:[%s8 + $0x18] sm:$0xff]
      %v4186 = vld [vmem:[%s8 + $0x20] sm:$0xff]
      %v4187 = vld [vmem:[%s8 + $0x28] sm:$0xff]
      %v4188 = vld [vmem:[%s8 + $0x30] sm:$0xff]
      %v4189 = vld [vmem:[%s8 + $0x38] sm:$0xff]
      %v4190 = vld [vmem:[%s8 + $0x40] sm:$0xff]
      %v4191 = vld [vmem:[%s8 + $0x48] sm:$0xff]
      %v4192 = vld [vmem:[%s8 + $0x50] sm:$0xff]
      %v4193 = vld [vmem:[%s8 + $0x58] sm:$0xff]
      %v4194 = vld [vmem:[%s8 + $0x60] sm:$0xff]
      %v4195 = vld [vmem:[%s8 + $0x68] sm:$0xff]
      %v4196 = vld [vmem:[%s8 + $0x70] sm:$0x33]
      %v4197 = vld [vmem:[%s8 + $0x78] sm:$0x33]
      %v4198 = vld [vmem:[#allocation5] sm:$0xff]
      %v4199 = vld [vmem:[#allocation5 + $0x8] sm:$0xff]
      %v4200 = vld [vmem:[#allocation5 + $0x10] sm:$0xff]
      %v4201 = vld [vmem:[#allocation5 + $0x18] sm:$0xff]
      %v4202 = vld [vmem:[#allocation5 + $0x20] sm:$0xff]
      %v4203 = vld [vmem:[#allocation5 + $0x28] sm:$0xff]
      %v4204 = vld [vmem:[#allocation5 + $0x30] sm:$0xff]
      %v4205 = vld [vmem:[#allocation5 + $0x38] sm:$0xff]
      %v4206 = vld [vmem:[#allocation5 + $0x40] sm:$0xff]
      %v4207 = vld [vmem:[#allocation5 + $0x48] sm:$0xff]
      %v4208 = vld [vmem:[#allocation5 + $0x50] sm:$0xff]
      %v4209 = vld [vmem:[#allocation5 + $0x58] sm:$0xff]
      %v4210 = vld [vmem:[#allocation5 + $0x60] sm:$0xff]
      %v4211 = vld [vmem:[#allocation5 + $0x68] sm:$0xff]
      %v4212 = vld [vmem:[#allocation5 + $0x70] sm:$0xff]
      %v4213 = vld [vmem:[#allocation5 + $0x78] sm:$0xff]
      %v4214 = vld [vmem:[#allocation5 + $0x80] sm:$0xff]
      %v4215 = vld [vmem:[#allocation5 + $0x88] sm:$0xff]
      %v4216 = vld [vmem:[#allocation5 + $0x90] sm:$0xff]
      %v4217 = vld [vmem:[#allocation5 + $0x98] sm:$0xff]
      %v4218 = vld [vmem:[#allocation5 + $0xa0] sm:$0xff]
      %v4219 = vld [vmem:[#allocation5 + $0xa8] sm:$0xff]
      %v4220 = vld [vmem:[#allocation5 + $0xb0] sm:$0xff]
      %v4221 = vld [vmem:[#allocation5 + $0xb8] sm:$0xff]
      %v4222 = vld [vmem:[#allocation5 + $0xc0] sm:$0xff]
      %v4223 = vld [vmem:[#allocation5 + $0xc8] sm:$0xff]
      %v4224 = vld [vmem:[#allocation5 + $0xd0] sm:$0xff]
      %v4225 = vld [vmem:[#allocation5 + $0xd8] sm:$0xff]
      %v4226 = vld [vmem:[#allocation5 + $0xe0] sm:$0xff]
      %v4227 = vld [vmem:[#allocation5 + $0xe8] sm:$0xff]
      %v4228 = vld [vmem:[#allocation5 + $0xf0] sm:$0xff]
      %v4229 = vld [vmem:[#allocation5 + $0xf8] sm:$0xff]
      %v4230 = vld [vmem:[#allocation5 + $0x100] sm:$0xff]
      %v4231 = vld [vmem:[#allocation5 + $0x108] sm:$0xff]
      %v4232 = vld [vmem:[#allocation5 + $0x110] sm:$0xff]
      %v4233 = vld [vmem:[#allocation5 + $0x118] sm:$0xff]
      %v4234 = vld [vmem:[#allocation5 + $0x120] sm:$0xff]
      %v4235 = vld [vmem:[#allocation5 + $0x128] sm:$0xff]
      %v4236 = vld [vmem:[#allocation5 + $0x130] sm:$0xff]
      %v4237 = vld [vmem:[#allocation5 + $0x138] sm:$0xff]
      %v4238 = vld [vmem:[#allocation5 + $0x140] sm:$0xff]
      %v4239 = vld [vmem:[#allocation5 + $0x148] sm:$0xff]
      %v4240 = vld [vmem:[#allocation5 + $0x150] sm:$0xff]
      %v4241 = vld [vmem:[#allocation5 + $0x158] sm:$0xff]
      %v4242 = vld [vmem:[#allocation5 + $0x160] sm:$0xff]
      %v4243 = vld [vmem:[#allocation5 + $0x168] sm:$0xff]
      %v4244 = vld [vmem:[#allocation5 + $0x170] sm:$0xff]
      %v4245 = vld [vmem:[#allocation5 + $0x178] sm:$0xff]
      %v4246 = vld [vmem:[#allocation5 + $0x180] sm:$0xff]
      %v4247 = vld [vmem:[#allocation5 + $0x188] sm:$0xff]
      %v4248 = vld [vmem:[%s9] sm:$0xff]
      %v4249 = vld [vmem:[%s9 + $0x8] sm:$0xff]
      %v4250 = vld [vmem:[%s9 + $0x10] sm:$0xff]
      %v4251 = vld [vmem:[%s9 + $0x18] sm:$0xff]
      %v4252 = vld [vmem:[%s9 + $0x20] sm:$0xff]
      %v4253 = vld [vmem:[%s9 + $0x28] sm:$0xff]
      %v4254 = vld [vmem:[%s9 + $0x30] sm:$0xff]
      %v4255 = vld [vmem:[%s9 + $0x38] sm:$0xf]
      %4257 = vset.pattern.permute.xlu0 0
      %4258 = vperm.xlu0 %4257, %v4248
      %v4259 = vpop.permute.xlu0 %4258
      %4262 = vset.pattern.permute.xlu0 0
      %4263 = vperm.xlu0 %4262, %v4249
      %v4264 = vpop.permute.xlu0 %4263
      %4267 = vset.pattern.permute.xlu0 0
      %4268 = vperm.xlu0 %4267, %v4250
      %v4269 = vpop.permute.xlu0 %4268
      %4272 = vset.pattern.permute.xlu0 0
      %4273 = vperm.xlu0 %4272, %v4251
      %v4274 = vpop.permute.xlu0 %4273
      %4277 = vset.pattern.permute.xlu0 0
      %4278 = vperm.xlu0 %4277, %v4252
      %v4279 = vpop.permute.xlu0 %4278
      %4282 = vset.pattern.permute.xlu0 0
      %4283 = vperm.xlu0 %4282, %v4253
      %v4284 = vpop.permute.xlu0 %4283
      %4287 = vset.pattern.permute.xlu0 0
      %4288 = vperm.xlu0 %4287, %v4254
      %v4289 = vpop.permute.xlu0 %4288
      %4292 = vset.pattern.permute.xlu0 0
      %4293 = vperm.xlu0 %4292, %v4255
      %v4294 = vpop.permute.xlu0 %4293
      %v4312 = vunpack.c.l.b16 %v4182
      %v4313 = vunpack.c.h.b16 %v4182
      %v4314 = vunpack.c.l.b16 %v4183
      %v4315 = vunpack.c.h.b16 %v4183
      %v4316 = vunpack.c.l.b16 %v4184
      %v4317 = vunpack.c.h.b16 %v4184
      %v4318 = vunpack.c.l.b16 %v4185
      %v4319 = vunpack.c.h.b16 %v4185
      %v4320 = vunpack.c.l.b16 %v4186
      %v4321 = vunpack.c.h.b16 %v4186
      %v4322 = vunpack.c.l.b16 %v4187
      %v4323 = vunpack.c.h.b16 %v4187
      %v4324 = vunpack.c.l.b16 %v4188
      %v4325 = vunpack.c.h.b16 %v4188
      %v4326 = vunpack.c.l.b16 %v4189
      %v4327 = vunpack.c.h.b16 %v4189
      %v4328 = vunpack.c.l.b16 %v4190
      %v4329 = vunpack.c.h.b16 %v4190
      %v4330 = vunpack.c.l.b16 %v4191
      %v4331 = vunpack.c.h.b16 %v4191
      %v4332 = vunpack.c.l.b16 %v4192
      %v4333 = vunpack.c.h.b16 %v4192
      %v4334 = vunpack.c.l.b16 %v4193
      %v4335 = vunpack.c.h.b16 %v4193
      %v4336 = vunpack.c.l.b16 %v4194
      %v4337 = vunpack.c.h.b16 %v4194
      %v4338 = vunpack.c.l.b16 %v4195
      %v4339 = vunpack.c.h.b16 %v4195
      %v4340 = vunpack.c.l.b16 %v4196
      %v4341 = vunpack.c.h.b16 %v4196
      %v4342 = vunpack.c.l.b16 %v4197
      %v4343 = vunpack.c.h.b16 %v4197
      %v4344 = vpack.c.b16 %v4316, %v4312
      %v4345 = vpack.c.b16 %v4317, %v4313
      %v4346 = vpack.c.b16 %v4318, %v4314
      %v4347 = vpack.c.b16 %v4319, %v4315
      %v4348 = vpack.c.b16 %v4324, %v4320
      %v4349 = vpack.c.b16 %v4325, %v4321
      %v4350 = vpack.c.b16 %v4326, %v4322
      %v4351 = vpack.c.b16 %v4327, %v4323
      %v4352 = vpack.c.b16 %v4332, %v4328
      %v4353 = vpack.c.b16 %v4333, %v4329
      %v4354 = vpack.c.b16 %v4334, %v4330
      %v4355 = vpack.c.b16 %v4335, %v4331
      %v4356 = vpack.c.b16 %v4340, %v4336
      %v4357 = vpack.c.b16 %v4341, %v4337
      %v4358 = vpack.c.b16 %v4342, %v4338
      %v4359 = vpack.c.b16 %v4343, %v4339
      %vm4372 = vcmask 130048
      %v4374 = vsel %vm4372, %v4347, 0
      %v4377 = vsel %vm4372, %v4351, 0
      %v4380 = vsel %vm4372, %v4355, 0
      %v4383 = vsel %vm4372, %v4359, 0
      %4385 = vmatprep.subr.bf16.mxu0 %v4199
      %4386 = vmatpush1.bf16.msra.mxu0 %v4198
      %4387 = vmatprep.subr.bf16.mxu0 %v4201
      %4388 = vmatpush1.bf16.msra.mxu0 %v4200
      %4389 = vmatprep.subr.bf16.mxu0 %v4203
      %4390 = vmatpush1.bf16.msra.mxu0 %v4202
      %4391 = vmatprep.subr.bf16.mxu0 %v4205
      %4392 = vmatpush1.bf16.msra.mxu0 %v4204
      %4393 = vmatprep.subr.bf16.mxu0 %v4207
      %4394 = vmatpush1.bf16.msra.mxu0 %v4206
      %4395 = vmatprep.subr.bf16.mxu0 %v4209
      %4396 = vmatpush1.bf16.msra.mxu0 %v4208
      %4397 = vmatprep.subr.bf16.mxu0 %v4211
      %4398 = vmatpush1.bf16.msra.mxu0 %v4210
      %4399 = vmatprep.subr.bf16.mxu0 %v4213
      %4400 = vmatpush1.bf16.msra.mxu0 %v4212
      %4401 = vmatprep.subr.bf16.mxu0 %v4215
      %4402 = vmatpush1.bf16.msra.mxu0 %v4214
      %4403 = vmatprep.subr.bf16.mxu0 %v4217
      %4404 = vmatpush1.bf16.msra.mxu0 %v4216
      %4405 = vmatprep.subr.bf16.mxu0 %v4219
      %4406 = vmatpush1.bf16.msra.mxu0 %v4218
      %4407 = vmatprep.subr.bf16.mxu0 %v4221
      %4408 = vmatpush1.bf16.msra.mxu0 %v4220
      %4409 = vmatprep.subr.bf16.mxu0 %v4223
      %4410 = vmatpush1.bf16.msra.mxu0 %v4222
      %4411 = vmatprep.subr.bf16.mxu0 %v4225
      %4412 = vmatpush1.bf16.msra.mxu0 %v4224
      %4413 = vmatprep.subr.bf16.mxu0 %v4227
      %4414 = vmatpush1.bf16.msra.mxu0 %v4226
      %4415 = vmatprep.subr.bf16.mxu0 %v4229
      %4416 = vmatpush1.bf16.msra.mxu0 %v4228
      %4417 = vmatprep.mubr.bf16.mxu0 %v4345
      %4418 = vmatmul.mubr.bf16.gmra.mrb[0].mxu0 %v4344
      %v4419 = vpop.f32.mrb[0].mxu0
      %v4420 = vadd.f32 %v4259, %v4419
      %v4421 = vpop.f32.mrb[0].mxu0
      %v4422 = vadd.f32 %v4259, %v4421
      %v4423 = vpop.f32.mrb[0].mxu0
      %v4424 = vadd.f32 %v4264, %v4423
      %v4425 = vpop.f32.mrb[0].mxu0
      %v4426 = vadd.f32 %v4264, %v4425
      %4427 = vmatprep.mubr.bf16.mxu0 %v4349
      %4428 = vmatmul.mubr.bf16.gmra.mrb[0].mxu0 %v4348
      %v4429 = vpop.f32.mrb[0].mxu0
      %v4430 = vadd.f32 %v4269, %v4429
      %v4431 = vpop.f32.mrb[0].mxu0
      %v4432 = vadd.f32 %v4269, %v4431
      %v4433 = vpop.f32.mrb[0].mxu0
      %v4434 = vadd.f32 %v4274, %v4433
      %v4435 = vpop.f32.mrb[0].mxu0
      %v4436 = vadd.f32 %v4274, %v4435
      %4437 = vmatprep.mubr.bf16.mxu0 %v4353
      %4438 = vmatmul.mubr.bf16.gmra.mrb[0].mxu0 %v4352
      %v4439 = vpop.f32.mrb[0].mxu0
      %v4440 = vadd.f32 %v4279, %v4439
      %v4441 = vpop.f32.mrb[0].mxu0
      %v4442 = vadd.f32 %v4279, %v4441
      %v4443 = vpop.f32.mrb[0].mxu0
      %v4444 = vadd.f32 %v4284, %v4443
      %v4445 = vpop.f32.mrb[0].mxu0
      %v4446 = vadd.f32 %v4284, %v4445
      %4447 = vmatprep.mubr.bf16.mxu0 %v4357
      %4448 = vmatmul.mubr.bf16.gmra.mrb[0].mxu0 %v4356
      %v4449 = vpop.f32.mrb[0].mxu0
      %v4450 = vadd.f32 %v4289, %v4449
      %v4451 = vpop.f32.mrb[0].mxu0
      %v4452 = vadd.f32 %v4289, %v4451
      %v4453 = vpop.f32.mrb[0].mxu0
      %v4454 = vadd.f32 %v4294, %v4453
      %v4455 = vpop.f32.mrb[0].mxu0
      %v4456 = vadd.f32 %v4294, %v4455
      %4457 = vdwg.mxu0
      %4458 = vmatprep.subr.bf16.mxu0 %v4231
      %4459 = vmatpush1.bf16.msra.mxu0 %v4230
      %4460 = vmatprep.subr.bf16.mxu0 %v4233
      %4461 = vmatpush1.bf16.msra.mxu0 %v4232
      %4462 = vmatprep.subr.bf16.mxu0 %v4235
      %4463 = vmatpush1.bf16.msra.mxu0 %v4234
      %4464 = vmatprep.subr.bf16.mxu0 %v4237
      %4465 = vmatpush1.bf16.msra.mxu0 %v4236
      %4466 = vmatprep.subr.bf16.mxu0 %v4239
      %4467 = vmatpush1.bf16.msra.mxu0 %v4238
      %4468 = vmatprep.subr.bf16.mxu0 %v4241
      %4469 = vmatpush1.bf16.msra.mxu0 %v4240
      %4470 = vmatprep.subr.bf16.mxu0 %v4243
      %4471 = vmatpush1.bf16.msra.mxu0 %v4242
      %4472 = vmatprep.subr.bf16.mxu0 %v4245
      %4473 = vmatpush1.bf16.msra.mxu0 %v4244
      %4474 = vmatprep.subr.bf16.mxu0 %v4247
      %4475 = vmatpush1.bf16.msra.mxu0 %v4246
      %4476 = vmatprep.subr.bf16.mxu0 0
      %4477 = vmatpush1.bf16.msra.mxu0 0
      %4478 = vmatprep.subr.bf16.mxu0 0
      %4479 = vmatpush1.bf16.msra.mxu0 0
      %4480 = vmatprep.subr.bf16.mxu0 0
      %4481 = vmatpush1.bf16.msra.mxu0 0
      %4482 = vmatprep.subr.bf16.mxu0 0
      %4483 = vmatpush1.bf16.msra.mxu0 0
      %4484 = vmatprep.subr.bf16.mxu0 0
      %4485 = vmatpush1.bf16.msra.mxu0 0
      %4486 = vmatprep.subr.bf16.mxu0 0
      %4487 = vmatpush1.bf16.msra.mxu0 0
      %4488 = vmatprep.subr.bf16.mxu0 0
      %4489 = vmatpush1.bf16.msra.mxu0 0
      %4490 = vmatprep.mubr.bf16.mxu0 %v4374
      %4491 = vmatmul.mubr.bf16.gmra.mrb[0].mxu0 %v4346
      %v4492 = vpop.f32.mrb[0].mxu0
      %v4493 = vadd.f32 %v4420, %v4492
      %v4494 = vpop.f32.mrb[0].mxu0
      %v4495 = vadd.f32 %v4422, %v4494
      %v4496 = vpop.f32.mrb[0].mxu0
      %v4497 = vadd.f32 %v4424, %v4496
      %v4498 = vpop.f32.mrb[0].mxu0
      %v4499 = vadd.f32 %v4426, %v4498
      %4500 = vmatprep.mubr.bf16.mxu0 %v4377
      %4501 = vmatmul.mubr.bf16.gmra.mrb[0].mxu0 %v4350
      %v4502 = vpop.f32.mrb[0].mxu0
      %v4503 = vadd.f32 %v4430, %v4502
      %v4504 = vpop.f32.mrb[0].mxu0
      %v4505 = vadd.f32 %v4432, %v4504
      %v4506 = vpop.f32.mrb[0].mxu0
      %v4507 = vadd.f32 %v4434, %v4506
      %v4508 = vpop.f32.mrb[0].mxu0
      %v4509 = vadd.f32 %v4436, %v4508
      %4510 = vmatprep.mubr.bf16.mxu0 %v4380
      %4511 = vmatmul.mubr.bf16.gmra.mrb[0].mxu0 %v4354
      %v4512 = vpop.f32.mrb[0].mxu0
      %v4513 = vadd.f32 %v4440, %v4512
      %v4514 = vpop.f32.mrb[0].mxu0
      %v4515 = vadd.f32 %v4442, %v4514
      %v4516 = vpop.f32.mrb[0].mxu0
      %v4517 = vadd.f32 %v4444, %v4516
      %v4518 = vpop.f32.mrb[0].mxu0
      %v4519 = vadd.f32 %v4446, %v4518
      %4520 = vmatprep.mubr.bf16.mxu0 %v4383
      %4521 = vmatmul.mubr.bf16.gmra.mrb[0].mxu0 %v4358
      %v4522 = vpop.f32.mrb[0].mxu0
      %v4523 = vadd.f32 %v4450, %v4522
      %v4524 = vpop.f32.mrb[0].mxu0
      %v4525 = vadd.f32 %v4452, %v4524
      %v4526 = vpop.f32.mrb[0].mxu0
      %v4527 = vadd.f32 %v4454, %v4526
      %v4528 = vpop.f32.mrb[0].mxu0
      %v4529 = vadd.f32 %v4456, %v4528
      %4530 = vdwg.mxu0
      %v4531 = vld [vmem:[%s12] sm:$0xf]
      %v4532 = vld [vmem:[%s12 + $0x4] sm:$0xf]
      %v4533 = vld [vmem:[%s12 + $0x8] sm:$0xf]
      %v4534 = vld [vmem:[%s12 + $0xc] sm:$0xf]
      %v4535 = vld [vmem:[%s12 + $0x10] sm:$0xf]
      %v4536 = vld [vmem:[%s12 + $0x14] sm:$0xf]
      %v4537 = vld [vmem:[%s12 + $0x18] sm:$0xf]
      %v4538 = vld [vmem:[%s12 + $0x1c] sm:$0xf]
      %v4539 = vld [vmem:[%s12 + $0x20] sm:$0xf]
      %v4540 = vld [vmem:[%s12 + $0x24] sm:$0xf]
      %v4541 = vld [vmem:[%s12 + $0x28] sm:$0xf]
      %v4542 = vld [vmem:[%s12 + $0x2c] sm:$0xf]
      %v4543 = vld [vmem:[%s12 + $0x30] sm:$0xf]
      %v4544 = vld [vmem:[%s12 + $0x34] sm:$0xf]
      %v4545 = vld [vmem:[%s12 + $0x38] sm:$0xf]
      %v4546 = vld [vmem:[%s12 + $0x3c] sm:$0xf]
      %v4547 = vld [vmem:[%s12 + $0x40] sm:$0xf]
      %v4548 = vld [vmem:[%s12 + $0x44] sm:$0xf]
      %v4549 = vld [vmem:[%s12 + $0x48] sm:$0xf]
      %v4550 = vld [vmem:[%s12 + $0x4c] sm:$0xf]
      %v4551 = vld [vmem:[%s12 + $0x50] sm:$0xf]
      %v4552 = vld [vmem:[%s12 + $0x54] sm:$0xf]
      %v4553 = vld [vmem:[%s12 + $0x58] sm:$0xf]
      %v4554 = vld [vmem:[%s12 + $0x5c] sm:$0xf]
      %v4555 = vld [vmem:[%s12 + $0x60] sm:$0xf]
      %v4556 = vld [vmem:[%s12 + $0x64] sm:$0xf]
      %v4557 = vld [vmem:[%s12 + $0x68] sm:$0xf]
      %v4558 = vld [vmem:[%s12 + $0x6c] sm:$0xf]
      %v4559 = vld [vmem:[%s12 + $0x70] sm:$0xf]
      %v4560 = vld [vmem:[%s12 + $0x74] sm:$0xf]
      %v4561 = vld [vmem:[%s12 + $0x78] sm:$0x3]
      %v4562 = vld [vmem:[%s10] sm:$0xff]
      %v4563 = vld [vmem:[%s10 + $0x8] sm:$0xff]
      %v4564 = vld [vmem:[%s10 + $0x10] sm:$0xff]
      %v4565 = vld [vmem:[%s10 + $0x18] sm:$0xff]
      %v4566 = vld [vmem:[%s10 + $0x20] sm:$0xff]
      %v4567 = vld [vmem:[%s10 + $0x28] sm:$0xff]
      %v4568 = vld [vmem:[%s10 + $0x30] sm:$0xff]
      %v4569 = vld [vmem:[%s10 + $0x38] sm:$0xf]
      %v4570 = vld [vmem:[%s11] sm:$0xff]
      %v4571 = vld [vmem:[%s11 + $0x8] sm:$0xff]
      %v4572 = vld [vmem:[%s11 + $0x10] sm:$0xff]
      %v4573 = vld [vmem:[%s11 + $0x18] sm:$0xff]
      %v4574 = vld [vmem:[%s11 + $0x20] sm:$0xff]
      %v4575 = vld [vmem:[%s11 + $0x28] sm:$0xff]
      %v4576 = vld [vmem:[%s11 + $0x30] sm:$0xff]
      %v4577 = vld [vmem:[%s11 + $0x38] sm:$0xf]
      %4594 = vrot.lane.b32.xlu0 %v4493, 127
      %v4595 = vpop.permute.xlu0 %4594
      %4596 = vrot.lane.b32.xlu0 %v4495, 127
      %v4597 = vpop.permute.xlu0 %4596
      %4598 = vrot.lane.b32.xlu0 %v4497, 127
      %v4599 = vpop.permute.xlu0 %4598
      %4600 = vrot.lane.b32.xlu0 %v4499, 127
      %v4601 = vpop.permute.xlu0 %4600
      %4602 = vrot.lane.b32.xlu0 %v4503, 127
      %v4603 = vpop.permute.xlu0 %4602
      %4604 = vrot.lane.b32.xlu0 %v4505, 127
      %v4605 = vpop.permute.xlu0 %4604
      %4606 = vrot.lane.b32.xlu0 %v4507, 127
      %v4607 = vpop.permute.xlu0 %4606
      %4608 = vrot.lane.b32.xlu0 %v4509, 127
      %v4609 = vpop.permute.xlu0 %4608
      %4610 = vrot.lane.b32.xlu0 %v4513, 127
      %v4611 = vpop.permute.xlu0 %4610
      %4612 = vrot.lane.b32.xlu0 %v4515, 127
      %v4613 = vpop.permute.xlu0 %4612
      %4614 = vrot.lane.b32.xlu0 %v4517, 127
      %v4615 = vpop.permute.xlu0 %4614
      %4616 = vrot.lane.b32.xlu0 %v4519, 127
      %v4617 = vpop.permute.xlu0 %4616
      %4618 = vrot.lane.b32.xlu0 %v4523, 127
      %v4619 = vpop.permute.xlu0 %4618
      %4620 = vrot.lane.b32.xlu0 %v4525, 127
      %v4621 = vpop.permute.xlu0 %4620
      %4622 = vrot.lane.b32.xlu0 %v4527, 127
      %v4623 = vpop.permute.xlu0 %4622
      %4624 = vrot.lane.b32.xlu0 %v4529, 127
      %v4625 = vpop.permute.xlu0 %4624
      %v4626 = vsel %vm752, %v4595, %v4597
      %v4627 = vsel %vm752, %v4599, %v4601
      %v4628 = vsel %vm752, %v4603, %v4605
      %v4629 = vsel %vm752, %v4607, %v4609
      %v4630 = vsel %vm752, %v4611, %v4613
      %v4631 = vsel %vm752, %v4615, %v4617
      %v4632 = vsel %vm752, %v4619, %v4621
      %v4633 = vsel %vm752, %v4623, %v4625
      %v4650 = vmax.f32 %v4493, %v4626
      %v4651 = vmax.f32 %v4495, %v4597
      %v4652 = vmax.f32 %v4497, %v4627
      %v4653 = vmax.f32 %v4499, %v4601
      %v4654 = vmax.f32 %v4503, %v4628
      %v4655 = vmax.f32 %v4505, %v4605
      %v4656 = vmax.f32 %v4507, %v4629
      %v4657 = vmax.f32 %v4509, %v4609
      %v4658 = vmax.f32 %v4513, %v4630
      %v4659 = vmax.f32 %v4515, %v4613
      %v4660 = vmax.f32 %v4517, %v4631
      %v4661 = vmax.f32 %v4519, %v4617
      %v4662 = vmax.f32 %v4523, %v4632
      %v4663 = vmax.f32 %v4525, %v4621
      %v4664 = vmax.f32 %v4527, %v4633
      %v4665 = vmax.f32 %v4529, %v4625
      %4666 = vrot.lane.b32.xlu0 %v4493, 126
      %v4667 = vpop.permute.xlu0 %4666
      %4668 = vrot.lane.b32.xlu0 %v4495, 126
      %v4669 = vpop.permute.xlu0 %4668
      %4670 = vrot.lane.b32.xlu0 %v4497, 126
      %v4671 = vpop.permute.xlu0 %4670
      %4672 = vrot.lane.b32.xlu0 %v4499, 126
      %v4673 = vpop.permute.xlu0 %4672
      %4674 = vrot.lane.b32.xlu0 %v4503, 126
      %v4675 = vpop.permute.xlu0 %4674
      %4676 = vrot.lane.b32.xlu0 %v4505, 126
      %v4677 = vpop.permute.xlu0 %4676
      %4678 = vrot.lane.b32.xlu0 %v4507, 126
      %v4679 = vpop.permute.xlu0 %4678
      %4680 = vrot.lane.b32.xlu0 %v4509, 126
      %v4681 = vpop.permute.xlu0 %4680
      %4682 = vrot.lane.b32.xlu0 %v4513, 126
      %v4683 = vpop.permute.xlu0 %4682
      %4684 = vrot.lane.b32.xlu0 %v4515, 126
      %v4685 = vpop.permute.xlu0 %4684
      %4686 = vrot.lane.b32.xlu0 %v4517, 126
      %v4687 = vpop.permute.xlu0 %4686
      %4688 = vrot.lane.b32.xlu0 %v4519, 126
      %v4689 = vpop.permute.xlu0 %4688
      %4690 = vrot.lane.b32.xlu0 %v4523, 126
      %v4691 = vpop.permute.xlu0 %4690
      %4692 = vrot.lane.b32.xlu0 %v4525, 126
      %v4693 = vpop.permute.xlu0 %4692
      %4694 = vrot.lane.b32.xlu0 %v4527, 126
      %v4695 = vpop.permute.xlu0 %4694
      %4696 = vrot.lane.b32.xlu0 %v4529, 126
      %v4697 = vpop.permute.xlu0 %4696
      %v4698 = vsel %vm761, %v4667, %v4669
      %v4699 = vsel %vm761, %v4671, %v4673
      %v4700 = vsel %vm761, %v4675, %v4677
      %v4701 = vsel %vm761, %v4679, %v4681
      %v4702 = vsel %vm761, %v4683, %v4685
      %v4703 = vsel %vm761, %v4687, %v4689
      %v4704 = vsel %vm761, %v4691, %v4693
      %v4705 = vsel %vm761, %v4695, %v4697
      %v4722 = vmax.f32 %v4650, %v4698
      %v4723 = vmax.f32 %v4651, %v4669
      %v4724 = vmax.f32 %v4652, %v4699
      %v4725 = vmax.f32 %v4653, %v4673
      %v4726 = vmax.f32 %v4654, %v4700
      %v4727 = vmax.f32 %v4655, %v4677
      %v4728 = vmax.f32 %v4656, %v4701
      %v4729 = vmax.f32 %v4657, %v4681
      %v4730 = vmax.f32 %v4658, %v4702
      %v4731 = vmax.f32 %v4659, %v4685
      %v4732 = vmax.f32 %v4660, %v4703
      %v4733 = vmax.f32 %v4661, %v4689
      %v4734 = vmax.f32 %v4662, %v4704
      %v4735 = vmax.f32 %v4663, %v4693
      %v4736 = vmax.f32 %v4664, %v4705
      %v4737 = vmax.f32 %v4665, %v4697
      %v4738 = vpack.c.bf16 %v4724, %v4722
      %v4739 = vpack.c.bf16 %v4725, %v4723
      %v4740 = vpack.c.bf16 %v4728, %v4726
      %v4741 = vpack.c.bf16 %v4729, %v4727
      %v4742 = vpack.c.bf16 %v4732, %v4730
      %v4743 = vpack.c.bf16 %v4733, %v4731
      %v4744 = vpack.c.bf16 %v4736, %v4734
      %v4745 = vpack.c.bf16 %v4737, %v4735
      %v4777 = vunpack.c.l.b16 %v4531
      %v4778 = vunpack.c.l.b16 %v4532
      %v4779 = vunpack.c.l.b16 %v4533
      %v4780 = vunpack.c.l.b16 %v4534
      %v4781 = vunpack.c.l.b16 %v4535
      %v4782 = vunpack.c.l.b16 %v4536
      %v4783 = vunpack.c.l.b16 %v4537
      %v4784 = vunpack.c.l.b16 %v4538
      %v4785 = vunpack.c.l.b16 %v4539
      %v4786 = vunpack.c.l.b16 %v4540
      %v4787 = vunpack.c.l.b16 %v4541
      %v4788 = vunpack.c.l.b16 %v4542
      %v4789 = vunpack.c.l.b16 %v4543
      %v4790 = vunpack.c.l.b16 %v4544
      %v4791 = vunpack.c.l.b16 %v4545
      %v4792 = vunpack.c.l.b16 %v4546
      %v4793 = vunpack.c.l.b16 %v4547
      %v4794 = vunpack.c.l.b16 %v4548
      %v4795 = vunpack.c.l.b16 %v4549
      %v4796 = vunpack.c.l.b16 %v4550
      %v4797 = vunpack.c.l.b16 %v4551
      %v4798 = vunpack.c.l.b16 %v4552
      %v4799 = vunpack.c.l.b16 %v4553
      %v4800 = vunpack.c.l.b16 %v4554
      %v4801 = vunpack.c.l.b16 %v4555
      %v4802 = vunpack.c.l.b16 %v4556
      %v4803 = vunpack.c.l.b16 %v4557
      %v4804 = vunpack.c.l.b16 %v4558
      %v4805 = vunpack.c.l.b16 %v4559
      %v4806 = vunpack.c.l.b16 %v4560
      %v4807 = vunpack.c.l.b16 %v4561
      %v4808 = vpack.c.b16 %v4778, %v4777
      %v4809 = vpack.c.b16 %v4780, %v4779
      %v4810 = vpack.c.b16 %v4782, %v4781
      %v4811 = vpack.c.b16 %v4784, %v4783
      %v4812 = vpack.c.b16 %v4786, %v4785
      %v4813 = vpack.c.b16 %v4788, %v4787
      %v4814 = vpack.c.b16 %v4790, %v4789
      %v4815 = vpack.c.b16 %v4792, %v4791
      %v4816 = vpack.c.b16 %v4794, %v4793
      %v4817 = vpack.c.b16 %v4796, %v4795
      %v4818 = vpack.c.b16 %v4798, %v4797
      %v4819 = vpack.c.b16 %v4800, %v4799
      %v4820 = vpack.c.b16 %v4802, %v4801
      %v4821 = vpack.c.b16 %v4804, %v4803
      %v4822 = vpack.c.b16 %v4806, %v4805
      %v4823 = vpack.c.b16 %v4807, %v4807
      %v4840 = vsel %vm851, %v4739, 0
      %v4843 = vsel %vm851, %v4741, 0
      %v4846 = vsel %vm851, %v4743, 0
      %v4849 = vsel %vm851, %v4745, 0
      %vm4851 = vcmask 1041408
      %v4853 = vsel %vm4851, %v4823, 0
      %4855 = vmatprep.subr.bf16.mxu0 0
      %4856 = vmatpush1.bf16.msra.mxu0 %v4808
      %4857 = vmatprep.subr.bf16.mxu0 0
      %4858 = vmatpush1.bf16.msra.mxu0 %v4809
      %4859 = vmatprep.subr.bf16.mxu0 0
      %4860 = vmatpush1.bf16.msra.mxu0 %v4810
      %4861 = vmatprep.subr.bf16.mxu0 0
      %4862 = vmatpush1.bf16.msra.mxu0 %v4811
      %4863 = vmatprep.subr.bf16.mxu0 0
      %4864 = vmatpush1.bf16.msra.mxu0 %v4812
      %4865 = vmatprep.subr.bf16.mxu0 0
      %4866 = vmatpush1.bf16.msra.mxu0 %v4813
      %4867 = vmatprep.subr.bf16.mxu0 0
      %4868 = vmatpush1.bf16.msra.mxu0 %v4814
      %4869 = vmatprep.subr.bf16.mxu0 0
      %4870 = vmatpush1.bf16.msra.mxu0 %v4815
      %4871 = vmatprep.subr.bf16.mxu0 0
      %4872 = vmatpush1.bf16.msra.mxu0 %v4816
      %4873 = vmatprep.subr.bf16.mxu0 0
      %4874 = vmatpush1.bf16.msra.mxu0 %v4817
      %4875 = vmatprep.subr.bf16.mxu0 0
      %4876 = vmatpush1.bf16.msra.mxu0 %v4818
      %4877 = vmatprep.subr.bf16.mxu0 0
      %4878 = vmatpush1.bf16.msra.mxu0 %v4819
      %4879 = vmatprep.subr.bf16.mxu0 0
      %4880 = vmatpush1.bf16.msra.mxu0 %v4820
      %4881 = vmatprep.subr.bf16.mxu0 0
      %4882 = vmatpush1.bf16.msra.mxu0 %v4821
      %4883 = vmatprep.subr.bf16.mxu0 0
      %4884 = vmatpush1.bf16.msra.mxu0 %v4822
      %4885 = vmatprep.subr.bf16.mxu0 0
      %4886 = vmatpush1.bf16.msra.mxu0 %v4853
      %4887 = vmatprep.mubr.bf16.mxu0 %v4840
      %4888 = vmatmul.mubr.bf16.gmra.mrb[0].mxu0 %v4738
      %v4889 = vpop.f32.mrb[0].mxu0
      %v4890 = vadd.f32 0.0, %v4889
      %v4891 = vpop.f32.mrb[0].mxu0
      %v4892 = vpop.f32.mrb[0].mxu0
      %v4893 = vadd.f32 0.0, %v4892
      %v4894 = vpop.f32.mrb[0].mxu0
      %4895 = vmatprep.mubr.bf16.mxu0 %v4843
      %4896 = vmatmul.mubr.bf16.gmra.mrb[0].mxu0 %v4740
      %v4897 = vpop.f32.mrb[0].mxu0
      %v4898 = vadd.f32 0.0, %v4897
      %v4899 = vpop.f32.mrb[0].mxu0
      %v4900 = vpop.f32.mrb[0].mxu0
      %v4901 = vadd.f32 0.0, %v4900
      %v4902 = vpop.f32.mrb[0].mxu0
      %4903 = vmatprep.mubr.bf16.mxu0 %v4846
      %4904 = vmatmul.mubr.bf16.gmra.mrb[0].mxu0 %v4742
      %v4905 = vpop.f32.mrb[0].mxu0
      %v4906 = vadd.f32 0.0, %v4905
      %v4907 = vpop.f32.mrb[0].mxu0
      %v4908 = vpop.f32.mrb[0].mxu0
      %v4909 = vadd.f32 0.0, %v4908
      %v4910 = vpop.f32.mrb[0].mxu0
      %4911 = vmatprep.mubr.bf16.mxu0 %v4849
      %4912 = vmatmul.mubr.bf16.gmra.mrb[0].mxu0 %v4744
      %v4913 = vpop.f32.mrb[0].mxu0
      %v4914 = vadd.f32 0.0, %v4913
      %v4915 = vpop.f32.mrb[0].mxu0
      %v4916 = vpop.f32.mrb[0].mxu0
      %v4917 = vadd.f32 0.0, %v4916
      %v4918 = vpop.f32.mrb[0].mxu0
      %4919 = vdwg.mxu0
      %vm4920 = vcmask 670720
      %v4921 = vsel %vm4920, %v4890, 0.0
      %4922 = vadd.xlane.f32.xlu0 %v4921
      %v4923 = vpop.xlane.xlu0 %4922
      %v4924 = vsel %vm4920, %v4893, 0.0
      %4925 = vadd.xlane.f32.xlu0 %v4924
      %v4926 = vpop.xlane.xlu0 %4925
      %v4927 = vsel %vm4920, %v4898, 0.0
      %4928 = vadd.xlane.f32.xlu0 %v4927
      %v4929 = vpop.xlane.xlu0 %4928
      %v4930 = vsel %vm4920, %v4901, 0.0
      %4931 = vadd.xlane.f32.xlu0 %v4930
      %v4932 = vpop.xlane.xlu0 %4931
      %v4933 = vsel %vm4920, %v4906, 0.0
      %4934 = vadd.xlane.f32.xlu0 %v4933
      %v4935 = vpop.xlane.xlu0 %4934
      %v4936 = vsel %vm4920, %v4909, 0.0
      %4937 = vadd.xlane.f32.xlu0 %v4936
      %v4938 = vpop.xlane.xlu0 %4937
      %v4939 = vsel %vm4920, %v4914, 0.0
      %4940 = vadd.xlane.f32.xlu0 %v4939
      %v4941 = vpop.xlane.xlu0 %4940
      %vm4942 = vcmask 666624
      %v4943 = vsel %vm4942, %v4917, 0.0
      %4944 = vadd.xlane.f32.xlu0 %v4943
      %v4945 = vpop.xlane.xlu0 %4944
      %v4946 = vrcp.pop 82.0
      %v4947 = vmul.f32 %v4923, %v4946
      %v4948 = vmul.f32 %v4926, %v4946
      %v4949 = vmul.f32 %v4929, %v4946
      %v4950 = vmul.f32 %v4932, %v4946
      %v4951 = vmul.f32 %v4935, %v4946
      %v4952 = vmul.f32 %v4938, %v4946
      %v4953 = vmul.f32 %v4941, %v4946
      %v4954 = vmul.f32 %v4945, %v4946
      %v4955 = vmul.f32 %v4890, %v4890
      %v4956 = vmul.f32 %v4893, %v4893
      %v4957 = vmul.f32 %v4898, %v4898
      %v4958 = vmul.f32 %v4901, %v4901
      %v4959 = vmul.f32 %v4906, %v4906
      %v4960 = vmul.f32 %v4909, %v4909
      %v4961 = vmul.f32 %v4914, %v4914
      %v4962 = vmul.f32 %v4917, %v4917
      %v4963 = vsel %vm4920, %v4955, 0.0
      %4964 = vadd.xlane.f32.xlu0 %v4963
      %v4965 = vpop.xlane.xlu0 %4964
      %v4966 = vsel %vm4920, %v4956, 0.0
      %4967 = vadd.xlane.f32.xlu0 %v4966
      %v4968 = vpop.xlane.xlu0 %4967
      %v4969 = vsel %vm4920, %v4957, 0.0
      %4970 = vadd.xlane.f32.xlu0 %v4969
      %v4971 = vpop.xlane.xlu0 %4970
      %v4972 = vsel %vm4920, %v4958, 0.0
      %4973 = vadd.xlane.f32.xlu0 %v4972
      %v4974 = vpop.xlane.xlu0 %4973
      %v4975 = vsel %vm4920, %v4959, 0.0
      %4976 = vadd.xlane.f32.xlu0 %v4975
      %v4977 = vpop.xlane.xlu0 %4976
      %v4978 = vsel %vm4920, %v4960, 0.0
      %4979 = vadd.xlane.f32.xlu0 %v4978
      %v4980 = vpop.xlane.xlu0 %4979
      %v4981 = vsel %vm4920, %v4961, 0.0
      %4982 = vadd.xlane.f32.xlu0 %v4981
      %v4983 = vpop.xlane.xlu0 %4982
      %v4984 = vsel %vm4942, %v4962, 0.0
      %4985 = vadd.xlane.f32.xlu0 %v4984
      %v4986 = vpop.xlane.xlu0 %4985
      %v4987 = vmul.f32 %v4965, %v4946
      %v4988 = vmul.f32 %v4968, %v4946
      %v4989 = vmul.f32 %v4971, %v4946
      %v4990 = vmul.f32 %v4974, %v4946
      %v4991 = vmul.f32 %v4977, %v4946
      %v4992 = vmul.f32 %v4980, %v4946
      %v4993 = vmul.f32 %v4983, %v4946
      %v4994 = vmul.f32 %v4986, %v4946
      %v4995 = vmul.f32 %v4947, %v4947
      %v4996 = vmul.f32 %v4948, %v4948
      %v4997 = vmul.f32 %v4949, %v4949
      %v4998 = vmul.f32 %v4950, %v4950
      %v4999 = vmul.f32 %v4951, %v4951
      %v5000 = vmul.f32 %v4952, %v4952
      %v5001 = vmul.f32 %v4953, %v4953
      %v5002 = vmul.f32 %v4954, %v4954
      %v5003 = vsub.f32 %v4987, %v4995
      %v5004 = vsub.f32 %v4988, %v4996
      %v5005 = vsub.f32 %v4989, %v4997
      %v5006 = vsub.f32 %v4990, %v4998
      %v5007 = vsub.f32 %v4991, %v4999
      %v5008 = vsub.f32 %v4992, %v5000
      %v5009 = vsub.f32 %v4993, %v5001
      %v5010 = vsub.f32 %v4994, %v5002
      %v5011 = vmax.f32 %v5003, 0.0
      %v5012 = vmax.f32 %v5004, 0.0
      %v5013 = vmax.f32 %v5005, 0.0
      %v5014 = vmax.f32 %v5006, 0.0
      %v5015 = vmax.f32 %v5007, 0.0
      %v5016 = vmax.f32 %v5008, 0.0
      %v5017 = vmax.f32 %v5009, 0.0
      %v5018 = vmax.f32 %v5010, 0.0
      %v5019 = vsub.f32 %v4890, %v4947
      %v5020 = vsub.f32 %v4893, %v4948
      %v5021 = vsub.f32 %v4898, %v4949
      %v5022 = vsub.f32 %v4901, %v4950
      %v5023 = vsub.f32 %v4906, %v4951
      %v5024 = vsub.f32 %v4909, %v4952
      %v5025 = vsub.f32 %v4914, %v4953
      %v5026 = vsub.f32 %v4917, %v4954
      %v5027 = vadd.f32 %v5011, 1e-05
      %v5028 = vadd.f32 %v5012, 1e-05
      %v5029 = vadd.f32 %v5013, 1e-05
      %v5030 = vadd.f32 %v5014, 1e-05
      %v5031 = vadd.f32 %v5015, 1e-05
      %v5032 = vadd.f32 %v5016, 1e-05
      %v5033 = vadd.f32 %v5017, 1e-05
      %v5034 = vadd.f32 %v5018, 1e-05
      %v5035 = vrsqrt.pop %v5027
      %v5036 = vrsqrt.pop %v5028
      %v5037 = vrsqrt.pop %v5029
      %v5038 = vrsqrt.pop %v5030
      %v5039 = vrsqrt.pop %v5031
      %v5040 = vrsqrt.pop %v5032
      %v5041 = vrsqrt.pop %v5033
      %v5042 = vrsqrt.pop %v5034
      %v5043 = vmul.f32 %v5019, %v5035
      %v5044 = vmul.f32 %v5020, %v5036
      %v5045 = vmul.f32 %v5021, %v5037
      %v5046 = vmul.f32 %v5022, %v5038
      %v5047 = vmul.f32 %v5023, %v5039
      %v5048 = vmul.f32 %v5024, %v5040
      %v5049 = vmul.f32 %v5025, %v5041
      %v5050 = vmul.f32 %v5026, %v5042
      %5052 = vset.pattern.permute.xlu0 0
      %5053 = vperm.xlu0 %5052, %v4562
      %v5054 = vpop.permute.xlu0 %5053
      %5057 = vset.pattern.permute.xlu0 0
      %5058 = vperm.xlu0 %5057, %v4563
      %v5059 = vpop.permute.xlu0 %5058
      %5062 = vset.pattern.permute.xlu0 0
      %5063 = vperm.xlu0 %5062, %v4564
      %v5064 = vpop.permute.xlu0 %5063
      %5067 = vset.pattern.permute.xlu0 0
      %5068 = vperm.xlu0 %5067, %v4565
      %v5069 = vpop.permute.xlu0 %5068
      %5072 = vset.pattern.permute.xlu0 0
      %5073 = vperm.xlu0 %5072, %v4566
      %v5074 = vpop.permute.xlu0 %5073
      %5077 = vset.pattern.permute.xlu0 0
      %5078 = vperm.xlu0 %5077, %v4567
      %v5079 = vpop.permute.xlu0 %5078
      %5082 = vset.pattern.permute.xlu0 0
      %5083 = vperm.xlu0 %5082, %v4568
      %v5084 = vpop.permute.xlu0 %5083
      %5087 = vset.pattern.permute.xlu0 0
      %5088 = vperm.xlu0 %5087, %v4569
      %v5089 = vpop.permute.xlu0 %5088
      %v5091 = vmul.f32 %v5043, %v5054
      %v5092 = vmul.f32 %v5044, %v5059
      %v5093 = vmul.f32 %v5045, %v5064
      %v5094 = vmul.f32 %v5046, %v5069
      %v5095 = vmul.f32 %v5047, %v5074
      %v5096 = vmul.f32 %v5048, %v5079
      %v5097 = vmul.f32 %v5049, %v5084
      %v5098 = vmul.f32 %v5050, %v5089
      %5100 = vset.pattern.permute.xlu0 0
      %5101 = vperm.xlu0 %5100, %v4570
      %v5102 = vpop.permute.xlu0 %5101
      %5105 = vset.pattern.permute.xlu0 0
      %5106 = vperm.xlu0 %5105, %v4571
      %v5107 = vpop.permute.xlu0 %5106
      %5110 = vset.pattern.permute.xlu0 0
      %5111 = vperm.xlu0 %5110, %v4572
      %v5112 = vpop.permute.xlu0 %5111
      %5115 = vset.pattern.permute.xlu0 0
      %5116 = vperm.xlu0 %5115, %v4573
      %v5117 = vpop.permute.xlu0 %5116
      %5120 = vset.pattern.permute.xlu0 0
      %5121 = vperm.xlu0 %5120, %v4574
      %v5122 = vpop.permute.xlu0 %5121
      %5125 = vset.pattern.permute.xlu0 0
      %5126 = vperm.xlu0 %5125, %v4575
      %v5127 = vpop.permute.xlu0 %5126
      %5130 = vset.pattern.permute.xlu0 0
      %5131 = vperm.xlu0 %5130, %v4576
      %v5132 = vpop.permute.xlu0 %5131
      %5135 = vset.pattern.permute.xlu0 0
      %5136 = vperm.xlu0 %5135, %v4577
      %v5137 = vpop.permute.xlu0 %5136
      %v5139 = vadd.f32 %v5091, %v5102
      %v5140 = vadd.f32 %v5092, %v5107
      %v5141 = vadd.f32 %v5093, %v5112
      %v5142 = vadd.f32 %v5094, %v5117
      %v5143 = vadd.f32 %v5095, %v5122
      %v5144 = vadd.f32 %v5096, %v5127
      %v5145 = vadd.f32 %v5097, %v5132
      %v5146 = vadd.f32 %v5098, %v5137
      %vm5147 = vcmp.ge.f32.partialorder %v5139, 0.0
      %vm5148 = vcmp.ge.f32.partialorder %v5140, 0.0
      %vm5149 = vcmp.ge.f32.partialorder %v5141, 0.0
      %vm5150 = vcmp.ge.f32.partialorder %v5142, 0.0
      %vm5151 = vcmp.ge.f32.partialorder %v5143, 0.0
      %vm5152 = vcmp.ge.f32.partialorder %v5144, 0.0
      %vm5153 = vcmp.ge.f32.partialorder %v5145, 0.0
      %vm5154 = vcmp.ge.f32.partialorder %v5146, 0.0
      %v5155 = vmul.f32 %v5139, 0.01
      %v5156 = vmul.f32 %v5140, 0.01
      %v5157 = vmul.f32 %v5141, 0.01
      %v5158 = vmul.f32 %v5142, 0.01
      %v5159 = vmul.f32 %v5143, 0.01
      %v5160 = vmul.f32 %v5144, 0.01
      %v5161 = vmul.f32 %v5145, 0.01
      %v5162 = vmul.f32 %v5146, 0.01
      %v5163 = vsel %vm5147, %v5139, %v5155
      %v5164 = vsel %vm5148, %v5140, %v5156
      %v5165 = vsel %vm5149, %v5141, %v5157
      %v5166 = vsel %vm5150, %v5142, %v5158
      %v5167 = vsel %vm5151, %v5143, %v5159
      %v5168 = vsel %vm5152, %v5144, %v5160
      %v5169 = vsel %vm5153, %v5145, %v5161
      %v5170 = vsel %vm5154, %v5146, %v5162
      %vm5171 = vcmask 637952
      %5172 = vst.msk [vmem:[#allocation6] sm:$0xff] %vm5171, %v5163
      %5173 = vst.msk [vmem:[#allocation6 + $0x8] sm:$0xff] %vm5171, %v5164
      %5174 = vst.msk [vmem:[#allocation6 + $0x10] sm:$0xff] %vm5171, %v5165
      %5175 = vst.msk [vmem:[#allocation6 + $0x18] sm:$0xff] %vm5171, %v5166
      %5176 = vst.msk [vmem:[#allocation6 + $0x20] sm:$0xff] %vm5171, %v5167
      %5177 = vst.msk [vmem:[#allocation6 + $0x28] sm:$0xff] %vm5171, %v5168
      %5178 = vst.msk [vmem:[#allocation6 + $0x30] sm:$0xff] %vm5171, %v5169
      %vm5179 = vcmask 633856
      %5180 = vst.msk [vmem:[#allocation6 + $0x38] sm:$0xf] %vm5179, %v5170
      %5189 = vrot.lane.b32.xlu0 %v5163, 127
      %v5190 = vpop.permute.xlu0 %5189
      %5191 = vrot.lane.b32.xlu0 %v5164, 127
      %v5192 = vpop.permute.xlu0 %5191
      %5193 = vrot.lane.b32.xlu0 %v5165, 127
      %v5194 = vpop.permute.xlu0 %5193
      %5195 = vrot.lane.b32.xlu0 %v5166, 127
      %v5196 = vpop.permute.xlu0 %5195
      %5197 = vrot.lane.b32.xlu0 %v5167, 127
      %v5198 = vpop.permute.xlu0 %5197
      %5199 = vrot.lane.b32.xlu0 %v5168, 127
      %v5200 = vpop.permute.xlu0 %5199
      %5201 = vrot.lane.b32.xlu0 %v5169, 127
      %v5202 = vpop.permute.xlu0 %5201
      %5203 = vrot.lane.b32.xlu0 %v5170, 127
      %v5204 = vpop.permute.xlu0 %5203
      %5213 = vst.msk [vmem:[#allocation6 + $0x3c] sm:$0xff] %vm5171, %v5190
      %5214 = vst.msk [vmem:[#allocation6 + $0x44] sm:$0xff] %vm5171, %v5192
      %5215 = vst.msk [vmem:[#allocation6 + $0x4c] sm:$0xff] %vm5171, %v5194
      %5216 = vst.msk [vmem:[#allocation6 + $0x54] sm:$0xff] %vm5171, %v5196
      %5217 = vst.msk [vmem:[#allocation6 + $0x5c] sm:$0xff] %vm5171, %v5198
      %5218 = vst.msk [vmem:[#allocation6 + $0x64] sm:$0xff] %vm5171, %v5200
      %5219 = vst.msk [vmem:[#allocation6 + $0x6c] sm:$0xff] %vm5171, %v5202
      %5220 = vst.msk [vmem:[#allocation6 + $0x74] sm:$0xf] %vm5179, %v5204
      %5221 = vrot.lane.b32.xlu0 %v5163, 126
      %v5222 = vpop.permute.xlu0 %5221
      %5223 = vrot.lane.b32.xlu0 %v5164, 126
      %v5224 = vpop.permute.xlu0 %5223
      %5225 = vrot.lane.b32.xlu0 %v5165, 126
      %v5226 = vpop.permute.xlu0 %5225
      %5227 = vrot.lane.b32.xlu0 %v5166, 126
      %v5228 = vpop.permute.xlu0 %5227
      %5229 = vrot.lane.b32.xlu0 %v5167, 126
      %v5230 = vpop.permute.xlu0 %5229
      %5231 = vrot.lane.b32.xlu0 %v5168, 126
      %v5232 = vpop.permute.xlu0 %5231
      %5233 = vrot.lane.b32.xlu0 %v5169, 126
      %v5234 = vpop.permute.xlu0 %5233
      %5235 = vrot.lane.b32.xlu0 %v5170, 126
      %v5236 = vpop.permute.xlu0 %5235
      %5245 = vst.msk [vmem:[#allocation6 + $0x78] sm:$0xff] %vm5171, %v5222
      %5246 = vst.msk [vmem:[#allocation6 + $0x80] sm:$0xff] %vm5171, %v5224
      %5247 = vst.msk [vmem:[#allocation6 + $0x88] sm:$0xff] %vm5171, %v5226
      %5248 = vst.msk [vmem:[#allocation6 + $0x90] sm:$0xff] %vm5171, %v5228
      %5249 = vst.msk [vmem:[#allocation6 + $0x98] sm:$0xff] %vm5171, %v5230
      %5250 = vst.msk [vmem:[#allocation6 + $0xa0] sm:$0xff] %vm5171, %v5232
      %5251 = vst.msk [vmem:[#allocation6 + $0xa8] sm:$0xff] %vm5171, %v5234
      %5252 = vst.msk [vmem:[#allocation6 + $0xb0] sm:$0xf] %vm5179, %v5236
      %5253 = vrot.lane.b32.xlu0 %v5163, 125
      %v5254 = vpop.permute.xlu0 %5253
      %5255 = vrot.lane.b32.xlu0 %v5164, 125
      %v5256 = vpop.permute.xlu0 %5255
      %5257 = vrot.lane.b32.xlu0 %v5165, 125
      %v5258 = vpop.permute.xlu0 %5257
      %5259 = vrot.lane.b32.xlu0 %v5166, 125
      %v5260 = vpop.permute.xlu0 %5259
      %5261 = vrot.lane.b32.xlu0 %v5167, 125
      %v5262 = vpop.permute.xlu0 %5261
      %5263 = vrot.lane.b32.xlu0 %v5168, 125
      %v5264 = vpop.permute.xlu0 %5263
      %5265 = vrot.lane.b32.xlu0 %v5169, 125
      %v5266 = vpop.permute.xlu0 %5265
      %5267 = vrot.lane.b32.xlu0 %v5170, 125
      %v5268 = vpop.permute.xlu0 %5267
      %5277 = vst.msk [vmem:[#allocation6 + $0xb4] sm:$0xff] %vm5171, %v5254
      %5278 = vst.msk [vmem:[#allocation6 + $0xbc] sm:$0xff] %vm5171, %v5256
      %5279 = vst.msk [vmem:[#allocation6 + $0xc4] sm:$0xff] %vm5171, %v5258
      %5280 = vst.msk [vmem:[#allocation6 + $0xcc] sm:$0xff] %vm5171, %v5260
      %5281 = vst.msk [vmem:[#allocation6 + $0xd4] sm:$0xff] %vm5171, %v5262
      %5282 = vst.msk [vmem:[#allocation6 + $0xdc] sm:$0xff] %vm5171, %v5264
      %5283 = vst.msk [vmem:[#allocation6 + $0xe4] sm:$0xff] %vm5171, %v5266
      %5284 = vst.msk [vmem:[#allocation6 + $0xec] sm:$0xf] %vm5179, %v5268
      %5285 = vrot.lane.b32.xlu0 %v5163, 124
      %v5286 = vpop.permute.xlu0 %5285
      %5287 = vrot.lane.b32.xlu0 %v5164, 124
      %v5288 = vpop.permute.xlu0 %5287
      %5289 = vrot.lane.b32.xlu0 %v5165, 124
      %v5290 = vpop.permute.xlu0 %5289
      %5291 = vrot.lane.b32.xlu0 %v5166, 124
      %v5292 = vpop.permute.xlu0 %5291
      %5293 = vrot.lane.b32.xlu0 %v5167, 124
      %v5294 = vpop.permute.xlu0 %5293
      %5295 = vrot.lane.b32.xlu0 %v5168, 124
      %v5296 = vpop.permute.xlu0 %5295
      %5297 = vrot.lane.b32.xlu0 %v5169, 124
      %v5298 = vpop.permute.xlu0 %5297
      %5299 = vrot.lane.b32.xlu0 %v5170, 124
      %v5300 = vpop.permute.xlu0 %5299
      %5309 = vst.msk [vmem:[#allocation6 + $0xf0] sm:$0xff] %vm5171, %v5286
      %5310 = vst.msk [vmem:[#allocation6 + $0xf8] sm:$0xff] %vm5171, %v5288
      %5311 = vst.msk [vmem:[#allocation6 + $0x100] sm:$0xff] %vm5171, %v5290
      %5312 = vst.msk [vmem:[#allocation6 + $0x108] sm:$0xff] %vm5171, %v5292
      %5313 = vst.msk [vmem:[#allocation6 + $0x110] sm:$0xff] %vm5171, %v5294
      %5314 = vst.msk [vmem:[#allocation6 + $0x118] sm:$0xff] %vm5171, %v5296
      %5315 = vst.msk [vmem:[#allocation6 + $0x120] sm:$0xff] %vm5171, %v5298
      %5316 = vst.msk [vmem:[#allocation6 + $0x128] sm:$0xf] %vm5179, %v5300
      %v5317 = vld [vmem:[%s13] sm:$0xff]
      %v5318 = vld [vmem:[%s13 + $0x8] sm:$0xf]
      %v5319 = vld [vmem:[%s13 + $0xc] sm:$0xff]
      %v5320 = vld [vmem:[%s13 + $0x14] sm:$0xf]
      %v5321 = vld [vmem:[%s13 + $0x18] sm:$0xff]
      %v5322 = vld [vmem:[%s13 + $0x20] sm:$0xf]
      %v5323 = vld [vmem:[%s13 + $0x24] sm:$0xff]
      %v5324 = vld [vmem:[%s13 + $0x2c] sm:$0xf]
      %v5325 = vld [vmem:[%s13 + $0x30] sm:$0xff]
      %v5326 = vld [vmem:[%s13 + $0x38] sm:$0xf]
      %v5327 = vld [vmem:[%s13 + $0x3c] sm:$0xff]
      %v5328 = vld [vmem:[%s13 + $0x44] sm:$0xf]
      %v5329 = vld [vmem:[%s13 + $0x48] sm:$0xff]
      %v5330 = vld [vmem:[%s13 + $0x50] sm:$0xf]
      %v5331 = vld [vmem:[%s13 + $0x54] sm:$0x33]
      %v5332 = vld [vmem:[%s13 + $0x5c] sm:$0x3]
      %v5333 = vld [vmem:[#allocation6] sm:$0xff]
      %v5334 = vld [vmem:[#allocation6 + $0x8] sm:$0xff]
      %v5335 = vld [vmem:[#allocation6 + $0x10] sm:$0xff]
      %v5336 = vld [vmem:[#allocation6 + $0x18] sm:$0xff]
      %v5337 = vld [vmem:[#allocation6 + $0x20] sm:$0xff]
      %v5338 = vld [vmem:[#allocation6 + $0x28] sm:$0xff]
      %v5339 = vld [vmem:[#allocation6 + $0x30] sm:$0xff]
      %v5340 = vld [vmem:[#allocation6 + $0x38] sm:$0xff]
      %v5341 = vld [vmem:[#allocation6 + $0x40] sm:$0xff]
      %v5342 = vld [vmem:[#allocation6 + $0x48] sm:$0xff]
      %v5343 = vld [vmem:[#allocation6 + $0x50] sm:$0xff]
      %v5344 = vld [vmem:[#allocation6 + $0x58] sm:$0xff]
      %v5345 = vld [vmem:[#allocation6 + $0x60] sm:$0xff]
      %v5346 = vld [vmem:[#allocation6 + $0x68] sm:$0xff]
      %v5347 = vld [vmem:[#allocation6 + $0x70] sm:$0xff]
      %v5348 = vld [vmem:[#allocation6 + $0x78] sm:$0xff]
      %v5349 = vld [vmem:[#allocation6 + $0x80] sm:$0xff]
      %v5350 = vld [vmem:[#allocation6 + $0x88] sm:$0xff]
      %v5351 = vld [vmem:[#allocation6 + $0x90] sm:$0xff]
      %v5352 = vld [vmem:[#allocation6 + $0x98] sm:$0xff]
      %v5353 = vld [vmem:[#allocation6 + $0xa0] sm:$0xff]
      %v5354 = vld [vmem:[#allocation6 + $0xa8] sm:$0xff]
      %v5355 = vld [vmem:[#allocation6 + $0xb0] sm:$0xff]
      %v5356 = vld [vmem:[#allocation6 + $0xb8] sm:$0xff]
      %v5357 = vld [vmem:[#allocation6 + $0xc0] sm:$0xff]
      %v5358 = vld [vmem:[#allocation6 + $0xc8] sm:$0xff]
      %v5359 = vld [vmem:[#allocation6 + $0xd0] sm:$0xff]
      %v5360 = vld [vmem:[#allocation6 + $0xd8] sm:$0xff]
      %v5361 = vld [vmem:[#allocation6 + $0xe0] sm:$0xff]
      %v5362 = vld [vmem:[#allocation6 + $0xe8] sm:$0xff]
      %v5363 = vld [vmem:[#allocation6 + $0xf0] sm:$0xff]
      %v5364 = vld [vmem:[#allocation6 + $0xf8] sm:$0xff]
      %v5365 = vld [vmem:[#allocation6 + $0x100] sm:$0xff]
      %v5366 = vld [vmem:[#allocation6 + $0x108] sm:$0xff]
      %v5367 = vld [vmem:[#allocation6 + $0x110] sm:$0xff]
      %v5368 = vld [vmem:[#allocation6 + $0x118] sm:$0xff]
      %v5369 = vld [vmem:[#allocation6 + $0x120] sm:$0xff]
      %v5370 = vld [vmem:[#allocation6 + $0x128] sm:$0xf]
      %v5371 = vpack.c.bf16 %v5334, %v5333
      %v5372 = vpack.c.bf16 %v5336, %v5335
      %v5373 = vpack.c.bf16 %v5338, %v5337
      %v5374 = vpack.c.bf16 %v5340, %v5339
      %v5375 = vpack.c.bf16 %v5342, %v5341
      %v5376 = vpack.c.bf16 %v5344, %v5343
      %v5377 = vpack.c.bf16 %v5346, %v5345
      %v5378 = vpack.c.bf16 %v5348, %v5347
      %v5379 = vpack.c.bf16 %v5350, %v5349
      %v5380 = vpack.c.bf16 %v5352, %v5351
      %v5381 = vpack.c.bf16 %v5354, %v5353
      %v5382 = vpack.c.bf16 %v5356, %v5355
      %v5383 = vpack.c.bf16 %v5358, %v5357
      %v5384 = vpack.c.bf16 %v5360, %v5359
      %v5385 = vpack.c.bf16 %v5362, %v5361
      %v5386 = vpack.c.bf16 %v5364, %v5363
      %v5387 = vpack.c.bf16 %v5366, %v5365
      %v5388 = vpack.c.bf16 %v5368, %v5367
      %v5389 = vpack.c.bf16 %v5370, %v5369
      %v5390 = vld [vmem:[%s14] sm:$0xff]
      %v5391 = vld [vmem:[%s14 + $0x8] sm:$0xff]
      %v5392 = vld [vmem:[%s14 + $0x10] sm:$0xff]
      %v5393 = vld [vmem:[%s14 + $0x18] sm:$0xff]
      %v5394 = vld [vmem:[%s14 + $0x20] sm:$0xff]
      %v5395 = vld [vmem:[%s14 + $0x28] sm:$0xff]
      %v5396 = vld [vmem:[%s14 + $0x30] sm:$0xff]
      %v5397 = vld [vmem:[%s14 + $0x38] sm:$0xf]
      %5399 = vset.pattern.permute.xlu0 0
      %5400 = vperm.xlu0 %5399, %v5390
      %v5401 = vpop.permute.xlu0 %5400
      %5404 = vset.pattern.permute.xlu0 0
      %5405 = vperm.xlu0 %5404, %v5391
      %v5406 = vpop.permute.xlu0 %5405
      %5409 = vset.pattern.permute.xlu0 0
      %5410 = vperm.xlu0 %5409, %v5392
      %v5411 = vpop.permute.xlu0 %5410
      %5414 = vset.pattern.permute.xlu0 0
      %5415 = vperm.xlu0 %5414, %v5393
      %v5416 = vpop.permute.xlu0 %5415
      %5419 = vset.pattern.permute.xlu0 0
      %5420 = vperm.xlu0 %5419, %v5394
      %v5421 = vpop.permute.xlu0 %5420
      %5424 = vset.pattern.permute.xlu0 0
      %5425 = vperm.xlu0 %5424, %v5395
      %v5426 = vpop.permute.xlu0 %5425
      %5429 = vset.pattern.permute.xlu0 0
      %5430 = vperm.xlu0 %5429, %v5396
      %v5431 = vpop.permute.xlu0 %5430
      %5434 = vset.pattern.permute.xlu0 0
      %5435 = vperm.xlu0 %5434, %v5397
      %v5436 = vpop.permute.xlu0 %5435
      %v5454 = vunpack.c.l.b16 %v5317
      %v5455 = vunpack.c.h.b16 %v5317
      %v5456 = vunpack.c.l.b16 %v5318
      %v5457 = vunpack.c.l.b16 %v5319
      %v5458 = vunpack.c.h.b16 %v5319
      %v5459 = vunpack.c.l.b16 %v5320
      %v5460 = vunpack.c.l.b16 %v5321
      %v5461 = vunpack.c.h.b16 %v5321
      %v5462 = vunpack.c.l.b16 %v5322
      %v5463 = vunpack.c.l.b16 %v5323
      %v5464 = vunpack.c.h.b16 %v5323
      %v5465 = vunpack.c.l.b16 %v5324
      %v5466 = vunpack.c.l.b16 %v5325
      %v5467 = vunpack.c.h.b16 %v5325
      %v5468 = vunpack.c.l.b16 %v5326
      %v5469 = vunpack.c.l.b16 %v5327
      %v5470 = vunpack.c.h.b16 %v5327
      %v5471 = vunpack.c.l.b16 %v5328
      %v5472 = vunpack.c.l.b16 %v5329
      %v5473 = vunpack.c.h.b16 %v5329
      %v5474 = vunpack.c.l.b16 %v5330
      %v5475 = vunpack.c.l.b16 %v5331
      %v5476 = vunpack.c.h.b16 %v5331
      %v5477 = vunpack.c.l.b16 %v5332
      %v5478 = vpack.c.b16 %v5457, %v5454
      %v5479 = vpack.c.b16 %v5458, %v5455
      %v5480 = vpack.c.b16 %v5459, %v5456
      %v5481 = vpack.c.b16 %v5463, %v5460
      %v5482 = vpack.c.b16 %v5464, %v5461
      %v5483 = vpack.c.b16 %v5465, %v5462
      %v5484 = vpack.c.b16 %v5469, %v5466
      %v5485 = vpack.c.b16 %v5470, %v5467
      %v5486 = vpack.c.b16 %v5471, %v5468
      %v5487 = vpack.c.b16 %v5475, %v5472
      %v5488 = vpack.c.b16 %v5476, %v5473
      %v5489 = vpack.c.b16 %v5477, %v5474
      %vm5498 = vcmask 359424
      %v5500 = vsel %vm5498, %v5480, 0
      %v5503 = vsel %vm5498, %v5483, 0
      %v5506 = vsel %vm5498, %v5486, 0
      %v5509 = vsel %vm5498, %v5489, 0
      %vm5511 = vcmask 1045504
      %v5513 = vsel %vm5511, %v5389, 0
      %5515 = vmatprep.subr.bf16.mxu0 0
      %5516 = vmatpush1.bf16.msra.mxu0 %v5371
      %5517 = vmatprep.subr.bf16.mxu0 0
      %5518 = vmatpush1.bf16.msra.mxu0 %v5372
      %5519 = vmatprep.subr.bf16.mxu0 0
      %5520 = vmatpush1.bf16.msra.mxu0 %v5373
      %5521 = vmatprep.subr.bf16.mxu0 0
      %5522 = vmatpush1.bf16.msra.mxu0 %v5374
      %5523 = vmatprep.subr.bf16.mxu0 0
      %5524 = vmatpush1.bf16.msra.mxu0 %v5375
      %5525 = vmatprep.subr.bf16.mxu0 0
      %5526 = vmatpush1.bf16.msra.mxu0 %v5376
      %5527 = vmatprep.subr.bf16.mxu0 0
      %5528 = vmatpush1.bf16.msra.mxu0 %v5377
      %5529 = vmatprep.subr.bf16.mxu0 0
      %5530 = vmatpush1.bf16.msra.mxu0 %v5378
      %5531 = vmatprep.subr.bf16.mxu0 0
      %5532 = vmatpush1.bf16.msra.mxu0 %v5379
      %5533 = vmatprep.subr.bf16.mxu0 0
      %5534 = vmatpush1.bf16.msra.mxu0 %v5380
      %5535 = vmatprep.subr.bf16.mxu0 0
      %5536 = vmatpush1.bf16.msra.mxu0 %v5381
      %5537 = vmatprep.subr.bf16.mxu0 0
      %5538 = vmatpush1.bf16.msra.mxu0 %v5382
      %5539 = vmatprep.subr.bf16.mxu0 0
      %5540 = vmatpush1.bf16.msra.mxu0 %v5383
      %5541 = vmatprep.subr.bf16.mxu0 0
      %5542 = vmatpush1.bf16.msra.mxu0 %v5384
      %5543 = vmatprep.subr.bf16.mxu0 0
      %5544 = vmatpush1.bf16.msra.mxu0 %v5385
      %5545 = vmatprep.subr.bf16.mxu0 0
      %5546 = vmatpush1.bf16.msra.mxu0 %v5386
      %5547 = vmatprep.mubr.bf16.mxu0 %v5479
      %5548 = vmatmul.mubr.bf16.gmra.mrb[0].mxu0 %v5478
      %v5549 = vpop.f32.mrb[0].mxu0
      %v5550 = vadd.f32 %v5401, %v5549
      %v5551 = vpop.f32.mrb[0].mxu0
      %v5552 = vpop.f32.mrb[0].mxu0
      %v5553 = vadd.f32 %v5406, %v5552
      %v5554 = vpop.f32.mrb[0].mxu0
      %5555 = vmatprep.mubr.bf16.mxu0 %v5482
      %5556 = vmatmul.mubr.bf16.gmra.mrb[0].mxu0 %v5481
      %v5557 = vpop.f32.mrb[0].mxu0
      %v5558 = vadd.f32 %v5411, %v5557
      %v5559 = vpop.f32.mrb[0].mxu0
      %v5560 = vpop.f32.mrb[0].mxu0
      %v5561 = vadd.f32 %v5416, %v5560
      %v5562 = vpop.f32.mrb[0].mxu0
      %5563 = vmatprep.mubr.bf16.mxu0 %v5485
      %5564 = vmatmul.mubr.bf16.gmra.mrb[0].mxu0 %v5484
      %v5565 = vpop.f32.mrb[0].mxu0
      %v5566 = vadd.f32 %v5421, %v5565
      %v5567 = vpop.f32.mrb[0].mxu0
      %v5568 = vpop.f32.mrb[0].mxu0
      %v5569 = vadd.f32 %v5426, %v5568
      %v5570 = vpop.f32.mrb[0].mxu0
      %5571 = vmatprep.mubr.bf16.mxu0 %v5488
      %5572 = vmatmul.mubr.bf16.gmra.mrb[0].mxu0 %v5487
      %v5573 = vpop.f32.mrb[0].mxu0
      %v5574 = vadd.f32 %v5431, %v5573
      %v5575 = vpop.f32.mrb[0].mxu0
      %v5576 = vpop.f32.mrb[0].mxu0
      %v5577 = vadd.f32 %v5436, %v5576
      %v5578 = vpop.f32.mrb[0].mxu0
      %5579 = vdwg.mxu0
      %5580 = vmatprep.subr.bf16.mxu0 0
      %5581 = vmatpush1.bf16.msra.mxu0 %v5387
      %5582 = vmatprep.subr.bf16.mxu0 0
      %5583 = vmatpush1.bf16.msra.mxu0 %v5388
      %5584 = vmatprep.subr.bf16.mxu0 0
      %5585 = vmatpush1.bf16.msra.mxu0 %v5513
      %5586 = vmatprep.subr.bf16.mxu0 0
      %5587 = vmatpush1.bf16.msra.mxu0 0
      %5588 = vmatprep.subr.bf16.mxu0 0
      %5589 = vmatpush1.bf16.msra.mxu0 0
      %5590 = vmatprep.subr.bf16.mxu0 0
      %5591 = vmatpush1.bf16.msra.mxu0 0
      %5592 = vmatprep.subr.bf16.mxu0 0
      %5593 = vmatpush1.bf16.msra.mxu0 0
      %5594 = vmatprep.subr.bf16.mxu0 0
      %5595 = vmatpush1.bf16.msra.mxu0 0
      %5596 = vmatprep.subr.bf16.mxu0 0
      %5597 = vmatpush1.bf16.msra.mxu0 0
      %5598 = vmatprep.subr.bf16.mxu0 0
      %5599 = vmatpush1.bf16.msra.mxu0 0
      %5600 = vmatprep.subr.bf16.mxu0 0
      %5601 = vmatpush1.bf16.msra.mxu0 0
      %5602 = vmatprep.subr.bf16.mxu0 0
      %5603 = vmatpush1.bf16.msra.mxu0 0
      %5604 = vmatprep.subr.bf16.mxu0 0
      %5605 = vmatpush1.bf16.msra.mxu0 0
      %5606 = vmatprep.subr.bf16.mxu0 0
      %5607 = vmatpush1.bf16.msra.mxu0 0
      %5608 = vmatprep.subr.bf16.mxu0 0
      %5609 = vmatpush1.bf16.msra.mxu0 0
      %5610 = vmatprep.subr.bf16.mxu0 0
      %5611 = vmatpush1.bf16.msra.mxu0 0
      %5612 = vmatprep.mubr.bf16.mxu0 0
      %5613 = vmatmul.mubr.bf16.gmra.mrb[0].mxu0 %v5500
      %v5614 = vpop.f32.mrb[0].mxu0
      %v5615 = vadd.f32 %v5550, %v5614
      %v5616 = vpop.f32.mrb[0].mxu0
      %v5617 = vpop.f32.mrb[0].mxu0
      %v5618 = vadd.f32 %v5553, %v5617
      %v5619 = vpop.f32.mrb[0].mxu0
      %5620 = vmatprep.mubr.bf16.mxu0 0
      %5621 = vmatmul.mubr.bf16.gmra.mrb[0].mxu0 %v5503
      %v5622 = vpop.f32.mrb[0].mxu0
      %v5623 = vadd.f32 %v5558, %v5622
      %v5624 = vpop.f32.mrb[0].mxu0
      %v5625 = vpop.f32.mrb[0].mxu0
      %v5626 = vadd.f32 %v5561, %v5625
      %v5627 = vpop.f32.mrb[0].mxu0
      %5628 = vmatprep.mubr.bf16.mxu0 0
      %5629 = vmatmul.mubr.bf16.gmra.mrb[0].mxu0 %v5506
      %v5630 = vpop.f32.mrb[0].mxu0
      %v5631 = vadd.f32 %v5566, %v5630
      %v5632 = vpop.f32.mrb[0].mxu0
      %v5633 = vpop.f32.mrb[0].mxu0
      %v5634 = vadd.f32 %v5569, %v5633
      %v5635 = vpop.f32.mrb[0].mxu0
      %5636 = vmatprep.mubr.bf16.mxu0 0
      %5637 = vmatmul.mubr.bf16.gmra.mrb[0].mxu0 %v5509
      %v5638 = vpop.f32.mrb[0].mxu0
      %v5639 = vadd.f32 %v5574, %v5638
      %v5640 = vpop.f32.mrb[0].mxu0
      %v5641 = vpop.f32.mrb[0].mxu0
      %v5642 = vadd.f32 %v5577, %v5641
      %v5643 = vpop.f32.mrb[0].mxu0
      %5644 = vdwg.mxu0
      %v5645 = vld [vmem:[%s17] sm:$0xf]
      %v5646 = vld [vmem:[%s17 + $0x4] sm:$0xf]
      %v5647 = vld [vmem:[%s17 + $0x8] sm:$0xf]
      %v5648 = vld [vmem:[%s17 + $0xc] sm:$0xf]
      %v5649 = vld [vmem:[%s17 + $0x10] sm:$0xf]
      %v5650 = vld [vmem:[%s17 + $0x14] sm:$0xf]
      %v5651 = vld [vmem:[%s17 + $0x18] sm:$0xf]
      %v5652 = vld [vmem:[%s17 + $0x1c] sm:$0xf]
      %v5653 = vld [vmem:[%s17 + $0x20] sm:$0xf]
      %v5654 = vld [vmem:[%s17 + $0x24] sm:$0x3]
      %v5655 = vld [vmem:[%s15] sm:$0xff]
      %v5656 = vld [vmem:[%s15 + $0x8] sm:$0xff]
      %v5657 = vld [vmem:[%s15 + $0x10] sm:$0xff]
      %v5658 = vld [vmem:[%s15 + $0x18] sm:$0xff]
      %v5659 = vld [vmem:[%s15 + $0x20] sm:$0xff]
      %v5660 = vld [vmem:[%s15 + $0x28] sm:$0xff]
      %v5661 = vld [vmem:[%s15 + $0x30] sm:$0xff]
      %v5662 = vld [vmem:[%s15 + $0x38] sm:$0xf]
      %v5663 = vld [vmem:[%s16] sm:$0xff]
      %v5664 = vld [vmem:[%s16 + $0x8] sm:$0xff]
      %v5665 = vld [vmem:[%s16 + $0x10] sm:$0xff]
      %v5666 = vld [vmem:[%s16 + $0x18] sm:$0xff]
      %v5667 = vld [vmem:[%s16 + $0x20] sm:$0xff]
      %v5668 = vld [vmem:[%s16 + $0x28] sm:$0xff]
      %v5669 = vld [vmem:[%s16 + $0x30] sm:$0xff]
      %v5670 = vld [vmem:[%s16 + $0x38] sm:$0xf]
      %5679 = vrot.lane.b32.xlu0 %v5615, 127
      %v5680 = vpop.permute.xlu0 %5679
      %5681 = vrot.lane.b32.xlu0 %v5618, 127
      %v5682 = vpop.permute.xlu0 %5681
      %5683 = vrot.lane.b32.xlu0 %v5623, 127
      %v5684 = vpop.permute.xlu0 %5683
      %5685 = vrot.lane.b32.xlu0 %v5626, 127
      %v5686 = vpop.permute.xlu0 %5685
      %5687 = vrot.lane.b32.xlu0 %v5631, 127
      %v5688 = vpop.permute.xlu0 %5687
      %5689 = vrot.lane.b32.xlu0 %v5634, 127
      %v5690 = vpop.permute.xlu0 %5689
      %5691 = vrot.lane.b32.xlu0 %v5639, 127
      %v5692 = vpop.permute.xlu0 %5691
      %5693 = vrot.lane.b32.xlu0 %v5642, 127
      %v5694 = vpop.permute.xlu0 %5693
      %v5703 = vmax.f32 %v5615, %v5680
      %v5704 = vmax.f32 %v5618, %v5682
      %v5705 = vmax.f32 %v5623, %v5684
      %v5706 = vmax.f32 %v5626, %v5686
      %v5707 = vmax.f32 %v5631, %v5688
      %v5708 = vmax.f32 %v5634, %v5690
      %v5709 = vmax.f32 %v5639, %v5692
      %v5710 = vmax.f32 %v5642, %v5694
      %5711 = vrot.lane.b32.xlu0 %v5615, 126
      %v5712 = vpop.permute.xlu0 %5711
      %5713 = vrot.lane.b32.xlu0 %v5618, 126
      %v5714 = vpop.permute.xlu0 %5713
      %5715 = vrot.lane.b32.xlu0 %v5623, 126
      %v5716 = vpop.permute.xlu0 %5715
      %5717 = vrot.lane.b32.xlu0 %v5626, 126
      %v5718 = vpop.permute.xlu0 %5717
      %5719 = vrot.lane.b32.xlu0 %v5631, 126
      %v5720 = vpop.permute.xlu0 %5719
      %5721 = vrot.lane.b32.xlu0 %v5634, 126
      %v5722 = vpop.permute.xlu0 %5721
      %5723 = vrot.lane.b32.xlu0 %v5639, 126
      %v5724 = vpop.permute.xlu0 %5723
      %5725 = vrot.lane.b32.xlu0 %v5642, 126
      %v5726 = vpop.permute.xlu0 %5725
      %v5735 = vmax.f32 %v5703, %v5712
      %v5736 = vmax.f32 %v5704, %v5714
      %v5737 = vmax.f32 %v5705, %v5716
      %v5738 = vmax.f32 %v5706, %v5718
      %v5739 = vmax.f32 %v5707, %v5720
      %v5740 = vmax.f32 %v5708, %v5722
      %v5741 = vmax.f32 %v5709, %v5724
      %v5742 = vmax.f32 %v5710, %v5726
      %v5743 = vpack.c.bf16 %v5736, %v5735
      %v5744 = vpack.c.bf16 %v5738, %v5737
      %v5745 = vpack.c.bf16 %v5740, %v5739
      %v5746 = vpack.c.bf16 %v5742, %v5741
      %v5757 = vunpack.c.l.b16 %v5645
      %v5758 = vunpack.c.l.b16 %v5646
      %v5759 = vunpack.c.l.b16 %v5647
      %v5760 = vunpack.c.l.b16 %v5648
      %v5761 = vunpack.c.l.b16 %v5649
      %v5762 = vunpack.c.l.b16 %v5650
      %v5763 = vunpack.c.l.b16 %v5651
      %v5764 = vunpack.c.l.b16 %v5652
      %v5765 = vunpack.c.l.b16 %v5653
      %v5766 = vunpack.c.l.b16 %v5654
      %v5767 = vpack.c.b16 %v5758, %v5757
      %v5768 = vpack.c.b16 %v5760, %v5759
      %v5769 = vpack.c.b16 %v5762, %v5761
      %v5770 = vpack.c.b16 %v5764, %v5763
      %v5771 = vpack.c.b16 %v5766, %v5765
      %vm5776 = vcmask 621568
      %v5778 = vsel %vm5776, %v5743, 0
      %v5781 = vsel %vm5776, %v5744, 0
      %v5784 = vsel %vm5776, %v5745, 0
      %v5787 = vsel %vm5776, %v5746, 0
      %v5790 = vsel %vm5511, %v5771, 0
      %5792 = vmatprep.subr.bf16.mxu0 0
      %5793 = vmatpush1.bf16.msra.mxu0 %v5767
      %5794 = vmatprep.subr.bf16.mxu0 0
      %5795 = vmatpush1.bf16.msra.mxu0 %v5768
      %5796 = vmatprep.subr.bf16.mxu0 0
      %5797 = vmatpush1.bf16.msra.mxu0 %v5769
      %5798 = vmatprep.subr.bf16.mxu0 0
      %5799 = vmatpush1.bf16.msra.mxu0 %v5770
      %5800 = vmatprep.subr.bf16.mxu0 0
      %5801 = vmatpush1.bf16.msra.mxu0 %v5790
      %5802 = vmatprep.subr.bf16.mxu0 0
      %5803 = vmatpush1.bf16.msra.mxu0 0
      %5804 = vmatprep.subr.bf16.mxu0 0
      %5805 = vmatpush1.bf16.msra.mxu0 0
      %5806 = vmatprep.subr.bf16.mxu0 0
      %5807 = vmatpush1.bf16.msra.mxu0 0
      %5808 = vmatprep.subr.bf16.mxu0 0
      %5809 = vmatpush1.bf16.msra.mxu0 0
      %5810 = vmatprep.subr.bf16.mxu0 0
      %5811 = vmatpush1.bf16.msra.mxu0 0
      %5812 = vmatprep.subr.bf16.mxu0 0
      %5813 = vmatpush1.bf16.msra.mxu0 0
      %5814 = vmatprep.subr.bf16.mxu0 0
      %5815 = vmatpush1.bf16.msra.mxu0 0
      %5816 = vmatprep.subr.bf16.mxu0 0
      %5817 = vmatpush1.bf16.msra.mxu0 0
      %5818 = vmatprep.subr.bf16.mxu0 0
      %5819 = vmatpush1.bf16.msra.mxu0 0
      %5820 = vmatprep.subr.bf16.mxu0 0
      %5821 = vmatpush1.bf16.msra.mxu0 0
      %5822 = vmatprep.subr.bf16.mxu0 0
      %5823 = vmatpush1.bf16.msra.mxu0 0
      %5824 = vmatprep.mubr.bf16.mxu0 0
      %5825 = vmatmul.mubr.bf16.gmra.mrb[0].mxu0 %v5778
      %v5826 = vpop.f32.mrb[0].mxu0
      %v5827 = vadd.f32 0.0, %v5826
      %v5828 = vpop.f32.mrb[0].mxu0
      %v5829 = vpop.f32.mrb[0].mxu0
      %v5830 = vadd.f32 0.0, %v5829
      %v5831 = vpop.f32.mrb[0].mxu0
      %5832 = vmatprep.mubr.bf16.mxu0 0
      %5833 = vmatmul.mubr.bf16.gmra.mrb[0].mxu0 %v5781
      %v5834 = vpop.f32.mrb[0].mxu0
      %v5835 = vadd.f32 0.0, %v5834
      %v5836 = vpop.f32.mrb[0].mxu0
      %v5837 = vpop.f32.mrb[0].mxu0
      %v5838 = vadd.f32 0.0, %v5837
      %v5839 = vpop.f32.mrb[0].mxu0
      %5840 = vmatprep.mubr.bf16.mxu0 0
      %5841 = vmatmul.mubr.bf16.gmra.mrb[0].mxu0 %v5784
      %v5842 = vpop.f32.mrb[0].mxu0
      %v5843 = vadd.f32 0.0, %v5842
      %v5844 = vpop.f32.mrb[0].mxu0
      %v5845 = vpop.f32.mrb[0].mxu0
      %v5846 = vadd.f32 0.0, %v5845
      %v5847 = vpop.f32.mrb[0].mxu0
      %5848 = vmatprep.mubr.bf16.mxu0 0
      %5849 = vmatmul.mubr.bf16.gmra.mrb[0].mxu0 %v5787
      %v5850 = vpop.f32.mrb[0].mxu0
      %v5851 = vadd.f32 0.0, %v5850
      %v5852 = vpop.f32.mrb[0].mxu0
      %v5853 = vpop.f32.mrb[0].mxu0
      %v5854 = vadd.f32 0.0, %v5853
      %v5855 = vpop.f32.mrb[0].mxu0
      %5856 = vdwg.mxu0
      %vm5857 = vcmask 211968
      %v5858 = vsel %vm5857, %v5827, 0.0
      %5859 = vadd.xlane.f32.xlu0 %v5858
      %v5860 = vpop.xlane.xlu0 %5859
      %v5861 = vsel %vm5857, %v5830, 0.0
      %5862 = vadd.xlane.f32.xlu0 %v5861
      %v5863 = vpop.xlane.xlu0 %5862
      %v5864 = vsel %vm5857, %v5835, 0.0
      %5865 = vadd.xlane.f32.xlu0 %v5864
      %v5866 = vpop.xlane.xlu0 %5865
      %v5867 = vsel %vm5857, %v5838, 0.0
      %5868 = vadd.xlane.f32.xlu0 %v5867
      %v5869 = vpop.xlane.xlu0 %5868
      %v5870 = vsel %vm5857, %v5843, 0.0
      %5871 = vadd.xlane.f32.xlu0 %v5870
      %v5872 = vpop.xlane.xlu0 %5871
      %v5873 = vsel %vm5857, %v5846, 0.0
      %5874 = vadd.xlane.f32.xlu0 %v5873
      %v5875 = vpop.xlane.xlu0 %5874
      %v5876 = vsel %vm5857, %v5851, 0.0
      %5877 = vadd.xlane.f32.xlu0 %v5876
      %v5878 = vpop.xlane.xlu0 %5877
      %vm5879 = vcmask 207872
      %v5880 = vsel %vm5879, %v5854, 0.0
      %5881 = vadd.xlane.f32.xlu0 %v5880
      %v5882 = vpop.xlane.xlu0 %5881
      %v5883 = vrcp.pop 26.0
      %v5884 = vmul.f32 %v5860, %v5883
      %v5885 = vmul.f32 %v5863, %v5883
      %v5886 = vmul.f32 %v5866, %v5883
      %v5887 = vmul.f32 %v5869, %v5883
      %v5888 = vmul.f32 %v5872, %v5883
      %v5889 = vmul.f32 %v5875, %v5883
      %v5890 = vmul.f32 %v5878, %v5883
      %v5891 = vmul.f32 %v5882, %v5883
      %v5892 = vmul.f32 %v5827, %v5827
      %v5893 = vmul.f32 %v5830, %v5830
      %v5894 = vmul.f32 %v5835, %v5835
      %v5895 = vmul.f32 %v5838, %v5838
      %v5896 = vmul.f32 %v5843, %v5843
      %v5897 = vmul.f32 %v5846, %v5846
      %v5898 = vmul.f32 %v5851, %v5851
      %v5899 = vmul.f32 %v5854, %v5854
      %v5900 = vsel %vm5857, %v5892, 0.0
      %5901 = vadd.xlane.f32.xlu0 %v5900
      %v5902 = vpop.xlane.xlu0 %5901
      %v5903 = vsel %vm5857, %v5893, 0.0
      %5904 = vadd.xlane.f32.xlu0 %v5903
      %v5905 = vpop.xlane.xlu0 %5904
      %v5906 = vsel %vm5857, %v5894, 0.0
      %5907 = vadd.xlane.f32.xlu0 %v5906
      %v5908 = vpop.xlane.xlu0 %5907
      %v5909 = vsel %vm5857, %v5895, 0.0
      %5910 = vadd.xlane.f32.xlu0 %v5909
      %v5911 = vpop.xlane.xlu0 %5910
      %v5912 = vsel %vm5857, %v5896, 0.0
      %5913 = vadd.xlane.f32.xlu0 %v5912
      %v5914 = vpop.xlane.xlu0 %5913
      %v5915 = vsel %vm5857, %v5897, 0.0
      %5916 = vadd.xlane.f32.xlu0 %v5915
      %v5917 = vpop.xlane.xlu0 %5916
      %v5918 = vsel %vm5857, %v5898, 0.0
      %5919 = vadd.xlane.f32.xlu0 %v5918
      %v5920 = vpop.xlane.xlu0 %5919
      %v5921 = vsel %vm5879, %v5899, 0.0
      %5922 = vadd.xlane.f32.xlu0 %v5921
      %v5923 = vpop.xlane.xlu0 %5922
      %v5924 = vmul.f32 %v5902, %v5883
      %v5925 = vmul.f32 %v5905, %v5883
      %v5926 = vmul.f32 %v5908, %v5883
      %v5927 = vmul.f32 %v5911, %v5883
      %v5928 = vmul.f32 %v5914, %v5883
      %v5929 = vmul.f32 %v5917, %v5883
      %v5930 = vmul.f32 %v5920, %v5883
      %v5931 = vmul.f32 %v5923, %v5883
      %v5932 = vmul.f32 %v5884, %v5884
      %v5933 = vmul.f32 %v5885, %v5885
      %v5934 = vmul.f32 %v5886, %v5886
      %v5935 = vmul.f32 %v5887, %v5887
      %v5936 = vmul.f32 %v5888, %v5888
      %v5937 = vmul.f32 %v5889, %v5889
      %v5938 = vmul.f32 %v5890, %v5890
      %v5939 = vmul.f32 %v5891, %v5891
      %v5940 = vsub.f32 %v5924, %v5932
      %v5941 = vsub.f32 %v5925, %v5933
      %v5942 = vsub.f32 %v5926, %v5934
      %v5943 = vsub.f32 %v5927, %v5935
      %v5944 = vsub.f32 %v5928, %v5936
      %v5945 = vsub.f32 %v5929, %v5937
      %v5946 = vsub.f32 %v5930, %v5938
      %v5947 = vsub.f32 %v5931, %v5939
      %v5948 = vmax.f32 %v5940, 0.0
      %v5949 = vmax.f32 %v5941, 0.0
      %v5950 = vmax.f32 %v5942, 0.0
      %v5951 = vmax.f32 %v5943, 0.0
      %v5952 = vmax.f32 %v5944, 0.0
      %v5953 = vmax.f32 %v5945, 0.0
      %v5954 = vmax.f32 %v5946, 0.0
      %v5955 = vmax.f32 %v5947, 0.0
      %v5956 = vsub.f32 %v5827, %v5884
      %v5957 = vsub.f32 %v5830, %v5885
      %v5958 = vsub.f32 %v5835, %v5886
      %v5959 = vsub.f32 %v5838, %v5887
      %v5960 = vsub.f32 %v5843, %v5888
      %v5961 = vsub.f32 %v5846, %v5889
      %v5962 = vsub.f32 %v5851, %v5890
      %v5963 = vsub.f32 %v5854, %v5891
      %v5964 = vadd.f32 %v5948, 1e-05
      %v5965 = vadd.f32 %v5949, 1e-05
      %v5966 = vadd.f32 %v5950, 1e-05
      %v5967 = vadd.f32 %v5951, 1e-05
      %v5968 = vadd.f32 %v5952, 1e-05
      %v5969 = vadd.f32 %v5953, 1e-05
      %v5970 = vadd.f32 %v5954, 1e-05
      %v5971 = vadd.f32 %v5955, 1e-05
      %v5972 = vrsqrt.pop %v5964
      %v5973 = vrsqrt.pop %v5965
      %v5974 = vrsqrt.pop %v5966
      %v5975 = vrsqrt.pop %v5967
      %v5976 = vrsqrt.pop %v5968
      %v5977 = vrsqrt.pop %v5969
      %v5978 = vrsqrt.pop %v5970
      %v5979 = vrsqrt.pop %v5971
      %v5980 = vmul.f32 %v5956, %v5972
      %v5981 = vmul.f32 %v5957, %v5973
      %v5982 = vmul.f32 %v5958, %v5974
      %v5983 = vmul.f32 %v5959, %v5975
      %v5984 = vmul.f32 %v5960, %v5976
      %v5985 = vmul.f32 %v5961, %v5977
      %v5986 = vmul.f32 %v5962, %v5978
      %v5987 = vmul.f32 %v5963, %v5979
      %5989 = vset.pattern.permute.xlu0 0
      %5990 = vperm.xlu0 %5989, %v5655
      %v5991 = vpop.permute.xlu0 %5990
      %5994 = vset.pattern.permute.xlu0 0
      %5995 = vperm.xlu0 %5994, %v5656
      %v5996 = vpop.permute.xlu0 %5995
      %5999 = vset.pattern.permute.xlu0 0
      %6000 = vperm.xlu0 %5999, %v5657
      %v6001 = vpop.permute.xlu0 %6000
      %6004 = vset.pattern.permute.xlu0 0
      %6005 = vperm.xlu0 %6004, %v5658
      %v6006 = vpop.permute.xlu0 %6005
      %6009 = vset.pattern.permute.xlu0 0
      %6010 = vperm.xlu0 %6009, %v5659
      %v6011 = vpop.permute.xlu0 %6010
      %6014 = vset.pattern.permute.xlu0 0
      %6015 = vperm.xlu0 %6014, %v5660
      %v6016 = vpop.permute.xlu0 %6015
      %6019 = vset.pattern.permute.xlu0 0
      %6020 = vperm.xlu0 %6019, %v5661
      %v6021 = vpop.permute.xlu0 %6020
      %6024 = vset.pattern.permute.xlu0 0
      %6025 = vperm.xlu0 %6024, %v5662
      %v6026 = vpop.permute.xlu0 %6025
      %v6028 = vmul.f32 %v5980, %v5991
      %v6029 = vmul.f32 %v5981, %v5996
      %v6030 = vmul.f32 %v5982, %v6001
      %v6031 = vmul.f32 %v5983, %v6006
      %v6032 = vmul.f32 %v5984, %v6011
      %v6033 = vmul.f32 %v5985, %v6016
      %v6034 = vmul.f32 %v5986, %v6021
      %v6035 = vmul.f32 %v5987, %v6026
      %6037 = vset.pattern.permute.xlu0 0
      %6038 = vperm.xlu0 %6037, %v5663
      %v6039 = vpop.permute.xlu0 %6038
      %6042 = vset.pattern.permute.xlu0 0
      %6043 = vperm.xlu0 %6042, %v5664
      %v6044 = vpop.permute.xlu0 %6043
      %6047 = vset.pattern.permute.xlu0 0
      %6048 = vperm.xlu0 %6047, %v5665
      %v6049 = vpop.permute.xlu0 %6048
      %6052 = vset.pattern.permute.xlu0 0
      %6053 = vperm.xlu0 %6052, %v5666
      %v6054 = vpop.permute.xlu0 %6053
      %6057 = vset.pattern.permute.xlu0 0
      %6058 = vperm.xlu0 %6057, %v5667
      %v6059 = vpop.permute.xlu0 %6058
      %6062 = vset.pattern.permute.xlu0 0
      %6063 = vperm.xlu0 %6062, %v5668
      %v6064 = vpop.permute.xlu0 %6063
      %6067 = vset.pattern.permute.xlu0 0
      %6068 = vperm.xlu0 %6067, %v5669
      %v6069 = vpop.permute.xlu0 %6068
      %6072 = vset.pattern.permute.xlu0 0
      %6073 = vperm.xlu0 %6072, %v5670
      %v6074 = vpop.permute.xlu0 %6073
      %v6076 = vadd.f32 %v6028, %v6039
      %v6077 = vadd.f32 %v6029, %v6044
      %v6078 = vadd.f32 %v6030, %v6049
      %v6079 = vadd.f32 %v6031, %v6054
      %v6080 = vadd.f32 %v6032, %v6059
      %v6081 = vadd.f32 %v6033, %v6064
      %v6082 = vadd.f32 %v6034, %v6069
      %v6083 = vadd.f32 %v6035, %v6074
      %vm6084 = vcmp.ge.f32.partialorder %v6076, 0.0
      %vm6085 = vcmp.ge.f32.partialorder %v6077, 0.0
      %vm6086 = vcmp.ge.f32.partialorder %v6078, 0.0
      %vm6087 = vcmp.ge.f32.partialorder %v6079, 0.0
      %vm6088 = vcmp.ge.f32.partialorder %v6080, 0.0
      %vm6089 = vcmp.ge.f32.partialorder %v6081, 0.0
      %vm6090 = vcmp.ge.f32.partialorder %v6082, 0.0
      %vm6091 = vcmp.ge.f32.partialorder %v6083, 0.0
      %v6092 = vmul.f32 %v6076, 0.01
      %v6093 = vmul.f32 %v6077, 0.01
      %v6094 = vmul.f32 %v6078, 0.01
      %v6095 = vmul.f32 %v6079, 0.01
      %v6096 = vmul.f32 %v6080, 0.01
      %v6097 = vmul.f32 %v6081, 0.01
      %v6098 = vmul.f32 %v6082, 0.01
      %v6099 = vmul.f32 %v6083, 0.01
      %v6100 = vsel %vm6084, %v6076, %v6092
      %v6101 = vsel %vm6085, %v6077, %v6093
      %v6102 = vsel %vm6086, %v6078, %v6094
      %v6103 = vsel %vm6087, %v6079, %v6095
      %v6104 = vsel %vm6088, %v6080, %v6096
      %v6105 = vsel %vm6089, %v6081, %v6097
      %v6106 = vsel %vm6090, %v6082, %v6098
      %v6107 = vsel %vm6091, %v6083, %v6099
      %6108 = vst.msk [vmem:[%s576] sm:$0xff] %vm5857, %v6100
      %6109 = vst.msk [vmem:[%s576 + $0x8] sm:$0xff] %vm5857, %v6101
      %6110 = vst.msk [vmem:[%s576 + $0x10] sm:$0xff] %vm5857, %v6102
      %6111 = vst.msk [vmem:[%s576 + $0x18] sm:$0xff] %vm5857, %v6103
      %6112 = vst.msk [vmem:[%s576 + $0x20] sm:$0xff] %vm5857, %v6104
      %6113 = vst.msk [vmem:[%s576 + $0x28] sm:$0xff] %vm5857, %v6105
      %6114 = vst.msk [vmem:[%s576 + $0x30] sm:$0xff] %vm5857, %v6106
      %6115 = vst.msk [vmem:[%s576 + $0x38] sm:$0xf] %vm5879, %v6107
      %p6116 = scmp.lt.s32.totalorder %s33, 1
      %s6117 = scalar_select %p6116, %s33, 1
      %s6118 = smul.addr %s6117, 8
      %s6119 = smul.addr %s6118, 8
      %s6120 = scalar_lea.vmem %s18, %s6119
      // Predicated region
      $region93: #{sincnet_forward.1} parent=91 // pred_check
        %p6121 = pneg %p434
      $region94: #{sincnet_forward.1} parent=91 // pred_check_branch
        %6123 = sbr.rel (%p6121) target = $region96
      $region95: #{sincnet_forward.1} parent=91 // pred_region
        _
      $region96: #{sincnet_forward.1} parent=91 // pred_fallthru
        _
    $region92: #{sincnet_forward.1} parent=5 // pred_fallthru
      _
    %p6124 = scmp.le.s32.totalorder 2, %s28
    // Predicated region
    $region97: #{sincnet_forward.1} parent=5 // pred_check
      %p6125 = pneg %p6124
    $region98: #{sincnet_forward.1} parent=5 // pred_check_branch
      %6127 = sbr.rel (%p6125) target = $region100
    $region99: #{sincnet_forward.1} parent=5 // pred_region
      %s6128 = ssub.s32 %s28, 2
      // Predicated region
      $region101: #{sincnet_forward.1} parent=99 // pred_check
        %p6129 = pneg %p440
      $region102: #{sincnet_forward.1} parent=99 // pred_check_branch
        %6131 = sbr.rel (%p6129) target = $region104
      $region103: #{sincnet_forward.1} parent=99 // pred_region
        %p6132 = scmp.lt.s32.totalorder %s34, 1
        %s6133 = scalar_select %p6132, %s34, 1
        %s6134 = smul.addr %s6133, 8
        %s6135 = smul.addr %s6134, 8
        %s6136 = scalar_lea.vmem %s18, %s6135
      $region104: #{sincnet_forward.1} parent=99 // pred_fallthru
        _
    $region100: #{sincnet_forward.1} parent=5 // pred_fallthru
      _
  $region6: #{sincnet_forward.1} parent=0 // loop_footer
    %s32 = sadd.s32 1, %s28
  $region7: #{sincnet_forward.1} parent=0 // loop_footer_branch
    %27 = sbr.rel target = $region3
  $region8: #{sincnet_forward.1} parent=0 // loop_exit
    _

</llo_original>
